<compile_context>
chip_gen: v7x
topology: tpu7x:2x2x1
jax: 0.10.0
libtpu: 0.0.40
codegen_flags: <defaults>
</compile_context>

<pallas_src>
import jax
import jax.numpy as jnp
from jax.experimental import pallas as pl
from jax.experimental.pallas import tpu as pltpu

EMB = 64
EPS = 1e-5  # torch.nn.LayerNorm default eps


# ---------------------------------------------------------------------------
# fused forward kernel
# ---------------------------------------------------------------------------
def gnn_forward_kernel(
    cons_x_ref, var_x_ref,
    cidx_ref, vidx_ref,
    ce_lng_ref, ce_lnb_ref, ce_w1_ref, ce_b1_ref, ce_w2_ref, ce_b2_ref,
    ve_lng_ref, ve_lnb_ref, ve_w1_ref, ve_b1_ref, ve_w2_ref, ve_b2_ref,
    vc_wpack_ref, vc_bpack_ref, vc_mats_ref, vc_vecs_ref,
    cv_wpack_ref, cv_bpack_ref, cv_mats_ref, cv_vecs_ref,
    hw1_ref, hb1_ref, hw2_ref, hb2_ref, hw3_ref,
    out_ref,
):
    f32 = jnp.float32
    bf16 = jnp.bfloat16

    def ln(x, g, b):
        """LayerNorm over the last dim (biased variance, eps=1e-5), like torch. f32."""
        m = jnp.mean(x, axis=-1, keepdims=True)
        var = jnp.mean((x - m) ** 2, axis=-1, keepdims=True)
        return (x - m) * jax.lax.rsqrt(var + EPS) * g + b

    def mxu(x, w):
        """bf16-operand MXU matmul with f32 accumulation."""
        return jnp.dot(x.astype(bf16), w.astype(bf16), preferred_element_type=f32)

    def mxu_t(g, x):
        """Transposed contraction: (N,E) x (N,64) -> (E,64), contracting the node axis.

        With g an incidence matrix (g[n, e] == 1 iff edge e touches node n) this is the
        per-edge row gather; the plain mxu(g, msg) with the same matrix is the
        scatter-add back to nodes.
        """
        return jax.lax.dot_general(
            g.astype(bf16), x.astype(bf16),
            dimension_numbers=(((0,), (0,)), ((), ())),
            preferred_element_type=f32)

    def small_dot(x, w):
        """(N, F) @ (F, 64) with tiny static F (2 or 6) — VPU broadcast-accumulate."""
        acc = x[:, 0:1] * w[0:1, :]
        for f in range(1, w.shape[0]):
            acc = acc + x[:, f:f + 1] * w[f:f + 1, :]
        return acc

    def embed(x, g, b, w1, b1, w2, b2):
        xn = ln(x, g, b)
        h = jnp.maximum(small_dot(xn, w1) + b1, 0.0)
        return jnp.maximum(mxu(h, w2) + b2, 0.0)

    nc = cons_x_ref.shape[0]
    nv = var_x_ref.shape[0]
    ne = cidx_ref.shape[1]

    # Incidence matrices, built once in-register from the (1, E) int32 index rows and
    # reused (gather AND scatter) for all 3 GNN iterations.  bf16: 0/1 is exact.
    cid = cidx_ref[...]   # (1, E) constraint index of each edge
    vid = vidx_ref[...]   # (1, E) variable index of each edge
    g_c = (jax.lax.broadcasted_iota(jnp.int32, (nc, ne), 0) == cid).astype(bf16)  # (Nc,E)
    g_v = (jax.lax.broadcasted_iota(jnp.int32, (nv, ne), 0) == vid).astype(bf16)  # (Nv,E)

    def biconv(left, right, g_src, g_tgt, wpack_ref, bpack_ref, mats_ref, vecs_ref):
        """One BipartiteGraphConvolution: targets `right` updated from sources `left`."""
        wr, wf, wo1h, wo2 = mats_ref[0], mats_ref[1], mats_ref[2], mats_ref[3]
        ln1g, ln1b = vecs_ref[0:1, :], vecs_ref[1:2, :]
        bfin = vecs_ref[2:3, :]
        ln2g, ln2b = vecs_ref[3:4, :], vecs_ref[4:5, :]
        bo2 = vecs_ref[5:6, :]

        # Single 128-lane MXU pass over `right`:
        #   lanes   0:64  = feature_module_left(right) + folded edge constant
        #   lanes 64:128  = right @ w_o1[64:, :] + b_o1   (output_module skip half)
        rt = mxu(right, wpack_ref[...]) + bpack_ref[...]          # (Nr, 128)
        a_t = rt[:, :EMB]
        o1_skip = rt[:, EMB:]

        b_s = mxu(left, wr)                                       # (Nl, 64)

        # per-edge message pre-activation: gather target/source rows by transposed
        # contraction against the incidence matrices.
        pre = mxu_t(g_tgt, a_t) + mxu_t(g_src, b_s)               # (E, 64)

        # feature_module_final: LayerNorm -> ReLU -> Linear
        msg = jnp.maximum(ln(pre, ln1g, ln1b), 0.0)
        msg = mxu(msg, wf) + bfin                                 # (E, 64)

        # 'add' aggregation to target nodes: plain dot with the same incidence matrix.
        agg = mxu(g_tgt, msg)                                     # (Nr, 64)

        # post_conv_module (LayerNorm) + output_module on concat([h, right]) without the
        # concat (w_o1 split; its right-half product + b_o1 already sit in o1_skip).
        h = ln(agg, ln2g, ln2b)
        o1 = jnp.maximum(mxu(h, wo1h) + o1_skip, 0.0)
        return mxu(o1, wo2) + bo2

    # embeddings
    c = embed(cons_x_ref[...], ce_lng_ref[...], ce_lnb_ref[...],
              ce_w1_ref[...], ce_b1_ref[...], ce_w2_ref[...], ce_b2_ref[...])
    v = embed(var_x_ref[...], ve_lng_ref[...], ve_lnb_ref[...],
              ve_w1_ref[...], ve_b1_ref[...], ve_w2_ref[...], ve_b2_ref[...])

    # 3 rounds of v->c then c->v convolutions; c/v stay resident in VMEM/vregs.
    for _ in range(3):
        c = biconv(v, c, g_v, g_c, vc_wpack_ref, vc_bpack_ref, vc_mats_ref, vc_vecs_ref)
        v = biconv(c, v, g_c, g_v, cv_wpack_ref, cv_bpack_ref, cv_mats_ref, cv_vecs_ref)

    # fused output_module / output_select head: 128-lane intermediates; final projection
    # padded to 128 lanes (heads in columns 0 and 64) so the store is lane-dense.
    h = jnp.maximum(mxu(v, hw1_ref[...]) + hb1_ref[...], 0.0)
    h = jnp.maximum(mxu(h, hw2_ref[...]) + hb2_ref[...], 0.0)
    out_ref[...] = mxu(h, hw3_ref[...])


# ---------------------------------------------------------------------------
# wrapper: parameter packing + single (grid-less) pallas_call
# ---------------------------------------------------------------------------
def gnn_policy_forward(params, constraint_features, edge_indices, edge_features,
                       variable_features):
    """GNNPolicy.forward (random_feature=False, tripartite=False), one fused kernel.

    Note: edge_features is accepted for API fidelity, but the torch module's
    edge_embedding = LayerNorm(1) maps every edge feature to its bias (variance of a
    single feature is 0), so the output does not depend on the edge feature values;
    that constant row is folded into the conv biases below.  This assumption only holds
    for edge feature dim == 1.
    """
    f32 = jnp.float32
    bf16 = jnp.bfloat16
    nv = variable_features.shape[0]

    e_idx = edge_indices.astype(jnp.int32)   # force int32 for in-kernel iota compares
    cons_idx = e_idx[0]                      # constraint index of each edge
    var_idx = e_idx[1]                       # variable index of each edge

    edge_b = params["edge_ln"]["ln_b"].astype(f32)        # (1,1): LayerNorm(1)(x) == ln_b

    def pack_conv(pc):
        b_left_eff = pc["b_left"] + edge_b * pc["w_edge"]            # fold edge constant
        # 128-lane pack over `right`: [w_left | w_o1_right_half], [b_left_eff | b_o1].
        wpack = jnp.concatenate([pc["w_left"], pc["w_o1"][EMB:, :]], axis=1)   # (64,128)
        bpack = jnp.concatenate([b_left_eff, pc["b_o1"]], axis=1)              # (1,128)
        mats = jnp.stack(
            [pc["w_right"], pc["w_final"], pc["w_o1"][:EMB, :], pc["w_o2"]], axis=0)
        vecs = jnp.concatenate(
            [pc["ln1_g"], pc["ln1_b"], pc["b_final"],
             pc["ln2_g"], pc["ln2_b"], pc["b_o2"]], axis=0)                    # (6,64)
        return wpack.astype(bf16), bpack.astype(f32), mats.astype(bf16), vecs.astype(f32)

    vc_wpack, vc_bpack, vc_mats, vc_vecs = pack_conv(params["conv_v_to_c"])
    cv_wpack, cv_bpack, cv_mats, cv_vecs = pack_conv(params["conv_c_to_v"])

    # fuse output_module & output_select into one 128-wide head (block-diagonal W2; the
    # zero blocks contribute exact zeros, so per-head math is unchanged).  W3 is padded
    # to 128 output lanes: column 0 = output_module head, column 64 = output_select.
    po, ps = params["output_module"], params["output_select"]
    z64 = jnp.zeros((EMB, EMB), f32)
    hw1 = jnp.concatenate([po["w1"], ps["w1"]], axis=1).astype(bf16)           # (64,128)
    hb1 = jnp.concatenate([po["b1"], ps["b1"]], axis=1).astype(f32)            # (1,128)
    hw2 = jnp.concatenate(
        [jnp.concatenate([po["w2"], z64], axis=1),
         jnp.concatenate([z64, ps["w2"]], axis=1)], axis=0).astype(bf16)       # (128,128)
    hb2 = jnp.concatenate([po["b2"], ps["b2"]], axis=1).astype(f32)            # (1,128)
    hw3 = jnp.zeros((2 * EMB, 2 * EMB), f32)
    hw3 = hw3.at[:EMB, 0:1].set(po["w3"]).at[EMB:, EMB:EMB + 1].set(ps["w3"])
    hw3 = hw3.astype(bf16)                                                     # (128,128)

    ce, ve = params["cons_emb"], params["var_emb"]
    args = [
        constraint_features.astype(f32), variable_features.astype(f32),
        cons_idx[None, :], var_idx[None, :],
        ce["ln_g"], ce["ln_b"], ce["w1"], ce["b1"], ce["w2"].astype(bf16), ce["b2"],
        ve["ln_g"], ve["ln_b"], ve["w1"], ve["b1"], ve["w2"].astype(bf16), ve["b2"],
        vc_wpack, vc_bpack, vc_mats, vc_vecs,
        cv_wpack, cv_bpack, cv_mats, cv_vecs,
        hw1, hb1, hw2, hb2, hw3,
    ]
    out_shape = jax.ShapeDtypeStruct((nv, 2 * EMB), f32)

    # TODO(synk): this fused, grid-less kernel keeps the whole graph resident. For large
    # graphs, replace the dense (N,E) incidence matmuls with a sorted-edge tiled
    # segment-sum (scalar-prefetched per-node-tile offsets via PrefetchScalarGridSpec),
    # grid = (node-tile parallel, edge-tile arbitrary) with pl.when init/finalize on a
    # VMEM accumulator, and mark the node-tile axis pltpu.PARALLEL for v7x's 2nd core.
    out = pl.pallas_call(
        gnn_forward_kernel,
        out_shape=out_shape,
        compiler_params=pltpu.CompilerParams(vmem_limit_bytes=32 * 1024 * 1024),
    )(*args)
    # heads live in lanes 0 (output) and 64 (select) of the lane-dense output slab.
    return out[:, 0], out[:, EMB]


# ---------------------------------------------------------------------------
# deterministic parameter initialization (synthetic; matches module __init__ shapes)
# ---------------------------------------------------------------------------
def _dense(key, fin, fout, scale=0.1):
    kw, kb = jax.random.split(key)
    w = jax.random.normal(kw, (fin, fout), jnp.float32) * scale
    b = jax.random.normal(kb, (1, fout), jnp.float32) * scale
    return w, b


def init_embed(key, fin):
    k1, k2 = jax.random.split(key)
    w1, b1 = _dense(k1, fin, EMB)
    w2, b2 = _dense(k2, EMB, EMB)
    return {
        "ln_g": jnp.ones((1, fin), jnp.float32),
        "ln_b": jnp.zeros((1, fin), jnp.float32),
        "w1": w1, "b1": b1, "w2": w2, "b2": b2,
    }


def init_biconv(key):
    ks = jax.random.split(key, 6)
    w_left, b_left = _dense(ks[0], EMB, EMB)
    w_edge = jax.random.normal(ks[1], (1, EMB), jnp.float32) * 0.1      # no bias
    w_right = jax.random.normal(ks[2], (EMB, EMB), jnp.float32) * 0.1   # no bias
    w_final, b_final = _dense(ks[3], EMB, EMB)
    w_o1, b_o1 = _dense(ks[4], 2 * EMB, EMB)
    w_o2, b_o2 = _dense(ks[5], EMB, EMB)
    return {
        "w_left": w_left, "b_left": b_left,
        "w_edge": w_edge, "w_right": w_right,
        "ln1_g": jnp.ones((1, EMB), jnp.float32), "ln1_b": jnp.zeros((1, EMB), jnp.float32),
        "w_final": w_final, "b_final": b_final,
        "ln2_g": jnp.ones((1, EMB), jnp.float32), "ln2_b": jnp.zeros((1, EMB), jnp.float32),
        "w_o1": w_o1, "b_o1": b_o1, "w_o2": w_o2, "b_o2": b_o2,
    }


def init_head(key):
    k1, k2, k3 = jax.random.split(key, 3)
    w1, b1 = _dense(k1, EMB, EMB)
    w2, b2 = _dense(k2, EMB, EMB)
    w3 = jax.random.normal(k3, (EMB, 1), jnp.float32) * 0.1  # no bias
    return {"w1": w1, "b1": b1, "w2": w2, "b2": b2, "w3": w3}


def init_params(key):
    ks = jax.random.split(key, 6)
    return {
        "cons_emb": init_embed(ks[0], 2),   # cons_nfeats = 2
        "var_emb": init_embed(ks[1], 6),    # var_nfeats = 6
        "edge_ln": {
            "ln_g": jnp.ones((1, 1), jnp.float32),
            "ln_b": jnp.zeros((1, 1), jnp.float32),
        },
        "conv_v_to_c": init_biconv(ks[2]),
        "conv_c_to_v": init_biconv(ks[3]),
        "output_module": init_head(ks[4]),
        "output_select": init_head(ks[5]),
    }


# ---------------------------------------------------------------------------
# pure-JAX reference (direct transcription of the torch forward) for validation
# ---------------------------------------------------------------------------
def _reference_forward(params, cons_x, edge_indices, edge_feats, var_x):
    hi = jax.lax.Precision.HIGHEST

    def ln(x, g, b):
        m = jnp.mean(x, -1, keepdims=True)
        v = jnp.mean((x - m) ** 2, -1, keepdims=True)
        return (x - m) * jax.lax.rsqrt(v + EPS) * g + b

    def emb(x, p):
        xn = ln(x, p["ln_g"], p["ln_b"])
        h = jnp.maximum(jnp.dot(xn, p["w1"], precision=hi) + p["b1"], 0.0)
        return jnp.maximum(jnp.dot(h, p["w2"], precision=hi) + p["b2"], 0.0)

    def conv(left, e_idx, e_feat, right, p):
        src, tgt = e_idx[0], e_idx[1]
        pre = (jnp.dot(right[tgt], p["w_left"], precision=hi) + p["b_left"]
               + jnp.dot(e_feat, p["w_edge"], precision=hi)
               + jnp.dot(left[src], p["w_right"], precision=hi))
        msg = jnp.maximum(ln(pre, p["ln1_g"], p["ln1_b"]), 0.0)
        msg = jnp.dot(msg, p["w_final"], precision=hi) + p["b_final"]
        agg = jax.ops.segment_sum(msg, tgt, num_segments=right.shape[0])
        h = ln(agg, p["ln2_g"], p["ln2_b"])
        cat = jnp.concatenate([h, right], axis=-1)
        o1 = jnp.maximum(jnp.dot(cat, p["w_o1"], precision=hi) + p["b_o1"], 0.0)
        return jnp.dot(o1, p["w_o2"], precision=hi) + p["b_o2"]

    def head(x, p):
        h = jnp.maximum(jnp.dot(x, p["w1"], precision=hi) + p["b1"], 0.0)
        h = jnp.maximum(jnp.dot(h, p["w2"], precision=hi) + p["b2"], 0.0)
        return jnp.dot(h, p["w3"], precision=hi)[:, 0]

    rev = jnp.stack([edge_indices[1], edge_indices[0]], axis=0)
    c = emb(cons_x, params["cons_emb"])
    e = ln(edge_feats, params["edge_ln"]["ln_g"], params["edge_ln"]["ln_b"])
    v = emb(var_x, params["var_emb"])
    for _ in range(3):
        c = conv(v, rev, e, c, params["conv_v_to_c"])
        v = conv(c, edge_indices, e, v, params["conv_c_to_v"])
    return head(v, params["output_module"]), head(v, params["output_select"])


if __name__ == "__main__":
    key = jax.random.PRNGKey(0)
    k_par, k_c, k_v, k_e, k_src, k_tgt = jax.random.split(key, 6)

    n_cons, n_vars, n_edges = 12, 20, 48
    params = init_params(k_par)

    constraint_features = jax.random.normal(k_c, (n_cons, 2), jnp.float32)
    variable_features = jax.random.normal(k_v, (n_vars, 6), jnp.float32)
    edge_features = jax.random.normal(k_e, (n_edges, 1), jnp.float32)
    edge_indices = jnp.stack(
        [
            jax.random.randint(k_src, (n_edges,), 0, n_cons, dtype=jnp.int32),
            jax.random.randint(k_tgt, (n_edges,), 0, n_vars, dtype=jnp.int32),
        ],
        axis=0,
    )

    fwd = jax.jit(gnn_policy_forward)
    output, select = fwd(params, constraint_features, edge_indices, edge_features,
                         variable_features)
    jax.block_until_ready((output, select))

    assert output.shape == (n_vars,) and select.shape == (n_vars,)
    assert bool(jnp.all(jnp.isfinite(output))) and bool(jnp.all(jnp.isfinite(select)))

    # validate against a pure-JAX (f32 HIGHEST) transcription of the torch module.
    # The kernel now uses bf16 MXU operands (f32 accumulation) across 3 stacked GNN
    # iterations, so the tolerance is scaled and looser than the pure-f32 version;
    # structural bugs produce errors on the order of `scale`.
    ref_out, ref_sel = jax.jit(_reference_forward)(
        params, constraint_features, edge_indices, edge_features, variable_features)
    err = max(float(jnp.max(jnp.abs(output - ref_out))),
              float(jnp.max(jnp.abs(select - ref_sel))))
    scale = max(float(jnp.max(jnp.abs(ref_out))), float(jnp.max(jnp.abs(ref_sel))), 1.0)
    assert err < 5e-2 * scale, f"mismatch vs reference: max abs err {err} (scale {scale})"

    print("KERNEL_OK")
</pallas_src>

<mosaic_0001>
module attributes {stable_mosaic.version = 11 : i64} {
  func.func @gnn_forward_kernel(%arg0: memref<12x2xf32, #tpu.memory_space<vmem>>, %arg1: memref<20x6xf32, #tpu.memory_space<vmem>>, %arg2: memref<1x48xi32, #tpu.memory_space<vmem>>, %arg3: memref<1x48xi32, #tpu.memory_space<vmem>>, %arg4: memref<1x2xf32, #tpu.memory_space<vmem>>, %arg5: memref<1x2xf32, #tpu.memory_space<vmem>>, %arg6: memref<2x64xf32, #tpu.memory_space<vmem>>, %arg7: memref<1x64xf32, #tpu.memory_space<vmem>>, %arg8: memref<64x64xbf16, #tpu.memory_space<vmem>>, %arg9: memref<1x64xf32, #tpu.memory_space<vmem>>, %arg10: memref<1x6xf32, #tpu.memory_space<vmem>>, %arg11: memref<1x6xf32, #tpu.memory_space<vmem>>, %arg12: memref<6x64xf32, #tpu.memory_space<vmem>>, %arg13: memref<1x64xf32, #tpu.memory_space<vmem>>, %arg14: memref<64x64xbf16, #tpu.memory_space<vmem>>, %arg15: memref<1x64xf32, #tpu.memory_space<vmem>>, %arg16: memref<64x128xbf16, #tpu.memory_space<vmem>>, %arg17: memref<1x128xf32, #tpu.memory_space<vmem>>, %arg18: memref<4x64x64xbf16, #tpu.memory_space<vmem>>, %arg19: memref<6x64xf32, #tpu.memory_space<vmem>>, %arg20: memref<64x128xbf16, #tpu.memory_space<vmem>>, %arg21: memref<1x128xf32, #tpu.memory_space<vmem>>, %arg22: memref<4x64x64xbf16, #tpu.memory_space<vmem>>, %arg23: memref<6x64xf32, #tpu.memory_space<vmem>>, %arg24: memref<64x128xbf16, #tpu.memory_space<vmem>>, %arg25: memref<1x128xf32, #tpu.memory_space<vmem>>, %arg26: memref<128x128xbf16, #tpu.memory_space<vmem>>, %arg27: memref<1x128xf32, #tpu.memory_space<vmem>>, %arg28: memref<128x128xbf16, #tpu.memory_space<vmem>>, %arg29: memref<20x128xf32, #tpu.memory_space<vmem>>) attributes {dimension_semantics = [], scalar_prefetch = 0 : i64, scratch_operands = 0 : i64, tpu.core_type = #tpu.core_type<tc>} {
    %c0 = arith.constant 0 : index
    %c0_0 = arith.constant 0 : index
    %0 = vector.load %arg2[%c0, %c0_0] : memref<1x48xi32, #tpu.memory_space<vmem>>, vector<1x48xi32>
    %c0_1 = arith.constant 0 : index
    %c0_2 = arith.constant 0 : index
    %1 = vector.load %arg3[%c0_1, %c0_2] : memref<1x48xi32, #tpu.memory_space<vmem>>, vector<1x48xi32>
    %2 = tpu.iota {dimensions = array<i32: 0>} : vector<12x48xi32>
    %3 = vector.broadcast %0 : vector<1x48xi32> to vector<12x48xi32>
    %4 = arith.cmpi eq, %2, %3 : vector<12x48xi32>
    %5 = arith.extui %4 : vector<12x48xi1> to vector<12x48xi32>
    %6 = arith.sitofp %5 : vector<12x48xi32> to vector<12x48xf32>
    %7 = arith.truncf %6 : vector<12x48xf32> to vector<12x48xbf16>
    %8 = tpu.iota {dimensions = array<i32: 0>} : vector<20x48xi32>
    %9 = vector.broadcast %1 : vector<1x48xi32> to vector<20x48xi32>
    %10 = arith.cmpi eq, %8, %9 : vector<20x48xi32>
    %11 = arith.extui %10 : vector<20x48xi1> to vector<20x48xi32>
    %12 = arith.sitofp %11 : vector<20x48xi32> to vector<20x48xf32>
    %13 = arith.truncf %12 : vector<20x48xf32> to vector<20x48xbf16>
    %c0_3 = arith.constant 0 : index
    %c0_4 = arith.constant 0 : index
    %14 = vector.load %arg0[%c0_3, %c0_4] : memref<12x2xf32, #tpu.memory_space<vmem>>, vector<12x2xf32>
    %c0_5 = arith.constant 0 : index
    %c0_6 = arith.constant 0 : index
    %15 = vector.load %arg4[%c0_5, %c0_6] : memref<1x2xf32, #tpu.memory_space<vmem>>, vector<1x2xf32>
    %c0_7 = arith.constant 0 : index
    %c0_8 = arith.constant 0 : index
    %16 = vector.load %arg5[%c0_7, %c0_8] : memref<1x2xf32, #tpu.memory_space<vmem>>, vector<1x2xf32>
    %c0_9 = arith.constant 0 : index
    %c0_10 = arith.constant 0 : index
    %17 = vector.load %arg6[%c0_9, %c0_10] : memref<2x64xf32, #tpu.memory_space<vmem>>, vector<2x64xf32>
    %c0_11 = arith.constant 0 : index
    %c0_12 = arith.constant 0 : index
    %18 = vector.load %arg7[%c0_11, %c0_12] : memref<1x64xf32, #tpu.memory_space<vmem>>, vector<1x64xf32>
    %c0_13 = arith.constant 0 : index
    %c0_14 = arith.constant 0 : index
    %19 = vector.load %arg8[%c0_13, %c0_14] : memref<64x64xbf16, #tpu.memory_space<vmem>>, vector<64x64xbf16>
    %c0_15 = arith.constant 0 : index
    %c0_16 = arith.constant 0 : index
    %20 = vector.load %arg9[%c0_15, %c0_16] : memref<1x64xf32, #tpu.memory_space<vmem>>, vector<1x64xf32>
    %cst = arith.constant dense<0.000000e+00> : vector<12xf32>
    %21 = vector.multi_reduction <add>, %14, %cst [1] : vector<12x2xf32> to vector<12xf32>
    %22 = vector.shape_cast %21 : vector<12xf32> to vector<12x1xf32>
    %cst_17 = arith.constant 2.000000e+00 : f32
    %23 = vector.broadcast %cst_17 : f32 to vector<12x1xf32>
    %24 = arith.divf %22, %23 : vector<12x1xf32>
    %25 = vector.broadcast %24 : vector<12x1xf32> to vector<12x2xf32>
    %26 = arith.subf %14, %25 : vector<12x2xf32>
    %27 = arith.mulf %26, %26 : vector<12x2xf32>
    %cst_18 = arith.constant dense<0.000000e+00> : vector<12xf32>
    %28 = vector.multi_reduction <add>, %27, %cst_18 [1] : vector<12x2xf32> to vector<12xf32>
    %29 = vector.shape_cast %28 : vector<12xf32> to vector<12x1xf32>
    %cst_19 = arith.constant 2.000000e+00 : f32
    %30 = vector.broadcast %cst_19 : f32 to vector<12x1xf32>
    %31 = arith.divf %29, %30 : vector<12x1xf32>
    %32 = vector.broadcast %24 : vector<12x1xf32> to vector<12x2xf32>
    %33 = arith.subf %14, %32 : vector<12x2xf32>
    %cst_20 = arith.constant 9.99999974E-6 : f32
    %34 = vector.broadcast %cst_20 : f32 to vector<12x1xf32>
    %35 = arith.addf %31, %34 : vector<12x1xf32>
    %36 = math.rsqrt %35 : vector<12x1xf32>
    %37 = vector.broadcast %36 : vector<12x1xf32> to vector<12x2xf32>
    %38 = arith.mulf %33, %37 : vector<12x2xf32>
    %39 = vector.broadcast %15 : vector<1x2xf32> to vector<12x2xf32>
    %40 = arith.mulf %38, %39 : vector<12x2xf32>
    %41 = vector.broadcast %16 : vector<1x2xf32> to vector<12x2xf32>
    %42 = arith.addf %40, %41 : vector<12x2xf32>
    %43 = vector.extract_strided_slice %42 {offsets = [0, 0], sizes = [12, 1], strides = [1, 1]} : vector<12x2xf32> to vector<12x1xf32>
    %44 = vector.extract_strided_slice %17 {offsets = [0, 0], sizes = [1, 64], strides = [1, 1]} : vector<2x64xf32> to vector<1x64xf32>
    %45 = vector.broadcast %43 : vector<12x1xf32> to vector<12x64xf32>
    %46 = vector.broadcast %44 : vector<1x64xf32> to vector<12x64xf32>
    %47 = arith.mulf %45, %46 : vector<12x64xf32>
    %48 = vector.extract_strided_slice %42 {offsets = [0, 1], sizes = [12, 1], strides = [1, 1]} : vector<12x2xf32> to vector<12x1xf32>
    %49 = vector.extract_strided_slice %17 {offsets = [1, 0], sizes = [1, 64], strides = [1, 1]} : vector<2x64xf32> to vector<1x64xf32>
    %50 = vector.broadcast %48 : vector<12x1xf32> to vector<12x64xf32>
    %51 = vector.broadcast %49 : vector<1x64xf32> to vector<12x64xf32>
    %52 = arith.mulf %50, %51 : vector<12x64xf32>
    %53 = arith.addf %47, %52 : vector<12x64xf32>
    %54 = vector.broadcast %18 : vector<1x64xf32> to vector<12x64xf32>
    %55 = arith.addf %53, %54 : vector<12x64xf32>
    %cst_21 = arith.constant 0.000000e+00 : f32
    %56 = vector.broadcast %cst_21 : f32 to vector<12x64xf32>
    %57 = arith.maximumf %55, %56 : vector<12x64xf32>
    %58 = arith.truncf %57 : vector<12x64xf32> to vector<12x64xbf16>
    %cst_22 = arith.constant dense<0.000000e+00> : vector<12x64xf32>
    %59 = tpu.matmul %58, %19, %cst_22 {dimension_numbers = #tpu.dot_dimension_numbers<[1], [0], [0], [1], [0, 0, 1, 1], [], []>} : vector<12x64xbf16>, vector<64x64xbf16>, vector<12x64xf32> -> vector<12x64xf32>
    %60 = vector.broadcast %20 : vector<1x64xf32> to vector<12x64xf32>
    %61 = arith.addf %59, %60 : vector<12x64xf32>
    %cst_23 = arith.constant 0.000000e+00 : f32
    %62 = vector.broadcast %cst_23 : f32 to vector<12x64xf32>
    %63 = arith.maximumf %61, %62 : vector<12x64xf32>
    %c0_24 = arith.constant 0 : index
    %c0_25 = arith.constant 0 : index
    %64 = vector.load %arg1[%c0_24, %c0_25] : memref<20x6xf32, #tpu.memory_space<vmem>>, vector<20x6xf32>
    %c0_26 = arith.constant 0 : index
    %c0_27 = arith.constant 0 : index
    %65 = vector.load %arg10[%c0_26, %c0_27] : memref<1x6xf32, #tpu.memory_space<vmem>>, vector<1x6xf32>
    %c0_28 = arith.constant 0 : index
    %c0_29 = arith.constant 0 : index
    %66 = vector.load %arg11[%c0_28, %c0_29] : memref<1x6xf32, #tpu.memory_space<vmem>>, vector<1x6xf32>
    %c0_30 = arith.constant 0 : index
    %c0_31 = arith.constant 0 : index
    %67 = vector.load %arg12[%c0_30, %c0_31] : memref<6x64xf32, #tpu.memory_space<vmem>>, vector<6x64xf32>
    %c0_32 = arith.constant 0 : index
    %c0_33 = arith.constant 0 : index
    %68 = vector.load %arg13[%c0_32, %c0_33] : memref<1x64xf32, #tpu.memory_space<vmem>>, vector<1x64xf32>
    %c0_34 = arith.constant 0 : index
    %c0_35 = arith.constant 0 : index
    %69 = vector.load %arg14[%c0_34, %c0_35] : memref<64x64xbf16, #tpu.memory_space<vmem>>, vector<64x64xbf16>
    %c0_36 = arith.constant 0 : index
    %c0_37 = arith.constant 0 : index
    %70 = vector.load %arg15[%c0_36, %c0_37] : memref<1x64xf32, #tpu.memory_space<vmem>>, vector<1x64xf32>
    %cst_38 = arith.constant dense<0.000000e+00> : vector<20xf32>
    %71 = vector.multi_reduction <add>, %64, %cst_38 [1] : vector<20x6xf32> to vector<20xf32>
    %72 = vector.shape_cast %71 : vector<20xf32> to vector<20x1xf32>
    %cst_39 = arith.constant 6.000000e+00 : f32
    %73 = vector.broadcast %cst_39 : f32 to vector<20x1xf32>
    %74 = arith.divf %72, %73 : vector<20x1xf32>
    %75 = vector.broadcast %74 : vector<20x1xf32> to vector<20x6xf32>
    %76 = arith.subf %64, %75 : vector<20x6xf32>
    %77 = arith.mulf %76, %76 : vector<20x6xf32>
    %cst_40 = arith.constant dense<0.000000e+00> : vector<20xf32>
    %78 = vector.multi_reduction <add>, %77, %cst_40 [1] : vector<20x6xf32> to vector<20xf32>
    %79 = vector.shape_cast %78 : vector<20xf32> to vector<20x1xf32>
    %cst_41 = arith.constant 6.000000e+00 : f32
    %80 = vector.broadcast %cst_41 : f32 to vector<20x1xf32>
    %81 = arith.divf %79, %80 : vector<20x1xf32>
    %82 = vector.broadcast %74 : vector<20x1xf32> to vector<20x6xf32>
    %83 = arith.subf %64, %82 : vector<20x6xf32>
    %cst_42 = arith.constant 9.99999974E-6 : f32
    %84 = vector.broadcast %cst_42 : f32 to vector<20x1xf32>
    %85 = arith.addf %81, %84 : vector<20x1xf32>
    %86 = math.rsqrt %85 : vector<20x1xf32>
    %87 = vector.broadcast %86 : vector<20x1xf32> to vector<20x6xf32>
    %88 = arith.mulf %83, %87 : vector<20x6xf32>
    %89 = vector.broadcast %65 : vector<1x6xf32> to vector<20x6xf32>
    %90 = arith.mulf %88, %89 : vector<20x6xf32>
    %91 = vector.broadcast %66 : vector<1x6xf32> to vector<20x6xf32>
    %92 = arith.addf %90, %91 : vector<20x6xf32>
    %93 = vector.extract_strided_slice %92 {offsets = [0, 0], sizes = [20, 1], strides = [1, 1]} : vector<20x6xf32> to vector<20x1xf32>
    %94 = vector.extract_strided_slice %67 {offsets = [0, 0], sizes = [1, 64], strides = [1, 1]} : vector<6x64xf32> to vector<1x64xf32>
    %95 = vector.broadcast %93 : vector<20x1xf32> to vector<20x64xf32>
    %96 = vector.broadcast %94 : vector<1x64xf32> to vector<20x64xf32>
    %97 = arith.mulf %95, %96 : vector<20x64xf32>
    %98 = vector.extract_strided_slice %92 {offsets = [0, 1], sizes = [20, 1], strides = [1, 1]} : vector<20x6xf32> to vector<20x1xf32>
    %99 = vector.extract_strided_slice %67 {offsets = [1, 0], sizes = [1, 64], strides = [1, 1]} : vector<6x64xf32> to vector<1x64xf32>
    %100 = vector.broadcast %98 : vector<20x1xf32> to vector<20x64xf32>
    %101 = vector.broadcast %99 : vector<1x64xf32> to vector<20x64xf32>
    %102 = arith.mulf %100, %101 : vector<20x64xf32>
    %103 = arith.addf %97, %102 : vector<20x64xf32>
    %104 = vector.extract_strided_slice %92 {offsets = [0, 2], sizes = [20, 1], strides = [1, 1]} : vector<20x6xf32> to vector<20x1xf32>
    %105 = vector.extract_strided_slice %67 {offsets = [2, 0], sizes = [1, 64], strides = [1, 1]} : vector<6x64xf32> to vector<1x64xf32>
    %106 = vector.broadcast %104 : vector<20x1xf32> to vector<20x64xf32>
    %107 = vector.broadcast %105 : vector<1x64xf32> to vector<20x64xf32>
    %108 = arith.mulf %106, %107 : vector<20x64xf32>
    %109 = arith.addf %103, %108 : vector<20x64xf32>
    %110 = vector.extract_strided_slice %92 {offsets = [0, 3], sizes = [20, 1], strides = [1, 1]} : vector<20x6xf32> to vector<20x1xf32>
    %111 = vector.extract_strided_slice %67 {offsets = [3, 0], sizes = [1, 64], strides = [1, 1]} : vector<6x64xf32> to vector<1x64xf32>
    %112 = vector.broadcast %110 : vector<20x1xf32> to vector<20x64xf32>
    %113 = vector.broadcast %111 : vector<1x64xf32> to vector<20x64xf32>
    %114 = arith.mulf %112, %113 : vector<20x64xf32>
    %115 = arith.addf %109, %114 : vector<20x64xf32>
    %116 = vector.extract_strided_slice %92 {offsets = [0, 4], sizes = [20, 1], strides = [1, 1]} : vector<20x6xf32> to vector<20x1xf32>
    %117 = vector.extract_strided_slice %67 {offsets = [4, 0], sizes = [1, 64], strides = [1, 1]} : vector<6x64xf32> to vector<1x64xf32>
    %118 = vector.broadcast %116 : vector<20x1xf32> to vector<20x64xf32>
    %119 = vector.broadcast %117 : vector<1x64xf32> to vector<20x64xf32>
    %120 = arith.mulf %118, %119 : vector<20x64xf32>
    %121 = arith.addf %115, %120 : vector<20x64xf32>
    %122 = vector.extract_strided_slice %92 {offsets = [0, 5], sizes = [20, 1], strides = [1, 1]} : vector<20x6xf32> to vector<20x1xf32>
    %123 = vector.extract_strided_slice %67 {offsets = [5, 0], sizes = [1, 64], strides = [1, 1]} : vector<6x64xf32> to vector<1x64xf32>
    %124 = vector.broadcast %122 : vector<20x1xf32> to vector<20x64xf32>
    %125 = vector.broadcast %123 : vector<1x64xf32> to vector<20x64xf32>
    %126 = arith.mulf %124, %125 : vector<20x64xf32>
    %127 = arith.addf %121, %126 : vector<20x64xf32>
    %128 = vector.broadcast %68 : vector<1x64xf32> to vector<20x64xf32>
    %129 = arith.addf %127, %128 : vector<20x64xf32>
    %cst_43 = arith.constant 0.000000e+00 : f32
    %130 = vector.broadcast %cst_43 : f32 to vector<20x64xf32>
    %131 = arith.maximumf %129, %130 : vector<20x64xf32>
    %132 = arith.truncf %131 : vector<20x64xf32> to vector<20x64xbf16>
    %cst_44 = arith.constant dense<0.000000e+00> : vector<20x64xf32>
    %133 = tpu.matmul %132, %69, %cst_44 {dimension_numbers = #tpu.dot_dimension_numbers<[1], [0], [0], [1], [0, 0, 1, 1], [], []>} : vector<20x64xbf16>, vector<64x64xbf16>, vector<20x64xf32> -> vector<20x64xf32>
    %134 = vector.broadcast %70 : vector<1x64xf32> to vector<20x64xf32>
    %135 = arith.addf %133, %134 : vector<20x64xf32>
    %cst_45 = arith.constant 0.000000e+00 : f32
    %136 = vector.broadcast %cst_45 : f32 to vector<20x64xf32>
    %137 = arith.maximumf %135, %136 : vector<20x64xf32>
    %c0_46 = arith.constant 0 : index
    %c0_47 = arith.constant 0 : index
    %c0_48 = arith.constant 0 : index
    %138 = vector.load %arg18[%c0_46, %c0_47, %c0_48] : memref<4x64x64xbf16, #tpu.memory_space<vmem>>, vector<1x64x64xbf16>
    %139 = vector.shape_cast %138 : vector<1x64x64xbf16> to vector<64x64xbf16>
    %c1 = arith.constant 1 : index
    %c0_49 = arith.constant 0 : index
    %c0_50 = arith.constant 0 : index
    %140 = vector.load %arg18[%c1, %c0_49, %c0_50] : memref<4x64x64xbf16, #tpu.memory_space<vmem>>, vector<1x64x64xbf16>
    %141 = vector.shape_cast %140 : vector<1x64x64xbf16> to vector<64x64xbf16>
    %c2 = arith.constant 2 : index
    %c0_51 = arith.constant 0 : index
    %c0_52 = arith.constant 0 : index
    %142 = vector.load %arg18[%c2, %c0_51, %c0_52] : memref<4x64x64xbf16, #tpu.memory_space<vmem>>, vector<1x64x64xbf16>
    %143 = vector.shape_cast %142 : vector<1x64x64xbf16> to vector<64x64xbf16>
    %c3 = arith.constant 3 : index
    %c0_53 = arith.constant 0 : index
    %c0_54 = arith.constant 0 : index
    %144 = vector.load %arg18[%c3, %c0_53, %c0_54] : memref<4x64x64xbf16, #tpu.memory_space<vmem>>, vector<1x64x64xbf16>
    %145 = vector.shape_cast %144 : vector<1x64x64xbf16> to vector<64x64xbf16>
    %c0_55 = arith.constant 0 : index
    %c0_56 = arith.constant 0 : index
    %146 = vector.load %arg19[%c0_55, %c0_56] : memref<6x64xf32, #tpu.memory_space<vmem>>, vector<1x64xf32>
    %c1_57 = arith.constant 1 : index
    %c0_58 = arith.constant 0 : index
    %147 = vector.load %arg19[%c1_57, %c0_58] : memref<6x64xf32, #tpu.memory_space<vmem>>, vector<1x64xf32>
    %c2_59 = arith.constant 2 : index
    %c0_60 = arith.constant 0 : index
    %148 = vector.load %arg19[%c2_59, %c0_60] : memref<6x64xf32, #tpu.memory_space<vmem>>, vector<1x64xf32>
    %c3_61 = arith.constant 3 : index
    %c0_62 = arith.constant 0 : index
    %149 = vector.load %arg19[%c3_61, %c0_62] : memref<6x64xf32, #tpu.memory_space<vmem>>, vector<1x64xf32>
    %c4 = arith.constant 4 : index
    %c0_63 = arith.constant 0 : index
    %150 = vector.load %arg19[%c4, %c0_63] : memref<6x64xf32, #tpu.memory_space<vmem>>, vector<1x64xf32>
    %c5 = arith.constant 5 : index
    %c0_64 = arith.constant 0 : index
    %151 = vector.load %arg19[%c5, %c0_64] : memref<6x64xf32, #tpu.memory_space<vmem>>, vector<1x64xf32>
    %c0_65 = arith.constant 0 : index
    %c0_66 = arith.constant 0 : index
    %152 = vector.load %arg16[%c0_65, %c0_66] : memref<64x128xbf16, #tpu.memory_space<vmem>>, vector<64x128xbf16>
    %153 = arith.truncf %63 : vector<12x64xf32> to vector<12x64xbf16>
    %cst_67 = arith.constant dense<0.000000e+00> : vector<12x128xf32>
    %154 = tpu.matmul %153, %152, %cst_67 {dimension_numbers = #tpu.dot_dimension_numbers<[1], [0], [0], [1], [0, 0, 1, 1], [], []>} : vector<12x64xbf16>, vector<64x128xbf16>, vector<12x128xf32> -> vector<12x128xf32>
    %c0_68 = arith.constant 0 : index
    %c0_69 = arith.constant 0 : index
    %155 = vector.load %arg17[%c0_68, %c0_69] : memref<1x128xf32, #tpu.memory_space<vmem>>, vector<1x128xf32>
    %156 = vector.broadcast %155 : vector<1x128xf32> to vector<12x128xf32>
    %157 = arith.addf %154, %156 : vector<12x128xf32>
    %158 = vector.extract_strided_slice %157 {offsets = [0, 0], sizes = [12, 64], strides = [1, 1]} : vector<12x128xf32> to vector<12x64xf32>
    %159 = vector.extract_strided_slice %157 {offsets = [0, 64], sizes = [12, 64], strides = [1, 1]} : vector<12x128xf32> to vector<12x64xf32>
    %160 = arith.truncf %137 : vector<20x64xf32> to vector<20x64xbf16>
    %cst_70 = arith.constant dense<0.000000e+00> : vector<20x64xf32>
    %161 = tpu.matmul %160, %139, %cst_70 {dimension_numbers = #tpu.dot_dimension_numbers<[1], [0], [0], [1], [0, 0, 1, 1], [], []>} : vector<20x64xbf16>, vector<64x64xbf16>, vector<20x64xf32> -> vector<20x64xf32>
    %162 = arith.truncf %158 : vector<12x64xf32> to vector<12x64xbf16>
    %cst_71 = arith.constant dense<0.000000e+00> : vector<48x64xf32>
    %163 = tpu.matmul %7, %162, %cst_71 {dimension_numbers = #tpu.dot_dimension_numbers<[0], [0], [1], [1], [0, 1, 1, 1], [], []>} : vector<12x48xbf16>, vector<12x64xbf16>, vector<48x64xf32> -> vector<48x64xf32>
    %164 = arith.truncf %161 : vector<20x64xf32> to vector<20x64xbf16>
    %cst_72 = arith.constant dense<0.000000e+00> : vector<48x64xf32>
    %165 = tpu.matmul %13, %164, %cst_72 {dimension_numbers = #tpu.dot_dimension_numbers<[0], [0], [1], [1], [0, 1, 1, 1], [], []>} : vector<20x48xbf16>, vector<20x64xbf16>, vector<48x64xf32> -> vector<48x64xf32>
    %166 = arith.addf %163, %165 : vector<48x64xf32>
    %cst_73 = arith.constant dense<0.000000e+00> : vector<48xf32>
    %167 = vector.multi_reduction <add>, %166, %cst_73 [1] : vector<48x64xf32> to vector<48xf32>
    %168 = vector.shape_cast %167 : vector<48xf32> to vector<48x1xf32>
    %cst_74 = arith.constant 6.400000e+01 : f32
    %169 = vector.broadcast %cst_74 : f32 to vector<48x1xf32>
    %170 = arith.divf %168, %169 : vector<48x1xf32>
    %171 = vector.broadcast %170 : vector<48x1xf32> to vector<48x64xf32>
    %172 = arith.subf %166, %171 : vector<48x64xf32>
    %173 = arith.mulf %172, %172 : vector<48x64xf32>
    %cst_75 = arith.constant dense<0.000000e+00> : vector<48xf32>
    %174 = vector.multi_reduction <add>, %173, %cst_75 [1] : vector<48x64xf32> to vector<48xf32>
    %175 = vector.shape_cast %174 : vector<48xf32> to vector<48x1xf32>
    %cst_76 = arith.constant 6.400000e+01 : f32
    %176 = vector.broadcast %cst_76 : f32 to vector<48x1xf32>
    %177 = arith.divf %175, %176 : vector<48x1xf32>
    %178 = vector.broadcast %170 : vector<48x1xf32> to vector<48x64xf32>
    %179 = arith.subf %166, %178 : vector<48x64xf32>
    %cst_77 = arith.constant 9.99999974E-6 : f32
    %180 = vector.broadcast %cst_77 : f32 to vector<48x1xf32>
    %181 = arith.addf %177, %180 : vector<48x1xf32>
    %182 = math.rsqrt %181 : vector<48x1xf32>
    %183 = vector.broadcast %182 : vector<48x1xf32> to vector<48x64xf32>
    %184 = arith.mulf %179, %183 : vector<48x64xf32>
    %185 = vector.broadcast %146 : vector<1x64xf32> to vector<48x64xf32>
    %186 = arith.mulf %184, %185 : vector<48x64xf32>
    %187 = vector.broadcast %147 : vector<1x64xf32> to vector<48x64xf32>
    %188 = arith.addf %186, %187 : vector<48x64xf32>
    %cst_78 = arith.constant 0.000000e+00 : f32
    %189 = vector.broadcast %cst_78 : f32 to vector<48x64xf32>
    %190 = arith.maximumf %188, %189 : vector<48x64xf32>
    %191 = arith.truncf %190 : vector<48x64xf32> to vector<48x64xbf16>
    %cst_79 = arith.constant dense<0.000000e+00> : vector<48x64xf32>
    %192 = tpu.matmul %191, %141, %cst_79 {dimension_numbers = #tpu.dot_dimension_numbers<[1], [0], [0], [1], [0, 0, 1, 1], [], []>} : vector<48x64xbf16>, vector<64x64xbf16>, vector<48x64xf32> -> vector<48x64xf32>
    %193 = vector.broadcast %148 : vector<1x64xf32> to vector<48x64xf32>
    %194 = arith.addf %192, %193 : vector<48x64xf32>
    %195 = arith.truncf %194 : vector<48x64xf32> to vector<48x64xbf16>
    %cst_80 = arith.constant dense<0.000000e+00> : vector<12x64xf32>
    %196 = tpu.matmul %7, %195, %cst_80 {dimension_numbers = #tpu.dot_dimension_numbers<[1], [0], [0], [1], [0, 0, 1, 1], [], []>} : vector<12x48xbf16>, vector<48x64xbf16>, vector<12x64xf32> -> vector<12x64xf32>
    %cst_81 = arith.constant dense<0.000000e+00> : vector<12xf32>
    %197 = vector.multi_reduction <add>, %196, %cst_81 [1] : vector<12x64xf32> to vector<12xf32>
    %198 = vector.shape_cast %197 : vector<12xf32> to vector<12x1xf32>
    %cst_82 = arith.constant 6.400000e+01 : f32
    %199 = vector.broadcast %cst_82 : f32 to vector<12x1xf32>
    %200 = arith.divf %198, %199 : vector<12x1xf32>
    %201 = vector.broadcast %200 : vector<12x1xf32> to vector<12x64xf32>
    %202 = arith.subf %196, %201 : vector<12x64xf32>
    %203 = arith.mulf %202, %202 : vector<12x64xf32>
    %cst_83 = arith.constant dense<0.000000e+00> : vector<12xf32>
    %204 = vector.multi_reduction <add>, %203, %cst_83 [1] : vector<12x64xf32> to vector<12xf32>
    %205 = vector.shape_cast %204 : vector<12xf32> to vector<12x1xf32>
    %cst_84 = arith.constant 6.400000e+01 : f32
    %206 = vector.broadcast %cst_84 : f32 to vector<12x1xf32>
    %207 = arith.divf %205, %206 : vector<12x1xf32>
    %208 = vector.broadcast %200 : vector<12x1xf32> to vector<12x64xf32>
    %209 = arith.subf %196, %208 : vector<12x64xf32>
    %cst_85 = arith.constant 9.99999974E-6 : f32
    %210 = vector.broadcast %cst_85 : f32 to vector<12x1xf32>
    %211 = arith.addf %207, %210 : vector<12x1xf32>
    %212 = math.rsqrt %211 : vector<12x1xf32>
    %213 = vector.broadcast %212 : vector<12x1xf32> to vector<12x64xf32>
    %214 = arith.mulf %209, %213 : vector<12x64xf32>
    %215 = vector.broadcast %149 : vector<1x64xf32> to vector<12x64xf32>
    %216 = arith.mulf %214, %215 : vector<12x64xf32>
    %217 = vector.broadcast %150 : vector<1x64xf32> to vector<12x64xf32>
    %218 = arith.addf %216, %217 : vector<12x64xf32>
    %219 = arith.truncf %218 : vector<12x64xf32> to vector<12x64xbf16>
    %cst_86 = arith.constant dense<0.000000e+00> : vector<12x64xf32>
    %220 = tpu.matmul %219, %143, %cst_86 {dimension_numbers = #tpu.dot_dimension_numbers<[1], [0], [0], [1], [0, 0, 1, 1], [], []>} : vector<12x64xbf16>, vector<64x64xbf16>, vector<12x64xf32> -> vector<12x64xf32>
    %221 = arith.addf %220, %159 : vector<12x64xf32>
    %cst_87 = arith.constant 0.000000e+00 : f32
    %222 = vector.broadcast %cst_87 : f32 to vector<12x64xf32>
    %223 = arith.maximumf %221, %222 : vector<12x64xf32>
    %224 = arith.truncf %223 : vector<12x64xf32> to vector<12x64xbf16>
    %cst_88 = arith.constant dense<0.000000e+00> : vector<12x64xf32>
    %225 = tpu.matmul %224, %145, %cst_88 {dimension_numbers = #tpu.dot_dimension_numbers<[1], [0], [0], [1], [0, 0, 1, 1], [], []>} : vector<12x64xbf16>, vector<64x64xbf16>, vector<12x64xf32> -> vector<12x64xf32>
    %226 = vector.broadcast %151 : vector<1x64xf32> to vector<12x64xf32>
    %227 = arith.addf %225, %226 : vector<12x64xf32>
    %c0_89 = arith.constant 0 : index
    %c0_90 = arith.constant 0 : index
    %c0_91 = arith.constant 0 : index
    %228 = vector.load %arg22[%c0_89, %c0_90, %c0_91] : memref<4x64x64xbf16, #tpu.memory_space<vmem>>, vector<1x64x64xbf16>
    %229 = vector.shape_cast %228 : vector<1x64x64xbf16> to vector<64x64xbf16>
    %c1_92 = arith.constant 1 : index
    %c0_93 = arith.constant 0 : index
    %c0_94 = arith.constant 0 : index
    %230 = vector.load %arg22[%c1_92, %c0_93, %c0_94] : memref<4x64x64xbf16, #tpu.memory_space<vmem>>, vector<1x64x64xbf16>
    %231 = vector.shape_cast %230 : vector<1x64x64xbf16> to vector<64x64xbf16>
    %c2_95 = arith.constant 2 : index
    %c0_96 = arith.constant 0 : index
    %c0_97 = arith.constant 0 : index
    %232 = vector.load %arg22[%c2_95, %c0_96, %c0_97] : memref<4x64x64xbf16, #tpu.memory_space<vmem>>, vector<1x64x64xbf16>
    %233 = vector.shape_cast %232 : vector<1x64x64xbf16> to vector<64x64xbf16>
    %c3_98 = arith.constant 3 : index
    %c0_99 = arith.constant 0 : index
    %c0_100 = arith.constant 0 : index
    %234 = vector.load %arg22[%c3_98, %c0_99, %c0_100] : memref<4x64x64xbf16, #tpu.memory_space<vmem>>, vector<1x64x64xbf16>
    %235 = vector.shape_cast %234 : vector<1x64x64xbf16> to vector<64x64xbf16>
    %c0_101 = arith.constant 0 : index
    %c0_102 = arith.constant 0 : index
    %236 = vector.load %arg23[%c0_101, %c0_102] : memref<6x64xf32, #tpu.memory_space<vmem>>, vector<1x64xf32>
    %c1_103 = arith.constant 1 : index
    %c0_104 = arith.constant 0 : index
    %237 = vector.load %arg23[%c1_103, %c0_104] : memref<6x64xf32, #tpu.memory_space<vmem>>, vector<1x64xf32>
    %c2_105 = arith.constant 2 : index
    %c0_106 = arith.constant 0 : index
    %238 = vector.load %arg23[%c2_105, %c0_106] : memref<6x64xf32, #tpu.memory_space<vmem>>, vector<1x64xf32>
    %c3_107 = arith.constant 3 : index
    %c0_108 = arith.constant 0 : index
    %239 = vector.load %arg23[%c3_107, %c0_108] : memref<6x64xf32, #tpu.memory_space<vmem>>, vector<1x64xf32>
    %c4_109 = arith.constant 4 : index
    %c0_110 = arith.constant 0 : index
    %240 = vector.load %arg23[%c4_109, %c0_110] : memref<6x64xf32, #tpu.memory_space<vmem>>, vector<1x64xf32>
    %c5_111 = arith.constant 5 : index
    %c0_112 = arith.constant 0 : index
    %241 = vector.load %arg23[%c5_111, %c0_112] : memref<6x64xf32, #tpu.memory_space<vmem>>, vector<1x64xf32>
    %c0_113 = arith.constant 0 : index
    %c0_114 = arith.constant 0 : index
    %242 = vector.load %arg20[%c0_113, %c0_114] : memref<64x128xbf16, #tpu.memory_space<vmem>>, vector<64x128xbf16>
    %243 = arith.truncf %137 : vector<20x64xf32> to vector<20x64xbf16>
    %cst_115 = arith.constant dense<0.000000e+00> : vector<20x128xf32>
    %244 = tpu.matmul %243, %242, %cst_115 {dimension_numbers = #tpu.dot_dimension_numbers<[1], [0], [0], [1], [0, 0, 1, 1], [], []>} : vector<20x64xbf16>, vector<64x128xbf16>, vector<20x128xf32> -> vector<20x128xf32>
    %c0_116 = arith.constant 0 : index
    %c0_117 = arith.constant 0 : index
    %245 = vector.load %arg21[%c0_116, %c0_117] : memref<1x128xf32, #tpu.memory_space<vmem>>, vector<1x128xf32>
    %246 = vector.broadcast %245 : vector<1x128xf32> to vector<20x128xf32>
    %247 = arith.addf %244, %246 : vector<20x128xf32>
    %248 = vector.extract_strided_slice %247 {offsets = [0, 0], sizes = [20, 64], strides = [1, 1]} : vector<20x128xf32> to vector<20x64xf32>
    %249 = vector.extract_strided_slice %247 {offsets = [0, 64], sizes = [20, 64], strides = [1, 1]} : vector<20x128xf32> to vector<20x64xf32>
    %250 = arith.truncf %227 : vector<12x64xf32> to vector<12x64xbf16>
    %cst_118 = arith.constant dense<0.000000e+00> : vector<12x64xf32>
    %251 = tpu.matmul %250, %229, %cst_118 {dimension_numbers = #tpu.dot_dimension_numbers<[1], [0], [0], [1], [0, 0, 1, 1], [], []>} : vector<12x64xbf16>, vector<64x64xbf16>, vector<12x64xf32> -> vector<12x64xf32>
    %252 = arith.truncf %248 : vector<20x64xf32> to vector<20x64xbf16>
    %cst_119 = arith.constant dense<0.000000e+00> : vector<48x64xf32>
    %253 = tpu.matmul %13, %252, %cst_119 {dimension_numbers = #tpu.dot_dimension_numbers<[0], [0], [1], [1], [0, 1, 1, 1], [], []>} : vector<20x48xbf16>, vector<20x64xbf16>, vector<48x64xf32> -> vector<48x64xf32>
    %254 = arith.truncf %251 : vector<12x64xf32> to vector<12x64xbf16>
    %cst_120 = arith.constant dense<0.000000e+00> : vector<48x64xf32>
    %255 = tpu.matmul %7, %254, %cst_120 {dimension_numbers = #tpu.dot_dimension_numbers<[0], [0], [1], [1], [0, 1, 1, 1], [], []>} : vector<12x48xbf16>, vector<12x64xbf16>, vector<48x64xf32> -> vector<48x64xf32>
    %256 = arith.addf %253, %255 : vector<48x64xf32>
    %cst_121 = arith.constant dense<0.000000e+00> : vector<48xf32>
    %257 = vector.multi_reduction <add>, %256, %cst_121 [1] : vector<48x64xf32> to vector<48xf32>
    %258 = vector.shape_cast %257 : vector<48xf32> to vector<48x1xf32>
    %cst_122 = arith.constant 6.400000e+01 : f32
    %259 = vector.broadcast %cst_122 : f32 to vector<48x1xf32>
    %260 = arith.divf %258, %259 : vector<48x1xf32>
    %261 = vector.broadcast %260 : vector<48x1xf32> to vector<48x64xf32>
    %262 = arith.subf %256, %261 : vector<48x64xf32>
    %263 = arith.mulf %262, %262 : vector<48x64xf32>
    %cst_123 = arith.constant dense<0.000000e+00> : vector<48xf32>
    %264 = vector.multi_reduction <add>, %263, %cst_123 [1] : vector<48x64xf32> to vector<48xf32>
    %265 = vector.shape_cast %264 : vector<48xf32> to vector<48x1xf32>
    %cst_124 = arith.constant 6.400000e+01 : f32
    %266 = vector.broadcast %cst_124 : f32 to vector<48x1xf32>
    %267 = arith.divf %265, %266 : vector<48x1xf32>
    %268 = vector.broadcast %260 : vector<48x1xf32> to vector<48x64xf32>
    %269 = arith.subf %256, %268 : vector<48x64xf32>
    %cst_125 = arith.constant 9.99999974E-6 : f32
    %270 = vector.broadcast %cst_125 : f32 to vector<48x1xf32>
    %271 = arith.addf %267, %270 : vector<48x1xf32>
    %272 = math.rsqrt %271 : vector<48x1xf32>
    %273 = vector.broadcast %272 : vector<48x1xf32> to vector<48x64xf32>
    %274 = arith.mulf %269, %273 : vector<48x64xf32>
    %275 = vector.broadcast %236 : vector<1x64xf32> to vector<48x64xf32>
    %276 = arith.mulf %274, %275 : vector<48x64xf32>
    %277 = vector.broadcast %237 : vector<1x64xf32> to vector<48x64xf32>
    %278 = arith.addf %276, %277 : vector<48x64xf32>
    %cst_126 = arith.constant 0.000000e+00 : f32
    %279 = vector.broadcast %cst_126 : f32 to vector<48x64xf32>
    %280 = arith.maximumf %278, %279 : vector<48x64xf32>
    %281 = arith.truncf %280 : vector<48x64xf32> to vector<48x64xbf16>
    %cst_127 = arith.constant dense<0.000000e+00> : vector<48x64xf32>
    %282 = tpu.matmul %281, %231, %cst_127 {dimension_numbers = #tpu.dot_dimension_numbers<[1], [0], [0], [1], [0, 0, 1, 1], [], []>} : vector<48x64xbf16>, vector<64x64xbf16>, vector<48x64xf32> -> vector<48x64xf32>
    %283 = vector.broadcast %238 : vector<1x64xf32> to vector<48x64xf32>
    %284 = arith.addf %282, %283 : vector<48x64xf32>
    %285 = arith.truncf %284 : vector<48x64xf32> to vector<48x64xbf16>
    %cst_128 = arith.constant dense<0.000000e+00> : vector<20x64xf32>
    %286 = tpu.matmul %13, %285, %cst_128 {dimension_numbers = #tpu.dot_dimension_numbers<[1], [0], [0], [1], [0, 0, 1, 1], [], []>} : vector<20x48xbf16>, vector<48x64xbf16>, vector<20x64xf32> -> vector<20x64xf32>
    %cst_129 = arith.constant dense<0.000000e+00> : vector<20xf32>
    %287 = vector.multi_reduction <add>, %286, %cst_129 [1] : vector<20x64xf32> to vector<20xf32>
    %288 = vector.shape_cast %287 : vector<20xf32> to vector<20x1xf32>
    %cst_130 = arith.constant 6.400000e+01 : f32
    %289 = vector.broadcast %cst_130 : f32 to vector<20x1xf32>
    %290 = arith.divf %288, %289 : vector<20x1xf32>
    %291 = vector.broadcast %290 : vector<20x1xf32> to vector<20x64xf32>
    %292 = arith.subf %286, %291 : vector<20x64xf32>
    %293 = arith.mulf %292, %292 : vector<20x64xf32>
    %cst_131 = arith.constant dense<0.000000e+00> : vector<20xf32>
    %294 = vector.multi_reduction <add>, %293, %cst_131 [1] : vector<20x64xf32> to vector<20xf32>
    %295 = vector.shape_cast %294 : vector<20xf32> to vector<20x1xf32>
    %cst_132 = arith.constant 6.400000e+01 : f32
    %296 = vector.broadcast %cst_132 : f32 to vector<20x1xf32>
    %297 = arith.divf %295, %296 : vector<20x1xf32>
    %298 = vector.broadcast %290 : vector<20x1xf32> to vector<20x64xf32>
    %299 = arith.subf %286, %298 : vector<20x64xf32>
    %cst_133 = arith.constant 9.99999974E-6 : f32
    %300 = vector.broadcast %cst_133 : f32 to vector<20x1xf32>
    %301 = arith.addf %297, %300 : vector<20x1xf32>
    %302 = math.rsqrt %301 : vector<20x1xf32>
    %303 = vector.broadcast %302 : vector<20x1xf32> to vector<20x64xf32>
    %304 = arith.mulf %299, %303 : vector<20x64xf32>
    %305 = vector.broadcast %239 : vector<1x64xf32> to vector<20x64xf32>
    %306 = arith.mulf %304, %305 : vector<20x64xf32>
    %307 = vector.broadcast %240 : vector<1x64xf32> to vector<20x64xf32>
    %308 = arith.addf %306, %307 : vector<20x64xf32>
    %309 = arith.truncf %308 : vector<20x64xf32> to vector<20x64xbf16>
    %cst_134 = arith.constant dense<0.000000e+00> : vector<20x64xf32>
    %310 = tpu.matmul %309, %233, %cst_134 {dimension_numbers = #tpu.dot_dimension_numbers<[1], [0], [0], [1], [0, 0, 1, 1], [], []>} : vector<20x64xbf16>, vector<64x64xbf16>, vector<20x64xf32> -> vector<20x64xf32>
    %311 = arith.addf %310, %249 : vector<20x64xf32>
    %cst_135 = arith.constant 0.000000e+00 : f32
    %312 = vector.broadcast %cst_135 : f32 to vector<20x64xf32>
    %313 = arith.maximumf %311, %312 : vector<20x64xf32>
    %314 = arith.truncf %313 : vector<20x64xf32> to vector<20x64xbf16>
    %cst_136 = arith.constant dense<0.000000e+00> : vector<20x64xf32>
    %315 = tpu.matmul %314, %235, %cst_136 {dimension_numbers = #tpu.dot_dimension_numbers<[1], [0], [0], [1], [0, 0, 1, 1], [], []>} : vector<20x64xbf16>, vector<64x64xbf16>, vector<20x64xf32> -> vector<20x64xf32>
    %316 = vector.broadcast %241 : vector<1x64xf32> to vector<20x64xf32>
    %317 = arith.addf %315, %316 : vector<20x64xf32>
    %c0_137 = arith.constant 0 : index
    %c0_138 = arith.constant 0 : index
    %c0_139 = arith.constant 0 : index
    %318 = vector.load %arg18[%c0_137, %c0_138, %c0_139] : memref<4x64x64xbf16, #tpu.memory_space<vmem>>, vector<1x64x64xbf16>
    %319 = vector.shape_cast %318 : vector<1x64x64xbf16> to vector<64x64xbf16>
    %c1_140 = arith.constant 1 : index
    %c0_141 = arith.constant 0 : index
    %c0_142 = arith.constant 0 : index
    %320 = vector.load %arg18[%c1_140, %c0_141, %c0_142] : memref<4x64x64xbf16, #tpu.memory_space<vmem>>, vector<1x64x64xbf16>
    %321 = vector.shape_cast %320 : vector<1x64x64xbf16> to vector<64x64xbf16>
    %c2_143 = arith.constant 2 : index
    %c0_144 = arith.constant 0 : index
    %c0_145 = arith.constant 0 : index
    %322 = vector.load %arg18[%c2_143, %c0_144, %c0_145] : memref<4x64x64xbf16, #tpu.memory_space<vmem>>, vector<1x64x64xbf16>
    %323 = vector.shape_cast %322 : vector<1x64x64xbf16> to vector<64x64xbf16>
    %c3_146 = arith.constant 3 : index
    %c0_147 = arith.constant 0 : index
    %c0_148 = arith.constant 0 : index
    %324 = vector.load %arg18[%c3_146, %c0_147, %c0_148] : memref<4x64x64xbf16, #tpu.memory_space<vmem>>, vector<1x64x64xbf16>
    %325 = vector.shape_cast %324 : vector<1x64x64xbf16> to vector<64x64xbf16>
    %c0_149 = arith.constant 0 : index
    %c0_150 = arith.constant 0 : index
    %326 = vector.load %arg19[%c0_149, %c0_150] : memref<6x64xf32, #tpu.memory_space<vmem>>, vector<1x64xf32>
    %c1_151 = arith.constant 1 : index
    %c0_152 = arith.constant 0 : index
    %327 = vector.load %arg19[%c1_151, %c0_152] : memref<6x64xf32, #tpu.memory_space<vmem>>, vector<1x64xf32>
    %c2_153 = arith.constant 2 : index
    %c0_154 = arith.constant 0 : index
    %328 = vector.load %arg19[%c2_153, %c0_154] : memref<6x64xf32, #tpu.memory_space<vmem>>, vector<1x64xf32>
    %c3_155 = arith.constant 3 : index
    %c0_156 = arith.constant 0 : index
    %329 = vector.load %arg19[%c3_155, %c0_156] : memref<6x64xf32, #tpu.memory_space<vmem>>, vector<1x64xf32>
    %c4_157 = arith.constant 4 : index
    %c0_158 = arith.constant 0 : index
    %330 = vector.load %arg19[%c4_157, %c0_158] : memref<6x64xf32, #tpu.memory_space<vmem>>, vector<1x64xf32>
    %c5_159 = arith.constant 5 : index
    %c0_160 = arith.constant 0 : index
    %331 = vector.load %arg19[%c5_159, %c0_160] : memref<6x64xf32, #tpu.memory_space<vmem>>, vector<1x64xf32>
    %c0_161 = arith.constant 0 : index
    %c0_162 = arith.constant 0 : index
    %332 = vector.load %arg16[%c0_161, %c0_162] : memref<64x128xbf16, #tpu.memory_space<vmem>>, vector<64x128xbf16>
    %333 = arith.truncf %227 : vector<12x64xf32> to vector<12x64xbf16>
    %cst_163 = arith.constant dense<0.000000e+00> : vector<12x128xf32>
    %334 = tpu.matmul %333, %332, %cst_163 {dimension_numbers = #tpu.dot_dimension_numbers<[1], [0], [0], [1], [0, 0, 1, 1], [], []>} : vector<12x64xbf16>, vector<64x128xbf16>, vector<12x128xf32> -> vector<12x128xf32>
    %c0_164 = arith.constant 0 : index
    %c0_165 = arith.constant 0 : index
    %335 = vector.load %arg17[%c0_164, %c0_165] : memref<1x128xf32, #tpu.memory_space<vmem>>, vector<1x128xf32>
    %336 = vector.broadcast %335 : vector<1x128xf32> to vector<12x128xf32>
    %337 = arith.addf %334, %336 : vector<12x128xf32>
    %338 = vector.extract_strided_slice %337 {offsets = [0, 0], sizes = [12, 64], strides = [1, 1]} : vector<12x128xf32> to vector<12x64xf32>
    %339 = vector.extract_strided_slice %337 {offsets = [0, 64], sizes = [12, 64], strides = [1, 1]} : vector<12x128xf32> to vector<12x64xf32>
    %340 = arith.truncf %317 : vector<20x64xf32> to vector<20x64xbf16>
    %cst_166 = arith.constant dense<0.000000e+00> : vector<20x64xf32>
    %341 = tpu.matmul %340, %319, %cst_166 {dimension_numbers = #tpu.dot_dimension_numbers<[1], [0], [0], [1], [0, 0, 1, 1], [], []>} : vector<20x64xbf16>, vector<64x64xbf16>, vector<20x64xf32> -> vector<20x64xf32>
    %342 = arith.truncf %338 : vector<12x64xf32> to vector<12x64xbf16>
    %cst_167 = arith.constant dense<0.000000e+00> : vector<48x64xf32>
    %343 = tpu.matmul %7, %342, %cst_167 {dimension_numbers = #tpu.dot_dimension_numbers<[0], [0], [1], [1], [0, 1, 1, 1], [], []>} : vector<12x48xbf16>, vector<12x64xbf16>, vector<48x64xf32> -> vector<48x64xf32>
    %344 = arith.truncf %341 : vector<20x64xf32> to vector<20x64xbf16>
    %cst_168 = arith.constant dense<0.000000e+00> : vector<48x64xf32>
    %345 = tpu.matmul %13, %344, %cst_168 {dimension_numbers = #tpu.dot_dimension_numbers<[0], [0], [1], [1], [0, 1, 1, 1], [], []>} : vector<20x48xbf16>, vector<20x64xbf16>, vector<48x64xf32> -> vector<48x64xf32>
    %346 = arith.addf %343, %345 : vector<48x64xf32>
    %cst_169 = arith.constant dense<0.000000e+00> : vector<48xf32>
    %347 = vector.multi_reduction <add>, %346, %cst_169 [1] : vector<48x64xf32> to vector<48xf32>
    %348 = vector.shape_cast %347 : vector<48xf32> to vector<48x1xf32>
    %cst_170 = arith.constant 6.400000e+01 : f32
    %349 = vector.broadcast %cst_170 : f32 to vector<48x1xf32>
    %350 = arith.divf %348, %349 : vector<48x1xf32>
    %351 = vector.broadcast %350 : vector<48x1xf32> to vector<48x64xf32>
    %352 = arith.subf %346, %351 : vector<48x64xf32>
    %353 = arith.mulf %352, %352 : vector<48x64xf32>
    %cst_171 = arith.constant dense<0.000000e+00> : vector<48xf32>
    %354 = vector.multi_reduction <add>, %353, %cst_171 [1] : vector<48x64xf32> to vector<48xf32>
    %355 = vector.shape_cast %354 : vector<48xf32> to vector<48x1xf32>
    %cst_172 = arith.constant 6.400000e+01 : f32
    %356 = vector.broadcast %cst_172 : f32 to vector<48x1xf32>
    %357 = arith.divf %355, %356 : vector<48x1xf32>
    %358 = vector.broadcast %350 : vector<48x1xf32> to vector<48x64xf32>
    %359 = arith.subf %346, %358 : vector<48x64xf32>
    %cst_173 = arith.constant 9.99999974E-6 : f32
    %360 = vector.broadcast %cst_173 : f32 to vector<48x1xf32>
    %361 = arith.addf %357, %360 : vector<48x1xf32>
    %362 = math.rsqrt %361 : vector<48x1xf32>
    %363 = vector.broadcast %362 : vector<48x1xf32> to vector<48x64xf32>
    %364 = arith.mulf %359, %363 : vector<48x64xf32>
    %365 = vector.broadcast %326 : vector<1x64xf32> to vector<48x64xf32>
    %366 = arith.mulf %364, %365 : vector<48x64xf32>
    %367 = vector.broadcast %327 : vector<1x64xf32> to vector<48x64xf32>
    %368 = arith.addf %366, %367 : vector<48x64xf32>
    %cst_174 = arith.constant 0.000000e+00 : f32
    %369 = vector.broadcast %cst_174 : f32 to vector<48x64xf32>
    %370 = arith.maximumf %368, %369 : vector<48x64xf32>
    %371 = arith.truncf %370 : vector<48x64xf32> to vector<48x64xbf16>
    %cst_175 = arith.constant dense<0.000000e+00> : vector<48x64xf32>
    %372 = tpu.matmul %371, %321, %cst_175 {dimension_numbers = #tpu.dot_dimension_numbers<[1], [0], [0], [1], [0, 0, 1, 1], [], []>} : vector<48x64xbf16>, vector<64x64xbf16>, vector<48x64xf32> -> vector<48x64xf32>
    %373 = vector.broadcast %328 : vector<1x64xf32> to vector<48x64xf32>
    %374 = arith.addf %372, %373 : vector<48x64xf32>
    %375 = arith.truncf %374 : vector<48x64xf32> to vector<48x64xbf16>
    %cst_176 = arith.constant dense<0.000000e+00> : vector<12x64xf32>
    %376 = tpu.matmul %7, %375, %cst_176 {dimension_numbers = #tpu.dot_dimension_numbers<[1], [0], [0], [1], [0, 0, 1, 1], [], []>} : vector<12x48xbf16>, vector<48x64xbf16>, vector<12x64xf32> -> vector<12x64xf32>
    %cst_177 = arith.constant dense<0.000000e+00> : vector<12xf32>
    %377 = vector.multi_reduction <add>, %376, %cst_177 [1] : vector<12x64xf32> to vector<12xf32>
    %378 = vector.shape_cast %377 : vector<12xf32> to vector<12x1xf32>
    %cst_178 = arith.constant 6.400000e+01 : f32
    %379 = vector.broadcast %cst_178 : f32 to vector<12x1xf32>
    %380 = arith.divf %378, %379 : vector<12x1xf32>
    %381 = vector.broadcast %380 : vector<12x1xf32> to vector<12x64xf32>
    %382 = arith.subf %376, %381 : vector<12x64xf32>
    %383 = arith.mulf %382, %382 : vector<12x64xf32>
    %cst_179 = arith.constant dense<0.000000e+00> : vector<12xf32>
    %384 = vector.multi_reduction <add>, %383, %cst_179 [1] : vector<12x64xf32> to vector<12xf32>
    %385 = vector.shape_cast %384 : vector<12xf32> to vector<12x1xf32>
    %cst_180 = arith.constant 6.400000e+01 : f32
    %386 = vector.broadcast %cst_180 : f32 to vector<12x1xf32>
    %387 = arith.divf %385, %386 : vector<12x1xf32>
    %388 = vector.broadcast %380 : vector<12x1xf32> to vector<12x64xf32>
    %389 = arith.subf %376, %388 : vector<12x64xf32>
    %cst_181 = arith.constant 9.99999974E-6 : f32
    %390 = vector.broadcast %cst_181 : f32 to vector<12x1xf32>
    %391 = arith.addf %387, %390 : vector<12x1xf32>
    %392 = math.rsqrt %391 : vector<12x1xf32>
    %393 = vector.broadcast %392 : vector<12x1xf32> to vector<12x64xf32>
    %394 = arith.mulf %389, %393 : vector<12x64xf32>
    %395 = vector.broadcast %329 : vector<1x64xf32> to vector<12x64xf32>
    %396 = arith.mulf %394, %395 : vector<12x64xf32>
    %397 = vector.broadcast %330 : vector<1x64xf32> to vector<12x64xf32>
    %398 = arith.addf %396, %397 : vector<12x64xf32>
    %399 = arith.truncf %398 : vector<12x64xf32> to vector<12x64xbf16>
    %cst_182 = arith.constant dense<0.000000e+00> : vector<12x64xf32>
    %400 = tpu.matmul %399, %323, %cst_182 {dimension_numbers = #tpu.dot_dimension_numbers<[1], [0], [0], [1], [0, 0, 1, 1], [], []>} : vector<12x64xbf16>, vector<64x64xbf16>, vector<12x64xf32> -> vector<12x64xf32>
    %401 = arith.addf %400, %339 : vector<12x64xf32>
    %cst_183 = arith.constant 0.000000e+00 : f32
    %402 = vector.broadcast %cst_183 : f32 to vector<12x64xf32>
    %403 = arith.maximumf %401, %402 : vector<12x64xf32>
    %404 = arith.truncf %403 : vector<12x64xf32> to vector<12x64xbf16>
    %cst_184 = arith.constant dense<0.000000e+00> : vector<12x64xf32>
    %405 = tpu.matmul %404, %325, %cst_184 {dimension_numbers = #tpu.dot_dimension_numbers<[1], [0], [0], [1], [0, 0, 1, 1], [], []>} : vector<12x64xbf16>, vector<64x64xbf16>, vector<12x64xf32> -> vector<12x64xf32>
    %406 = vector.broadcast %331 : vector<1x64xf32> to vector<12x64xf32>
    %407 = arith.addf %405, %406 : vector<12x64xf32>
    %c0_185 = arith.constant 0 : index
    %c0_186 = arith.constant 0 : index
    %c0_187 = arith.constant 0 : index
    %408 = vector.load %arg22[%c0_185, %c0_186, %c0_187] : memref<4x64x64xbf16, #tpu.memory_space<vmem>>, vector<1x64x64xbf16>
    %409 = vector.shape_cast %408 : vector<1x64x64xbf16> to vector<64x64xbf16>
    %c1_188 = arith.constant 1 : index
    %c0_189 = arith.constant 0 : index
    %c0_190 = arith.constant 0 : index
    %410 = vector.load %arg22[%c1_188, %c0_189, %c0_190] : memref<4x64x64xbf16, #tpu.memory_space<vmem>>, vector<1x64x64xbf16>
    %411 = vector.shape_cast %410 : vector<1x64x64xbf16> to vector<64x64xbf16>
    %c2_191 = arith.constant 2 : index
    %c0_192 = arith.constant 0 : index
    %c0_193 = arith.constant 0 : index
    %412 = vector.load %arg22[%c2_191, %c0_192, %c0_193] : memref<4x64x64xbf16, #tpu.memory_space<vmem>>, vector<1x64x64xbf16>
    %413 = vector.shape_cast %412 : vector<1x64x64xbf16> to vector<64x64xbf16>
    %c3_194 = arith.constant 3 : index
    %c0_195 = arith.constant 0 : index
    %c0_196 = arith.constant 0 : index
    %414 = vector.load %arg22[%c3_194, %c0_195, %c0_196] : memref<4x64x64xbf16, #tpu.memory_space<vmem>>, vector<1x64x64xbf16>
    %415 = vector.shape_cast %414 : vector<1x64x64xbf16> to vector<64x64xbf16>
    %c0_197 = arith.constant 0 : index
    %c0_198 = arith.constant 0 : index
    %416 = vector.load %arg23[%c0_197, %c0_198] : memref<6x64xf32, #tpu.memory_space<vmem>>, vector<1x64xf32>
    %c1_199 = arith.constant 1 : index
    %c0_200 = arith.constant 0 : index
    %417 = vector.load %arg23[%c1_199, %c0_200] : memref<6x64xf32, #tpu.memory_space<vmem>>, vector<1x64xf32>
    %c2_201 = arith.constant 2 : index
    %c0_202 = arith.constant 0 : index
    %418 = vector.load %arg23[%c2_201, %c0_202] : memref<6x64xf32, #tpu.memory_space<vmem>>, vector<1x64xf32>
    %c3_203 = arith.constant 3 : index
    %c0_204 = arith.constant 0 : index
    %419 = vector.load %arg23[%c3_203, %c0_204] : memref<6x64xf32, #tpu.memory_space<vmem>>, vector<1x64xf32>
    %c4_205 = arith.constant 4 : index
    %c0_206 = arith.constant 0 : index
    %420 = vector.load %arg23[%c4_205, %c0_206] : memref<6x64xf32, #tpu.memory_space<vmem>>, vector<1x64xf32>
    %c5_207 = arith.constant 5 : index
    %c0_208 = arith.constant 0 : index
    %421 = vector.load %arg23[%c5_207, %c0_208] : memref<6x64xf32, #tpu.memory_space<vmem>>, vector<1x64xf32>
    %c0_209 = arith.constant 0 : index
    %c0_210 = arith.constant 0 : index
    %422 = vector.load %arg20[%c0_209, %c0_210] : memref<64x128xbf16, #tpu.memory_space<vmem>>, vector<64x128xbf16>
    %423 = arith.truncf %317 : vector<20x64xf32> to vector<20x64xbf16>
    %cst_211 = arith.constant dense<0.000000e+00> : vector<20x128xf32>
    %424 = tpu.matmul %423, %422, %cst_211 {dimension_numbers = #tpu.dot_dimension_numbers<[1], [0], [0], [1], [0, 0, 1, 1], [], []>} : vector<20x64xbf16>, vector<64x128xbf16>, vector<20x128xf32> -> vector<20x128xf32>
    %c0_212 = arith.constant 0 : index
    %c0_213 = arith.constant 0 : index
    %425 = vector.load %arg21[%c0_212, %c0_213] : memref<1x128xf32, #tpu.memory_space<vmem>>, vector<1x128xf32>
    %426 = vector.broadcast %425 : vector<1x128xf32> to vector<20x128xf32>
    %427 = arith.addf %424, %426 : vector<20x128xf32>
    %428 = vector.extract_strided_slice %427 {offsets = [0, 0], sizes = [20, 64], strides = [1, 1]} : vector<20x128xf32> to vector<20x64xf32>
    %429 = vector.extract_strided_slice %427 {offsets = [0, 64], sizes = [20, 64], strides = [1, 1]} : vector<20x128xf32> to vector<20x64xf32>
    %430 = arith.truncf %407 : vector<12x64xf32> to vector<12x64xbf16>
    %cst_214 = arith.constant dense<0.000000e+00> : vector<12x64xf32>
    %431 = tpu.matmul %430, %409, %cst_214 {dimension_numbers = #tpu.dot_dimension_numbers<[1], [0], [0], [1], [0, 0, 1, 1], [], []>} : vector<12x64xbf16>, vector<64x64xbf16>, vector<12x64xf32> -> vector<12x64xf32>
    %432 = arith.truncf %428 : vector<20x64xf32> to vector<20x64xbf16>
    %cst_215 = arith.constant dense<0.000000e+00> : vector<48x64xf32>
    %433 = tpu.matmul %13, %432, %cst_215 {dimension_numbers = #tpu.dot_dimension_numbers<[0], [0], [1], [1], [0, 1, 1, 1], [], []>} : vector<20x48xbf16>, vector<20x64xbf16>, vector<48x64xf32> -> vector<48x64xf32>
    %434 = arith.truncf %431 : vector<12x64xf32> to vector<12x64xbf16>
    %cst_216 = arith.constant dense<0.000000e+00> : vector<48x64xf32>
    %435 = tpu.matmul %7, %434, %cst_216 {dimension_numbers = #tpu.dot_dimension_numbers<[0], [0], [1], [1], [0, 1, 1, 1], [], []>} : vector<12x48xbf16>, vector<12x64xbf16>, vector<48x64xf32> -> vector<48x64xf32>
    %436 = arith.addf %433, %435 : vector<48x64xf32>
    %cst_217 = arith.constant dense<0.000000e+00> : vector<48xf32>
    %437 = vector.multi_reduction <add>, %436, %cst_217 [1] : vector<48x64xf32> to vector<48xf32>
    %438 = vector.shape_cast %437 : vector<48xf32> to vector<48x1xf32>
    %cst_218 = arith.constant 6.400000e+01 : f32
    %439 = vector.broadcast %cst_218 : f32 to vector<48x1xf32>
    %440 = arith.divf %438, %439 : vector<48x1xf32>
    %441 = vector.broadcast %440 : vector<48x1xf32> to vector<48x64xf32>
    %442 = arith.subf %436, %441 : vector<48x64xf32>
    %443 = arith.mulf %442, %442 : vector<48x64xf32>
    %cst_219 = arith.constant dense<0.000000e+00> : vector<48xf32>
    %444 = vector.multi_reduction <add>, %443, %cst_219 [1] : vector<48x64xf32> to vector<48xf32>
    %445 = vector.shape_cast %444 : vector<48xf32> to vector<48x1xf32>
    %cst_220 = arith.constant 6.400000e+01 : f32
    %446 = vector.broadcast %cst_220 : f32 to vector<48x1xf32>
    %447 = arith.divf %445, %446 : vector<48x1xf32>
    %448 = vector.broadcast %440 : vector<48x1xf32> to vector<48x64xf32>
    %449 = arith.subf %436, %448 : vector<48x64xf32>
    %cst_221 = arith.constant 9.99999974E-6 : f32
    %450 = vector.broadcast %cst_221 : f32 to vector<48x1xf32>
    %451 = arith.addf %447, %450 : vector<48x1xf32>
    %452 = math.rsqrt %451 : vector<48x1xf32>
    %453 = vector.broadcast %452 : vector<48x1xf32> to vector<48x64xf32>
    %454 = arith.mulf %449, %453 : vector<48x64xf32>
    %455 = vector.broadcast %416 : vector<1x64xf32> to vector<48x64xf32>
    %456 = arith.mulf %454, %455 : vector<48x64xf32>
    %457 = vector.broadcast %417 : vector<1x64xf32> to vector<48x64xf32>
    %458 = arith.addf %456, %457 : vector<48x64xf32>
    %cst_222 = arith.constant 0.000000e+00 : f32
    %459 = vector.broadcast %cst_222 : f32 to vector<48x64xf32>
    %460 = arith.maximumf %458, %459 : vector<48x64xf32>
    %461 = arith.truncf %460 : vector<48x64xf32> to vector<48x64xbf16>
    %cst_223 = arith.constant dense<0.000000e+00> : vector<48x64xf32>
    %462 = tpu.matmul %461, %411, %cst_223 {dimension_numbers = #tpu.dot_dimension_numbers<[1], [0], [0], [1], [0, 0, 1, 1], [], []>} : vector<48x64xbf16>, vector<64x64xbf16>, vector<48x64xf32> -> vector<48x64xf32>
    %463 = vector.broadcast %418 : vector<1x64xf32> to vector<48x64xf32>
    %464 = arith.addf %462, %463 : vector<48x64xf32>
    %465 = arith.truncf %464 : vector<48x64xf32> to vector<48x64xbf16>
    %cst_224 = arith.constant dense<0.000000e+00> : vector<20x64xf32>
    %466 = tpu.matmul %13, %465, %cst_224 {dimension_numbers = #tpu.dot_dimension_numbers<[1], [0], [0], [1], [0, 0, 1, 1], [], []>} : vector<20x48xbf16>, vector<48x64xbf16>, vector<20x64xf32> -> vector<20x64xf32>
    %cst_225 = arith.constant dense<0.000000e+00> : vector<20xf32>
    %467 = vector.multi_reduction <add>, %466, %cst_225 [1] : vector<20x64xf32> to vector<20xf32>
    %468 = vector.shape_cast %467 : vector<20xf32> to vector<20x1xf32>
    %cst_226 = arith.constant 6.400000e+01 : f32
    %469 = vector.broadcast %cst_226 : f32 to vector<20x1xf32>
    %470 = arith.divf %468, %469 : vector<20x1xf32>
    %471 = vector.broadcast %470 : vector<20x1xf32> to vector<20x64xf32>
    %472 = arith.subf %466, %471 : vector<20x64xf32>
    %473 = arith.mulf %472, %472 : vector<20x64xf32>
    %cst_227 = arith.constant dense<0.000000e+00> : vector<20xf32>
    %474 = vector.multi_reduction <add>, %473, %cst_227 [1] : vector<20x64xf32> to vector<20xf32>
    %475 = vector.shape_cast %474 : vector<20xf32> to vector<20x1xf32>
    %cst_228 = arith.constant 6.400000e+01 : f32
    %476 = vector.broadcast %cst_228 : f32 to vector<20x1xf32>
    %477 = arith.divf %475, %476 : vector<20x1xf32>
    %478 = vector.broadcast %470 : vector<20x1xf32> to vector<20x64xf32>
    %479 = arith.subf %466, %478 : vector<20x64xf32>
    %cst_229 = arith.constant 9.99999974E-6 : f32
    %480 = vector.broadcast %cst_229 : f32 to vector<20x1xf32>
    %481 = arith.addf %477, %480 : vector<20x1xf32>
    %482 = math.rsqrt %481 : vector<20x1xf32>
    %483 = vector.broadcast %482 : vector<20x1xf32> to vector<20x64xf32>
    %484 = arith.mulf %479, %483 : vector<20x64xf32>
    %485 = vector.broadcast %419 : vector<1x64xf32> to vector<20x64xf32>
    %486 = arith.mulf %484, %485 : vector<20x64xf32>
    %487 = vector.broadcast %420 : vector<1x64xf32> to vector<20x64xf32>
    %488 = arith.addf %486, %487 : vector<20x64xf32>
    %489 = arith.truncf %488 : vector<20x64xf32> to vector<20x64xbf16>
    %cst_230 = arith.constant dense<0.000000e+00> : vector<20x64xf32>
    %490 = tpu.matmul %489, %413, %cst_230 {dimension_numbers = #tpu.dot_dimension_numbers<[1], [0], [0], [1], [0, 0, 1, 1], [], []>} : vector<20x64xbf16>, vector<64x64xbf16>, vector<20x64xf32> -> vector<20x64xf32>
    %491 = arith.addf %490, %429 : vector<20x64xf32>
    %cst_231 = arith.constant 0.000000e+00 : f32
    %492 = vector.broadcast %cst_231 : f32 to vector<20x64xf32>
    %493 = arith.maximumf %491, %492 : vector<20x64xf32>
    %494 = arith.truncf %493 : vector<20x64xf32> to vector<20x64xbf16>
    %cst_232 = arith.constant dense<0.000000e+00> : vector<20x64xf32>
    %495 = tpu.matmul %494, %415, %cst_232 {dimension_numbers = #tpu.dot_dimension_numbers<[1], [0], [0], [1], [0, 0, 1, 1], [], []>} : vector<20x64xbf16>, vector<64x64xbf16>, vector<20x64xf32> -> vector<20x64xf32>
    %496 = vector.broadcast %421 : vector<1x64xf32> to vector<20x64xf32>
    %497 = arith.addf %495, %496 : vector<20x64xf32>
    %c0_233 = arith.constant 0 : index
    %c0_234 = arith.constant 0 : index
    %c0_235 = arith.constant 0 : index
    %498 = vector.load %arg18[%c0_233, %c0_234, %c0_235] : memref<4x64x64xbf16, #tpu.memory_space<vmem>>, vector<1x64x64xbf16>
    %499 = vector.shape_cast %498 : vector<1x64x64xbf16> to vector<64x64xbf16>
    %c1_236 = arith.constant 1 : index
    %c0_237 = arith.constant 0 : index
    %c0_238 = arith.constant 0 : index
    %500 = vector.load %arg18[%c1_236, %c0_237, %c0_238] : memref<4x64x64xbf16, #tpu.memory_space<vmem>>, vector<1x64x64xbf16>
    %501 = vector.shape_cast %500 : vector<1x64x64xbf16> to vector<64x64xbf16>
    %c2_239 = arith.constant 2 : index
    %c0_240 = arith.constant 0 : index
    %c0_241 = arith.constant 0 : index
    %502 = vector.load %arg18[%c2_239, %c0_240, %c0_241] : memref<4x64x64xbf16, #tpu.memory_space<vmem>>, vector<1x64x64xbf16>
    %503 = vector.shape_cast %502 : vector<1x64x64xbf16> to vector<64x64xbf16>
    %c3_242 = arith.constant 3 : index
    %c0_243 = arith.constant 0 : index
    %c0_244 = arith.constant 0 : index
    %504 = vector.load %arg18[%c3_242, %c0_243, %c0_244] : memref<4x64x64xbf16, #tpu.memory_space<vmem>>, vector<1x64x64xbf16>
    %505 = vector.shape_cast %504 : vector<1x64x64xbf16> to vector<64x64xbf16>
    %c0_245 = arith.constant 0 : index
    %c0_246 = arith.constant 0 : index
    %506 = vector.load %arg19[%c0_245, %c0_246] : memref<6x64xf32, #tpu.memory_space<vmem>>, vector<1x64xf32>
    %c1_247 = arith.constant 1 : index
    %c0_248 = arith.constant 0 : index
    %507 = vector.load %arg19[%c1_247, %c0_248] : memref<6x64xf32, #tpu.memory_space<vmem>>, vector<1x64xf32>
    %c2_249 = arith.constant 2 : index
    %c0_250 = arith.constant 0 : index
    %508 = vector.load %arg19[%c2_249, %c0_250] : memref<6x64xf32, #tpu.memory_space<vmem>>, vector<1x64xf32>
    %c3_251 = arith.constant 3 : index
    %c0_252 = arith.constant 0 : index
    %509 = vector.load %arg19[%c3_251, %c0_252] : memref<6x64xf32, #tpu.memory_space<vmem>>, vector<1x64xf32>
    %c4_253 = arith.constant 4 : index
    %c0_254 = arith.constant 0 : index
    %510 = vector.load %arg19[%c4_253, %c0_254] : memref<6x64xf32, #tpu.memory_space<vmem>>, vector<1x64xf32>
    %c5_255 = arith.constant 5 : index
    %c0_256 = arith.constant 0 : index
    %511 = vector.load %arg19[%c5_255, %c0_256] : memref<6x64xf32, #tpu.memory_space<vmem>>, vector<1x64xf32>
    %c0_257 = arith.constant 0 : index
    %c0_258 = arith.constant 0 : index
    %512 = vector.load %arg16[%c0_257, %c0_258] : memref<64x128xbf16, #tpu.memory_space<vmem>>, vector<64x128xbf16>
    %513 = arith.truncf %407 : vector<12x64xf32> to vector<12x64xbf16>
    %cst_259 = arith.constant dense<0.000000e+00> : vector<12x128xf32>
    %514 = tpu.matmul %513, %512, %cst_259 {dimension_numbers = #tpu.dot_dimension_numbers<[1], [0], [0], [1], [0, 0, 1, 1], [], []>} : vector<12x64xbf16>, vector<64x128xbf16>, vector<12x128xf32> -> vector<12x128xf32>
    %c0_260 = arith.constant 0 : index
    %c0_261 = arith.constant 0 : index
    %515 = vector.load %arg17[%c0_260, %c0_261] : memref<1x128xf32, #tpu.memory_space<vmem>>, vector<1x128xf32>
    %516 = vector.broadcast %515 : vector<1x128xf32> to vector<12x128xf32>
    %517 = arith.addf %514, %516 : vector<12x128xf32>
    %518 = vector.extract_strided_slice %517 {offsets = [0, 0], sizes = [12, 64], strides = [1, 1]} : vector<12x128xf32> to vector<12x64xf32>
    %519 = vector.extract_strided_slice %517 {offsets = [0, 64], sizes = [12, 64], strides = [1, 1]} : vector<12x128xf32> to vector<12x64xf32>
    %520 = arith.truncf %497 : vector<20x64xf32> to vector<20x64xbf16>
    %cst_262 = arith.constant dense<0.000000e+00> : vector<20x64xf32>
    %521 = tpu.matmul %520, %499, %cst_262 {dimension_numbers = #tpu.dot_dimension_numbers<[1], [0], [0], [1], [0, 0, 1, 1], [], []>} : vector<20x64xbf16>, vector<64x64xbf16>, vector<20x64xf32> -> vector<20x64xf32>
    %522 = arith.truncf %518 : vector<12x64xf32> to vector<12x64xbf16>
    %cst_263 = arith.constant dense<0.000000e+00> : vector<48x64xf32>
    %523 = tpu.matmul %7, %522, %cst_263 {dimension_numbers = #tpu.dot_dimension_numbers<[0], [0], [1], [1], [0, 1, 1, 1], [], []>} : vector<12x48xbf16>, vector<12x64xbf16>, vector<48x64xf32> -> vector<48x64xf32>
    %524 = arith.truncf %521 : vector<20x64xf32> to vector<20x64xbf16>
    %cst_264 = arith.constant dense<0.000000e+00> : vector<48x64xf32>
    %525 = tpu.matmul %13, %524, %cst_264 {dimension_numbers = #tpu.dot_dimension_numbers<[0], [0], [1], [1], [0, 1, 1, 1], [], []>} : vector<20x48xbf16>, vector<20x64xbf16>, vector<48x64xf32> -> vector<48x64xf32>
    %526 = arith.addf %523, %525 : vector<48x64xf32>
    %cst_265 = arith.constant dense<0.000000e+00> : vector<48xf32>
    %527 = vector.multi_reduction <add>, %526, %cst_265 [1] : vector<48x64xf32> to vector<48xf32>
    %528 = vector.shape_cast %527 : vector<48xf32> to vector<48x1xf32>
    %cst_266 = arith.constant 6.400000e+01 : f32
    %529 = vector.broadcast %cst_266 : f32 to vector<48x1xf32>
    %530 = arith.divf %528, %529 : vector<48x1xf32>
    %531 = vector.broadcast %530 : vector<48x1xf32> to vector<48x64xf32>
    %532 = arith.subf %526, %531 : vector<48x64xf32>
    %533 = arith.mulf %532, %532 : vector<48x64xf32>
    %cst_267 = arith.constant dense<0.000000e+00> : vector<48xf32>
    %534 = vector.multi_reduction <add>, %533, %cst_267 [1] : vector<48x64xf32> to vector<48xf32>
    %535 = vector.shape_cast %534 : vector<48xf32> to vector<48x1xf32>
    %cst_268 = arith.constant 6.400000e+01 : f32
    %536 = vector.broadcast %cst_268 : f32 to vector<48x1xf32>
    %537 = arith.divf %535, %536 : vector<48x1xf32>
    %538 = vector.broadcast %530 : vector<48x1xf32> to vector<48x64xf32>
    %539 = arith.subf %526, %538 : vector<48x64xf32>
    %cst_269 = arith.constant 9.99999974E-6 : f32
    %540 = vector.broadcast %cst_269 : f32 to vector<48x1xf32>
    %541 = arith.addf %537, %540 : vector<48x1xf32>
    %542 = math.rsqrt %541 : vector<48x1xf32>
    %543 = vector.broadcast %542 : vector<48x1xf32> to vector<48x64xf32>
    %544 = arith.mulf %539, %543 : vector<48x64xf32>
    %545 = vector.broadcast %506 : vector<1x64xf32> to vector<48x64xf32>
    %546 = arith.mulf %544, %545 : vector<48x64xf32>
    %547 = vector.broadcast %507 : vector<1x64xf32> to vector<48x64xf32>
    %548 = arith.addf %546, %547 : vector<48x64xf32>
    %cst_270 = arith.constant 0.000000e+00 : f32
    %549 = vector.broadcast %cst_270 : f32 to vector<48x64xf32>
    %550 = arith.maximumf %548, %549 : vector<48x64xf32>
    %551 = arith.truncf %550 : vector<48x64xf32> to vector<48x64xbf16>
    %cst_271 = arith.constant dense<0.000000e+00> : vector<48x64xf32>
    %552 = tpu.matmul %551, %501, %cst_271 {dimension_numbers = #tpu.dot_dimension_numbers<[1], [0], [0], [1], [0, 0, 1, 1], [], []>} : vector<48x64xbf16>, vector<64x64xbf16>, vector<48x64xf32> -> vector<48x64xf32>
    %553 = vector.broadcast %508 : vector<1x64xf32> to vector<48x64xf32>
    %554 = arith.addf %552, %553 : vector<48x64xf32>
    %555 = arith.truncf %554 : vector<48x64xf32> to vector<48x64xbf16>
    %cst_272 = arith.constant dense<0.000000e+00> : vector<12x64xf32>
    %556 = tpu.matmul %7, %555, %cst_272 {dimension_numbers = #tpu.dot_dimension_numbers<[1], [0], [0], [1], [0, 0, 1, 1], [], []>} : vector<12x48xbf16>, vector<48x64xbf16>, vector<12x64xf32> -> vector<12x64xf32>
    %cst_273 = arith.constant dense<0.000000e+00> : vector<12xf32>
    %557 = vector.multi_reduction <add>, %556, %cst_273 [1] : vector<12x64xf32> to vector<12xf32>
    %558 = vector.shape_cast %557 : vector<12xf32> to vector<12x1xf32>
    %cst_274 = arith.constant 6.400000e+01 : f32
    %559 = vector.broadcast %cst_274 : f32 to vector<12x1xf32>
    %560 = arith.divf %558, %559 : vector<12x1xf32>
    %561 = vector.broadcast %560 : vector<12x1xf32> to vector<12x64xf32>
    %562 = arith.subf %556, %561 : vector<12x64xf32>
    %563 = arith.mulf %562, %562 : vector<12x64xf32>
    %cst_275 = arith.constant dense<0.000000e+00> : vector<12xf32>
    %564 = vector.multi_reduction <add>, %563, %cst_275 [1] : vector<12x64xf32> to vector<12xf32>
    %565 = vector.shape_cast %564 : vector<12xf32> to vector<12x1xf32>
    %cst_276 = arith.constant 6.400000e+01 : f32
    %566 = vector.broadcast %cst_276 : f32 to vector<12x1xf32>
    %567 = arith.divf %565, %566 : vector<12x1xf32>
    %568 = vector.broadcast %560 : vector<12x1xf32> to vector<12x64xf32>
    %569 = arith.subf %556, %568 : vector<12x64xf32>
    %cst_277 = arith.constant 9.99999974E-6 : f32
    %570 = vector.broadcast %cst_277 : f32 to vector<12x1xf32>
    %571 = arith.addf %567, %570 : vector<12x1xf32>
    %572 = math.rsqrt %571 : vector<12x1xf32>
    %573 = vector.broadcast %572 : vector<12x1xf32> to vector<12x64xf32>
    %574 = arith.mulf %569, %573 : vector<12x64xf32>
    %575 = vector.broadcast %509 : vector<1x64xf32> to vector<12x64xf32>
    %576 = arith.mulf %574, %575 : vector<12x64xf32>
    %577 = vector.broadcast %510 : vector<1x64xf32> to vector<12x64xf32>
    %578 = arith.addf %576, %577 : vector<12x64xf32>
    %579 = arith.truncf %578 : vector<12x64xf32> to vector<12x64xbf16>
    %cst_278 = arith.constant dense<0.000000e+00> : vector<12x64xf32>
    %580 = tpu.matmul %579, %503, %cst_278 {dimension_numbers = #tpu.dot_dimension_numbers<[1], [0], [0], [1], [0, 0, 1, 1], [], []>} : vector<12x64xbf16>, vector<64x64xbf16>, vector<12x64xf32> -> vector<12x64xf32>
    %581 = arith.addf %580, %519 : vector<12x64xf32>
    %cst_279 = arith.constant 0.000000e+00 : f32
    %582 = vector.broadcast %cst_279 : f32 to vector<12x64xf32>
    %583 = arith.maximumf %581, %582 : vector<12x64xf32>
    %584 = arith.truncf %583 : vector<12x64xf32> to vector<12x64xbf16>
    %cst_280 = arith.constant dense<0.000000e+00> : vector<12x64xf32>
    %585 = tpu.matmul %584, %505, %cst_280 {dimension_numbers = #tpu.dot_dimension_numbers<[1], [0], [0], [1], [0, 0, 1, 1], [], []>} : vector<12x64xbf16>, vector<64x64xbf16>, vector<12x64xf32> -> vector<12x64xf32>
    %586 = vector.broadcast %511 : vector<1x64xf32> to vector<12x64xf32>
    %587 = arith.addf %585, %586 : vector<12x64xf32>
    %c0_281 = arith.constant 0 : index
    %c0_282 = arith.constant 0 : index
    %c0_283 = arith.constant 0 : index
    %588 = vector.load %arg22[%c0_281, %c0_282, %c0_283] : memref<4x64x64xbf16, #tpu.memory_space<vmem>>, vector<1x64x64xbf16>
    %589 = vector.shape_cast %588 : vector<1x64x64xbf16> to vector<64x64xbf16>
    %c1_284 = arith.constant 1 : index
    %c0_285 = arith.constant 0 : index
    %c0_286 = arith.constant 0 : index
    %590 = vector.load %arg22[%c1_284, %c0_285, %c0_286] : memref<4x64x64xbf16, #tpu.memory_space<vmem>>, vector<1x64x64xbf16>
    %591 = vector.shape_cast %590 : vector<1x64x64xbf16> to vector<64x64xbf16>
    %c2_287 = arith.constant 2 : index
    %c0_288 = arith.constant 0 : index
    %c0_289 = arith.constant 0 : index
    %592 = vector.load %arg22[%c2_287, %c0_288, %c0_289] : memref<4x64x64xbf16, #tpu.memory_space<vmem>>, vector<1x64x64xbf16>
    %593 = vector.shape_cast %592 : vector<1x64x64xbf16> to vector<64x64xbf16>
    %c3_290 = arith.constant 3 : index
    %c0_291 = arith.constant 0 : index
    %c0_292 = arith.constant 0 : index
    %594 = vector.load %arg22[%c3_290, %c0_291, %c0_292] : memref<4x64x64xbf16, #tpu.memory_space<vmem>>, vector<1x64x64xbf16>
    %595 = vector.shape_cast %594 : vector<1x64x64xbf16> to vector<64x64xbf16>
    %c0_293 = arith.constant 0 : index
    %c0_294 = arith.constant 0 : index
    %596 = vector.load %arg23[%c0_293, %c0_294] : memref<6x64xf32, #tpu.memory_space<vmem>>, vector<1x64xf32>
    %c1_295 = arith.constant 1 : index
    %c0_296 = arith.constant 0 : index
    %597 = vector.load %arg23[%c1_295, %c0_296] : memref<6x64xf32, #tpu.memory_space<vmem>>, vector<1x64xf32>
    %c2_297 = arith.constant 2 : index
    %c0_298 = arith.constant 0 : index
    %598 = vector.load %arg23[%c2_297, %c0_298] : memref<6x64xf32, #tpu.memory_space<vmem>>, vector<1x64xf32>
    %c3_299 = arith.constant 3 : index
    %c0_300 = arith.constant 0 : index
    %599 = vector.load %arg23[%c3_299, %c0_300] : memref<6x64xf32, #tpu.memory_space<vmem>>, vector<1x64xf32>
    %c4_301 = arith.constant 4 : index
    %c0_302 = arith.constant 0 : index
    %600 = vector.load %arg23[%c4_301, %c0_302] : memref<6x64xf32, #tpu.memory_space<vmem>>, vector<1x64xf32>
    %c5_303 = arith.constant 5 : index
    %c0_304 = arith.constant 0 : index
    %601 = vector.load %arg23[%c5_303, %c0_304] : memref<6x64xf32, #tpu.memory_space<vmem>>, vector<1x64xf32>
    %c0_305 = arith.constant 0 : index
    %c0_306 = arith.constant 0 : index
    %602 = vector.load %arg20[%c0_305, %c0_306] : memref<64x128xbf16, #tpu.memory_space<vmem>>, vector<64x128xbf16>
    %603 = arith.truncf %497 : vector<20x64xf32> to vector<20x64xbf16>
    %cst_307 = arith.constant dense<0.000000e+00> : vector<20x128xf32>
    %604 = tpu.matmul %603, %602, %cst_307 {dimension_numbers = #tpu.dot_dimension_numbers<[1], [0], [0], [1], [0, 0, 1, 1], [], []>} : vector<20x64xbf16>, vector<64x128xbf16>, vector<20x128xf32> -> vector<20x128xf32>
    %c0_308 = arith.constant 0 : index
    %c0_309 = arith.constant 0 : index
    %605 = vector.load %arg21[%c0_308, %c0_309] : memref<1x128xf32, #tpu.memory_space<vmem>>, vector<1x128xf32>
    %606 = vector.broadcast %605 : vector<1x128xf32> to vector<20x128xf32>
    %607 = arith.addf %604, %606 : vector<20x128xf32>
    %608 = vector.extract_strided_slice %607 {offsets = [0, 0], sizes = [20, 64], strides = [1, 1]} : vector<20x128xf32> to vector<20x64xf32>
    %609 = vector.extract_strided_slice %607 {offsets = [0, 64], sizes = [20, 64], strides = [1, 1]} : vector<20x128xf32> to vector<20x64xf32>
    %610 = arith.truncf %587 : vector<12x64xf32> to vector<12x64xbf16>
    %cst_310 = arith.constant dense<0.000000e+00> : vector<12x64xf32>
    %611 = tpu.matmul %610, %589, %cst_310 {dimension_numbers = #tpu.dot_dimension_numbers<[1], [0], [0], [1], [0, 0, 1, 1], [], []>} : vector<12x64xbf16>, vector<64x64xbf16>, vector<12x64xf32> -> vector<12x64xf32>
    %612 = arith.truncf %608 : vector<20x64xf32> to vector<20x64xbf16>
    %cst_311 = arith.constant dense<0.000000e+00> : vector<48x64xf32>
    %613 = tpu.matmul %13, %612, %cst_311 {dimension_numbers = #tpu.dot_dimension_numbers<[0], [0], [1], [1], [0, 1, 1, 1], [], []>} : vector<20x48xbf16>, vector<20x64xbf16>, vector<48x64xf32> -> vector<48x64xf32>
    %614 = arith.truncf %611 : vector<12x64xf32> to vector<12x64xbf16>
    %cst_312 = arith.constant dense<0.000000e+00> : vector<48x64xf32>
    %615 = tpu.matmul %7, %614, %cst_312 {dimension_numbers = #tpu.dot_dimension_numbers<[0], [0], [1], [1], [0, 1, 1, 1], [], []>} : vector<12x48xbf16>, vector<12x64xbf16>, vector<48x64xf32> -> vector<48x64xf32>
    %616 = arith.addf %613, %615 : vector<48x64xf32>
    %cst_313 = arith.constant dense<0.000000e+00> : vector<48xf32>
    %617 = vector.multi_reduction <add>, %616, %cst_313 [1] : vector<48x64xf32> to vector<48xf32>
    %618 = vector.shape_cast %617 : vector<48xf32> to vector<48x1xf32>
    %cst_314 = arith.constant 6.400000e+01 : f32
    %619 = vector.broadcast %cst_314 : f32 to vector<48x1xf32>
    %620 = arith.divf %618, %619 : vector<48x1xf32>
    %621 = vector.broadcast %620 : vector<48x1xf32> to vector<48x64xf32>
    %622 = arith.subf %616, %621 : vector<48x64xf32>
    %623 = arith.mulf %622, %622 : vector<48x64xf32>
    %cst_315 = arith.constant dense<0.000000e+00> : vector<48xf32>
    %624 = vector.multi_reduction <add>, %623, %cst_315 [1] : vector<48x64xf32> to vector<48xf32>
    %625 = vector.shape_cast %624 : vector<48xf32> to vector<48x1xf32>
    %cst_316 = arith.constant 6.400000e+01 : f32
    %626 = vector.broadcast %cst_316 : f32 to vector<48x1xf32>
    %627 = arith.divf %625, %626 : vector<48x1xf32>
    %628 = vector.broadcast %620 : vector<48x1xf32> to vector<48x64xf32>
    %629 = arith.subf %616, %628 : vector<48x64xf32>
    %cst_317 = arith.constant 9.99999974E-6 : f32
    %630 = vector.broadcast %cst_317 : f32 to vector<48x1xf32>
    %631 = arith.addf %627, %630 : vector<48x1xf32>
    %632 = math.rsqrt %631 : vector<48x1xf32>
    %633 = vector.broadcast %632 : vector<48x1xf32> to vector<48x64xf32>
    %634 = arith.mulf %629, %633 : vector<48x64xf32>
    %635 = vector.broadcast %596 : vector<1x64xf32> to vector<48x64xf32>
    %636 = arith.mulf %634, %635 : vector<48x64xf32>
    %637 = vector.broadcast %597 : vector<1x64xf32> to vector<48x64xf32>
    %638 = arith.addf %636, %637 : vector<48x64xf32>
    %cst_318 = arith.constant 0.000000e+00 : f32
    %639 = vector.broadcast %cst_318 : f32 to vector<48x64xf32>
    %640 = arith.maximumf %638, %639 : vector<48x64xf32>
    %641 = arith.truncf %640 : vector<48x64xf32> to vector<48x64xbf16>
    %cst_319 = arith.constant dense<0.000000e+00> : vector<48x64xf32>
    %642 = tpu.matmul %641, %591, %cst_319 {dimension_numbers = #tpu.dot_dimension_numbers<[1], [0], [0], [1], [0, 0, 1, 1], [], []>} : vector<48x64xbf16>, vector<64x64xbf16>, vector<48x64xf32> -> vector<48x64xf32>
    %643 = vector.broadcast %598 : vector<1x64xf32> to vector<48x64xf32>
    %644 = arith.addf %642, %643 : vector<48x64xf32>
    %645 = arith.truncf %644 : vector<48x64xf32> to vector<48x64xbf16>
    %cst_320 = arith.constant dense<0.000000e+00> : vector<20x64xf32>
    %646 = tpu.matmul %13, %645, %cst_320 {dimension_numbers = #tpu.dot_dimension_numbers<[1], [0], [0], [1], [0, 0, 1, 1], [], []>} : vector<20x48xbf16>, vector<48x64xbf16>, vector<20x64xf32> -> vector<20x64xf32>
    %cst_321 = arith.constant dense<0.000000e+00> : vector<20xf32>
    %647 = vector.multi_reduction <add>, %646, %cst_321 [1] : vector<20x64xf32> to vector<20xf32>
    %648 = vector.shape_cast %647 : vector<20xf32> to vector<20x1xf32>
    %cst_322 = arith.constant 6.400000e+01 : f32
    %649 = vector.broadcast %cst_322 : f32 to vector<20x1xf32>
    %650 = arith.divf %648, %649 : vector<20x1xf32>
    %651 = vector.broadcast %650 : vector<20x1xf32> to vector<20x64xf32>
    %652 = arith.subf %646, %651 : vector<20x64xf32>
    %653 = arith.mulf %652, %652 : vector<20x64xf32>
    %cst_323 = arith.constant dense<0.000000e+00> : vector<20xf32>
    %654 = vector.multi_reduction <add>, %653, %cst_323 [1] : vector<20x64xf32> to vector<20xf32>
    %655 = vector.shape_cast %654 : vector<20xf32> to vector<20x1xf32>
    %cst_324 = arith.constant 6.400000e+01 : f32
    %656 = vector.broadcast %cst_324 : f32 to vector<20x1xf32>
    %657 = arith.divf %655, %656 : vector<20x1xf32>
    %658 = vector.broadcast %650 : vector<20x1xf32> to vector<20x64xf32>
    %659 = arith.subf %646, %658 : vector<20x64xf32>
    %cst_325 = arith.constant 9.99999974E-6 : f32
    %660 = vector.broadcast %cst_325 : f32 to vector<20x1xf32>
    %661 = arith.addf %657, %660 : vector<20x1xf32>
    %662 = math.rsqrt %661 : vector<20x1xf32>
    %663 = vector.broadcast %662 : vector<20x1xf32> to vector<20x64xf32>
    %664 = arith.mulf %659, %663 : vector<20x64xf32>
    %665 = vector.broadcast %599 : vector<1x64xf32> to vector<20x64xf32>
    %666 = arith.mulf %664, %665 : vector<20x64xf32>
    %667 = vector.broadcast %600 : vector<1x64xf32> to vector<20x64xf32>
    %668 = arith.addf %666, %667 : vector<20x64xf32>
    %669 = arith.truncf %668 : vector<20x64xf32> to vector<20x64xbf16>
    %cst_326 = arith.constant dense<0.000000e+00> : vector<20x64xf32>
    %670 = tpu.matmul %669, %593, %cst_326 {dimension_numbers = #tpu.dot_dimension_numbers<[1], [0], [0], [1], [0, 0, 1, 1], [], []>} : vector<20x64xbf16>, vector<64x64xbf16>, vector<20x64xf32> -> vector<20x64xf32>
    %671 = arith.addf %670, %609 : vector<20x64xf32>
    %cst_327 = arith.constant 0.000000e+00 : f32
    %672 = vector.broadcast %cst_327 : f32 to vector<20x64xf32>
    %673 = arith.maximumf %671, %672 : vector<20x64xf32>
    %674 = arith.truncf %673 : vector<20x64xf32> to vector<20x64xbf16>
    %cst_328 = arith.constant dense<0.000000e+00> : vector<20x64xf32>
    %675 = tpu.matmul %674, %595, %cst_328 {dimension_numbers = #tpu.dot_dimension_numbers<[1], [0], [0], [1], [0, 0, 1, 1], [], []>} : vector<20x64xbf16>, vector<64x64xbf16>, vector<20x64xf32> -> vector<20x64xf32>
    %676 = vector.broadcast %601 : vector<1x64xf32> to vector<20x64xf32>
    %677 = arith.addf %675, %676 : vector<20x64xf32>
    %c0_329 = arith.constant 0 : index
    %c0_330 = arith.constant 0 : index
    %678 = vector.load %arg24[%c0_329, %c0_330] : memref<64x128xbf16, #tpu.memory_space<vmem>>, vector<64x128xbf16>
    %679 = arith.truncf %677 : vector<20x64xf32> to vector<20x64xbf16>
    %cst_331 = arith.constant dense<0.000000e+00> : vector<20x128xf32>
    %680 = tpu.matmul %679, %678, %cst_331 {dimension_numbers = #tpu.dot_dimension_numbers<[1], [0], [0], [1], [0, 0, 1, 1], [], []>} : vector<20x64xbf16>, vector<64x128xbf16>, vector<20x128xf32> -> vector<20x128xf32>
    %c0_332 = arith.constant 0 : index
    %c0_333 = arith.constant 0 : index
    %681 = vector.load %arg25[%c0_332, %c0_333] : memref<1x128xf32, #tpu.memory_space<vmem>>, vector<1x128xf32>
    %682 = vector.broadcast %681 : vector<1x128xf32> to vector<20x128xf32>
    %683 = arith.addf %680, %682 : vector<20x128xf32>
    %cst_334 = arith.constant 0.000000e+00 : f32
    %684 = vector.broadcast %cst_334 : f32 to vector<20x128xf32>
    %685 = arith.maximumf %683, %684 : vector<20x128xf32>
    %c0_335 = arith.constant 0 : index
    %c0_336 = arith.constant 0 : index
    %686 = vector.load %arg26[%c0_335, %c0_336] : memref<128x128xbf16, #tpu.memory_space<vmem>>, vector<128x128xbf16>
    %687 = arith.truncf %685 : vector<20x128xf32> to vector<20x128xbf16>
    %cst_337 = arith.constant dense<0.000000e+00> : vector<20x128xf32>
    %688 = tpu.matmul %687, %686, %cst_337 {dimension_numbers = #tpu.dot_dimension_numbers<[1], [0], [0], [1], [0, 0, 1, 1], [], []>} : vector<20x128xbf16>, vector<128x128xbf16>, vector<20x128xf32> -> vector<20x128xf32>
    %c0_338 = arith.constant 0 : index
    %c0_339 = arith.constant 0 : index
    %689 = vector.load %arg27[%c0_338, %c0_339] : memref<1x128xf32, #tpu.memory_space<vmem>>, vector<1x128xf32>
    %690 = vector.broadcast %689 : vector<1x128xf32> to vector<20x128xf32>
    %691 = arith.addf %688, %690 : vector<20x128xf32>
    %cst_340 = arith.constant 0.000000e+00 : f32
    %692 = vector.broadcast %cst_340 : f32 to vector<20x128xf32>
    %693 = arith.maximumf %691, %692 : vector<20x128xf32>
    %c0_341 = arith.constant 0 : index
    %c0_342 = arith.constant 0 : index
    %694 = vector.load %arg28[%c0_341, %c0_342] : memref<128x128xbf16, #tpu.memory_space<vmem>>, vector<128x128xbf16>
    %695 = arith.truncf %693 : vector<20x128xf32> to vector<20x128xbf16>
    %cst_343 = arith.constant dense<0.000000e+00> : vector<20x128xf32>
    %696 = tpu.matmul %695, %694, %cst_343 {dimension_numbers = #tpu.dot_dimension_numbers<[1], [0], [0], [1], [0, 0, 1, 1], [], []>} : vector<20x128xbf16>, vector<128x128xbf16>, vector<20x128xf32> -> vector<20x128xf32>
    %c0_344 = arith.constant 0 : index
    %c0_345 = arith.constant 0 : index
    %697 = vector.load %arg29[%c0_344, %c0_345] : memref<20x128xf32, #tpu.memory_space<vmem>>, vector<20x128xf32>
    tpu.vector_store %arg29[%c0_344, %c0_345], %696 {strides = array<i32>} : memref<20x128xf32, #tpu.memory_space<vmem>>, vector<20x128xf32>,
    return
  }
}

</mosaic_0001>

<llo_original>
// kernel: gnn_policy_forward.1
$region0: #{gnn_policy_forward.1}
  #allocation0 [shape = 'u32[]', space=smem, size = 0x4, offset = 0x4, fixed_abs, tag = 'smem constant byte address 0x4 - core index']
  #allocation1 [shape = 'u32[144,128]{1,0:T(1,128)}', space=vmem, size = 0x12000, scoped, tag = 'internal scratch']
  %s0 = inlined_call_operand.smem [shape: u32[30], index: -1, kind: input, shape index: {}]
  %s1 = sld [smem:[%s0]]
  %s2 = scalar_lea.smem %s0, 1
  %s3 = sld [smem:[%s2]]
  %s4 = scalar_lea.smem %s0, 2
  %s5 = sld [smem:[%s4]]
  %s6 = scalar_lea.smem %s0, 3
  %s7 = sld [smem:[%s6]]
  %s8 = scalar_lea.smem %s0, 4
  %s9 = sld [smem:[%s8]]
  %s10 = scalar_lea.smem %s0, 5
  %s11 = sld [smem:[%s10]]
  %s12 = scalar_lea.smem %s0, 6
  %s13 = sld [smem:[%s12]]
  %s14 = scalar_lea.smem %s0, 7
  %s15 = sld [smem:[%s14]]
  %s16 = scalar_lea.smem %s0, 8
  %s17 = sld [smem:[%s16]]
  %s18 = scalar_lea.smem %s0, 9
  %s19 = sld [smem:[%s18]]
  %s20 = scalar_lea.smem %s0, 10
  %s21 = sld [smem:[%s20]]
  %s22 = scalar_lea.smem %s0, 11
  %s23 = sld [smem:[%s22]]
  %s24 = scalar_lea.smem %s0, 12
  %s25 = sld [smem:[%s24]]
  %s26 = scalar_lea.smem %s0, 13
  %s27 = sld [smem:[%s26]]
  %s28 = scalar_lea.smem %s0, 14
  %s29 = sld [smem:[%s28]]
  %s30 = scalar_lea.smem %s0, 15
  %s31 = sld [smem:[%s30]]
  %s32 = scalar_lea.smem %s0, 16
  %s33 = sld [smem:[%s32]]
  %s34 = scalar_lea.smem %s0, 17
  %s35 = sld [smem:[%s34]]
  %s36 = scalar_lea.smem %s0, 18
  %s37 = sld [smem:[%s36]]
  %s38 = scalar_lea.smem %s0, 19
  %s39 = sld [smem:[%s38]]
  %s40 = scalar_lea.smem %s0, 20
  %s41 = sld [smem:[%s40]]
  %s42 = scalar_lea.smem %s0, 21
  %s43 = sld [smem:[%s42]]
  %s44 = scalar_lea.smem %s0, 22
  %s45 = sld [smem:[%s44]]
  %s46 = scalar_lea.smem %s0, 23
  %s47 = sld [smem:[%s46]]
  %s48 = scalar_lea.smem %s0, 24
  %s49 = sld [smem:[%s48]]
  %s50 = scalar_lea.smem %s0, 25
  %s51 = sld [smem:[%s50]]
  %s52 = scalar_lea.smem %s0, 26
  %s53 = sld [smem:[%s52]]
  %s54 = scalar_lea.smem %s0, 27
  %s55 = sld [smem:[%s54]]
  %s56 = scalar_lea.smem %s0, 28
  %s57 = sld [smem:[%s56]]
  %s58 = scalar_lea.smem %s0, 29
  %s59 = sld [smem:[%s58]]
  %s60 = sld [smem:[#allocation0]]
  $region126: #{gnn_policy_forward.1} parent=0
    _
  %s62 = ssub.s32 1, %s60
  %s63 = scalar_select 0, %s62, %s60
  // Predicated region
  $region2: #{gnn_policy_forward.1} parent=0 // pred_check
    _
  $region3: #{gnn_policy_forward.1} parent=0 // pred_check_branch
    %65 = sbr.rel (0) target = $region5
  $region4: #{gnn_policy_forward.1} parent=0 // pred_region
    _
  $region5: #{gnn_policy_forward.1} parent=0 // pred_fallthru
    _
  // Predicated region
  $region6: #{gnn_policy_forward.1} parent=0 // pred_check
    _
  $region7: #{gnn_policy_forward.1} parent=0 // pred_check_branch
    %67 = sbr.rel (0) target = $region9
  $region8: #{gnn_policy_forward.1} parent=0 // pred_region
    _
  $region9: #{gnn_policy_forward.1} parent=0 // pred_fallthru
    _
  // Predicated region
  $region10: #{gnn_policy_forward.1} parent=0 // pred_check
    _
  $region11: #{gnn_policy_forward.1} parent=0 // pred_check_branch
    %69 = sbr.rel (0) target = $region13
  $region12: #{gnn_policy_forward.1} parent=0 // pred_region
    _
  $region13: #{gnn_policy_forward.1} parent=0 // pred_fallthru
    _
  // Predicated region
  $region14: #{gnn_policy_forward.1} parent=0 // pred_check
    _
  $region15: #{gnn_policy_forward.1} parent=0 // pred_check_branch
    %71 = sbr.rel (0) target = $region17
  $region16: #{gnn_policy_forward.1} parent=0 // pred_region
    _
  $region17: #{gnn_policy_forward.1} parent=0 // pred_fallthru
    _
  // Predicated region
  $region18: #{gnn_policy_forward.1} parent=0 // pred_check
    _
  $region19: #{gnn_policy_forward.1} parent=0 // pred_check_branch
    %73 = sbr.rel (0) target = $region21
  $region20: #{gnn_policy_forward.1} parent=0 // pred_region
    _
  $region21: #{gnn_policy_forward.1} parent=0 // pred_fallthru
    _
  // Predicated region
  $region22: #{gnn_policy_forward.1} parent=0 // pred_check
    _
  $region23: #{gnn_policy_forward.1} parent=0 // pred_check_branch
    %75 = sbr.rel (0) target = $region25
  $region24: #{gnn_policy_forward.1} parent=0 // pred_region
    _
  $region25: #{gnn_policy_forward.1} parent=0 // pred_fallthru
    _
  // Predicated region
  $region26: #{gnn_policy_forward.1} parent=0 // pred_check
    _
  $region27: #{gnn_policy_forward.1} parent=0 // pred_check_branch
    %77 = sbr.rel (0) target = $region29
  $region28: #{gnn_policy_forward.1} parent=0 // pred_region
    _
  $region29: #{gnn_policy_forward.1} parent=0 // pred_fallthru
    _
  // Predicated region
  $region30: #{gnn_policy_forward.1} parent=0 // pred_check
    _
  $region31: #{gnn_policy_forward.1} parent=0 // pred_check_branch
    %79 = sbr.rel (0) target = $region33
  $region32: #{gnn_policy_forward.1} parent=0 // pred_region
    _
  $region33: #{gnn_policy_forward.1} parent=0 // pred_fallthru
    _
  // Predicated region
  $region34: #{gnn_policy_forward.1} parent=0 // pred_check
    _
  $region35: #{gnn_policy_forward.1} parent=0 // pred_check_branch
    %81 = sbr.rel (0) target = $region37
  $region36: #{gnn_policy_forward.1} parent=0 // pred_region
    _
  $region37: #{gnn_policy_forward.1} parent=0 // pred_fallthru
    _
  // Predicated region
  $region38: #{gnn_policy_forward.1} parent=0 // pred_check
    _
  $region39: #{gnn_policy_forward.1} parent=0 // pred_check_branch
    %83 = sbr.rel (0) target = $region41
  $region40: #{gnn_policy_forward.1} parent=0 // pred_region
    _
  $region41: #{gnn_policy_forward.1} parent=0 // pred_fallthru
    _
  // Predicated region
  $region42: #{gnn_policy_forward.1} parent=0 // pred_check
    _
  $region43: #{gnn_policy_forward.1} parent=0 // pred_check_branch
    %85 = sbr.rel (0) target = $region45
  $region44: #{gnn_policy_forward.1} parent=0 // pred_region
    _
  $region45: #{gnn_policy_forward.1} parent=0 // pred_fallthru
    _
  // Predicated region
  $region46: #{gnn_policy_forward.1} parent=0 // pred_check
    _
  $region47: #{gnn_policy_forward.1} parent=0 // pred_check_branch
    %87 = sbr.rel (0) target = $region49
  $region48: #{gnn_policy_forward.1} parent=0 // pred_region
    _
  $region49: #{gnn_policy_forward.1} parent=0 // pred_fallthru
    _
  // Predicated region
  $region50: #{gnn_policy_forward.1} parent=0 // pred_check
    _
  $region51: #{gnn_policy_forward.1} parent=0 // pred_check_branch
    %89 = sbr.rel (0) target = $region53
  $region52: #{gnn_policy_forward.1} parent=0 // pred_region
    _
  $region53: #{gnn_policy_forward.1} parent=0 // pred_fallthru
    _
  // Predicated region
  $region54: #{gnn_policy_forward.1} parent=0 // pred_check
    _
  $region55: #{gnn_policy_forward.1} parent=0 // pred_check_branch
    %91 = sbr.rel (0) target = $region57
  $region56: #{gnn_policy_forward.1} parent=0 // pred_region
    _
  $region57: #{gnn_policy_forward.1} parent=0 // pred_fallthru
    _
  // Predicated region
  $region58: #{gnn_policy_forward.1} parent=0 // pred_check
    _
  $region59: #{gnn_policy_forward.1} parent=0 // pred_check_branch
    %93 = sbr.rel (0) target = $region61
  $region60: #{gnn_policy_forward.1} parent=0 // pred_region
    _
  $region61: #{gnn_policy_forward.1} parent=0 // pred_fallthru
    _
  // Predicated region
  $region62: #{gnn_policy_forward.1} parent=0 // pred_check
    _
  $region63: #{gnn_policy_forward.1} parent=0 // pred_check_branch
    %95 = sbr.rel (0) target = $region65
  $region64: #{gnn_policy_forward.1} parent=0 // pred_region
    _
  $region65: #{gnn_policy_forward.1} parent=0 // pred_fallthru
    _
  // Predicated region
  $region66: #{gnn_policy_forward.1} parent=0 // pred_check
    _
  $region67: #{gnn_policy_forward.1} parent=0 // pred_check_branch
    %97 = sbr.rel (0) target = $region69
  $region68: #{gnn_policy_forward.1} parent=0 // pred_region
    _
  $region69: #{gnn_policy_forward.1} parent=0 // pred_fallthru
    _
  // Predicated region
  $region70: #{gnn_policy_forward.1} parent=0 // pred_check
    _
  $region71: #{gnn_policy_forward.1} parent=0 // pred_check_branch
    %99 = sbr.rel (0) target = $region73
  $region72: #{gnn_policy_forward.1} parent=0 // pred_region
    _
  $region73: #{gnn_policy_forward.1} parent=0 // pred_fallthru
    _
  // Predicated region
  $region74: #{gnn_policy_forward.1} parent=0 // pred_check
    _
  $region75: #{gnn_policy_forward.1} parent=0 // pred_check_branch
    %101 = sbr.rel (0) target = $region77
  $region76: #{gnn_policy_forward.1} parent=0 // pred_region
    _
  $region77: #{gnn_policy_forward.1} parent=0 // pred_fallthru
    _
  // Predicated region
  $region78: #{gnn_policy_forward.1} parent=0 // pred_check
    _
  $region79: #{gnn_policy_forward.1} parent=0 // pred_check_branch
    %103 = sbr.rel (0) target = $region81
  $region80: #{gnn_policy_forward.1} parent=0 // pred_region
    _
  $region81: #{gnn_policy_forward.1} parent=0 // pred_fallthru
    _
  // Predicated region
  $region82: #{gnn_policy_forward.1} parent=0 // pred_check
    _
  $region83: #{gnn_policy_forward.1} parent=0 // pred_check_branch
    %105 = sbr.rel (0) target = $region85
  $region84: #{gnn_policy_forward.1} parent=0 // pred_region
    _
  $region85: #{gnn_policy_forward.1} parent=0 // pred_fallthru
    _
  // Predicated region
  $region86: #{gnn_policy_forward.1} parent=0 // pred_check
    _
  $region87: #{gnn_policy_forward.1} parent=0 // pred_check_branch
    %107 = sbr.rel (0) target = $region89
  $region88: #{gnn_policy_forward.1} parent=0 // pred_region
    _
  $region89: #{gnn_policy_forward.1} parent=0 // pred_fallthru
    _
  // Predicated region
  $region90: #{gnn_policy_forward.1} parent=0 // pred_check
    _
  $region91: #{gnn_policy_forward.1} parent=0 // pred_check_branch
    %109 = sbr.rel (0) target = $region93
  $region92: #{gnn_policy_forward.1} parent=0 // pred_region
    _
  $region93: #{gnn_policy_forward.1} parent=0 // pred_fallthru
    _
  // Predicated region
  $region94: #{gnn_policy_forward.1} parent=0 // pred_check
    _
  $region95: #{gnn_policy_forward.1} parent=0 // pred_check_branch
    %111 = sbr.rel (0) target = $region97
  $region96: #{gnn_policy_forward.1} parent=0 // pred_region
    _
  $region97: #{gnn_policy_forward.1} parent=0 // pred_fallthru
    _
  // Predicated region
  $region98: #{gnn_policy_forward.1} parent=0 // pred_check
    _
  $region99: #{gnn_policy_forward.1} parent=0 // pred_check_branch
    %113 = sbr.rel (0) target = $region101
  $region100: #{gnn_policy_forward.1} parent=0 // pred_region
    _
  $region101: #{gnn_policy_forward.1} parent=0 // pred_fallthru
    _
  // Predicated region
  $region102: #{gnn_policy_forward.1} parent=0 // pred_check
    _
  $region103: #{gnn_policy_forward.1} parent=0 // pred_check_branch
    %115 = sbr.rel (0) target = $region105
  $region104: #{gnn_policy_forward.1} parent=0 // pred_region
    _
  $region105: #{gnn_policy_forward.1} parent=0 // pred_fallthru
    _
  // Predicated region
  $region106: #{gnn_policy_forward.1} parent=0 // pred_check
    _
  $region107: #{gnn_policy_forward.1} parent=0 // pred_check_branch
    %117 = sbr.rel (0) target = $region109
  $region108: #{gnn_policy_forward.1} parent=0 // pred_region
    _
  $region109: #{gnn_policy_forward.1} parent=0 // pred_fallthru
    _
  // Predicated region
  $region110: #{gnn_policy_forward.1} parent=0 // pred_check
    _
  $region111: #{gnn_policy_forward.1} parent=0 // pred_check_branch
    %119 = sbr.rel (0) target = $region113
  $region112: #{gnn_policy_forward.1} parent=0 // pred_region
    _
  $region113: #{gnn_policy_forward.1} parent=0 // pred_fallthru
    _
  // Predicated region
  $region114: #{gnn_policy_forward.1} parent=0 // pred_check
    _
  $region115: #{gnn_policy_forward.1} parent=0 // pred_check_branch
    %121 = sbr.rel (0) target = $region117
  $region116: #{gnn_policy_forward.1} parent=0 // pred_region
    _
  $region117: #{gnn_policy_forward.1} parent=0 // pred_fallthru
    _
  %v123 = vld [vmem:[%s5] sm:$0x1]
  %v124 = vld [vmem:[%s7] sm:$0x1]
  %v125 = vlaneseq
  %v126 = vshrl.u32 %v125, 7
  %v127 = vadd.s32 %v126, 8
  %v128 = vlaneseq
  %v129 = vshrl.u32 %v128, 7
  %v130 = vsub.s32 0, %v129
  %v131 = vrot.slane %v123, %v130
  %vm132 = vcmp.eq.s32.totalorder %v126, %v131
  %vm133 = vcmp.eq.s32.totalorder %v127, %v131
  %v134 = vsel %vm132, 1, 0
  %v135 = vsel %vm133, 1, 0
  %v136 = vcvt.s32.f32 %v134
  %v137 = vcvt.s32.f32 %v135
  %v138 = vpack.c.bf16 %v137, %v136
  %v139 = vadd.s32 %v126, 16
  %v140 = vlaneseq
  %v141 = vshrl.u32 %v140, 7
  %v142 = vsub.s32 0, %v141
  %v143 = vrot.slane %v124, %v142
  %vm144 = vcmp.eq.s32.totalorder %v126, %v143
  %vm145 = vcmp.eq.s32.totalorder %v127, %v143
  %vm146 = vcmp.eq.s32.totalorder %v139, %v143
  %v147 = vsel %vm144, 1, 0
  %v148 = vsel %vm145, 1, 0
  %v149 = vsel %vm146, 1, 0
  %v150 = vcvt.s32.f32 %v147
  %v151 = vcvt.s32.f32 %v148
  %v152 = vcvt.s32.f32 %v149
  %v153 = vpack.c.bf16 %v151, %v150
  %v154 = vpack.c.bf16 %v152, %v152
  %v155 = vld [vmem:[%s1] sm:$0xff]
  %v156 = vld [vmem:[%s1 + $0x8] sm:$0xf]
  %v157 = vld [vmem:[%s9] sm:$0x1]
  %v158 = vld [vmem:[%s11] sm:$0x1]
  %v159 = vld [vmem:[%s13] sm:$0x3]
  %v160 = vld [vmem:[%s15] sm:$0x1]
  %v161 = vld [vmem:[%s17] sm:$0xf]
  %v162 = vld [vmem:[%s17 + $0x4] sm:$0xf]
  %v163 = vld [vmem:[%s17 + $0x8] sm:$0xf]
  %v164 = vld [vmem:[%s17 + $0xc] sm:$0xf]
  %v165 = vld [vmem:[%s17 + $0x10] sm:$0xf]
  %v166 = vld [vmem:[%s17 + $0x14] sm:$0xf]
  %v167 = vld [vmem:[%s17 + $0x18] sm:$0xf]
  %v168 = vld [vmem:[%s17 + $0x1c] sm:$0xf]
  %v169 = vld [vmem:[%s19] sm:$0x1]
  %vm170 = vcmask 15360
  %v171 = vsel %vm170, %v155, 0.0
  %172 = vadd.xlane.f32.xlu0 %v171
  %v173 = vpop.xlane.xlu0 %172
  %vm174 = vcmask 11264
  %v175 = vsel %vm174, %v156, 0.0
  %176 = vadd.xlane.f32.xlu0 %v175
  %v177 = vpop.xlane.xlu0 %176
  %v178 = vrcp.pop 2.0
  %v179 = vmul.f32 %v173, %v178
  %v180 = vmul.f32 %v177, %v178
  %v181 = vsub.f32 %v155, %v179
  %v182 = vsub.f32 %v156, %v180
  %v183 = vmul.f32 %v181, %v181
  %v184 = vmul.f32 %v182, %v182
  %v185 = vsel %vm170, %v183, 0.0
  %186 = vadd.xlane.f32.xlu0 %v185
  %v187 = vpop.xlane.xlu0 %186
  %v188 = vsel %vm174, %v184, 0.0
  %189 = vadd.xlane.f32.xlu0 %v188
  %v190 = vpop.xlane.xlu0 %189
  %v191 = vmul.f32 %v187, %v178
  %v192 = vmul.f32 %v190, %v178
  %v193 = vadd.f32 %v191, 1e-05
  %v194 = vadd.f32 %v192, 1e-05
  %v195 = vrsqrt.pop %v193
  %v196 = vrsqrt.pop %v194
  %v197 = vmul.f32 %v181, %v195
  %v198 = vmul.f32 %v182, %v196
  %v200 = vlaneseq
  %v201 = vshrl.u32 %v200, 7
  %v202 = vsub.s32 0, %v201
  %v203 = vrot.slane %v157, %v202
  %v205 = vmul.f32 %v197, %v203
  %v206 = vmul.f32 %v198, %v203
  %v208 = vlaneseq
  %v209 = vshrl.u32 %v208, 7
  %v210 = vsub.s32 0, %v209
  %v211 = vrot.slane %v158, %v210
  %v213 = vadd.f32 %v205, %v211
  %v214 = vadd.f32 %v206, %v211
  %216 = vset.pattern.permute.xlu0 0
  %217 = vperm.xlu0 %216, %v213
  %v218 = vpop.permute.xlu0 %217
  %221 = vset.pattern.permute.xlu0 0
  %222 = vperm.xlu0 %221, %v214
  %v223 = vpop.permute.xlu0 %222
  %v225 = vlaneseq
  %v226 = vshrl.u32 %v225, 7
  %v227 = vsub.s32 0, %v226
  %v228 = vrot.slane %v159, %v227
  %v229 = vmul.f32 %v218, %v228
  %v230 = vmul.f32 %v223, %v228
  %231 = vset.pattern.permute.xlu0 1
  %232 = vperm.xlu0 %231, %v213
  %v233 = vpop.permute.xlu0 %232
  %235 = vset.pattern.permute.xlu0 1
  %236 = vperm.xlu0 %235, %v214
  %v237 = vpop.permute.xlu0 %236
  %v239 = vlaneseq
  %v240 = vshrl.u32 %v239, 7
  %v241 = vsub.s32 1, %v240
  %v242 = vrot.slane %v159, %v241
  %v243 = vmul.f32 %v233, %v242
  %v244 = vmul.f32 %v237, %v242
  %v245 = vadd.f32 %v229, %v243
  %v246 = vadd.f32 %v230, %v244
  %v248 = vlaneseq
  %v249 = vshrl.u32 %v248, 7
  %v250 = vsub.s32 0, %v249
  %v251 = vrot.slane %v160, %v250
  %v253 = vadd.f32 %v245, %v251
  %v254 = vadd.f32 %v246, %v251
  %v255 = vmax.f32 %v253, 0.0
  %v256 = vmax.f32 %v254, 0.0
  %v257 = vpack.c.bf16 %v256, %v255
  %v259 = vlaneseq
  %v260 = vshrl.u32 %v259, 7
  %v261 = vsub.s32 0, %v260
  %v262 = vrot.slane %v169, %v261
  %v272 = vunpack.c.l.b16 %v161
  %v273 = vunpack.c.l.b16 %v162
  %v274 = vunpack.c.l.b16 %v163
  %v275 = vunpack.c.l.b16 %v164
  %v276 = vunpack.c.l.b16 %v165
  %v277 = vunpack.c.l.b16 %v166
  %v278 = vunpack.c.l.b16 %v167
  %v279 = vunpack.c.l.b16 %v168
  %v280 = vpack.c.b16 %v273, %v272
  %v281 = vpack.c.b16 %v275, %v274
  %v282 = vpack.c.b16 %v277, %v276
  %v283 = vpack.c.b16 %v279, %v278
  %vm288 = vcmask 523264
  %v290 = vsel %vm288, %v257, 0
  %292 = vmatprep.subr.bf16.mxu0 0
  %293 = vmatpush1.bf16.msra.mxu0 %v280
  %294 = vmatprep.subr.bf16.mxu0 0
  %295 = vmatpush1.bf16.msra.mxu0 %v281
  %296 = vmatprep.subr.bf16.mxu0 0
  %297 = vmatpush1.bf16.msra.mxu0 %v282
  %298 = vmatprep.subr.bf16.mxu0 0
  %299 = vmatpush1.bf16.msra.mxu0 %v283
  %300 = vmatprep.subr.bf16.mxu0 0
  %301 = vmatpush1.bf16.msra.mxu0 0
  %302 = vmatprep.subr.bf16.mxu0 0
  %303 = vmatpush1.bf16.msra.mxu0 0
  %304 = vmatprep.subr.bf16.mxu0 0
  %305 = vmatpush1.bf16.msra.mxu0 0
  %306 = vmatprep.subr.bf16.mxu0 0
  %307 = vmatpush1.bf16.msra.mxu0 0
  %308 = vmatprep.subr.bf16.mxu0 0
  %309 = vmatpush1.bf16.msra.mxu0 0
  %310 = vmatprep.subr.bf16.mxu0 0
  %311 = vmatpush1.bf16.msra.mxu0 0
  %312 = vmatprep.subr.bf16.mxu0 0
  %313 = vmatpush1.bf16.msra.mxu0 0
  %314 = vmatprep.subr.bf16.mxu0 0
  %315 = vmatpush1.bf16.msra.mxu0 0
  %316 = vmatprep.subr.bf16.mxu0 0
  %317 = vmatpush1.bf16.msra.mxu0 0
  %318 = vmatprep.subr.bf16.mxu0 0
  %319 = vmatpush1.bf16.msra.mxu0 0
  %320 = vmatprep.subr.bf16.mxu0 0
  %321 = vmatpush1.bf16.msra.mxu0 0
  %322 = vmatprep.subr.bf16.mxu0 0
  %323 = vmatpush1.bf16.msra.mxu0 0
  %324 = vmatprep.mubr.bf16.mxu0 0
  %325 = vmatmul.mubr.bf16.gmra.mrb[0].mxu0 %v290
  %v326 = vpop.f32.mrb[0].mxu0
  %v327 = vadd.f32 %v262, %v326
  %v328 = vpop.f32.mrb[0].mxu0
  %v329 = vpop.f32.mrb[0].mxu0
  %v330 = vadd.f32 %v262, %v329
  %v331 = vpop.f32.mrb[0].mxu0
  %332 = vdwg.mxu0
  %v333 = vmax.f32 %v327, 0.0
  %v334 = vmax.f32 %v330, 0.0
  %v335 = vld [vmem:[%s3] sm:$0xff]
  %v336 = vld [vmem:[%s3 + $0x8] sm:$0xff]
  %v337 = vld [vmem:[%s3 + $0x10] sm:$0xf]
  %v338 = vld [vmem:[%s21] sm:$0x1]
  %v339 = vld [vmem:[%s23] sm:$0x1]
  %v340 = vld [vmem:[%s25] sm:$0x3f]
  %v341 = vld [vmem:[%s27] sm:$0x1]
  %v342 = vld [vmem:[%s29] sm:$0xf]
  %v343 = vld [vmem:[%s29 + $0x4] sm:$0xf]
  %v344 = vld [vmem:[%s29 + $0x8] sm:$0xf]
  %v345 = vld [vmem:[%s29 + $0xc] sm:$0xf]
  %v346 = vld [vmem:[%s29 + $0x10] sm:$0xf]
  %v347 = vld [vmem:[%s29 + $0x14] sm:$0xf]
  %v348 = vld [vmem:[%s29 + $0x18] sm:$0xf]
  %v349 = vld [vmem:[%s29 + $0x1c] sm:$0xf]
  %v350 = vld [vmem:[%s31] sm:$0x1]
  %vm351 = vcmask 48128
  %v352 = vsel %vm351, %v335, 0.0
  %353 = vadd.xlane.f32.xlu0 %v352
  %v354 = vpop.xlane.xlu0 %353
  %v355 = vsel %vm351, %v336, 0.0
  %356 = vadd.xlane.f32.xlu0 %v355
  %v357 = vpop.xlane.xlu0 %356
  %vm358 = vcmask 44032
  %v359 = vsel %vm358, %v337, 0.0
  %360 = vadd.xlane.f32.xlu0 %v359
  %v361 = vpop.xlane.xlu0 %360
  %v362 = vrcp.pop 6.0
  %v363 = vmul.f32 %v354, %v362
  %v364 = vmul.f32 %v357, %v362
  %v365 = vmul.f32 %v361, %v362
  %v366 = vsub.f32 %v335, %v363
  %v367 = vsub.f32 %v336, %v364
  %v368 = vsub.f32 %v337, %v365
  %v369 = vmul.f32 %v366, %v366
  %v370 = vmul.f32 %v367, %v367
  %v371 = vmul.f32 %v368, %v368
  %v372 = vsel %vm351, %v369, 0.0
  %373 = vadd.xlane.f32.xlu0 %v372
  %v374 = vpop.xlane.xlu0 %373
  %v375 = vsel %vm351, %v370, 0.0
  %376 = vadd.xlane.f32.xlu0 %v375
  %v377 = vpop.xlane.xlu0 %376
  %v378 = vsel %vm358, %v371, 0.0
  %379 = vadd.xlane.f32.xlu0 %v378
  %v380 = vpop.xlane.xlu0 %379
  %v381 = vmul.f32 %v374, %v362
  %v382 = vmul.f32 %v377, %v362
  %v383 = vmul.f32 %v380, %v362
  %v384 = vadd.f32 %v381, 1e-05
  %v385 = vadd.f32 %v382, 1e-05
  %v386 = vadd.f32 %v383, 1e-05
  %v387 = vrsqrt.pop %v384
  %v388 = vrsqrt.pop %v385
  %v389 = vrsqrt.pop %v386
  %v390 = vmul.f32 %v366, %v387
  %v391 = vmul.f32 %v367, %v388
  %v392 = vmul.f32 %v368, %v389
  %v394 = vlaneseq
  %v395 = vshrl.u32 %v394, 7
  %v396 = vsub.s32 0, %v395
  %v397 = vrot.slane %v338, %v396
  %v399 = vmul.f32 %v390, %v397
  %v400 = vmul.f32 %v391, %v397
  %v401 = vmul.f32 %v392, %v397
  %v403 = vlaneseq
  %v404 = vshrl.u32 %v403, 7
  %v405 = vsub.s32 0, %v404
  %v406 = vrot.slane %v339, %v405
  %v408 = vadd.f32 %v399, %v406
  %v409 = vadd.f32 %v400, %v406
  %v410 = vadd.f32 %v401, %v406
  %412 = vset.pattern.permute.xlu0 0
  %413 = vperm.xlu0 %412, %v408
  %v414 = vpop.permute.xlu0 %413
  %417 = vset.pattern.permute.xlu0 0
  %418 = vperm.xlu0 %417, %v409
  %v419 = vpop.permute.xlu0 %418
  %422 = vset.pattern.permute.xlu0 0
  %423 = vperm.xlu0 %422, %v410
  %v424 = vpop.permute.xlu0 %423
  %v426 = vlaneseq
  %v427 = vshrl.u32 %v426, 7
  %v428 = vsub.s32 0, %v427
  %v429 = vrot.slane %v340, %v428
  %v430 = vmul.f32 %v414, %v429
  %v431 = vmul.f32 %v419, %v429
  %v432 = vmul.f32 %v424, %v429
  %433 = vset.pattern.permute.xlu0 1
  %434 = vperm.xlu0 %433, %v408
  %v435 = vpop.permute.xlu0 %434
  %437 = vset.pattern.permute.xlu0 1
  %438 = vperm.xlu0 %437, %v409
  %v439 = vpop.permute.xlu0 %438
  %441 = vset.pattern.permute.xlu0 1
  %442 = vperm.xlu0 %441, %v410
  %v443 = vpop.permute.xlu0 %442
  %v445 = vlaneseq
  %v446 = vshrl.u32 %v445, 7
  %v447 = vsub.s32 1, %v446
  %v448 = vrot.slane %v340, %v447
  %v449 = vmul.f32 %v435, %v448
  %v450 = vmul.f32 %v439, %v448
  %v451 = vmul.f32 %v443, %v448
  %v452 = vadd.f32 %v430, %v449
  %v453 = vadd.f32 %v431, %v450
  %v454 = vadd.f32 %v432, %v451
  %455 = vset.pattern.permute.xlu0 2
  %456 = vperm.xlu0 %455, %v408
  %v457 = vpop.permute.xlu0 %456
  %459 = vset.pattern.permute.xlu0 2
  %460 = vperm.xlu0 %459, %v409
  %v461 = vpop.permute.xlu0 %460
  %463 = vset.pattern.permute.xlu0 2
  %464 = vperm.xlu0 %463, %v410
  %v465 = vpop.permute.xlu0 %464
  %v467 = vlaneseq
  %v468 = vshrl.u32 %v467, 7
  %v469 = vsub.s32 2, %v468
  %v470 = vrot.slane %v340, %v469
  %v471 = vmul.f32 %v457, %v470
  %v472 = vmul.f32 %v461, %v470
  %v473 = vmul.f32 %v465, %v470
  %v474 = vadd.f32 %v452, %v471
  %v475 = vadd.f32 %v453, %v472
  %v476 = vadd.f32 %v454, %v473
  %477 = vset.pattern.permute.xlu0 3
  %478 = vperm.xlu0 %477, %v408
  %v479 = vpop.permute.xlu0 %478
  %481 = vset.pattern.permute.xlu0 3
  %482 = vperm.xlu0 %481, %v409
  %v483 = vpop.permute.xlu0 %482
  %485 = vset.pattern.permute.xlu0 3
  %486 = vperm.xlu0 %485, %v410
  %v487 = vpop.permute.xlu0 %486
  %v489 = vlaneseq
  %v490 = vshrl.u32 %v489, 7
  %v491 = vsub.s32 3, %v490
  %v492 = vrot.slane %v340, %v491
  %v493 = vmul.f32 %v479, %v492
  %v494 = vmul.f32 %v483, %v492
  %v495 = vmul.f32 %v487, %v492
  %v496 = vadd.f32 %v474, %v493
  %v497 = vadd.f32 %v475, %v494
  %v498 = vadd.f32 %v476, %v495
  %499 = vset.pattern.permute.xlu0 4
  %500 = vperm.xlu0 %499, %v408
  %v501 = vpop.permute.xlu0 %500
  %503 = vset.pattern.permute.xlu0 4
  %504 = vperm.xlu0 %503, %v409
  %v505 = vpop.permute.xlu0 %504
  %507 = vset.pattern.permute.xlu0 4
  %508 = vperm.xlu0 %507, %v410
  %v509 = vpop.permute.xlu0 %508
  %v511 = vlaneseq
  %v512 = vshrl.u32 %v511, 7
  %v513 = vsub.s32 4, %v512
  %v514 = vrot.slane %v340, %v513
  %v515 = vmul.f32 %v501, %v514
  %v516 = vmul.f32 %v505, %v514
  %v517 = vmul.f32 %v509, %v514
  %v518 = vadd.f32 %v496, %v515
  %v519 = vadd.f32 %v497, %v516
  %v520 = vadd.f32 %v498, %v517
  %521 = vset.pattern.permute.xlu0 5
  %522 = vperm.xlu0 %521, %v408
  %v523 = vpop.permute.xlu0 %522
  %525 = vset.pattern.permute.xlu0 5
  %526 = vperm.xlu0 %525, %v409
  %v527 = vpop.permute.xlu0 %526
  %529 = vset.pattern.permute.xlu0 5
  %530 = vperm.xlu0 %529, %v410
  %v531 = vpop.permute.xlu0 %530
  %v533 = vlaneseq
  %v534 = vshrl.u32 %v533, 7
  %v535 = vsub.s32 5, %v534
  %v536 = vrot.slane %v340, %v535
  %v537 = vmul.f32 %v523, %v536
  %v538 = vmul.f32 %v527, %v536
  %v539 = vmul.f32 %v531, %v536
  %v540 = vadd.f32 %v518, %v537
  %v541 = vadd.f32 %v519, %v538
  %v542 = vadd.f32 %v520, %v539
  %v544 = vlaneseq
  %v545 = vshrl.u32 %v544, 7
  %v546 = vsub.s32 0, %v545
  %v547 = vrot.slane %v341, %v546
  %v549 = vadd.f32 %v540, %v547
  %v550 = vadd.f32 %v541, %v547
  %v551 = vadd.f32 %v542, %v547
  %v552 = vmax.f32 %v549, 0.0
  %v553 = vmax.f32 %v550, 0.0
  %v554 = vmax.f32 %v551, 0.0
  %v555 = vpack.c.bf16 %v553, %v552
  %v556 = vpack.c.bf16 %v554, %v554
  %v558 = vlaneseq
  %v559 = vshrl.u32 %v558, 7
  %v560 = vsub.s32 0, %v559
  %v561 = vrot.slane %v350, %v560
  %v571 = vunpack.c.l.b16 %v342
  %v572 = vunpack.c.l.b16 %v343
  %v573 = vunpack.c.l.b16 %v344
  %v574 = vunpack.c.l.b16 %v345
  %v575 = vunpack.c.l.b16 %v346
  %v576 = vunpack.c.l.b16 %v347
  %v577 = vunpack.c.l.b16 %v348
  %v578 = vunpack.c.l.b16 %v349
  %v579 = vpack.c.b16 %v572, %v571
  %v580 = vpack.c.b16 %v574, %v573
  %v581 = vpack.c.b16 %v576, %v575
  %v582 = vpack.c.b16 %v578, %v577
  %v588 = vsel %vm288, %v555, 0
  %v591 = vsel %vm288, %v556, 0
  %593 = vmatprep.subr.bf16.mxu0 0
  %594 = vmatpush1.bf16.msra.mxu0 %v579
  %595 = vmatprep.subr.bf16.mxu0 0
  %596 = vmatpush1.bf16.msra.mxu0 %v580
  %597 = vmatprep.subr.bf16.mxu0 0
  %598 = vmatpush1.bf16.msra.mxu0 %v581
  %599 = vmatprep.subr.bf16.mxu0 0
  %600 = vmatpush1.bf16.msra.mxu0 %v582
  %601 = vmatprep.subr.bf16.mxu0 0
  %602 = vmatpush1.bf16.msra.mxu0 0
  %603 = vmatprep.subr.bf16.mxu0 0
  %604 = vmatpush1.bf16.msra.mxu0 0
  %605 = vmatprep.subr.bf16.mxu0 0
  %606 = vmatpush1.bf16.msra.mxu0 0
  %607 = vmatprep.subr.bf16.mxu0 0
  %608 = vmatpush1.bf16.msra.mxu0 0
  %609 = vmatprep.subr.bf16.mxu0 0
  %610 = vmatpush1.bf16.msra.mxu0 0
  %611 = vmatprep.subr.bf16.mxu0 0
  %612 = vmatpush1.bf16.msra.mxu0 0
  %613 = vmatprep.subr.bf16.mxu0 0
  %614 = vmatpush1.bf16.msra.mxu0 0
  %615 = vmatprep.subr.bf16.mxu0 0
  %616 = vmatpush1.bf16.msra.mxu0 0
  %617 = vmatprep.subr.bf16.mxu0 0
  %618 = vmatpush1.bf16.msra.mxu0 0
  %619 = vmatprep.subr.bf16.mxu0 0
  %620 = vmatpush1.bf16.msra.mxu0 0
  %621 = vmatprep.subr.bf16.mxu0 0
  %622 = vmatpush1.bf16.msra.mxu0 0
  %623 = vmatprep.subr.bf16.mxu0 0
  %624 = vmatpush1.bf16.msra.mxu0 0
  %625 = vmatprep.mubr.bf16.mxu0 0
  %626 = vmatmul.mubr.bf16.gmra.mrb[0].mxu0 %v588
  %v627 = vpop.f32.mrb[0].mxu0
  %v628 = vadd.f32 %v561, %v627
  %v629 = vpop.f32.mrb[0].mxu0
  %v630 = vpop.f32.mrb[0].mxu0
  %v631 = vadd.f32 %v561, %v630
  %v632 = vpop.f32.mrb[0].mxu0
  %633 = vmatprep.mubr.bf16.mxu0 0
  %634 = vmatmul.mubr.bf16.gmra.mrb[0].mxu0 %v591
  %v635 = vpop.f32.mrb[0].mxu0
  %v636 = vadd.f32 %v561, %v635
  %v637 = vpop.f32.mrb[0].mxu0
  %v638 = vpop.f32.mrb[0].mxu0
  %v639 = vpop.f32.mrb[0].mxu0
  %640 = vdwg.mxu0
  %v641 = vmax.f32 %v628, 0.0
  %v642 = vmax.f32 %v631, 0.0
  %v643 = vmax.f32 %v636, 0.0
  %v644 = vld [vmem:[%s37] sm:$0xf]
  %v645 = vld [vmem:[%s37 + $0x4] sm:$0xf]
  %v646 = vld [vmem:[%s37 + $0x8] sm:$0xf]
  %v647 = vld [vmem:[%s37 + $0xc] sm:$0xf]
  %v648 = vld [vmem:[%s37 + $0x10] sm:$0xf]
  %v649 = vld [vmem:[%s37 + $0x14] sm:$0xf]
  %v650 = vld [vmem:[%s37 + $0x18] sm:$0xf]
  %v651 = vld [vmem:[%s37 + $0x1c] sm:$0xf]
  %s652 = scalar_lea.vmem %s37, 32
  %v653 = vld [vmem:[%s652] sm:$0xf]
  %v654 = vld [vmem:[%s652 + $0x4] sm:$0xf]
  %v655 = vld [vmem:[%s652 + $0x8] sm:$0xf]
  %v656 = vld [vmem:[%s652 + $0xc] sm:$0xf]
  %v657 = vld [vmem:[%s652 + $0x10] sm:$0xf]
  %v658 = vld [vmem:[%s652 + $0x14] sm:$0xf]
  %v659 = vld [vmem:[%s652 + $0x18] sm:$0xf]
  %v660 = vld [vmem:[%s652 + $0x1c] sm:$0xf]
  %s661 = scalar_lea.vmem %s37, 64
  %v662 = vld [vmem:[%s661] sm:$0xf]
  %v663 = vld [vmem:[%s661 + $0x4] sm:$0xf]
  %v664 = vld [vmem:[%s661 + $0x8] sm:$0xf]
  %v665 = vld [vmem:[%s661 + $0xc] sm:$0xf]
  %v666 = vld [vmem:[%s661 + $0x10] sm:$0xf]
  %v667 = vld [vmem:[%s661 + $0x14] sm:$0xf]
  %v668 = vld [vmem:[%s661 + $0x18] sm:$0xf]
  %v669 = vld [vmem:[%s661 + $0x1c] sm:$0xf]
  %s670 = scalar_lea.vmem %s37, 96
  %v671 = vld [vmem:[%s670] sm:$0xf]
  %v672 = vld [vmem:[%s670 + $0x4] sm:$0xf]
  %v673 = vld [vmem:[%s670 + $0x8] sm:$0xf]
  %v674 = vld [vmem:[%s670 + $0xc] sm:$0xf]
  %v675 = vld [vmem:[%s670 + $0x10] sm:$0xf]
  %v676 = vld [vmem:[%s670 + $0x14] sm:$0xf]
  %v677 = vld [vmem:[%s670 + $0x18] sm:$0xf]
  %v678 = vld [vmem:[%s670 + $0x1c] sm:$0xf]
  %v679 = vld [vmem:[%s39] sm:$0x1]
  %v680 = vld [vmem:[%s39 + $0x1] sm:$0x1]
  %v681 = vld [vmem:[%s39 + $0x2] sm:$0x1]
  %v682 = vld [vmem:[%s39 + $0x3] sm:$0x1]
  %v683 = vld [vmem:[%s39 + $0x4] sm:$0x1]
  %v684 = vld [vmem:[%s39 + $0x5] sm:$0x1]
  %v685 = vld [vmem:[%s33] sm:$0xf]
  %v686 = vld [vmem:[%s33 + $0x4] sm:$0xf]
  %v687 = vld [vmem:[%s33 + $0x8] sm:$0xf]
  %v688 = vld [vmem:[%s33 + $0xc] sm:$0xf]
  %v689 = vld [vmem:[%s33 + $0x10] sm:$0xf]
  %v690 = vld [vmem:[%s33 + $0x14] sm:$0xf]
  %v691 = vld [vmem:[%s33 + $0x18] sm:$0xf]
  %v692 = vld [vmem:[%s33 + $0x1c] sm:$0xf]
  %v693 = vpack.c.bf16 %v334, %v333
  %v694 = vld [vmem:[%s35] sm:$0x1]
  %v696 = vlaneseq
  %v697 = vshrl.u32 %v696, 7
  %v698 = vsub.s32 0, %v697
  %v699 = vrot.slane %v694, %v698
  %v709 = vunpack.c.l.b16 %v685
  %v710 = vunpack.c.l.b16 %v686
  %v711 = vunpack.c.l.b16 %v687
  %v712 = vunpack.c.l.b16 %v688
  %v713 = vunpack.c.l.b16 %v689
  %v714 = vunpack.c.l.b16 %v690
  %v715 = vunpack.c.l.b16 %v691
  %v716 = vunpack.c.l.b16 %v692
  %v717 = vpack.c.b16 %v710, %v709
  %v718 = vpack.c.b16 %v712, %v711
  %v719 = vpack.c.b16 %v714, %v713
  %v720 = vpack.c.b16 %v716, %v715
  %v726 = vsel %vm288, %v693, 0
  %728 = vmatprep.subr.bf16.mxu0 0
  %729 = vmatpush1.bf16.msra.mxu0 %v717
  %730 = vmatprep.subr.bf16.mxu0 0
  %731 = vmatpush1.bf16.msra.mxu0 %v718
  %732 = vmatprep.subr.bf16.mxu0 0
  %733 = vmatpush1.bf16.msra.mxu0 %v719
  %734 = vmatprep.subr.bf16.mxu0 0
  %735 = vmatpush1.bf16.msra.mxu0 %v720
  %736 = vmatprep.subr.bf16.mxu0 0
  %737 = vmatpush1.bf16.msra.mxu0 0
  %738 = vmatprep.subr.bf16.mxu0 0
  %739 = vmatpush1.bf16.msra.mxu0 0
  %740 = vmatprep.subr.bf16.mxu0 0
  %741 = vmatpush1.bf16.msra.mxu0 0
  %742 = vmatprep.subr.bf16.mxu0 0
  %743 = vmatpush1.bf16.msra.mxu0 0
  %744 = vmatprep.subr.bf16.mxu0 0
  %745 = vmatpush1.bf16.msra.mxu0 0
  %746 = vmatprep.subr.bf16.mxu0 0
  %747 = vmatpush1.bf16.msra.mxu0 0
  %748 = vmatprep.subr.bf16.mxu0 0
  %749 = vmatpush1.bf16.msra.mxu0 0
  %750 = vmatprep.subr.bf16.mxu0 0
  %751 = vmatpush1.bf16.msra.mxu0 0
  %752 = vmatprep.subr.bf16.mxu0 0
  %753 = vmatpush1.bf16.msra.mxu0 0
  %754 = vmatprep.subr.bf16.mxu0 0
  %755 = vmatpush1.bf16.msra.mxu0 0
  %756 = vmatprep.subr.bf16.mxu0 0
  %757 = vmatpush1.bf16.msra.mxu0 0
  %758 = vmatprep.subr.bf16.mxu0 0
  %759 = vmatpush1.bf16.msra.mxu0 0
  %760 = vmatprep.mubr.bf16.mxu0 0
  %761 = vmatmul.mubr.bf16.gmra.mrb[0].mxu0 %v726
  %v762 = vpop.f32.mrb[0].mxu0
  %v763 = vadd.f32 %v699, %v762
  %v764 = vpop.f32.mrb[0].mxu0
  %v765 = vpop.f32.mrb[0].mxu0
  %v766 = vadd.f32 %v699, %v765
  %v767 = vpop.f32.mrb[0].mxu0
  %768 = vdwg.mxu0
  %v769 = vpack.c.bf16 %v642, %v641
  %v770 = vpack.c.bf16 %v643, %v643
  %v779 = vunpack.c.l.b16 %v644
  %v780 = vunpack.c.l.b16 %v645
  %v781 = vunpack.c.l.b16 %v646
  %v782 = vunpack.c.l.b16 %v647
  %v783 = vunpack.c.l.b16 %v648
  %v784 = vunpack.c.l.b16 %v649
  %v785 = vunpack.c.l.b16 %v650
  %v786 = vunpack.c.l.b16 %v651
  %v787 = vpack.c.b16 %v780, %v779
  %v788 = vpack.c.b16 %v782, %v781
  %v789 = vpack.c.b16 %v784, %v783
  %v790 = vpack.c.b16 %v786, %v785
  %v796 = vsel %vm288, %v769, 0
  %v799 = vsel %vm288, %v770, 0
  %801 = vmatprep.subr.bf16.mxu0 0
  %802 = vmatpush1.bf16.msra.mxu0 %v787
  %803 = vmatprep.subr.bf16.mxu0 0
  %804 = vmatpush1.bf16.msra.mxu0 %v788
  %805 = vmatprep.subr.bf16.mxu0 0
  %806 = vmatpush1.bf16.msra.mxu0 %v789
  %807 = vmatprep.subr.bf16.mxu0 0
  %808 = vmatpush1.bf16.msra.mxu0 %v790
  %809 = vmatprep.subr.bf16.mxu0 0
  %810 = vmatpush1.bf16.msra.mxu0 0
  %811 = vmatprep.subr.bf16.mxu0 0
  %812 = vmatpush1.bf16.msra.mxu0 0
  %813 = vmatprep.subr.bf16.mxu0 0
  %814 = vmatpush1.bf16.msra.mxu0 0
  %815 = vmatprep.subr.bf16.mxu0 0
  %816 = vmatpush1.bf16.msra.mxu0 0
  %817 = vmatprep.subr.bf16.mxu0 0
  %818 = vmatpush1.bf16.msra.mxu0 0
  %819 = vmatprep.subr.bf16.mxu0 0
  %820 = vmatpush1.bf16.msra.mxu0 0
  %821 = vmatprep.subr.bf16.mxu0 0
  %822 = vmatpush1.bf16.msra.mxu0 0
  %823 = vmatprep.subr.bf16.mxu0 0
  %824 = vmatpush1.bf16.msra.mxu0 0
  %825 = vmatprep.subr.bf16.mxu0 0
  %826 = vmatpush1.bf16.msra.mxu0 0
  %827 = vmatprep.subr.bf16.mxu0 0
  %828 = vmatpush1.bf16.msra.mxu0 0
  %829 = vmatprep.subr.bf16.mxu0 0
  %830 = vmatpush1.bf16.msra.mxu0 0
  %831 = vmatprep.subr.bf16.mxu0 0
  %832 = vmatpush1.bf16.msra.mxu0 0
  %833 = vmatprep.mubr.bf16.mxu0 0
  %834 = vmatmul.mubr.bf16.gmra.mrb[0].mxu0 %v796
  %v835 = vpop.f32.mrb[0].mxu0
  %v836 = vadd.f32 0.0, %v835
  %v837 = vpop.f32.mrb[0].mxu0
  %v838 = vpop.f32.mrb[0].mxu0
  %v839 = vadd.f32 0.0, %v838
  %v840 = vpop.f32.mrb[0].mxu0
  %841 = vmatprep.mubr.bf16.mxu0 0
  %842 = vmatmul.mubr.bf16.gmra.mrb[0].mxu0 %v799
  %v843 = vpop.f32.mrb[0].mxu0
  %v844 = vadd.f32 0.0, %v843
  %v845 = vpop.f32.mrb[0].mxu0
  %v846 = vpop.f32.mrb[0].mxu0
  %v847 = vpop.f32.mrb[0].mxu0
  %848 = vdwg.mxu0
  %v849 = vpack.c.bf16 %v766, %v763
  %v850 = vpack.c.bf16 %v839, %v836
  %v851 = vpack.c.bf16 %v844, %v844
  %852 = vxpose.xlu0.c.b16.start [1/8] %v153, 128
  %853 = vxpose.xlu0.c.b16.cont [2/8] %v154, 128
  %854 = vxpose.xlu0.c.b16.cont [3/8] 0, 128
  %855 = vxpose.xlu0.c.b16.cont [4/8] 0, 128
  %856 = vxpose.xlu0.c.b16.cont [5/8] 0, 128
  %857 = vxpose.xlu0.c.b16.cont [6/8] 0, 128
  %858 = vxpose.xlu0.c.b16.cont [7/8] 0, 128
  %859 = vxpose.xlu0.c.b16.end [8/8] 0, 128
  %v860 = vpop.trf.xlu0
  %v861 = vpop.trf.xlu0
  %v862 = vpop.trf.xlu0
  %v863 = vpop.trf.xlu0
  %v864 = vpop.trf.xlu0
  %v865 = vpop.trf.xlu0
  %v866 = vpop.trf.xlu0
  %v867 = vpop.trf.xlu0
  %vm868 = vcmask 162816
  %v870 = vsel %vm868, %v860, 0
  %v873 = vsel %vm868, %v861, 0
  %v876 = vsel %vm868, %v862, 0
  %vm878 = vcmask 1041408
  %v880 = vsel %vm878, %v851, 0
  %882 = vmatprep.subr.bf16.mxu0 0
  %883 = vmatpush1.bf16.msra.mxu0 %v850
  %884 = vmatprep.subr.bf16.mxu0 0
  %885 = vmatpush1.bf16.msra.mxu0 %v880
  %886 = vmatprep.subr.bf16.mxu0 0
  %887 = vmatpush1.bf16.msra.mxu0 0
  %888 = vmatprep.subr.bf16.mxu0 0
  %889 = vmatpush1.bf16.msra.mxu0 0
  %890 = vmatprep.subr.bf16.mxu0 0
  %891 = vmatpush1.bf16.msra.mxu0 0
  %892 = vmatprep.subr.bf16.mxu0 0
  %893 = vmatpush1.bf16.msra.mxu0 0
  %894 = vmatprep.subr.bf16.mxu0 0
  %895 = vmatpush1.bf16.msra.mxu0 0
  %896 = vmatprep.subr.bf16.mxu0 0
  %897 = vmatpush1.bf16.msra.mxu0 0
  %898 = vmatprep.subr.bf16.mxu0 0
  %899 = vmatpush1.bf16.msra.mxu0 0
  %900 = vmatprep.subr.bf16.mxu0 0
  %901 = vmatpush1.bf16.msra.mxu0 0
  %902 = vmatprep.subr.bf16.mxu0 0
  %903 = vmatpush1.bf16.msra.mxu0 0
  %904 = vmatprep.subr.bf16.mxu0 0
  %905 = vmatpush1.bf16.msra.mxu0 0
  %906 = vmatprep.subr.bf16.mxu0 0
  %907 = vmatpush1.bf16.msra.mxu0 0
  %908 = vmatprep.subr.bf16.mxu0 0
  %909 = vmatpush1.bf16.msra.mxu0 0
  %910 = vmatprep.subr.bf16.mxu0 0
  %911 = vmatpush1.bf16.msra.mxu0 0
  %912 = vmatprep.subr.bf16.mxu0 0
  %913 = vmatpush1.bf16.msra.mxu0 0
  %914 = vmatprep.mubr.bf16.mxu0 0
  %915 = vmatmul.mubr.bf16.gmra.mrb[0].mxu0 %v870
  %v916 = vpop.f32.mrb[0].mxu0
  %v917 = vadd.f32 0.0, %v916
  %v918 = vpop.f32.mrb[0].mxu0
  %v919 = vpop.f32.mrb[0].mxu0
  %v920 = vadd.f32 0.0, %v919
  %v921 = vpop.f32.mrb[0].mxu0
  %922 = vmatprep.mubr.bf16.mxu0 0
  %923 = vmatmul.mubr.bf16.gmra.mrb[0].mxu0 %v873
  %v924 = vpop.f32.mrb[0].mxu0
  %v925 = vadd.f32 0.0, %v924
  %v926 = vpop.f32.mrb[0].mxu0
  %v927 = vpop.f32.mrb[0].mxu0
  %v928 = vadd.f32 0.0, %v927
  %v929 = vpop.f32.mrb[0].mxu0
  %930 = vmatprep.mubr.bf16.mxu0 0
  %931 = vmatmul.mubr.bf16.gmra.mrb[0].mxu0 %v876
  %v932 = vpop.f32.mrb[0].mxu0
  %v933 = vadd.f32 0.0, %v932
  %v934 = vpop.f32.mrb[0].mxu0
  %v935 = vpop.f32.mrb[0].mxu0
  %v936 = vadd.f32 0.0, %v935
  %v937 = vpop.f32.mrb[0].mxu0
  %938 = vdwg.mxu0
  %939 = vxpose.xlu0.c.b16.start [1/8] %v138, 128
  %940 = vxpose.xlu0.c.b16.cont [2/8] 0, 128
  %941 = vxpose.xlu0.c.b16.cont [3/8] 0, 128
  %942 = vxpose.xlu0.c.b16.cont [4/8] 0, 128
  %943 = vxpose.xlu0.c.b16.cont [5/8] 0, 128
  %944 = vxpose.xlu0.c.b16.cont [6/8] 0, 128
  %945 = vxpose.xlu0.c.b16.cont [7/8] 0, 128
  %946 = vxpose.xlu0.c.b16.end [8/8] 0, 128
  %v947 = vpop.trf.xlu0
  %v948 = vpop.trf.xlu0
  %v949 = vpop.trf.xlu0
  %v950 = vpop.trf.xlu0
  %v951 = vpop.trf.xlu0
  %v952 = vpop.trf.xlu0
  %v953 = vpop.trf.xlu0
  %v954 = vpop.trf.xlu0
  %vm955 = vcmask 97280
  %v957 = vsel %vm955, %v947, 0
  %v960 = vsel %vm955, %v948, 0
  %v963 = vsel %vm955, %v949, 0
  %vm965 = vcmask 1045504
  %v967 = vsel %vm965, %v849, 0
  %969 = vmatprep.subr.bf16.mxu0 0
  %970 = vmatpush1.bf16.msra.mxu0 %v967
  %971 = vmatprep.subr.bf16.mxu0 0
  %972 = vmatpush1.bf16.msra.mxu0 0
  %973 = vmatprep.subr.bf16.mxu0 0
  %974 = vmatpush1.bf16.msra.mxu0 0
  %975 = vmatprep.subr.bf16.mxu0 0
  %976 = vmatpush1.bf16.msra.mxu0 0
  %977 = vmatprep.subr.bf16.mxu0 0
  %978 = vmatpush1.bf16.msra.mxu0 0
  %979 = vmatprep.subr.bf16.mxu0 0
  %980 = vmatpush1.bf16.msra.mxu0 0
  %981 = vmatprep.subr.bf16.mxu0 0
  %982 = vmatpush1.bf16.msra.mxu0 0
  %983 = vmatprep.subr.bf16.mxu0 0
  %984 = vmatpush1.bf16.msra.mxu0 0
  %985 = vmatprep.subr.bf16.mxu0 0
  %986 = vmatpush1.bf16.msra.mxu0 0
  %987 = vmatprep.subr.bf16.mxu0 0
  %988 = vmatpush1.bf16.msra.mxu0 0
  %989 = vmatprep.subr.bf16.mxu0 0
  %990 = vmatpush1.bf16.msra.mxu0 0
  %991 = vmatprep.subr.bf16.mxu0 0
  %992 = vmatpush1.bf16.msra.mxu0 0
  %993 = vmatprep.subr.bf16.mxu0 0
  %994 = vmatpush1.bf16.msra.mxu0 0
  %995 = vmatprep.subr.bf16.mxu0 0
  %996 = vmatpush1.bf16.msra.mxu0 0
  %997 = vmatprep.subr.bf16.mxu0 0
  %998 = vmatpush1.bf16.msra.mxu0 0
  %999 = vmatprep.subr.bf16.mxu0 0
  %1000 = vmatpush1.bf16.msra.mxu0 0
  %1001 = vmatprep.mubr.bf16.mxu0 0
  %1002 = vmatmul.mubr.bf16.gmra.mrb[0].mxu0 %v957
  %v1003 = vpop.f32.mrb[0].mxu0
  %v1004 = vadd.f32 %v917, %v1003
  %v1005 = vpop.f32.mrb[0].mxu0
  %v1006 = vpop.f32.mrb[0].mxu0
  %v1007 = vadd.f32 %v920, %v1006
  %v1008 = vpop.f32.mrb[0].mxu0
  %1009 = vmatprep.mubr.bf16.mxu0 0
  %1010 = vmatmul.mubr.bf16.gmra.mrb[0].mxu0 %v960
  %v1011 = vpop.f32.mrb[0].mxu0
  %v1012 = vadd.f32 %v925, %v1011
  %v1013 = vpop.f32.mrb[0].mxu0
  %v1014 = vpop.f32.mrb[0].mxu0
  %v1015 = vadd.f32 %v928, %v1014
  %v1016 = vpop.f32.mrb[0].mxu0
  %1017 = vmatprep.mubr.bf16.mxu0 0
  %1018 = vmatmul.mubr.bf16.gmra.mrb[0].mxu0 %v963
  %v1019 = vpop.f32.mrb[0].mxu0
  %v1020 = vadd.f32 %v933, %v1019
  %v1021 = vpop.f32.mrb[0].mxu0
  %v1022 = vpop.f32.mrb[0].mxu0
  %v1023 = vadd.f32 %v936, %v1022
  %v1024 = vpop.f32.mrb[0].mxu0
  %1025 = vdwg.mxu0
  %v1026 = vsel %vm288, %v1004, 0.0
  %1027 = vadd.xlane.f32.xlu0 %v1026
  %v1028 = vpop.xlane.xlu0 %1027
  %v1029 = vsel %vm288, %v1007, 0.0
  %1030 = vadd.xlane.f32.xlu0 %v1029
  %v1031 = vpop.xlane.xlu0 %1030
  %v1032 = vsel %vm288, %v1012, 0.0
  %1033 = vadd.xlane.f32.xlu0 %v1032
  %v1034 = vpop.xlane.xlu0 %1033
  %v1035 = vsel %vm288, %v1015, 0.0
  %1036 = vadd.xlane.f32.xlu0 %v1035
  %v1037 = vpop.xlane.xlu0 %1036
  %v1038 = vsel %vm288, %v1020, 0.0
  %1039 = vadd.xlane.f32.xlu0 %v1038
  %v1040 = vpop.xlane.xlu0 %1039
  %v1041 = vsel %vm288, %v1023, 0.0
  %1042 = vadd.xlane.f32.xlu0 %v1041
  %v1043 = vpop.xlane.xlu0 %1042
  %v1044 = vrcp.pop 64.0
  %v1045 = vmul.f32 %v1028, %v1044
  %v1046 = vmul.f32 %v1031, %v1044
  %v1047 = vmul.f32 %v1034, %v1044
  %v1048 = vmul.f32 %v1037, %v1044
  %v1049 = vmul.f32 %v1040, %v1044
  %v1050 = vmul.f32 %v1043, %v1044
  %v1051 = vsub.f32 %v1004, %v1045
  %v1052 = vsub.f32 %v1007, %v1046
  %v1053 = vsub.f32 %v1012, %v1047
  %v1054 = vsub.f32 %v1015, %v1048
  %v1055 = vsub.f32 %v1020, %v1049
  %v1056 = vsub.f32 %v1023, %v1050
  %v1057 = vmul.f32 %v1051, %v1051
  %v1058 = vmul.f32 %v1052, %v1052
  %v1059 = vmul.f32 %v1053, %v1053
  %v1060 = vmul.f32 %v1054, %v1054
  %v1061 = vmul.f32 %v1055, %v1055
  %v1062 = vmul.f32 %v1056, %v1056
  %v1063 = vsel %vm288, %v1057, 0.0
  %1064 = vadd.xlane.f32.xlu0 %v1063
  %v1065 = vpop.xlane.xlu0 %1064
  %v1066 = vsel %vm288, %v1058, 0.0
  %1067 = vadd.xlane.f32.xlu0 %v1066
  %v1068 = vpop.xlane.xlu0 %1067
  %v1069 = vsel %vm288, %v1059, 0.0
  %1070 = vadd.xlane.f32.xlu0 %v1069
  %v1071 = vpop.xlane.xlu0 %1070
  %v1072 = vsel %vm288, %v1060, 0.0
  %1073 = vadd.xlane.f32.xlu0 %v1072
  %v1074 = vpop.xlane.xlu0 %1073
  %v1075 = vsel %vm288, %v1061, 0.0
  %1076 = vadd.xlane.f32.xlu0 %v1075
  %v1077 = vpop.xlane.xlu0 %1076
  %v1078 = vsel %vm288, %v1062, 0.0
  %1079 = vadd.xlane.f32.xlu0 %v1078
  %v1080 = vpop.xlane.xlu0 %1079
  %v1081 = vmul.f32 %v1065, %v1044
  %v1082 = vmul.f32 %v1068, %v1044
  %v1083 = vmul.f32 %v1071, %v1044
  %v1084 = vmul.f32 %v1074, %v1044
  %v1085 = vmul.f32 %v1077, %v1044
  %v1086 = vmul.f32 %v1080, %v1044
  %v1087 = vadd.f32 %v1081, 1e-05
  %v1088 = vadd.f32 %v1082, 1e-05
  %v1089 = vadd.f32 %v1083, 1e-05
  %v1090 = vadd.f32 %v1084, 1e-05
  %v1091 = vadd.f32 %v1085, 1e-05
  %v1092 = vadd.f32 %v1086, 1e-05
  %v1093 = vrsqrt.pop %v1087
  %v1094 = vrsqrt.pop %v1088
  %v1095 = vrsqrt.pop %v1089
  %v1096 = vrsqrt.pop %v1090
  %v1097 = vrsqrt.pop %v1091
  %v1098 = vrsqrt.pop %v1092
  %v1099 = vmul.f32 %v1051, %v1093
  %v1100 = vmul.f32 %v1052, %v1094
  %v1101 = vmul.f32 %v1053, %v1095
  %v1102 = vmul.f32 %v1054, %v1096
  %v1103 = vmul.f32 %v1055, %v1097
  %v1104 = vmul.f32 %v1056, %v1098
  %v1105 = vlaneseq
  %v1106 = vshrl.u32 %v1105, 7
  %v1107 = vsub.s32 0, %v1106
  %v1108 = vrot.slane %v679, %v1107
  %v1109 = vmul.f32 %v1099, %v1108
  %v1110 = vmul.f32 %v1100, %v1108
  %v1111 = vmul.f32 %v1101, %v1108
  %v1112 = vmul.f32 %v1102, %v1108
  %v1113 = vmul.f32 %v1103, %v1108
  %v1114 = vmul.f32 %v1104, %v1108
  %v1115 = vlaneseq
  %v1116 = vshrl.u32 %v1115, 7
  %v1117 = vsub.s32 0, %v1116
  %v1118 = vrot.slane %v680, %v1117
  %v1119 = vadd.f32 %v1109, %v1118
  %v1120 = vadd.f32 %v1110, %v1118
  %v1121 = vadd.f32 %v1111, %v1118
  %v1122 = vadd.f32 %v1112, %v1118
  %v1123 = vadd.f32 %v1113, %v1118
  %v1124 = vadd.f32 %v1114, %v1118
  %v1125 = vmax.f32 %v1119, 0.0
  %v1126 = vmax.f32 %v1120, 0.0
  %v1127 = vmax.f32 %v1121, 0.0
  %v1128 = vmax.f32 %v1122, 0.0
  %v1129 = vmax.f32 %v1123, 0.0
  %v1130 = vmax.f32 %v1124, 0.0
  %v1131 = vpack.c.bf16 %v1126, %v1125
  %v1132 = vpack.c.bf16 %v1128, %v1127
  %v1133 = vpack.c.bf16 %v1130, %v1129
  %v1134 = vlaneseq
  %v1135 = vshrl.u32 %v1134, 7
  %v1136 = vsub.s32 0, %v1135
  %v1137 = vrot.slane %v681, %v1136
  %v1146 = vunpack.c.l.b16 %v653
  %v1147 = vunpack.c.l.b16 %v654
  %v1148 = vunpack.c.l.b16 %v655
  %v1149 = vunpack.c.l.b16 %v656
  %v1150 = vunpack.c.l.b16 %v657
  %v1151 = vunpack.c.l.b16 %v658
  %v1152 = vunpack.c.l.b16 %v659
  %v1153 = vunpack.c.l.b16 %v660
  %v1154 = vpack.c.b16 %v1147, %v1146
  %v1155 = vpack.c.b16 %v1149, %v1148
  %v1156 = vpack.c.b16 %v1151, %v1150
  %v1157 = vpack.c.b16 %v1153, %v1152
  %v1163 = vsel %vm288, %v1131, 0
  %v1166 = vsel %vm288, %v1132, 0
  %v1169 = vsel %vm288, %v1133, 0
  %1171 = vmatprep.subr.bf16.mxu0 0
  %1172 = vmatpush1.bf16.msra.mxu0 %v1154
  %1173 = vmatprep.subr.bf16.mxu0 0
  %1174 = vmatpush1.bf16.msra.mxu0 %v1155
  %1175 = vmatprep.subr.bf16.mxu0 0
  %1176 = vmatpush1.bf16.msra.mxu0 %v1156
  %1177 = vmatprep.subr.bf16.mxu0 0
  %1178 = vmatpush1.bf16.msra.mxu0 %v1157
  %1179 = vmatprep.subr.bf16.mxu0 0
  %1180 = vmatpush1.bf16.msra.mxu0 0
  %1181 = vmatprep.subr.bf16.mxu0 0
  %1182 = vmatpush1.bf16.msra.mxu0 0
  %1183 = vmatprep.subr.bf16.mxu0 0
  %1184 = vmatpush1.bf16.msra.mxu0 0
  %1185 = vmatprep.subr.bf16.mxu0 0
  %1186 = vmatpush1.bf16.msra.mxu0 0
  %1187 = vmatprep.subr.bf16.mxu0 0
  %1188 = vmatpush1.bf16.msra.mxu0 0
  %1189 = vmatprep.subr.bf16.mxu0 0
  %1190 = vmatpush1.bf16.msra.mxu0 0
  %1191 = vmatprep.subr.bf16.mxu0 0
  %1192 = vmatpush1.bf16.msra.mxu0 0
  %1193 = vmatprep.subr.bf16.mxu0 0
  %1194 = vmatpush1.bf16.msra.mxu0 0
  %1195 = vmatprep.subr.bf16.mxu0 0
  %1196 = vmatpush1.bf16.msra.mxu0 0
  %1197 = vmatprep.subr.bf16.mxu0 0
  %1198 = vmatpush1.bf16.msra.mxu0 0
  %1199 = vmatprep.subr.bf16.mxu0 0
  %1200 = vmatpush1.bf16.msra.mxu0 0
  %1201 = vmatprep.subr.bf16.mxu0 0
  %1202 = vmatpush1.bf16.msra.mxu0 0
  %1203 = vmatprep.mubr.bf16.mxu0 0
  %1204 = vmatmul.mubr.bf16.gmra.mrb[0].mxu0 %v1163
  %v1205 = vpop.f32.mrb[0].mxu0
  %v1206 = vadd.f32 %v1137, %v1205
  %v1207 = vpop.f32.mrb[0].mxu0
  %v1208 = vpop.f32.mrb[0].mxu0
  %v1209 = vadd.f32 %v1137, %v1208
  %v1210 = vpop.f32.mrb[0].mxu0
  %1211 = vmatprep.mubr.bf16.mxu0 0
  %1212 = vmatmul.mubr.bf16.gmra.mrb[0].mxu0 %v1166
  %v1213 = vpop.f32.mrb[0].mxu0
  %v1214 = vadd.f32 %v1137, %v1213
  %v1215 = vpop.f32.mrb[0].mxu0
  %v1216 = vpop.f32.mrb[0].mxu0
  %v1217 = vadd.f32 %v1137, %v1216
  %v1218 = vpop.f32.mrb[0].mxu0
  %1219 = vmatprep.mubr.bf16.mxu0 0
  %1220 = vmatmul.mubr.bf16.gmra.mrb[0].mxu0 %v1169
  %v1221 = vpop.f32.mrb[0].mxu0
  %v1222 = vadd.f32 %v1137, %v1221
  %v1223 = vpop.f32.mrb[0].mxu0
  %v1224 = vpop.f32.mrb[0].mxu0
  %v1225 = vadd.f32 %v1137, %v1224
  %v1226 = vpop.f32.mrb[0].mxu0
  %1227 = vdwg.mxu0
  %v1228 = vpack.c.bf16 %v1209, %v1206
  %v1229 = vpack.c.bf16 %v1217, %v1214
  %v1230 = vpack.c.bf16 %v1225, %v1222
  %vm1231 = vcmask 392192
  %v1233 = vsel %vm1231, %v138, 0
  %1235 = vmatprep.subr.bf16.mxu0 0
  %1236 = vmatpush1.bf16.msra.mxu0 %v1228
  %1237 = vmatprep.subr.bf16.mxu0 0
  %1238 = vmatpush1.bf16.msra.mxu0 %v1229
  %1239 = vmatprep.subr.bf16.mxu0 0
  %1240 = vmatpush1.bf16.msra.mxu0 %v1230
  %1241 = vmatprep.subr.bf16.mxu0 0
  %1242 = vmatpush1.bf16.msra.mxu0 0
  %1243 = vmatprep.subr.bf16.mxu0 0
  %1244 = vmatpush1.bf16.msra.mxu0 0
  %1245 = vmatprep.subr.bf16.mxu0 0
  %1246 = vmatpush1.bf16.msra.mxu0 0
  %1247 = vmatprep.subr.bf16.mxu0 0
  %1248 = vmatpush1.bf16.msra.mxu0 0
  %1249 = vmatprep.subr.bf16.mxu0 0
  %1250 = vmatpush1.bf16.msra.mxu0 0
  %1251 = vmatprep.subr.bf16.mxu0 0
  %1252 = vmatpush1.bf16.msra.mxu0 0
  %1253 = vmatprep.subr.bf16.mxu0 0
  %1254 = vmatpush1.bf16.msra.mxu0 0
  %1255 = vmatprep.subr.bf16.mxu0 0
  %1256 = vmatpush1.bf16.msra.mxu0 0
  %1257 = vmatprep.subr.bf16.mxu0 0
  %1258 = vmatpush1.bf16.msra.mxu0 0
  %1259 = vmatprep.subr.bf16.mxu0 0
  %1260 = vmatpush1.bf16.msra.mxu0 0
  %1261 = vmatprep.subr.bf16.mxu0 0
  %1262 = vmatpush1.bf16.msra.mxu0 0
  %1263 = vmatprep.subr.bf16.mxu0 0
  %1264 = vmatpush1.bf16.msra.mxu0 0
  %1265 = vmatprep.subr.bf16.mxu0 0
  %1266 = vmatpush1.bf16.msra.mxu0 0
  %1267 = vmatprep.mubr.bf16.mxu0 0
  %1268 = vmatmul.mubr.bf16.gmra.mrb[0].mxu0 %v1233
  %v1269 = vpop.f32.mrb[0].mxu0
  %v1270 = vadd.f32 0.0, %v1269
  %v1271 = vpop.f32.mrb[0].mxu0
  %v1272 = vpop.f32.mrb[0].mxu0
  %v1273 = vadd.f32 0.0, %v1272
  %v1274 = vpop.f32.mrb[0].mxu0
  %1275 = vdwg.mxu0
  %v1276 = vsel %vm288, %v1270, 0.0
  %1277 = vadd.xlane.f32.xlu0 %v1276
  %v1278 = vpop.xlane.xlu0 %1277
  %vm1279 = vcmask 519168
  %v1280 = vsel %vm1279, %v1273, 0.0
  %1281 = vadd.xlane.f32.xlu0 %v1280
  %v1282 = vpop.xlane.xlu0 %1281
  %v1283 = vmul.f32 %v1278, %v1044
  %v1284 = vmul.f32 %v1282, %v1044
  %v1285 = vsub.f32 %v1270, %v1283
  %v1286 = vsub.f32 %v1273, %v1284
  %v1287 = vmul.f32 %v1285, %v1285
  %v1288 = vmul.f32 %v1286, %v1286
  %v1289 = vsel %vm288, %v1287, 0.0
  %1290 = vadd.xlane.f32.xlu0 %v1289
  %v1291 = vpop.xlane.xlu0 %1290
  %v1292 = vsel %vm1279, %v1288, 0.0
  %1293 = vadd.xlane.f32.xlu0 %v1292
  %v1294 = vpop.xlane.xlu0 %1293
  %v1295 = vmul.f32 %v1291, %v1044
  %v1296 = vmul.f32 %v1294, %v1044
  %v1297 = vadd.f32 %v1295, 1e-05
  %v1298 = vadd.f32 %v1296, 1e-05
  %v1299 = vrsqrt.pop %v1297
  %v1300 = vrsqrt.pop %v1298
  %v1301 = vmul.f32 %v1285, %v1299
  %v1302 = vmul.f32 %v1286, %v1300
  %v1303 = vlaneseq
  %v1304 = vshrl.u32 %v1303, 7
  %v1305 = vsub.s32 0, %v1304
  %v1306 = vrot.slane %v682, %v1305
  %v1307 = vmul.f32 %v1301, %v1306
  %v1308 = vmul.f32 %v1302, %v1306
  %v1309 = vlaneseq
  %v1310 = vshrl.u32 %v1309, 7
  %v1311 = vsub.s32 0, %v1310
  %v1312 = vrot.slane %v683, %v1311
  %v1313 = vadd.f32 %v1307, %v1312
  %v1314 = vadd.f32 %v1308, %v1312
  %v1315 = vpack.c.bf16 %v1314, %v1313
  %v1324 = vunpack.c.l.b16 %v662
  %v1325 = vunpack.c.l.b16 %v663
  %v1326 = vunpack.c.l.b16 %v664
  %v1327 = vunpack.c.l.b16 %v665
  %v1328 = vunpack.c.l.b16 %v666
  %v1329 = vunpack.c.l.b16 %v667
  %v1330 = vunpack.c.l.b16 %v668
  %v1331 = vunpack.c.l.b16 %v669
  %v1332 = vpack.c.b16 %v1325, %v1324
  %v1333 = vpack.c.b16 %v1327, %v1326
  %v1334 = vpack.c.b16 %v1329, %v1328
  %v1335 = vpack.c.b16 %v1331, %v1330
  %1342 = vrot.lane.b32.xlu0 %v763, 64
  %v1343 = vpop.permute.xlu0 %1342
  %1344 = vrot.lane.b32.xlu0 %v766, 64
  %v1345 = vpop.permute.xlu0 %1344
  %v1349 = vsel %vm288, %v1315, 0
  %1351 = vmatprep.subr.bf16.mxu0 0
  %1352 = vmatpush1.bf16.msra.mxu0 %v1332
  %1353 = vmatprep.subr.bf16.mxu0 0
  %1354 = vmatpush1.bf16.msra.mxu0 %v1333
  %1355 = vmatprep.subr.bf16.mxu0 0
  %1356 = vmatpush1.bf16.msra.mxu0 %v1334
  %1357 = vmatprep.subr.bf16.mxu0 0
  %1358 = vmatpush1.bf16.msra.mxu0 %v1335
  %1359 = vmatprep.subr.bf16.mxu0 0
  %1360 = vmatpush1.bf16.msra.mxu0 0
  %1361 = vmatprep.subr.bf16.mxu0 0
  %1362 = vmatpush1.bf16.msra.mxu0 0
  %1363 = vmatprep.subr.bf16.mxu0 0
  %1364 = vmatpush1.bf16.msra.mxu0 0
  %1365 = vmatprep.subr.bf16.mxu0 0
  %1366 = vmatpush1.bf16.msra.mxu0 0
  %1367 = vmatprep.subr.bf16.mxu0 0
  %1368 = vmatpush1.bf16.msra.mxu0 0
  %1369 = vmatprep.subr.bf16.mxu0 0
  %1370 = vmatpush1.bf16.msra.mxu0 0
  %1371 = vmatprep.subr.bf16.mxu0 0
  %1372 = vmatpush1.bf16.msra.mxu0 0
  %1373 = vmatprep.subr.bf16.mxu0 0
  %1374 = vmatpush1.bf16.msra.mxu0 0
  %1375 = vmatprep.subr.bf16.mxu0 0
  %1376 = vmatpush1.bf16.msra.mxu0 0
  %1377 = vmatprep.subr.bf16.mxu0 0
  %1378 = vmatpush1.bf16.msra.mxu0 0
  %1379 = vmatprep.subr.bf16.mxu0 0
  %1380 = vmatpush1.bf16.msra.mxu0 0
  %1381 = vmatprep.subr.bf16.mxu0 0
  %1382 = vmatpush1.bf16.msra.mxu0 0
  %1383 = vmatprep.mubr.bf16.mxu0 0
  %1384 = vmatmul.mubr.bf16.gmra.mrb[0].mxu0 %v1349
  %v1385 = vpop.f32.mrb[0].mxu0
  %v1386 = vadd.f32 %v1343, %v1385
  %v1387 = vpop.f32.mrb[0].mxu0
  %v1388 = vpop.f32.mrb[0].mxu0
  %v1389 = vadd.f32 %v1345, %v1388
  %v1390 = vpop.f32.mrb[0].mxu0
  %1391 = vdwg.mxu0
  %v1392 = vmax.f32 %v1386, 0.0
  %v1393 = vmax.f32 %v1389, 0.0
  %v1394 = vpack.c.bf16 %v1393, %v1392
  %v1395 = vlaneseq
  %v1396 = vshrl.u32 %v1395, 7
  %v1397 = vsub.s32 0, %v1396
  %v1398 = vrot.slane %v684, %v1397
  %v1407 = vunpack.c.l.b16 %v671
  %v1408 = vunpack.c.l.b16 %v672
  %v1409 = vunpack.c.l.b16 %v673
  %v1410 = vunpack.c.l.b16 %v674
  %v1411 = vunpack.c.l.b16 %v675
  %v1412 = vunpack.c.l.b16 %v676
  %v1413 = vunpack.c.l.b16 %v677
  %v1414 = vunpack.c.l.b16 %v678
  %v1415 = vpack.c.b16 %v1408, %v1407
  %v1416 = vpack.c.b16 %v1410, %v1409
  %v1417 = vpack.c.b16 %v1412, %v1411
  %v1418 = vpack.c.b16 %v1414, %v1413
  %v1424 = vsel %vm288, %v1394, 0
  %1426 = vmatprep.subr.bf16.mxu0 0
  %1427 = vmatpush1.bf16.msra.mxu0 %v1415
  %1428 = vmatprep.subr.bf16.mxu0 0
  %1429 = vmatpush1.bf16.msra.mxu0 %v1416
  %1430 = vmatprep.subr.bf16.mxu0 0
  %1431 = vmatpush1.bf16.msra.mxu0 %v1417
  %1432 = vmatprep.subr.bf16.mxu0 0
  %1433 = vmatpush1.bf16.msra.mxu0 %v1418
  %1434 = vmatprep.subr.bf16.mxu0 0
  %1435 = vmatpush1.bf16.msra.mxu0 0
  %1436 = vmatprep.subr.bf16.mxu0 0
  %1437 = vmatpush1.bf16.msra.mxu0 0
  %1438 = vmatprep.subr.bf16.mxu0 0
  %1439 = vmatpush1.bf16.msra.mxu0 0
  %1440 = vmatprep.subr.bf16.mxu0 0
  %1441 = vmatpush1.bf16.msra.mxu0 0
  %1442 = vmatprep.subr.bf16.mxu0 0
  %1443 = vmatpush1.bf16.msra.mxu0 0
  %1444 = vmatprep.subr.bf16.mxu0 0
  %1445 = vmatpush1.bf16.msra.mxu0 0
  %1446 = vmatprep.subr.bf16.mxu0 0
  %1447 = vmatpush1.bf16.msra.mxu0 0
  %1448 = vmatprep.subr.bf16.mxu0 0
  %1449 = vmatpush1.bf16.msra.mxu0 0
  %1450 = vmatprep.subr.bf16.mxu0 0
  %1451 = vmatpush1.bf16.msra.mxu0 0
  %1452 = vmatprep.subr.bf16.mxu0 0
  %1453 = vmatpush1.bf16.msra.mxu0 0
  %1454 = vmatprep.subr.bf16.mxu0 0
  %1455 = vmatpush1.bf16.msra.mxu0 0
  %1456 = vmatprep.subr.bf16.mxu0 0
  %1457 = vmatpush1.bf16.msra.mxu0 0
  %1458 = vmatprep.mubr.bf16.mxu0 0
  %1459 = vmatmul.mubr.bf16.gmra.mrb[0].mxu0 %v1424
  %v1460 = vpop.f32.mrb[0].mxu0
  %v1461 = vadd.f32 %v1398, %v1460
  %v1462 = vpop.f32.mrb[0].mxu0
  %v1463 = vpop.f32.mrb[0].mxu0
  %v1464 = vadd.f32 %v1398, %v1463
  %v1465 = vpop.f32.mrb[0].mxu0
  %1466 = vdwg.mxu0
  %v1467 = vld [vmem:[%s45] sm:$0xf]
  %v1468 = vld [vmem:[%s45 + $0x4] sm:$0xf]
  %v1469 = vld [vmem:[%s45 + $0x8] sm:$0xf]
  %v1470 = vld [vmem:[%s45 + $0xc] sm:$0xf]
  %v1471 = vld [vmem:[%s45 + $0x10] sm:$0xf]
  %v1472 = vld [vmem:[%s45 + $0x14] sm:$0xf]
  %v1473 = vld [vmem:[%s45 + $0x18] sm:$0xf]
  %v1474 = vld [vmem:[%s45 + $0x1c] sm:$0xf]
  %s1475 = scalar_lea.vmem %s45, 32
  %v1476 = vld [vmem:[%s1475] sm:$0xf]
  %v1477 = vld [vmem:[%s1475 + $0x4] sm:$0xf]
  %v1478 = vld [vmem:[%s1475 + $0x8] sm:$0xf]
  %v1479 = vld [vmem:[%s1475 + $0xc] sm:$0xf]
  %v1480 = vld [vmem:[%s1475 + $0x10] sm:$0xf]
  %v1481 = vld [vmem:[%s1475 + $0x14] sm:$0xf]
  %v1482 = vld [vmem:[%s1475 + $0x18] sm:$0xf]
  %v1483 = vld [vmem:[%s1475 + $0x1c] sm:$0xf]
  %s1484 = scalar_lea.vmem %s45, 64
  %v1485 = vld [vmem:[%s1484] sm:$0xf]
  %v1486 = vld [vmem:[%s1484 + $0x4] sm:$0xf]
  %v1487 = vld [vmem:[%s1484 + $0x8] sm:$0xf]
  %v1488 = vld [vmem:[%s1484 + $0xc] sm:$0xf]
  %v1489 = vld [vmem:[%s1484 + $0x10] sm:$0xf]
  %v1490 = vld [vmem:[%s1484 + $0x14] sm:$0xf]
  %v1491 = vld [vmem:[%s1484 + $0x18] sm:$0xf]
  %v1492 = vld [vmem:[%s1484 + $0x1c] sm:$0xf]
  %s1493 = scalar_lea.vmem %s45, 96
  %v1494 = vld [vmem:[%s1493] sm:$0xf]
  %v1495 = vld [vmem:[%s1493 + $0x4] sm:$0xf]
  %v1496 = vld [vmem:[%s1493 + $0x8] sm:$0xf]
  %v1497 = vld [vmem:[%s1493 + $0xc] sm:$0xf]
  %v1498 = vld [vmem:[%s1493 + $0x10] sm:$0xf]
  %v1499 = vld [vmem:[%s1493 + $0x14] sm:$0xf]
  %v1500 = vld [vmem:[%s1493 + $0x18] sm:$0xf]
  %v1501 = vld [vmem:[%s1493 + $0x1c] sm:$0xf]
  %v1502 = vld [vmem:[%s47] sm:$0x1]
  %v1503 = vld [vmem:[%s47 + $0x1] sm:$0x1]
  %v1504 = vld [vmem:[%s47 + $0x2] sm:$0x1]
  %v1505 = vld [vmem:[%s47 + $0x3] sm:$0x1]
  %v1506 = vld [vmem:[%s47 + $0x4] sm:$0x1]
  %v1507 = vld [vmem:[%s47 + $0x5] sm:$0x1]
  %v1508 = vld [vmem:[%s41] sm:$0xf]
  %v1509 = vld [vmem:[%s41 + $0x4] sm:$0xf]
  %v1510 = vld [vmem:[%s41 + $0x8] sm:$0xf]
  %v1511 = vld [vmem:[%s41 + $0xc] sm:$0xf]
  %v1512 = vld [vmem:[%s41 + $0x10] sm:$0xf]
  %v1513 = vld [vmem:[%s41 + $0x14] sm:$0xf]
  %v1514 = vld [vmem:[%s41 + $0x18] sm:$0xf]
  %v1515 = vld [vmem:[%s41 + $0x1c] sm:$0xf]
  %v1516 = vld [vmem:[%s43] sm:$0x1]
  %v1518 = vlaneseq
  %v1519 = vshrl.u32 %v1518, 7
  %v1520 = vsub.s32 0, %v1519
  %v1521 = vrot.slane %v1516, %v1520
  %v1531 = vunpack.c.l.b16 %v1508
  %v1532 = vunpack.c.l.b16 %v1509
  %v1533 = vunpack.c.l.b16 %v1510
  %v1534 = vunpack.c.l.b16 %v1511
  %v1535 = vunpack.c.l.b16 %v1512
  %v1536 = vunpack.c.l.b16 %v1513
  %v1537 = vunpack.c.l.b16 %v1514
  %v1538 = vunpack.c.l.b16 %v1515
  %v1539 = vpack.c.b16 %v1532, %v1531
  %v1540 = vpack.c.b16 %v1534, %v1533
  %v1541 = vpack.c.b16 %v1536, %v1535
  %v1542 = vpack.c.b16 %v1538, %v1537
  %1547 = vmatprep.subr.bf16.mxu0 0
  %1548 = vmatpush1.bf16.msra.mxu0 %v1539
  %1549 = vmatprep.subr.bf16.mxu0 0
  %1550 = vmatpush1.bf16.msra.mxu0 %v1540
  %1551 = vmatprep.subr.bf16.mxu0 0
  %1552 = vmatpush1.bf16.msra.mxu0 %v1541
  %1553 = vmatprep.subr.bf16.mxu0 0
  %1554 = vmatpush1.bf16.msra.mxu0 %v1542
  %1555 = vmatprep.subr.bf16.mxu0 0
  %1556 = vmatpush1.bf16.msra.mxu0 0
  %1557 = vmatprep.subr.bf16.mxu0 0
  %1558 = vmatpush1.bf16.msra.mxu0 0
  %1559 = vmatprep.subr.bf16.mxu0 0
  %1560 = vmatpush1.bf16.msra.mxu0 0
  %1561 = vmatprep.subr.bf16.mxu0 0
  %1562 = vmatpush1.bf16.msra.mxu0 0
  %1563 = vmatprep.subr.bf16.mxu0 0
  %1564 = vmatpush1.bf16.msra.mxu0 0
  %1565 = vmatprep.subr.bf16.mxu0 0
  %1566 = vmatpush1.bf16.msra.mxu0 0
  %1567 = vmatprep.subr.bf16.mxu0 0
  %1568 = vmatpush1.bf16.msra.mxu0 0
  %1569 = vmatprep.subr.bf16.mxu0 0
  %1570 = vmatpush1.bf16.msra.mxu0 0
  %1571 = vmatprep.subr.bf16.mxu0 0
  %1572 = vmatpush1.bf16.msra.mxu0 0
  %1573 = vmatprep.subr.bf16.mxu0 0
  %1574 = vmatpush1.bf16.msra.mxu0 0
  %1575 = vmatprep.subr.bf16.mxu0 0
  %1576 = vmatpush1.bf16.msra.mxu0 0
  %1577 = vmatprep.subr.bf16.mxu0 0
  %1578 = vmatpush1.bf16.msra.mxu0 0
  %1579 = vmatprep.mubr.bf16.mxu0 0
  %1580 = vmatmul.mubr.bf16.gmra.mrb[0].mxu0 %v796
  %v1581 = vpop.f32.mrb[0].mxu0
  %v1582 = vadd.f32 %v1521, %v1581
  %v1583 = vpop.f32.mrb[0].mxu0
  %v1584 = vpop.f32.mrb[0].mxu0
  %v1585 = vadd.f32 %v1521, %v1584
  %v1586 = vpop.f32.mrb[0].mxu0
  %1587 = vmatprep.mubr.bf16.mxu0 0
  %1588 = vmatmul.mubr.bf16.gmra.mrb[0].mxu0 %v799
  %v1589 = vpop.f32.mrb[0].mxu0
  %v1590 = vadd.f32 %v1521, %v1589
  %v1591 = vpop.f32.mrb[0].mxu0
  %v1592 = vpop.f32.mrb[0].mxu0
  %v1593 = vpop.f32.mrb[0].mxu0
  %1594 = vdwg.mxu0
  %v1595 = vpack.c.bf16 %v1464, %v1461
  %v1604 = vunpack.c.l.b16 %v1467
  %v1605 = vunpack.c.l.b16 %v1468
  %v1606 = vunpack.c.l.b16 %v1469
  %v1607 = vunpack.c.l.b16 %v1470
  %v1608 = vunpack.c.l.b16 %v1471
  %v1609 = vunpack.c.l.b16 %v1472
  %v1610 = vunpack.c.l.b16 %v1473
  %v1611 = vunpack.c.l.b16 %v1474
  %v1612 = vpack.c.b16 %v1605, %v1604
  %v1613 = vpack.c.b16 %v1607, %v1606
  %v1614 = vpack.c.b16 %v1609, %v1608
  %v1615 = vpack.c.b16 %v1611, %v1610
  %v1621 = vsel %vm288, %v1595, 0
  %1623 = vmatprep.subr.bf16.mxu0 0
  %1624 = vmatpush1.bf16.msra.mxu0 %v1612
  %1625 = vmatprep.subr.bf16.mxu0 0
  %1626 = vmatpush1.bf16.msra.mxu0 %v1613
  %1627 = vmatprep.subr.bf16.mxu0 0
  %1628 = vmatpush1.bf16.msra.mxu0 %v1614
  %1629 = vmatprep.subr.bf16.mxu0 0
  %1630 = vmatpush1.bf16.msra.mxu0 %v1615
  %1631 = vmatprep.subr.bf16.mxu0 0
  %1632 = vmatpush1.bf16.msra.mxu0 0
  %1633 = vmatprep.subr.bf16.mxu0 0
  %1634 = vmatpush1.bf16.msra.mxu0 0
  %1635 = vmatprep.subr.bf16.mxu0 0
  %1636 = vmatpush1.bf16.msra.mxu0 0
  %1637 = vmatprep.subr.bf16.mxu0 0
  %1638 = vmatpush1.bf16.msra.mxu0 0
  %1639 = vmatprep.subr.bf16.mxu0 0
  %1640 = vmatpush1.bf16.msra.mxu0 0
  %1641 = vmatprep.subr.bf16.mxu0 0
  %1642 = vmatpush1.bf16.msra.mxu0 0
  %1643 = vmatprep.subr.bf16.mxu0 0
  %1644 = vmatpush1.bf16.msra.mxu0 0
  %1645 = vmatprep.subr.bf16.mxu0 0
  %1646 = vmatpush1.bf16.msra.mxu0 0
  %1647 = vmatprep.subr.bf16.mxu0 0
  %1648 = vmatpush1.bf16.msra.mxu0 0
  %1649 = vmatprep.subr.bf16.mxu0 0
  %1650 = vmatpush1.bf16.msra.mxu0 0
  %1651 = vmatprep.subr.bf16.mxu0 0
  %1652 = vmatpush1.bf16.msra.mxu0 0
  %1653 = vmatprep.subr.bf16.mxu0 0
  %1654 = vmatpush1.bf16.msra.mxu0 0
  %1655 = vmatprep.mubr.bf16.mxu0 0
  %1656 = vmatmul.mubr.bf16.gmra.mrb[0].mxu0 %v1621
  %v1657 = vpop.f32.mrb[0].mxu0
  %v1658 = vadd.f32 0.0, %v1657
  %v1659 = vpop.f32.mrb[0].mxu0
  %v1660 = vpop.f32.mrb[0].mxu0
  %v1661 = vadd.f32 0.0, %v1660
  %v1662 = vpop.f32.mrb[0].mxu0
  %1663 = vdwg.mxu0
  %v1664 = vpack.c.bf16 %v1585, %v1582
  %v1665 = vpack.c.bf16 %v1590, %v1590
  %v1666 = vpack.c.bf16 %v1661, %v1658
  %v1668 = vsel %vm965, %v1666, 0
  %1670 = vmatprep.subr.bf16.mxu0 0
  %1671 = vmatpush1.bf16.msra.mxu0 %v1668
  %1672 = vmatprep.subr.bf16.mxu0 0
  %1673 = vmatpush1.bf16.msra.mxu0 0
  %1674 = vmatprep.subr.bf16.mxu0 0
  %1675 = vmatpush1.bf16.msra.mxu0 0
  %1676 = vmatprep.subr.bf16.mxu0 0
  %1677 = vmatpush1.bf16.msra.mxu0 0
  %1678 = vmatprep.subr.bf16.mxu0 0
  %1679 = vmatpush1.bf16.msra.mxu0 0
  %1680 = vmatprep.subr.bf16.mxu0 0
  %1681 = vmatpush1.bf16.msra.mxu0 0
  %1682 = vmatprep.subr.bf16.mxu0 0
  %1683 = vmatpush1.bf16.msra.mxu0 0
  %1684 = vmatprep.subr.bf16.mxu0 0
  %1685 = vmatpush1.bf16.msra.mxu0 0
  %1686 = vmatprep.subr.bf16.mxu0 0
  %1687 = vmatpush1.bf16.msra.mxu0 0
  %1688 = vmatprep.subr.bf16.mxu0 0
  %1689 = vmatpush1.bf16.msra.mxu0 0
  %1690 = vmatprep.subr.bf16.mxu0 0
  %1691 = vmatpush1.bf16.msra.mxu0 0
  %1692 = vmatprep.subr.bf16.mxu0 0
  %1693 = vmatpush1.bf16.msra.mxu0 0
  %1694 = vmatprep.subr.bf16.mxu0 0
  %1695 = vmatpush1.bf16.msra.mxu0 0
  %1696 = vmatprep.subr.bf16.mxu0 0
  %1697 = vmatpush1.bf16.msra.mxu0 0
  %1698 = vmatprep.subr.bf16.mxu0 0
  %1699 = vmatpush1.bf16.msra.mxu0 0
  %1700 = vmatprep.subr.bf16.mxu0 0
  %1701 = vmatpush1.bf16.msra.mxu0 0
  %1702 = vmatprep.mubr.bf16.mxu0 0
  %1703 = vmatmul.mubr.bf16.gmra.mrb[0].mxu0 %v957
  %v1704 = vpop.f32.mrb[0].mxu0
  %v1705 = vadd.f32 0.0, %v1704
  %v1706 = vpop.f32.mrb[0].mxu0
  %v1707 = vpop.f32.mrb[0].mxu0
  %v1708 = vadd.f32 0.0, %v1707
  %v1709 = vpop.f32.mrb[0].mxu0
  %1710 = vmatprep.mubr.bf16.mxu0 0
  %1711 = vmatmul.mubr.bf16.gmra.mrb[0].mxu0 %v960
  %v1712 = vpop.f32.mrb[0].mxu0
  %v1713 = vadd.f32 0.0, %v1712
  %v1714 = vpop.f32.mrb[0].mxu0
  %v1715 = vpop.f32.mrb[0].mxu0
  %v1716 = vadd.f32 0.0, %v1715
  %v1717 = vpop.f32.mrb[0].mxu0
  %1718 = vmatprep.mubr.bf16.mxu0 0
  %1719 = vmatmul.mubr.bf16.gmra.mrb[0].mxu0 %v963
  %v1720 = vpop.f32.mrb[0].mxu0
  %v1721 = vadd.f32 0.0, %v1720
  %v1722 = vpop.f32.mrb[0].mxu0
  %v1723 = vpop.f32.mrb[0].mxu0
  %v1724 = vadd.f32 0.0, %v1723
  %v1725 = vpop.f32.mrb[0].mxu0
  %1726 = vdwg.mxu0
  %v1728 = vsel %vm878, %v1665, 0
  %1730 = vmatprep.subr.bf16.mxu0 0
  %1731 = vmatpush1.bf16.msra.mxu0 %v1664
  %1732 = vmatprep.subr.bf16.mxu0 0
  %1733 = vmatpush1.bf16.msra.mxu0 %v1728
  %1734 = vmatprep.subr.bf16.mxu0 0
  %1735 = vmatpush1.bf16.msra.mxu0 0
  %1736 = vmatprep.subr.bf16.mxu0 0
  %1737 = vmatpush1.bf16.msra.mxu0 0
  %1738 = vmatprep.subr.bf16.mxu0 0
  %1739 = vmatpush1.bf16.msra.mxu0 0
  %1740 = vmatprep.subr.bf16.mxu0 0
  %1741 = vmatpush1.bf16.msra.mxu0 0
  %1742 = vmatprep.subr.bf16.mxu0 0
  %1743 = vmatpush1.bf16.msra.mxu0 0
  %1744 = vmatprep.subr.bf16.mxu0 0
  %1745 = vmatpush1.bf16.msra.mxu0 0
  %1746 = vmatprep.subr.bf16.mxu0 0
  %1747 = vmatpush1.bf16.msra.mxu0 0
  %1748 = vmatprep.subr.bf16.mxu0 0
  %1749 = vmatpush1.bf16.msra.mxu0 0
  %1750 = vmatprep.subr.bf16.mxu0 0
  %1751 = vmatpush1.bf16.msra.mxu0 0
  %1752 = vmatprep.subr.bf16.mxu0 0
  %1753 = vmatpush1.bf16.msra.mxu0 0
  %1754 = vmatprep.subr.bf16.mxu0 0
  %1755 = vmatpush1.bf16.msra.mxu0 0
  %1756 = vmatprep.subr.bf16.mxu0 0
  %1757 = vmatpush1.bf16.msra.mxu0 0
  %1758 = vmatprep.subr.bf16.mxu0 0
  %1759 = vmatpush1.bf16.msra.mxu0 0
  %1760 = vmatprep.subr.bf16.mxu0 0
  %1761 = vmatpush1.bf16.msra.mxu0 0
  %1762 = vmatprep.mubr.bf16.mxu0 0
  %1763 = vmatmul.mubr.bf16.gmra.mrb[0].mxu0 %v870
  %v1764 = vpop.f32.mrb[0].mxu0
  %v1765 = vadd.f32 %v1705, %v1764
  %v1766 = vpop.f32.mrb[0].mxu0
  %v1767 = vpop.f32.mrb[0].mxu0
  %v1768 = vadd.f32 %v1708, %v1767
  %v1769 = vpop.f32.mrb[0].mxu0
  %1770 = vmatprep.mubr.bf16.mxu0 0
  %1771 = vmatmul.mubr.bf16.gmra.mrb[0].mxu0 %v873
  %v1772 = vpop.f32.mrb[0].mxu0
  %v1773 = vadd.f32 %v1713, %v1772
  %v1774 = vpop.f32.mrb[0].mxu0
  %v1775 = vpop.f32.mrb[0].mxu0
  %v1776 = vadd.f32 %v1716, %v1775
  %v1777 = vpop.f32.mrb[0].mxu0
  %1778 = vmatprep.mubr.bf16.mxu0 0
  %1779 = vmatmul.mubr.bf16.gmra.mrb[0].mxu0 %v876
  %v1780 = vpop.f32.mrb[0].mxu0
  %v1781 = vadd.f32 %v1721, %v1780
  %v1782 = vpop.f32.mrb[0].mxu0
  %v1783 = vpop.f32.mrb[0].mxu0
  %v1784 = vadd.f32 %v1724, %v1783
  %v1785 = vpop.f32.mrb[0].mxu0
  %1786 = vdwg.mxu0
  %v1787 = vsel %vm288, %v1765, 0.0
  %1788 = vadd.xlane.f32.xlu0 %v1787
  %v1789 = vpop.xlane.xlu0 %1788
  %v1790 = vsel %vm288, %v1768, 0.0
  %1791 = vadd.xlane.f32.xlu0 %v1790
  %v1792 = vpop.xlane.xlu0 %1791
  %v1793 = vsel %vm288, %v1773, 0.0
  %1794 = vadd.xlane.f32.xlu0 %v1793
  %v1795 = vpop.xlane.xlu0 %1794
  %v1796 = vsel %vm288, %v1776, 0.0
  %1797 = vadd.xlane.f32.xlu0 %v1796
  %v1798 = vpop.xlane.xlu0 %1797
  %v1799 = vsel %vm288, %v1781, 0.0
  %1800 = vadd.xlane.f32.xlu0 %v1799
  %v1801 = vpop.xlane.xlu0 %1800
  %v1802 = vsel %vm288, %v1784, 0.0
  %1803 = vadd.xlane.f32.xlu0 %v1802
  %v1804 = vpop.xlane.xlu0 %1803
  %v1805 = vmul.f32 %v1789, %v1044
  %v1806 = vmul.f32 %v1792, %v1044
  %v1807 = vmul.f32 %v1795, %v1044
  %v1808 = vmul.f32 %v1798, %v1044
  %v1809 = vmul.f32 %v1801, %v1044
  %v1810 = vmul.f32 %v1804, %v1044
  %v1811 = vsub.f32 %v1765, %v1805
  %v1812 = vsub.f32 %v1768, %v1806
  %v1813 = vsub.f32 %v1773, %v1807
  %v1814 = vsub.f32 %v1776, %v1808
  %v1815 = vsub.f32 %v1781, %v1809
  %v1816 = vsub.f32 %v1784, %v1810
  %v1817 = vmul.f32 %v1811, %v1811
  %v1818 = vmul.f32 %v1812, %v1812
  %v1819 = vmul.f32 %v1813, %v1813
  %v1820 = vmul.f32 %v1814, %v1814
  %v1821 = vmul.f32 %v1815, %v1815
  %v1822 = vmul.f32 %v1816, %v1816
  %v1823 = vsel %vm288, %v1817, 0.0
  %1824 = vadd.xlane.f32.xlu0 %v1823
  %v1825 = vpop.xlane.xlu0 %1824
  %v1826 = vsel %vm288, %v1818, 0.0
  %1827 = vadd.xlane.f32.xlu0 %v1826
  %v1828 = vpop.xlane.xlu0 %1827
  %v1829 = vsel %vm288, %v1819, 0.0
  %1830 = vadd.xlane.f32.xlu0 %v1829
  %v1831 = vpop.xlane.xlu0 %1830
  %v1832 = vsel %vm288, %v1820, 0.0
  %1833 = vadd.xlane.f32.xlu0 %v1832
  %v1834 = vpop.xlane.xlu0 %1833
  %v1835 = vsel %vm288, %v1821, 0.0
  %1836 = vadd.xlane.f32.xlu0 %v1835
  %v1837 = vpop.xlane.xlu0 %1836
  %v1838 = vsel %vm288, %v1822, 0.0
  %1839 = vadd.xlane.f32.xlu0 %v1838
  %v1840 = vpop.xlane.xlu0 %1839
  %v1841 = vmul.f32 %v1825, %v1044
  %v1842 = vmul.f32 %v1828, %v1044
  %v1843 = vmul.f32 %v1831, %v1044
  %v1844 = vmul.f32 %v1834, %v1044
  %v1845 = vmul.f32 %v1837, %v1044
  %v1846 = vmul.f32 %v1840, %v1044
  %v1847 = vadd.f32 %v1841, 1e-05
  %v1848 = vadd.f32 %v1842, 1e-05
  %v1849 = vadd.f32 %v1843, 1e-05
  %v1850 = vadd.f32 %v1844, 1e-05
  %v1851 = vadd.f32 %v1845, 1e-05
  %v1852 = vadd.f32 %v1846, 1e-05
  %v1853 = vrsqrt.pop %v1847
  %v1854 = vrsqrt.pop %v1848
  %v1855 = vrsqrt.pop %v1849
  %v1856 = vrsqrt.pop %v1850
  %v1857 = vrsqrt.pop %v1851
  %v1858 = vrsqrt.pop %v1852
  %v1859 = vmul.f32 %v1811, %v1853
  %v1860 = vmul.f32 %v1812, %v1854
  %v1861 = vmul.f32 %v1813, %v1855
  %v1862 = vmul.f32 %v1814, %v1856
  %v1863 = vmul.f32 %v1815, %v1857
  %v1864 = vmul.f32 %v1816, %v1858
  %v1865 = vlaneseq
  %v1866 = vshrl.u32 %v1865, 7
  %v1867 = vsub.s32 0, %v1866
  %v1868 = vrot.slane %v1502, %v1867
  %v1869 = vmul.f32 %v1859, %v1868
  %v1870 = vmul.f32 %v1860, %v1868
  %v1871 = vmul.f32 %v1861, %v1868
  %v1872 = vmul.f32 %v1862, %v1868
  %v1873 = vmul.f32 %v1863, %v1868
  %v1874 = vmul.f32 %v1864, %v1868
  %v1875 = vlaneseq
  %v1876 = vshrl.u32 %v1875, 7
  %v1877 = vsub.s32 0, %v1876
  %v1878 = vrot.slane %v1503, %v1877
  %v1879 = vadd.f32 %v1869, %v1878
  %v1880 = vadd.f32 %v1870, %v1878
  %v1881 = vadd.f32 %v1871, %v1878
  %v1882 = vadd.f32 %v1872, %v1878
  %v1883 = vadd.f32 %v1873, %v1878
  %v1884 = vadd.f32 %v1874, %v1878
  %v1885 = vmax.f32 %v1879, 0.0
  %v1886 = vmax.f32 %v1880, 0.0
  %v1887 = vmax.f32 %v1881, 0.0
  %v1888 = vmax.f32 %v1882, 0.0
  %v1889 = vmax.f32 %v1883, 0.0
  %v1890 = vmax.f32 %v1884, 0.0
  %v1891 = vpack.c.bf16 %v1886, %v1885
  %v1892 = vpack.c.bf16 %v1888, %v1887
  %v1893 = vpack.c.bf16 %v1890, %v1889
  %v1894 = vlaneseq
  %v1895 = vshrl.u32 %v1894, 7
  %v1896 = vsub.s32 0, %v1895
  %v1897 = vrot.slane %v1504, %v1896
  %v1906 = vunpack.c.l.b16 %v1476
  %v1907 = vunpack.c.l.b16 %v1477
  %v1908 = vunpack.c.l.b16 %v1478
  %v1909 = vunpack.c.l.b16 %v1479
  %v1910 = vunpack.c.l.b16 %v1480
  %v1911 = vunpack.c.l.b16 %v1481
  %v1912 = vunpack.c.l.b16 %v1482
  %v1913 = vunpack.c.l.b16 %v1483
  %v1914 = vpack.c.b16 %v1907, %v1906
  %v1915 = vpack.c.b16 %v1909, %v1908
  %v1916 = vpack.c.b16 %v1911, %v1910
  %v1917 = vpack.c.b16 %v1913, %v1912
  %v1923 = vsel %vm288, %v1891, 0
  %v1926 = vsel %vm288, %v1892, 0
  %v1929 = vsel %vm288, %v1893, 0
  %1931 = vmatprep.subr.bf16.mxu0 0
  %1932 = vmatpush1.bf16.msra.mxu0 %v1914
  %1933 = vmatprep.subr.bf16.mxu0 0
  %1934 = vmatpush1.bf16.msra.mxu0 %v1915
  %1935 = vmatprep.subr.bf16.mxu0 0
  %1936 = vmatpush1.bf16.msra.mxu0 %v1916
  %1937 = vmatprep.subr.bf16.mxu0 0
  %1938 = vmatpush1.bf16.msra.mxu0 %v1917
  %1939 = vmatprep.subr.bf16.mxu0 0
  %1940 = vmatpush1.bf16.msra.mxu0 0
  %1941 = vmatprep.subr.bf16.mxu0 0
  %1942 = vmatpush1.bf16.msra.mxu0 0
  %1943 = vmatprep.subr.bf16.mxu0 0
  %1944 = vmatpush1.bf16.msra.mxu0 0
  %1945 = vmatprep.subr.bf16.mxu0 0
  %1946 = vmatpush1.bf16.msra.mxu0 0
  %1947 = vmatprep.subr.bf16.mxu0 0
  %1948 = vmatpush1.bf16.msra.mxu0 0
  %1949 = vmatprep.subr.bf16.mxu0 0
  %1950 = vmatpush1.bf16.msra.mxu0 0
  %1951 = vmatprep.subr.bf16.mxu0 0
  %1952 = vmatpush1.bf16.msra.mxu0 0
  %1953 = vmatprep.subr.bf16.mxu0 0
  %1954 = vmatpush1.bf16.msra.mxu0 0
  %1955 = vmatprep.subr.bf16.mxu0 0
  %1956 = vmatpush1.bf16.msra.mxu0 0
  %1957 = vmatprep.subr.bf16.mxu0 0
  %1958 = vmatpush1.bf16.msra.mxu0 0
  %1959 = vmatprep.subr.bf16.mxu0 0
  %1960 = vmatpush1.bf16.msra.mxu0 0
  %1961 = vmatprep.subr.bf16.mxu0 0
  %1962 = vmatpush1.bf16.msra.mxu0 0
  %1963 = vmatprep.mubr.bf16.mxu0 0
  %1964 = vmatmul.mubr.bf16.gmra.mrb[0].mxu0 %v1923
  %v1965 = vpop.f32.mrb[0].mxu0
  %v1966 = vadd.f32 %v1897, %v1965
  %v1967 = vpop.f32.mrb[0].mxu0
  %v1968 = vpop.f32.mrb[0].mxu0
  %v1969 = vadd.f32 %v1897, %v1968
  %v1970 = vpop.f32.mrb[0].mxu0
  %1971 = vmatprep.mubr.bf16.mxu0 0
  %1972 = vmatmul.mubr.bf16.gmra.mrb[0].mxu0 %v1926
  %v1973 = vpop.f32.mrb[0].mxu0
  %v1974 = vadd.f32 %v1897, %v1973
  %v1975 = vpop.f32.mrb[0].mxu0
  %v1976 = vpop.f32.mrb[0].mxu0
  %v1977 = vadd.f32 %v1897, %v1976
  %v1978 = vpop.f32.mrb[0].mxu0
  %1979 = vmatprep.mubr.bf16.mxu0 0
  %1980 = vmatmul.mubr.bf16.gmra.mrb[0].mxu0 %v1929
  %v1981 = vpop.f32.mrb[0].mxu0
  %v1982 = vadd.f32 %v1897, %v1981
  %v1983 = vpop.f32.mrb[0].mxu0
  %v1984 = vpop.f32.mrb[0].mxu0
  %v1985 = vadd.f32 %v1897, %v1984
  %v1986 = vpop.f32.mrb[0].mxu0
  %1987 = vdwg.mxu0
  %v1988 = vpack.c.bf16 %v1969, %v1966
  %v1989 = vpack.c.bf16 %v1977, %v1974
  %v1990 = vpack.c.bf16 %v1985, %v1982
  %v1992 = vsel %vm1231, %v153, 0
  %v1995 = vsel %vm1231, %v154, 0
  %1997 = vmatprep.subr.bf16.mxu0 0
  %1998 = vmatpush1.bf16.msra.mxu0 %v1988
  %1999 = vmatprep.subr.bf16.mxu0 0
  %2000 = vmatpush1.bf16.msra.mxu0 %v1989
  %2001 = vmatprep.subr.bf16.mxu0 0
  %2002 = vmatpush1.bf16.msra.mxu0 %v1990
  %2003 = vmatprep.subr.bf16.mxu0 0
  %2004 = vmatpush1.bf16.msra.mxu0 0
  %2005 = vmatprep.subr.bf16.mxu0 0
  %2006 = vmatpush1.bf16.msra.mxu0 0
  %2007 = vmatprep.subr.bf16.mxu0 0
  %2008 = vmatpush1.bf16.msra.mxu0 0
  %2009 = vmatprep.subr.bf16.mxu0 0
  %2010 = vmatpush1.bf16.msra.mxu0 0
  %2011 = vmatprep.subr.bf16.mxu0 0
  %2012 = vmatpush1.bf16.msra.mxu0 0
  %2013 = vmatprep.subr.bf16.mxu0 0
  %2014 = vmatpush1.bf16.msra.mxu0 0
  %2015 = vmatprep.subr.bf16.mxu0 0
  %2016 = vmatpush1.bf16.msra.mxu0 0
  %2017 = vmatprep.subr.bf16.mxu0 0
  %2018 = vmatpush1.bf16.msra.mxu0 0
  %2019 = vmatprep.subr.bf16.mxu0 0
  %2020 = vmatpush1.bf16.msra.mxu0 0
  %2021 = vmatprep.subr.bf16.mxu0 0
  %2022 = vmatpush1.bf16.msra.mxu0 0
  %2023 = vmatprep.subr.bf16.mxu0 0
  %2024 = vmatpush1.bf16.msra.mxu0 0
  %2025 = vmatprep.subr.bf16.mxu0 0
  %2026 = vmatpush1.bf16.msra.mxu0 0
  %2027 = vmatprep.subr.bf16.mxu0 0
  %2028 = vmatpush1.bf16.msra.mxu0 0
  %2029 = vmatprep.mubr.bf16.mxu0 0
  %2030 = vmatmul.mubr.bf16.gmra.mrb[0].mxu0 %v1992
  %v2031 = vpop.f32.mrb[0].mxu0
  %v2032 = vadd.f32 0.0, %v2031
  %v2033 = vpop.f32.mrb[0].mxu0
  %v2034 = vpop.f32.mrb[0].mxu0
  %v2035 = vadd.f32 0.0, %v2034
  %v2036 = vpop.f32.mrb[0].mxu0
  %2037 = vmatprep.mubr.bf16.mxu0 0
  %2038 = vmatmul.mubr.bf16.gmra.mrb[0].mxu0 %v1995
  %v2039 = vpop.f32.mrb[0].mxu0
  %v2040 = vadd.f32 0.0, %v2039
  %v2041 = vpop.f32.mrb[0].mxu0
  %v2042 = vpop.f32.mrb[0].mxu0
  %v2043 = vpop.f32.mrb[0].mxu0
  %2044 = vdwg.mxu0
  %v2045 = vsel %vm288, %v2032, 0.0
  %2046 = vadd.xlane.f32.xlu0 %v2045
  %v2047 = vpop.xlane.xlu0 %2046
  %v2048 = vsel %vm288, %v2035, 0.0
  %2049 = vadd.xlane.f32.xlu0 %v2048
  %v2050 = vpop.xlane.xlu0 %2049
  %v2051 = vsel %vm1279, %v2040, 0.0
  %2052 = vadd.xlane.f32.xlu0 %v2051
  %v2053 = vpop.xlane.xlu0 %2052
  %v2054 = vmul.f32 %v2047, %v1044
  %v2055 = vmul.f32 %v2050, %v1044
  %v2056 = vmul.f32 %v2053, %v1044
  %v2057 = vsub.f32 %v2032, %v2054
  %v2058 = vsub.f32 %v2035, %v2055
  %v2059 = vsub.f32 %v2040, %v2056
  %v2060 = vmul.f32 %v2057, %v2057
  %v2061 = vmul.f32 %v2058, %v2058
  %v2062 = vmul.f32 %v2059, %v2059
  %v2063 = vsel %vm288, %v2060, 0.0
  %2064 = vadd.xlane.f32.xlu0 %v2063
  %v2065 = vpop.xlane.xlu0 %2064
  %v2066 = vsel %vm288, %v2061, 0.0
  %2067 = vadd.xlane.f32.xlu0 %v2066
  %v2068 = vpop.xlane.xlu0 %2067
  %v2069 = vsel %vm1279, %v2062, 0.0
  %2070 = vadd.xlane.f32.xlu0 %v2069
  %v2071 = vpop.xlane.xlu0 %2070
  %v2072 = vmul.f32 %v2065, %v1044
  %v2073 = vmul.f32 %v2068, %v1044
  %v2074 = vmul.f32 %v2071, %v1044
  %v2075 = vadd.f32 %v2072, 1e-05
  %v2076 = vadd.f32 %v2073, 1e-05
  %v2077 = vadd.f32 %v2074, 1e-05
  %v2078 = vrsqrt.pop %v2075
  %v2079 = vrsqrt.pop %v2076
  %v2080 = vrsqrt.pop %v2077
  %v2081 = vmul.f32 %v2057, %v2078
  %v2082 = vmul.f32 %v2058, %v2079
  %v2083 = vmul.f32 %v2059, %v2080
  %v2084 = vlaneseq
  %v2085 = vshrl.u32 %v2084, 7
  %v2086 = vsub.s32 0, %v2085
  %v2087 = vrot.slane %v1505, %v2086
  %v2088 = vmul.f32 %v2081, %v2087
  %v2089 = vmul.f32 %v2082, %v2087
  %v2090 = vmul.f32 %v2083, %v2087
  %v2091 = vlaneseq
  %v2092 = vshrl.u32 %v2091, 7
  %v2093 = vsub.s32 0, %v2092
  %v2094 = vrot.slane %v1506, %v2093
  %v2095 = vadd.f32 %v2088, %v2094
  %v2096 = vadd.f32 %v2089, %v2094
  %v2097 = vadd.f32 %v2090, %v2094
  %v2098 = vpack.c.bf16 %v2096, %v2095
  %v2099 = vpack.c.bf16 %v2097, %v2097
  %v2108 = vunpack.c.l.b16 %v1485
  %v2109 = vunpack.c.l.b16 %v1486
  %v2110 = vunpack.c.l.b16 %v1487
  %v2111 = vunpack.c.l.b16 %v1488
  %v2112 = vunpack.c.l.b16 %v1489
  %v2113 = vunpack.c.l.b16 %v1490
  %v2114 = vunpack.c.l.b16 %v1491
  %v2115 = vunpack.c.l.b16 %v1492
  %v2116 = vpack.c.b16 %v2109, %v2108
  %v2117 = vpack.c.b16 %v2111, %v2110
  %v2118 = vpack.c.b16 %v2113, %v2112
  %v2119 = vpack.c.b16 %v2115, %v2114
  %2127 = vrot.lane.b32.xlu0 %v1582, 64
  %v2128 = vpop.permute.xlu0 %2127
  %2129 = vrot.lane.b32.xlu0 %v1585, 64
  %v2130 = vpop.permute.xlu0 %2129
  %2131 = vrot.lane.b32.xlu0 %v1590, 64
  %v2132 = vpop.permute.xlu0 %2131
  %v2137 = vsel %vm288, %v2098, 0
  %v2140 = vsel %vm288, %v2099, 0
  %2142 = vmatprep.subr.bf16.mxu0 0
  %2143 = vmatpush1.bf16.msra.mxu0 %v2116
  %2144 = vmatprep.subr.bf16.mxu0 0
  %2145 = vmatpush1.bf16.msra.mxu0 %v2117
  %2146 = vmatprep.subr.bf16.mxu0 0
  %2147 = vmatpush1.bf16.msra.mxu0 %v2118
  %2148 = vmatprep.subr.bf16.mxu0 0
  %2149 = vmatpush1.bf16.msra.mxu0 %v2119
  %2150 = vmatprep.subr.bf16.mxu0 0
  %2151 = vmatpush1.bf16.msra.mxu0 0
  %2152 = vmatprep.subr.bf16.mxu0 0
  %2153 = vmatpush1.bf16.msra.mxu0 0
  %2154 = vmatprep.subr.bf16.mxu0 0
  %2155 = vmatpush1.bf16.msra.mxu0 0
  %2156 = vmatprep.subr.bf16.mxu0 0
  %2157 = vmatpush1.bf16.msra.mxu0 0
  %2158 = vmatprep.subr.bf16.mxu0 0
  %2159 = vmatpush1.bf16.msra.mxu0 0
  %2160 = vmatprep.subr.bf16.mxu0 0
  %2161 = vmatpush1.bf16.msra.mxu0 0
  %2162 = vmatprep.subr.bf16.mxu0 0
  %2163 = vmatpush1.bf16.msra.mxu0 0
  %2164 = vmatprep.subr.bf16.mxu0 0
  %2165 = vmatpush1.bf16.msra.mxu0 0
  %2166 = vmatprep.subr.bf16.mxu0 0
  %2167 = vmatpush1.bf16.msra.mxu0 0
  %2168 = vmatprep.subr.bf16.mxu0 0
  %2169 = vmatpush1.bf16.msra.mxu0 0
  %2170 = vmatprep.subr.bf16.mxu0 0
  %2171 = vmatpush1.bf16.msra.mxu0 0
  %2172 = vmatprep.subr.bf16.mxu0 0
  %2173 = vmatpush1.bf16.msra.mxu0 0
  %2174 = vmatprep.mubr.bf16.mxu0 0
  %2175 = vmatmul.mubr.bf16.gmra.mrb[0].mxu0 %v2137
  %v2176 = vpop.f32.mrb[0].mxu0
  %v2177 = vadd.f32 %v2128, %v2176
  %v2178 = vpop.f32.mrb[0].mxu0
  %v2179 = vpop.f32.mrb[0].mxu0
  %v2180 = vadd.f32 %v2130, %v2179
  %v2181 = vpop.f32.mrb[0].mxu0
  %2182 = vmatprep.mubr.bf16.mxu0 0
  %2183 = vmatmul.mubr.bf16.gmra.mrb[0].mxu0 %v2140
  %v2184 = vpop.f32.mrb[0].mxu0
  %v2185 = vadd.f32 %v2132, %v2184
  %v2186 = vpop.f32.mrb[0].mxu0
  %v2187 = vpop.f32.mrb[0].mxu0
  %v2188 = vpop.f32.mrb[0].mxu0
  %2189 = vdwg.mxu0
  %v2190 = vmax.f32 %v2177, 0.0
  %v2191 = vmax.f32 %v2180, 0.0
  %v2192 = vmax.f32 %v2185, 0.0
  %v2193 = vpack.c.bf16 %v2191, %v2190
  %v2194 = vpack.c.bf16 %v2192, %v2192
  %v2195 = vlaneseq
  %v2196 = vshrl.u32 %v2195, 7
  %v2197 = vsub.s32 0, %v2196
  %v2198 = vrot.slane %v1507, %v2197
  %v2207 = vunpack.c.l.b16 %v1494
  %v2208 = vunpack.c.l.b16 %v1495
  %v2209 = vunpack.c.l.b16 %v1496
  %v2210 = vunpack.c.l.b16 %v1497
  %v2211 = vunpack.c.l.b16 %v1498
  %v2212 = vunpack.c.l.b16 %v1499
  %v2213 = vunpack.c.l.b16 %v1500
  %v2214 = vunpack.c.l.b16 %v1501
  %v2215 = vpack.c.b16 %v2208, %v2207
  %v2216 = vpack.c.b16 %v2210, %v2209
  %v2217 = vpack.c.b16 %v2212, %v2211
  %v2218 = vpack.c.b16 %v2214, %v2213
  %v2224 = vsel %vm288, %v2193, 0
  %v2227 = vsel %vm288, %v2194, 0
  %2229 = vmatprep.subr.bf16.mxu0 0
  %2230 = vmatpush1.bf16.msra.mxu0 %v2215
  %2231 = vmatprep.subr.bf16.mxu0 0
  %2232 = vmatpush1.bf16.msra.mxu0 %v2216
  %2233 = vmatprep.subr.bf16.mxu0 0
  %2234 = vmatpush1.bf16.msra.mxu0 %v2217
  %2235 = vmatprep.subr.bf16.mxu0 0
  %2236 = vmatpush1.bf16.msra.mxu0 %v2218
  %2237 = vmatprep.subr.bf16.mxu0 0
  %2238 = vmatpush1.bf16.msra.mxu0 0
  %2239 = vmatprep.subr.bf16.mxu0 0
  %2240 = vmatpush1.bf16.msra.mxu0 0
  %2241 = vmatprep.subr.bf16.mxu0 0
  %2242 = vmatpush1.bf16.msra.mxu0 0
  %2243 = vmatprep.subr.bf16.mxu0 0
  %2244 = vmatpush1.bf16.msra.mxu0 0
  %2245 = vmatprep.subr.bf16.mxu0 0
  %2246 = vmatpush1.bf16.msra.mxu0 0
  %2247 = vmatprep.subr.bf16.mxu0 0
  %2248 = vmatpush1.bf16.msra.mxu0 0
  %2249 = vmatprep.subr.bf16.mxu0 0
  %2250 = vmatpush1.bf16.msra.mxu0 0
  %2251 = vmatprep.subr.bf16.mxu0 0
  %2252 = vmatpush1.bf16.msra.mxu0 0
  %2253 = vmatprep.subr.bf16.mxu0 0
  %2254 = vmatpush1.bf16.msra.mxu0 0
  %2255 = vmatprep.subr.bf16.mxu0 0
  %2256 = vmatpush1.bf16.msra.mxu0 0
  %2257 = vmatprep.subr.bf16.mxu0 0
  %2258 = vmatpush1.bf16.msra.mxu0 0
  %2259 = vmatprep.subr.bf16.mxu0 0
  %2260 = vmatpush1.bf16.msra.mxu0 0
  %2261 = vmatprep.mubr.bf16.mxu0 0
  %2262 = vmatmul.mubr.bf16.gmra.mrb[0].mxu0 %v2224
  %v2263 = vpop.f32.mrb[0].mxu0
  %v2264 = vadd.f32 %v2198, %v2263
  %v2265 = vpop.f32.mrb[0].mxu0
  %v2266 = vpop.f32.mrb[0].mxu0
  %v2267 = vadd.f32 %v2198, %v2266
  %v2268 = vpop.f32.mrb[0].mxu0
  %2269 = vmatprep.mubr.bf16.mxu0 0
  %2270 = vmatmul.mubr.bf16.gmra.mrb[0].mxu0 %v2227
  %v2271 = vpop.f32.mrb[0].mxu0
  %v2272 = vadd.f32 %v2198, %v2271
  %v2273 = vpop.f32.mrb[0].mxu0
  %v2274 = vpop.f32.mrb[0].mxu0
  %v2275 = vpop.f32.mrb[0].mxu0
  %2276 = vdwg.mxu0
  %2277 = vmatprep.subr.bf16.mxu0 0
  %2278 = vmatpush1.bf16.msra.mxu0 %v717
  %2279 = vmatprep.subr.bf16.mxu0 0
  %2280 = vmatpush1.bf16.msra.mxu0 %v718
  %2281 = vmatprep.subr.bf16.mxu0 0
  %2282 = vmatpush1.bf16.msra.mxu0 %v719
  %2283 = vmatprep.subr.bf16.mxu0 0
  %2284 = vmatpush1.bf16.msra.mxu0 %v720
  %2285 = vmatprep.subr.bf16.mxu0 0
  %2286 = vmatpush1.bf16.msra.mxu0 0
  %2287 = vmatprep.subr.bf16.mxu0 0
  %2288 = vmatpush1.bf16.msra.mxu0 0
  %2289 = vmatprep.subr.bf16.mxu0 0
  %2290 = vmatpush1.bf16.msra.mxu0 0
  %2291 = vmatprep.subr.bf16.mxu0 0
  %2292 = vmatpush1.bf16.msra.mxu0 0
  %2293 = vmatprep.subr.bf16.mxu0 0
  %2294 = vmatpush1.bf16.msra.mxu0 0
  %2295 = vmatprep.subr.bf16.mxu0 0
  %2296 = vmatpush1.bf16.msra.mxu0 0
  %2297 = vmatprep.subr.bf16.mxu0 0
  %2298 = vmatpush1.bf16.msra.mxu0 0
  %2299 = vmatprep.subr.bf16.mxu0 0
  %2300 = vmatpush1.bf16.msra.mxu0 0
  %2301 = vmatprep.subr.bf16.mxu0 0
  %2302 = vmatpush1.bf16.msra.mxu0 0
  %2303 = vmatprep.subr.bf16.mxu0 0
  %2304 = vmatpush1.bf16.msra.mxu0 0
  %2305 = vmatprep.subr.bf16.mxu0 0
  %2306 = vmatpush1.bf16.msra.mxu0 0
  %2307 = vmatprep.subr.bf16.mxu0 0
  %2308 = vmatpush1.bf16.msra.mxu0 0
  %2309 = vmatprep.mubr.bf16.mxu0 0
  %2310 = vmatmul.mubr.bf16.gmra.mrb[0].mxu0 %v1621
  %v2311 = vpop.f32.mrb[0].mxu0
  %v2312 = vadd.f32 %v699, %v2311
  %v2313 = vpop.f32.mrb[0].mxu0
  %v2314 = vpop.f32.mrb[0].mxu0
  %v2315 = vadd.f32 %v699, %v2314
  %v2316 = vpop.f32.mrb[0].mxu0
  %2317 = vdwg.mxu0
  %v2318 = vpack.c.bf16 %v2267, %v2264
  %v2319 = vpack.c.bf16 %v2272, %v2272
  %v2321 = vsel %vm288, %v2318, 0
  %v2324 = vsel %vm288, %v2319, 0
  %2326 = vmatprep.subr.bf16.mxu0 0
  %2327 = vmatpush1.bf16.msra.mxu0 %v787
  %2328 = vmatprep.subr.bf16.mxu0 0
  %2329 = vmatpush1.bf16.msra.mxu0 %v788
  %2330 = vmatprep.subr.bf16.mxu0 0
  %2331 = vmatpush1.bf16.msra.mxu0 %v789
  %2332 = vmatprep.subr.bf16.mxu0 0
  %2333 = vmatpush1.bf16.msra.mxu0 %v790
  %2334 = vmatprep.subr.bf16.mxu0 0
  %2335 = vmatpush1.bf16.msra.mxu0 0
  %2336 = vmatprep.subr.bf16.mxu0 0
  %2337 = vmatpush1.bf16.msra.mxu0 0
  %2338 = vmatprep.subr.bf16.mxu0 0
  %2339 = vmatpush1.bf16.msra.mxu0 0
  %2340 = vmatprep.subr.bf16.mxu0 0
  %2341 = vmatpush1.bf16.msra.mxu0 0
  %2342 = vmatprep.subr.bf16.mxu0 0
  %2343 = vmatpush1.bf16.msra.mxu0 0
  %2344 = vmatprep.subr.bf16.mxu0 0
  %2345 = vmatpush1.bf16.msra.mxu0 0
  %2346 = vmatprep.subr.bf16.mxu0 0
  %2347 = vmatpush1.bf16.msra.mxu0 0
  %2348 = vmatprep.subr.bf16.mxu0 0
  %2349 = vmatpush1.bf16.msra.mxu0 0
  %2350 = vmatprep.subr.bf16.mxu0 0
  %2351 = vmatpush1.bf16.msra.mxu0 0
  %2352 = vmatprep.subr.bf16.mxu0 0
  %2353 = vmatpush1.bf16.msra.mxu0 0
  %2354 = vmatprep.subr.bf16.mxu0 0
  %2355 = vmatpush1.bf16.msra.mxu0 0
  %2356 = vmatprep.subr.bf16.mxu0 0
  %2357 = vmatpush1.bf16.msra.mxu0 0
  %2358 = vmatprep.mubr.bf16.mxu0 0
  %2359 = vmatmul.mubr.bf16.gmra.mrb[0].mxu0 %v2321
  %v2360 = vpop.f32.mrb[0].mxu0
  %v2361 = vadd.f32 0.0, %v2360
  %v2362 = vpop.f32.mrb[0].mxu0
  %v2363 = vpop.f32.mrb[0].mxu0
  %v2364 = vadd.f32 0.0, %v2363
  %v2365 = vpop.f32.mrb[0].mxu0
  %2366 = vmatprep.mubr.bf16.mxu0 0
  %2367 = vmatmul.mubr.bf16.gmra.mrb[0].mxu0 %v2324
  %v2368 = vpop.f32.mrb[0].mxu0
  %v2369 = vadd.f32 0.0, %v2368
  %v2370 = vpop.f32.mrb[0].mxu0
  %v2371 = vpop.f32.mrb[0].mxu0
  %v2372 = vpop.f32.mrb[0].mxu0
  %2373 = vdwg.mxu0
  %v2374 = vpack.c.bf16 %v2315, %v2312
  %v2375 = vpack.c.bf16 %v2364, %v2361
  %v2376 = vpack.c.bf16 %v2369, %v2369
  %v2378 = vsel %vm878, %v2376, 0
  %2380 = vmatprep.subr.bf16.mxu0 0
  %2381 = vmatpush1.bf16.msra.mxu0 %v2375
  %2382 = vmatprep.subr.bf16.mxu0 0
  %2383 = vmatpush1.bf16.msra.mxu0 %v2378
  %2384 = vmatprep.subr.bf16.mxu0 0
  %2385 = vmatpush1.bf16.msra.mxu0 0
  %2386 = vmatprep.subr.bf16.mxu0 0
  %2387 = vmatpush1.bf16.msra.mxu0 0
  %2388 = vmatprep.subr.bf16.mxu0 0
  %2389 = vmatpush1.bf16.msra.mxu0 0
  %2390 = vmatprep.subr.bf16.mxu0 0
  %2391 = vmatpush1.bf16.msra.mxu0 0
  %2392 = vmatprep.subr.bf16.mxu0 0
  %2393 = vmatpush1.bf16.msra.mxu0 0
  %2394 = vmatprep.subr.bf16.mxu0 0
  %2395 = vmatpush1.bf16.msra.mxu0 0
  %2396 = vmatprep.subr.bf16.mxu0 0
  %2397 = vmatpush1.bf16.msra.mxu0 0
  %2398 = vmatprep.subr.bf16.mxu0 0
  %2399 = vmatpush1.bf16.msra.mxu0 0
  %2400 = vmatprep.subr.bf16.mxu0 0
  %2401 = vmatpush1.bf16.msra.mxu0 0
  %2402 = vmatprep.subr.bf16.mxu0 0
  %2403 = vmatpush1.bf16.msra.mxu0 0
  %2404 = vmatprep.subr.bf16.mxu0 0
  %2405 = vmatpush1.bf16.msra.mxu0 0
  %2406 = vmatprep.subr.bf16.mxu0 0
  %2407 = vmatpush1.bf16.msra.mxu0 0
  %2408 = vmatprep.subr.bf16.mxu0 0
  %2409 = vmatpush1.bf16.msra.mxu0 0
  %2410 = vmatprep.subr.bf16.mxu0 0
  %2411 = vmatpush1.bf16.msra.mxu0 0
  %2412 = vmatprep.mubr.bf16.mxu0 0
  %2413 = vmatmul.mubr.bf16.gmra.mrb[0].mxu0 %v870
  %v2414 = vpop.f32.mrb[0].mxu0
  %v2415 = vadd.f32 0.0, %v2414
  %v2416 = vpop.f32.mrb[0].mxu0
  %v2417 = vpop.f32.mrb[0].mxu0
  %v2418 = vadd.f32 0.0, %v2417
  %v2419 = vpop.f32.mrb[0].mxu0
  %2420 = vmatprep.mubr.bf16.mxu0 0
  %2421 = vmatmul.mubr.bf16.gmra.mrb[0].mxu0 %v873
  %v2422 = vpop.f32.mrb[0].mxu0
  %v2423 = vadd.f32 0.0, %v2422
  %v2424 = vpop.f32.mrb[0].mxu0
  %v2425 = vpop.f32.mrb[0].mxu0
  %v2426 = vadd.f32 0.0, %v2425
  %v2427 = vpop.f32.mrb[0].mxu0
  %2428 = vmatprep.mubr.bf16.mxu0 0
  %2429 = vmatmul.mubr.bf16.gmra.mrb[0].mxu0 %v876
  %v2430 = vpop.f32.mrb[0].mxu0
  %v2431 = vadd.f32 0.0, %v2430
  %v2432 = vpop.f32.mrb[0].mxu0
  %v2433 = vpop.f32.mrb[0].mxu0
  %v2434 = vadd.f32 0.0, %v2433
  %v2435 = vpop.f32.mrb[0].mxu0
  %2436 = vdwg.mxu0
  %v2438 = vsel %vm965, %v2374, 0
  %2440 = vmatprep.subr.bf16.mxu0 0
  %2441 = vmatpush1.bf16.msra.mxu0 %v2438
  %2442 = vmatprep.subr.bf16.mxu0 0
  %2443 = vmatpush1.bf16.msra.mxu0 0
  %2444 = vmatprep.subr.bf16.mxu0 0
  %2445 = vmatpush1.bf16.msra.mxu0 0
  %2446 = vmatprep.subr.bf16.mxu0 0
  %2447 = vmatpush1.bf16.msra.mxu0 0
  %2448 = vmatprep.subr.bf16.mxu0 0
  %2449 = vmatpush1.bf16.msra.mxu0 0
  %2450 = vmatprep.subr.bf16.mxu0 0
  %2451 = vmatpush1.bf16.msra.mxu0 0
  %2452 = vmatprep.subr.bf16.mxu0 0
  %2453 = vmatpush1.bf16.msra.mxu0 0
  %2454 = vmatprep.subr.bf16.mxu0 0
  %2455 = vmatpush1.bf16.msra.mxu0 0
  %2456 = vmatprep.subr.bf16.mxu0 0
  %2457 = vmatpush1.bf16.msra.mxu0 0
  %2458 = vmatprep.subr.bf16.mxu0 0
  %2459 = vmatpush1.bf16.msra.mxu0 0
  %2460 = vmatprep.subr.bf16.mxu0 0
  %2461 = vmatpush1.bf16.msra.mxu0 0
  %2462 = vmatprep.subr.bf16.mxu0 0
  %2463 = vmatpush1.bf16.msra.mxu0 0
  %2464 = vmatprep.subr.bf16.mxu0 0
  %2465 = vmatpush1.bf16.msra.mxu0 0
  %2466 = vmatprep.subr.bf16.mxu0 0
  %2467 = vmatpush1.bf16.msra.mxu0 0
  %2468 = vmatprep.subr.bf16.mxu0 0
  %2469 = vmatpush1.bf16.msra.mxu0 0
  %2470 = vmatprep.subr.bf16.mxu0 0
  %2471 = vmatpush1.bf16.msra.mxu0 0
  %2472 = vmatprep.mubr.bf16.mxu0 0
  %2473 = vmatmul.mubr.bf16.gmra.mrb[0].mxu0 %v957
  %v2474 = vpop.f32.mrb[0].mxu0
  %v2475 = vadd.f32 %v2415, %v2474
  %v2476 = vpop.f32.mrb[0].mxu0
  %v2477 = vpop.f32.mrb[0].mxu0
  %v2478 = vadd.f32 %v2418, %v2477
  %v2479 = vpop.f32.mrb[0].mxu0
  %2480 = vmatprep.mubr.bf16.mxu0 0
  %2481 = vmatmul.mubr.bf16.gmra.mrb[0].mxu0 %v960
  %v2482 = vpop.f32.mrb[0].mxu0
  %v2483 = vadd.f32 %v2423, %v2482
  %v2484 = vpop.f32.mrb[0].mxu0
  %v2485 = vpop.f32.mrb[0].mxu0
  %v2486 = vadd.f32 %v2426, %v2485
  %v2487 = vpop.f32.mrb[0].mxu0
  %2488 = vmatprep.mubr.bf16.mxu0 0
  %2489 = vmatmul.mubr.bf16.gmra.mrb[0].mxu0 %v963
  %v2490 = vpop.f32.mrb[0].mxu0
  %v2491 = vadd.f32 %v2431, %v2490
  %v2492 = vpop.f32.mrb[0].mxu0
  %v2493 = vpop.f32.mrb[0].mxu0
  %v2494 = vadd.f32 %v2434, %v2493
  %v2495 = vpop.f32.mrb[0].mxu0
  %2496 = vdwg.mxu0
  %v2497 = vsel %vm288, %v2475, 0.0
  %2498 = vadd.xlane.f32.xlu0 %v2497
  %v2499 = vpop.xlane.xlu0 %2498
  %v2500 = vsel %vm288, %v2478, 0.0
  %2501 = vadd.xlane.f32.xlu0 %v2500
  %v2502 = vpop.xlane.xlu0 %2501
  %v2503 = vsel %vm288, %v2483, 0.0
  %2504 = vadd.xlane.f32.xlu0 %v2503
  %v2505 = vpop.xlane.xlu0 %2504
  %v2506 = vsel %vm288, %v2486, 0.0
  %2507 = vadd.xlane.f32.xlu0 %v2506
  %v2508 = vpop.xlane.xlu0 %2507
  %v2509 = vsel %vm288, %v2491, 0.0
  %2510 = vadd.xlane.f32.xlu0 %v2509
  %v2511 = vpop.xlane.xlu0 %2510
  %v2512 = vsel %vm288, %v2494, 0.0
  %2513 = vadd.xlane.f32.xlu0 %v2512
  %v2514 = vpop.xlane.xlu0 %2513
  %v2515 = vmul.f32 %v2499, %v1044
  %v2516 = vmul.f32 %v2502, %v1044
  %v2517 = vmul.f32 %v2505, %v1044
  %v2518 = vmul.f32 %v2508, %v1044
  %v2519 = vmul.f32 %v2511, %v1044
  %v2520 = vmul.f32 %v2514, %v1044
  %v2521 = vsub.f32 %v2475, %v2515
  %v2522 = vsub.f32 %v2478, %v2516
  %v2523 = vsub.f32 %v2483, %v2517
  %v2524 = vsub.f32 %v2486, %v2518
  %v2525 = vsub.f32 %v2491, %v2519
  %v2526 = vsub.f32 %v2494, %v2520
  %v2527 = vmul.f32 %v2521, %v2521
  %v2528 = vmul.f32 %v2522, %v2522
  %v2529 = vmul.f32 %v2523, %v2523
  %v2530 = vmul.f32 %v2524, %v2524
  %v2531 = vmul.f32 %v2525, %v2525
  %v2532 = vmul.f32 %v2526, %v2526
  %v2533 = vsel %vm288, %v2527, 0.0
  %2534 = vadd.xlane.f32.xlu0 %v2533
  %v2535 = vpop.xlane.xlu0 %2534
  %v2536 = vsel %vm288, %v2528, 0.0
  %2537 = vadd.xlane.f32.xlu0 %v2536
  %v2538 = vpop.xlane.xlu0 %2537
  %v2539 = vsel %vm288, %v2529, 0.0
  %2540 = vadd.xlane.f32.xlu0 %v2539
  %v2541 = vpop.xlane.xlu0 %2540
  %v2542 = vsel %vm288, %v2530, 0.0
  %2543 = vadd.xlane.f32.xlu0 %v2542
  %v2544 = vpop.xlane.xlu0 %2543
  %v2545 = vsel %vm288, %v2531, 0.0
  %2546 = vadd.xlane.f32.xlu0 %v2545
  %v2547 = vpop.xlane.xlu0 %2546
  %v2548 = vsel %vm288, %v2532, 0.0
  %2549 = vadd.xlane.f32.xlu0 %v2548
  %v2550 = vpop.xlane.xlu0 %2549
  %v2551 = vmul.f32 %v2535, %v1044
  %v2552 = vmul.f32 %v2538, %v1044
  %v2553 = vmul.f32 %v2541, %v1044
  %v2554 = vmul.f32 %v2544, %v1044
  %v2555 = vmul.f32 %v2547, %v1044
  %v2556 = vmul.f32 %v2550, %v1044
  %v2557 = vadd.f32 %v2551, 1e-05
  %v2558 = vadd.f32 %v2552, 1e-05
  %v2559 = vadd.f32 %v2553, 1e-05
  %v2560 = vadd.f32 %v2554, 1e-05
  %v2561 = vadd.f32 %v2555, 1e-05
  %v2562 = vadd.f32 %v2556, 1e-05
  %v2563 = vrsqrt.pop %v2557
  %v2564 = vrsqrt.pop %v2558
  %v2565 = vrsqrt.pop %v2559
  %v2566 = vrsqrt.pop %v2560
  %v2567 = vrsqrt.pop %v2561
  %v2568 = vrsqrt.pop %v2562
  %v2569 = vmul.f32 %v2521, %v2563
  %v2570 = vmul.f32 %v2522, %v2564
  %v2571 = vmul.f32 %v2523, %v2565
  %v2572 = vmul.f32 %v2524, %v2566
  %v2573 = vmul.f32 %v2525, %v2567
  %v2574 = vmul.f32 %v2526, %v2568
  %v2575 = vmul.f32 %v2569, %v1108
  %v2576 = vmul.f32 %v2570, %v1108
  %v2577 = vmul.f32 %v2571, %v1108
  %v2578 = vmul.f32 %v2572, %v1108
  %v2579 = vmul.f32 %v2573, %v1108
  %v2580 = vmul.f32 %v2574, %v1108
  %v2581 = vadd.f32 %v2575, %v1118
  %v2582 = vadd.f32 %v2576, %v1118
  %v2583 = vadd.f32 %v2577, %v1118
  %v2584 = vadd.f32 %v2578, %v1118
  %v2585 = vadd.f32 %v2579, %v1118
  %v2586 = vadd.f32 %v2580, %v1118
  %v2587 = vmax.f32 %v2581, 0.0
  %v2588 = vmax.f32 %v2582, 0.0
  %v2589 = vmax.f32 %v2583, 0.0
  %v2590 = vmax.f32 %v2584, 0.0
  %v2591 = vmax.f32 %v2585, 0.0
  %v2592 = vmax.f32 %v2586, 0.0
  %v2593 = vpack.c.bf16 %v2588, %v2587
  %v2594 = vpack.c.bf16 %v2590, %v2589
  %v2595 = vpack.c.bf16 %v2592, %v2591
  %v2597 = vsel %vm288, %v2593, 0
  %v2600 = vsel %vm288, %v2594, 0
  %v2603 = vsel %vm288, %v2595, 0
  %2605 = vmatprep.subr.bf16.mxu0 0
  %2606 = vmatpush1.bf16.msra.mxu0 %v1154
  %2607 = vmatprep.subr.bf16.mxu0 0
  %2608 = vmatpush1.bf16.msra.mxu0 %v1155
  %2609 = vmatprep.subr.bf16.mxu0 0
  %2610 = vmatpush1.bf16.msra.mxu0 %v1156
  %2611 = vmatprep.subr.bf16.mxu0 0
  %2612 = vmatpush1.bf16.msra.mxu0 %v1157
  %2613 = vmatprep.subr.bf16.mxu0 0
  %2614 = vmatpush1.bf16.msra.mxu0 0
  %2615 = vmatprep.subr.bf16.mxu0 0
  %2616 = vmatpush1.bf16.msra.mxu0 0
  %2617 = vmatprep.subr.bf16.mxu0 0
  %2618 = vmatpush1.bf16.msra.mxu0 0
  %2619 = vmatprep.subr.bf16.mxu0 0
  %2620 = vmatpush1.bf16.msra.mxu0 0
  %2621 = vmatprep.subr.bf16.mxu0 0
  %2622 = vmatpush1.bf16.msra.mxu0 0
  %2623 = vmatprep.subr.bf16.mxu0 0
  %2624 = vmatpush1.bf16.msra.mxu0 0
  %2625 = vmatprep.subr.bf16.mxu0 0
  %2626 = vmatpush1.bf16.msra.mxu0 0
  %2627 = vmatprep.subr.bf16.mxu0 0
  %2628 = vmatpush1.bf16.msra.mxu0 0
  %2629 = vmatprep.subr.bf16.mxu0 0
  %2630 = vmatpush1.bf16.msra.mxu0 0
  %2631 = vmatprep.subr.bf16.mxu0 0
  %2632 = vmatpush1.bf16.msra.mxu0 0
  %2633 = vmatprep.subr.bf16.mxu0 0
  %2634 = vmatpush1.bf16.msra.mxu0 0
  %2635 = vmatprep.subr.bf16.mxu0 0
  %2636 = vmatpush1.bf16.msra.mxu0 0
  %2637 = vmatprep.mubr.bf16.mxu0 0
  %2638 = vmatmul.mubr.bf16.gmra.mrb[0].mxu0 %v2597
  %v2639 = vpop.f32.mrb[0].mxu0
  %v2640 = vadd.f32 %v1137, %v2639
  %v2641 = vpop.f32.mrb[0].mxu0
  %v2642 = vpop.f32.mrb[0].mxu0
  %v2643 = vadd.f32 %v1137, %v2642
  %v2644 = vpop.f32.mrb[0].mxu0
  %2645 = vmatprep.mubr.bf16.mxu0 0
  %2646 = vmatmul.mubr.bf16.gmra.mrb[0].mxu0 %v2600
  %v2647 = vpop.f32.mrb[0].mxu0
  %v2648 = vadd.f32 %v1137, %v2647
  %v2649 = vpop.f32.mrb[0].mxu0
  %v2650 = vpop.f32.mrb[0].mxu0
  %v2651 = vadd.f32 %v1137, %v2650
  %v2652 = vpop.f32.mrb[0].mxu0
  %2653 = vmatprep.mubr.bf16.mxu0 0
  %2654 = vmatmul.mubr.bf16.gmra.mrb[0].mxu0 %v2603
  %v2655 = vpop.f32.mrb[0].mxu0
  %v2656 = vadd.f32 %v1137, %v2655
  %v2657 = vpop.f32.mrb[0].mxu0
  %v2658 = vpop.f32.mrb[0].mxu0
  %v2659 = vadd.f32 %v1137, %v2658
  %v2660 = vpop.f32.mrb[0].mxu0
  %2661 = vdwg.mxu0
  %v2662 = vpack.c.bf16 %v2643, %v2640
  %v2663 = vpack.c.bf16 %v2651, %v2648
  %v2664 = vpack.c.bf16 %v2659, %v2656
  %2665 = vmatprep.subr.bf16.mxu0 0
  %2666 = vmatpush1.bf16.msra.mxu0 %v2662
  %2667 = vmatprep.subr.bf16.mxu0 0
  %2668 = vmatpush1.bf16.msra.mxu0 %v2663
  %2669 = vmatprep.subr.bf16.mxu0 0
  %2670 = vmatpush1.bf16.msra.mxu0 %v2664
  %2671 = vmatprep.subr.bf16.mxu0 0
  %2672 = vmatpush1.bf16.msra.mxu0 0
  %2673 = vmatprep.subr.bf16.mxu0 0
  %2674 = vmatpush1.bf16.msra.mxu0 0
  %2675 = vmatprep.subr.bf16.mxu0 0
  %2676 = vmatpush1.bf16.msra.mxu0 0
  %2677 = vmatprep.subr.bf16.mxu0 0
  %2678 = vmatpush1.bf16.msra.mxu0 0
  %2679 = vmatprep.subr.bf16.mxu0 0
  %2680 = vmatpush1.bf16.msra.mxu0 0
  %2681 = vmatprep.subr.bf16.mxu0 0
  %2682 = vmatpush1.bf16.msra.mxu0 0
  %2683 = vmatprep.subr.bf16.mxu0 0
  %2684 = vmatpush1.bf16.msra.mxu0 0
  %2685 = vmatprep.subr.bf16.mxu0 0
  %2686 = vmatpush1.bf16.msra.mxu0 0
  %2687 = vmatprep.subr.bf16.mxu0 0
  %2688 = vmatpush1.bf16.msra.mxu0 0
  %2689 = vmatprep.subr.bf16.mxu0 0
  %2690 = vmatpush1.bf16.msra.mxu0 0
  %2691 = vmatprep.subr.bf16.mxu0 0
  %2692 = vmatpush1.bf16.msra.mxu0 0
  %2693 = vmatprep.subr.bf16.mxu0 0
  %2694 = vmatpush1.bf16.msra.mxu0 0
  %2695 = vmatprep.subr.bf16.mxu0 0
  %2696 = vmatpush1.bf16.msra.mxu0 0
  %2697 = vmatprep.mubr.bf16.mxu0 0
  %2698 = vmatmul.mubr.bf16.gmra.mrb[0].mxu0 %v1233
  %v2699 = vpop.f32.mrb[0].mxu0
  %v2700 = vadd.f32 0.0, %v2699
  %v2701 = vpop.f32.mrb[0].mxu0
  %v2702 = vpop.f32.mrb[0].mxu0
  %v2703 = vadd.f32 0.0, %v2702
  %v2704 = vpop.f32.mrb[0].mxu0
  %2705 = vdwg.mxu0
  %v2706 = vsel %vm288, %v2700, 0.0
  %2707 = vadd.xlane.f32.xlu0 %v2706
  %v2708 = vpop.xlane.xlu0 %2707
  %v2709 = vsel %vm1279, %v2703, 0.0
  %2710 = vadd.xlane.f32.xlu0 %v2709
  %v2711 = vpop.xlane.xlu0 %2710
  %v2712 = vmul.f32 %v2708, %v1044
  %v2713 = vmul.f32 %v2711, %v1044
  %v2714 = vsub.f32 %v2700, %v2712
  %v2715 = vsub.f32 %v2703, %v2713
  %v2716 = vmul.f32 %v2714, %v2714
  %v2717 = vmul.f32 %v2715, %v2715
  %v2718 = vsel %vm288, %v2716, 0.0
  %2719 = vadd.xlane.f32.xlu0 %v2718
  %v2720 = vpop.xlane.xlu0 %2719
  %v2721 = vsel %vm1279, %v2717, 0.0
  %2722 = vadd.xlane.f32.xlu0 %v2721
  %v2723 = vpop.xlane.xlu0 %2722
  %v2724 = vmul.f32 %v2720, %v1044
  %v2725 = vmul.f32 %v2723, %v1044
  %v2726 = vadd.f32 %v2724, 1e-05
  %v2727 = vadd.f32 %v2725, 1e-05
  %v2728 = vrsqrt.pop %v2726
  %v2729 = vrsqrt.pop %v2727
  %v2730 = vmul.f32 %v2714, %v2728
  %v2731 = vmul.f32 %v2715, %v2729
  %v2732 = vmul.f32 %v2730, %v1306
  %v2733 = vmul.f32 %v2731, %v1306
  %v2734 = vadd.f32 %v2732, %v1312
  %v2735 = vadd.f32 %v2733, %v1312
  %v2736 = vpack.c.bf16 %v2735, %v2734
  %2739 = vrot.lane.b32.xlu0 %v2312, 64
  %v2740 = vpop.permute.xlu0 %2739
  %2741 = vrot.lane.b32.xlu0 %v2315, 64
  %v2742 = vpop.permute.xlu0 %2741
  %v2746 = vsel %vm288, %v2736, 0
  %2748 = vmatprep.subr.bf16.mxu0 0
  %2749 = vmatpush1.bf16.msra.mxu0 %v1332
  %2750 = vmatprep.subr.bf16.mxu0 0
  %2751 = vmatpush1.bf16.msra.mxu0 %v1333
  %2752 = vmatprep.subr.bf16.mxu0 0
  %2753 = vmatpush1.bf16.msra.mxu0 %v1334
  %2754 = vmatprep.subr.bf16.mxu0 0
  %2755 = vmatpush1.bf16.msra.mxu0 %v1335
  %2756 = vmatprep.subr.bf16.mxu0 0
  %2757 = vmatpush1.bf16.msra.mxu0 0
  %2758 = vmatprep.subr.bf16.mxu0 0
  %2759 = vmatpush1.bf16.msra.mxu0 0
  %2760 = vmatprep.subr.bf16.mxu0 0
  %2761 = vmatpush1.bf16.msra.mxu0 0
  %2762 = vmatprep.subr.bf16.mxu0 0
  %2763 = vmatpush1.bf16.msra.mxu0 0
  %2764 = vmatprep.subr.bf16.mxu0 0
  %2765 = vmatpush1.bf16.msra.mxu0 0
  %2766 = vmatprep.subr.bf16.mxu0 0
  %2767 = vmatpush1.bf16.msra.mxu0 0
  %2768 = vmatprep.subr.bf16.mxu0 0
  %2769 = vmatpush1.bf16.msra.mxu0 0
  %2770 = vmatprep.subr.bf16.mxu0 0
  %2771 = vmatpush1.bf16.msra.mxu0 0
  %2772 = vmatprep.subr.bf16.mxu0 0
  %2773 = vmatpush1.bf16.msra.mxu0 0
  %2774 = vmatprep.subr.bf16.mxu0 0
  %2775 = vmatpush1.bf16.msra.mxu0 0
  %2776 = vmatprep.subr.bf16.mxu0 0
  %2777 = vmatpush1.bf16.msra.mxu0 0
  %2778 = vmatprep.subr.bf16.mxu0 0
  %2779 = vmatpush1.bf16.msra.mxu0 0
  %2780 = vmatprep.mubr.bf16.mxu0 0
  %2781 = vmatmul.mubr.bf16.gmra.mrb[0].mxu0 %v2746
  %v2782 = vpop.f32.mrb[0].mxu0
  %v2783 = vadd.f32 %v2740, %v2782
  %v2784 = vpop.f32.mrb[0].mxu0
  %v2785 = vpop.f32.mrb[0].mxu0
  %v2786 = vadd.f32 %v2742, %v2785
  %v2787 = vpop.f32.mrb[0].mxu0
  %2788 = vdwg.mxu0
  %v2789 = vmax.f32 %v2783, 0.0
  %v2790 = vmax.f32 %v2786, 0.0
  %v2791 = vpack.c.bf16 %v2790, %v2789
  %v2793 = vsel %vm288, %v2791, 0
  %2795 = vmatprep.subr.bf16.mxu0 0
  %2796 = vmatpush1.bf16.msra.mxu0 %v1415
  %2797 = vmatprep.subr.bf16.mxu0 0
  %2798 = vmatpush1.bf16.msra.mxu0 %v1416
  %2799 = vmatprep.subr.bf16.mxu0 0
  %2800 = vmatpush1.bf16.msra.mxu0 %v1417
  %2801 = vmatprep.subr.bf16.mxu0 0
  %2802 = vmatpush1.bf16.msra.mxu0 %v1418
  %2803 = vmatprep.subr.bf16.mxu0 0
  %2804 = vmatpush1.bf16.msra.mxu0 0
  %2805 = vmatprep.subr.bf16.mxu0 0
  %2806 = vmatpush1.bf16.msra.mxu0 0
  %2807 = vmatprep.subr.bf16.mxu0 0
  %2808 = vmatpush1.bf16.msra.mxu0 0
  %2809 = vmatprep.subr.bf16.mxu0 0
  %2810 = vmatpush1.bf16.msra.mxu0 0
  %2811 = vmatprep.subr.bf16.mxu0 0
  %2812 = vmatpush1.bf16.msra.mxu0 0
  %2813 = vmatprep.subr.bf16.mxu0 0
  %2814 = vmatpush1.bf16.msra.mxu0 0
  %2815 = vmatprep.subr.bf16.mxu0 0
  %2816 = vmatpush1.bf16.msra.mxu0 0
  %2817 = vmatprep.subr.bf16.mxu0 0
  %2818 = vmatpush1.bf16.msra.mxu0 0
  %2819 = vmatprep.subr.bf16.mxu0 0
  %2820 = vmatpush1.bf16.msra.mxu0 0
  %2821 = vmatprep.subr.bf16.mxu0 0
  %2822 = vmatpush1.bf16.msra.mxu0 0
  %2823 = vmatprep.subr.bf16.mxu0 0
  %2824 = vmatpush1.bf16.msra.mxu0 0
  %2825 = vmatprep.subr.bf16.mxu0 0
  %2826 = vmatpush1.bf16.msra.mxu0 0
  %2827 = vmatprep.mubr.bf16.mxu0 0
  %2828 = vmatmul.mubr.bf16.gmra.mrb[0].mxu0 %v2793
  %v2829 = vpop.f32.mrb[0].mxu0
  %v2830 = vadd.f32 %v1398, %v2829
  %v2831 = vpop.f32.mrb[0].mxu0
  %v2832 = vpop.f32.mrb[0].mxu0
  %v2833 = vadd.f32 %v1398, %v2832
  %v2834 = vpop.f32.mrb[0].mxu0
  %2835 = vdwg.mxu0
  %2836 = vmatprep.subr.bf16.mxu0 0
  %2837 = vmatpush1.bf16.msra.mxu0 %v1539
  %2838 = vmatprep.subr.bf16.mxu0 0
  %2839 = vmatpush1.bf16.msra.mxu0 %v1540
  %2840 = vmatprep.subr.bf16.mxu0 0
  %2841 = vmatpush1.bf16.msra.mxu0 %v1541
  %2842 = vmatprep.subr.bf16.mxu0 0
  %2843 = vmatpush1.bf16.msra.mxu0 %v1542
  %2844 = vmatprep.subr.bf16.mxu0 0
  %2845 = vmatpush1.bf16.msra.mxu0 0
  %2846 = vmatprep.subr.bf16.mxu0 0
  %2847 = vmatpush1.bf16.msra.mxu0 0
  %2848 = vmatprep.subr.bf16.mxu0 0
  %2849 = vmatpush1.bf16.msra.mxu0 0
  %2850 = vmatprep.subr.bf16.mxu0 0
  %2851 = vmatpush1.bf16.msra.mxu0 0
  %2852 = vmatprep.subr.bf16.mxu0 0
  %2853 = vmatpush1.bf16.msra.mxu0 0
  %2854 = vmatprep.subr.bf16.mxu0 0
  %2855 = vmatpush1.bf16.msra.mxu0 0
  %2856 = vmatprep.subr.bf16.mxu0 0
  %2857 = vmatpush1.bf16.msra.mxu0 0
  %2858 = vmatprep.subr.bf16.mxu0 0
  %2859 = vmatpush1.bf16.msra.mxu0 0
  %2860 = vmatprep.subr.bf16.mxu0 0
  %2861 = vmatpush1.bf16.msra.mxu0 0
  %2862 = vmatprep.subr.bf16.mxu0 0
  %2863 = vmatpush1.bf16.msra.mxu0 0
  %2864 = vmatprep.subr.bf16.mxu0 0
  %2865 = vmatpush1.bf16.msra.mxu0 0
  %2866 = vmatprep.subr.bf16.mxu0 0
  %2867 = vmatpush1.bf16.msra.mxu0 0
  %2868 = vmatprep.mubr.bf16.mxu0 0
  %2869 = vmatmul.mubr.bf16.gmra.mrb[0].mxu0 %v2321
  %v2870 = vpop.f32.mrb[0].mxu0
  %v2871 = vadd.f32 %v1521, %v2870
  %v2872 = vpop.f32.mrb[0].mxu0
  %v2873 = vpop.f32.mrb[0].mxu0
  %v2874 = vadd.f32 %v1521, %v2873
  %v2875 = vpop.f32.mrb[0].mxu0
  %2876 = vmatprep.mubr.bf16.mxu0 0
  %2877 = vmatmul.mubr.bf16.gmra.mrb[0].mxu0 %v2324
  %v2878 = vpop.f32.mrb[0].mxu0
  %v2879 = vadd.f32 %v1521, %v2878
  %v2880 = vpop.f32.mrb[0].mxu0
  %v2881 = vpop.f32.mrb[0].mxu0
  %v2882 = vpop.f32.mrb[0].mxu0
  %2883 = vdwg.mxu0
  %v2884 = vpack.c.bf16 %v2833, %v2830
  %v2886 = vsel %vm288, %v2884, 0
  %2888 = vmatprep.subr.bf16.mxu0 0
  %2889 = vmatpush1.bf16.msra.mxu0 %v1612
  %2890 = vmatprep.subr.bf16.mxu0 0
  %2891 = vmatpush1.bf16.msra.mxu0 %v1613
  %2892 = vmatprep.subr.bf16.mxu0 0
  %2893 = vmatpush1.bf16.msra.mxu0 %v1614
  %2894 = vmatprep.subr.bf16.mxu0 0
  %2895 = vmatpush1.bf16.msra.mxu0 %v1615
  %2896 = vmatprep.subr.bf16.mxu0 0
  %2897 = vmatpush1.bf16.msra.mxu0 0
  %2898 = vmatprep.subr.bf16.mxu0 0
  %2899 = vmatpush1.bf16.msra.mxu0 0
  %2900 = vmatprep.subr.bf16.mxu0 0
  %2901 = vmatpush1.bf16.msra.mxu0 0
  %2902 = vmatprep.subr.bf16.mxu0 0
  %2903 = vmatpush1.bf16.msra.mxu0 0
  %2904 = vmatprep.subr.bf16.mxu0 0
  %2905 = vmatpush1.bf16.msra.mxu0 0
  %2906 = vmatprep.subr.bf16.mxu0 0
  %2907 = vmatpush1.bf16.msra.mxu0 0
  %2908 = vmatprep.subr.bf16.mxu0 0
  %2909 = vmatpush1.bf16.msra.mxu0 0
  %2910 = vmatprep.subr.bf16.mxu0 0
  %2911 = vmatpush1.bf16.msra.mxu0 0
  %2912 = vmatprep.subr.bf16.mxu0 0
  %2913 = vmatpush1.bf16.msra.mxu0 0
  %2914 = vmatprep.subr.bf16.mxu0 0
  %2915 = vmatpush1.bf16.msra.mxu0 0
  %2916 = vmatprep.subr.bf16.mxu0 0
  %2917 = vmatpush1.bf16.msra.mxu0 0
  %2918 = vmatprep.subr.bf16.mxu0 0
  %2919 = vmatpush1.bf16.msra.mxu0 0
  %2920 = vmatprep.mubr.bf16.mxu0 0
  %2921 = vmatmul.mubr.bf16.gmra.mrb[0].mxu0 %v2886
  %v2922 = vpop.f32.mrb[0].mxu0
  %v2923 = vadd.f32 0.0, %v2922
  %v2924 = vpop.f32.mrb[0].mxu0
  %v2925 = vpop.f32.mrb[0].mxu0
  %v2926 = vadd.f32 0.0, %v2925
  %v2927 = vpop.f32.mrb[0].mxu0
  %2928 = vdwg.mxu0
  %v2929 = vpack.c.bf16 %v2874, %v2871
  %v2930 = vpack.c.bf16 %v2879, %v2879
  %v2931 = vpack.c.bf16 %v2926, %v2923
  %v2933 = vsel %vm965, %v2931, 0
  %2935 = vmatprep.subr.bf16.mxu0 0
  %2936 = vmatpush1.bf16.msra.mxu0 %v2933
  %2937 = vmatprep.subr.bf16.mxu0 0
  %2938 = vmatpush1.bf16.msra.mxu0 0
  %2939 = vmatprep.subr.bf16.mxu0 0
  %2940 = vmatpush1.bf16.msra.mxu0 0
  %2941 = vmatprep.subr.bf16.mxu0 0
  %2942 = vmatpush1.bf16.msra.mxu0 0
  %2943 = vmatprep.subr.bf16.mxu0 0
  %2944 = vmatpush1.bf16.msra.mxu0 0
  %2945 = vmatprep.subr.bf16.mxu0 0
  %2946 = vmatpush1.bf16.msra.mxu0 0
  %2947 = vmatprep.subr.bf16.mxu0 0
  %2948 = vmatpush1.bf16.msra.mxu0 0
  %2949 = vmatprep.subr.bf16.mxu0 0
  %2950 = vmatpush1.bf16.msra.mxu0 0
  %2951 = vmatprep.subr.bf16.mxu0 0
  %2952 = vmatpush1.bf16.msra.mxu0 0
  %2953 = vmatprep.subr.bf16.mxu0 0
  %2954 = vmatpush1.bf16.msra.mxu0 0
  %2955 = vmatprep.subr.bf16.mxu0 0
  %2956 = vmatpush1.bf16.msra.mxu0 0
  %2957 = vmatprep.subr.bf16.mxu0 0
  %2958 = vmatpush1.bf16.msra.mxu0 0
  %2959 = vmatprep.subr.bf16.mxu0 0
  %2960 = vmatpush1.bf16.msra.mxu0 0
  %2961 = vmatprep.subr.bf16.mxu0 0
  %2962 = vmatpush1.bf16.msra.mxu0 0
  %2963 = vmatprep.subr.bf16.mxu0 0
  %2964 = vmatpush1.bf16.msra.mxu0 0
  %2965 = vmatprep.subr.bf16.mxu0 0
  %2966 = vmatpush1.bf16.msra.mxu0 0
  %2967 = vmatprep.mubr.bf16.mxu0 0
  %2968 = vmatmul.mubr.bf16.gmra.mrb[0].mxu0 %v957
  %v2969 = vpop.f32.mrb[0].mxu0
  %v2970 = vadd.f32 0.0, %v2969
  %v2971 = vpop.f32.mrb[0].mxu0
  %v2972 = vpop.f32.mrb[0].mxu0
  %v2973 = vadd.f32 0.0, %v2972
  %v2974 = vpop.f32.mrb[0].mxu0
  %2975 = vmatprep.mubr.bf16.mxu0 0
  %2976 = vmatmul.mubr.bf16.gmra.mrb[0].mxu0 %v960
  %v2977 = vpop.f32.mrb[0].mxu0
  %v2978 = vadd.f32 0.0, %v2977
  %v2979 = vpop.f32.mrb[0].mxu0
  %v2980 = vpop.f32.mrb[0].mxu0
  %v2981 = vadd.f32 0.0, %v2980
  %v2982 = vpop.f32.mrb[0].mxu0
  %2983 = vmatprep.mubr.bf16.mxu0 0
  %2984 = vmatmul.mubr.bf16.gmra.mrb[0].mxu0 %v963
  %v2985 = vpop.f32.mrb[0].mxu0
  %v2986 = vadd.f32 0.0, %v2985
  %v2987 = vpop.f32.mrb[0].mxu0
  %v2988 = vpop.f32.mrb[0].mxu0
  %v2989 = vadd.f32 0.0, %v2988
  %v2990 = vpop.f32.mrb[0].mxu0
  %2991 = vdwg.mxu0
  %v2993 = vsel %vm878, %v2930, 0
  %2995 = vmatprep.subr.bf16.mxu0 0
  %2996 = vmatpush1.bf16.msra.mxu0 %v2929
  %2997 = vmatprep.subr.bf16.mxu0 0
  %2998 = vmatpush1.bf16.msra.mxu0 %v2993
  %2999 = vmatprep.subr.bf16.mxu0 0
  %3000 = vmatpush1.bf16.msra.mxu0 0
  %3001 = vmatprep.subr.bf16.mxu0 0
  %3002 = vmatpush1.bf16.msra.mxu0 0
  %3003 = vmatprep.subr.bf16.mxu0 0
  %3004 = vmatpush1.bf16.msra.mxu0 0
  %3005 = vmatprep.subr.bf16.mxu0 0
  %3006 = vmatpush1.bf16.msra.mxu0 0
  %3007 = vmatprep.subr.bf16.mxu0 0
  %3008 = vmatpush1.bf16.msra.mxu0 0
  %3009 = vmatprep.subr.bf16.mxu0 0
  %3010 = vmatpush1.bf16.msra.mxu0 0
  %3011 = vmatprep.subr.bf16.mxu0 0
  %3012 = vmatpush1.bf16.msra.mxu0 0
  %3013 = vmatprep.subr.bf16.mxu0 0
  %3014 = vmatpush1.bf16.msra.mxu0 0
  %3015 = vmatprep.subr.bf16.mxu0 0
  %3016 = vmatpush1.bf16.msra.mxu0 0
  %3017 = vmatprep.subr.bf16.mxu0 0
  %3018 = vmatpush1.bf16.msra.mxu0 0
  %3019 = vmatprep.subr.bf16.mxu0 0
  %3020 = vmatpush1.bf16.msra.mxu0 0
  %3021 = vmatprep.subr.bf16.mxu0 0
  %3022 = vmatpush1.bf16.msra.mxu0 0
  %3023 = vmatprep.subr.bf16.mxu0 0
  %3024 = vmatpush1.bf16.msra.mxu0 0
  %3025 = vmatprep.subr.bf16.mxu0 0
  %3026 = vmatpush1.bf16.msra.mxu0 0
  %3027 = vmatprep.mubr.bf16.mxu0 0
  %3028 = vmatmul.mubr.bf16.gmra.mrb[0].mxu0 %v870
  %v3029 = vpop.f32.mrb[0].mxu0
  %v3030 = vadd.f32 %v2970, %v3029
  %v3031 = vpop.f32.mrb[0].mxu0
  %v3032 = vpop.f32.mrb[0].mxu0
  %v3033 = vadd.f32 %v2973, %v3032
  %v3034 = vpop.f32.mrb[0].mxu0
  %3035 = vmatprep.mubr.bf16.mxu0 0
  %3036 = vmatmul.mubr.bf16.gmra.mrb[0].mxu0 %v873
  %v3037 = vpop.f32.mrb[0].mxu0
  %v3038 = vadd.f32 %v2978, %v3037
  %v3039 = vpop.f32.mrb[0].mxu0
  %v3040 = vpop.f32.mrb[0].mxu0
  %v3041 = vadd.f32 %v2981, %v3040
  %v3042 = vpop.f32.mrb[0].mxu0
  %3043 = vmatprep.mubr.bf16.mxu0 0
  %3044 = vmatmul.mubr.bf16.gmra.mrb[0].mxu0 %v876
  %v3045 = vpop.f32.mrb[0].mxu0
  %v3046 = vadd.f32 %v2986, %v3045
  %v3047 = vpop.f32.mrb[0].mxu0
  %v3048 = vpop.f32.mrb[0].mxu0
  %v3049 = vadd.f32 %v2989, %v3048
  %v3050 = vpop.f32.mrb[0].mxu0
  %3051 = vdwg.mxu0
  %v3052 = vsel %vm288, %v3030, 0.0
  %3053 = vadd.xlane.f32.xlu0 %v3052
  %v3054 = vpop.xlane.xlu0 %3053
  %v3055 = vsel %vm288, %v3033, 0.0
  %3056 = vadd.xlane.f32.xlu0 %v3055
  %v3057 = vpop.xlane.xlu0 %3056
  %v3058 = vsel %vm288, %v3038, 0.0
  %3059 = vadd.xlane.f32.xlu0 %v3058
  %v3060 = vpop.xlane.xlu0 %3059
  %v3061 = vsel %vm288, %v3041, 0.0
  %3062 = vadd.xlane.f32.xlu0 %v3061
  %v3063 = vpop.xlane.xlu0 %3062
  %v3064 = vsel %vm288, %v3046, 0.0
  %3065 = vadd.xlane.f32.xlu0 %v3064
  %v3066 = vpop.xlane.xlu0 %3065
  %v3067 = vsel %vm288, %v3049, 0.0
  %3068 = vadd.xlane.f32.xlu0 %v3067
  %v3069 = vpop.xlane.xlu0 %3068
  %v3070 = vmul.f32 %v3054, %v1044
  %v3071 = vmul.f32 %v3057, %v1044
  %v3072 = vmul.f32 %v3060, %v1044
  %v3073 = vmul.f32 %v3063, %v1044
  %v3074 = vmul.f32 %v3066, %v1044
  %v3075 = vmul.f32 %v3069, %v1044
  %v3076 = vsub.f32 %v3030, %v3070
  %v3077 = vsub.f32 %v3033, %v3071
  %v3078 = vsub.f32 %v3038, %v3072
  %v3079 = vsub.f32 %v3041, %v3073
  %v3080 = vsub.f32 %v3046, %v3074
  %v3081 = vsub.f32 %v3049, %v3075
  %v3082 = vmul.f32 %v3076, %v3076
  %v3083 = vmul.f32 %v3077, %v3077
  %v3084 = vmul.f32 %v3078, %v3078
  %v3085 = vmul.f32 %v3079, %v3079
  %v3086 = vmul.f32 %v3080, %v3080
  %v3087 = vmul.f32 %v3081, %v3081
  %v3088 = vsel %vm288, %v3082, 0.0
  %3089 = vadd.xlane.f32.xlu0 %v3088
  %v3090 = vpop.xlane.xlu0 %3089
  %v3091 = vsel %vm288, %v3083, 0.0
  %3092 = vadd.xlane.f32.xlu0 %v3091
  %v3093 = vpop.xlane.xlu0 %3092
  %v3094 = vsel %vm288, %v3084, 0.0
  %3095 = vadd.xlane.f32.xlu0 %v3094
  %v3096 = vpop.xlane.xlu0 %3095
  %v3097 = vsel %vm288, %v3085, 0.0
  %3098 = vadd.xlane.f32.xlu0 %v3097
  %v3099 = vpop.xlane.xlu0 %3098
  %v3100 = vsel %vm288, %v3086, 0.0
  %3101 = vadd.xlane.f32.xlu0 %v3100
  %v3102 = vpop.xlane.xlu0 %3101
  %v3103 = vsel %vm288, %v3087, 0.0
  %3104 = vadd.xlane.f32.xlu0 %v3103
  %v3105 = vpop.xlane.xlu0 %3104
  %v3106 = vmul.f32 %v3090, %v1044
  %v3107 = vmul.f32 %v3093, %v1044
  %v3108 = vmul.f32 %v3096, %v1044
  %v3109 = vmul.f32 %v3099, %v1044
  %v3110 = vmul.f32 %v3102, %v1044
  %v3111 = vmul.f32 %v3105, %v1044
  %v3112 = vadd.f32 %v3106, 1e-05
  %v3113 = vadd.f32 %v3107, 1e-05
  %v3114 = vadd.f32 %v3108, 1e-05
  %v3115 = vadd.f32 %v3109, 1e-05
  %v3116 = vadd.f32 %v3110, 1e-05
  %v3117 = vadd.f32 %v3111, 1e-05
  %v3118 = vrsqrt.pop %v3112
  %v3119 = vrsqrt.pop %v3113
  %v3120 = vrsqrt.pop %v3114
  %v3121 = vrsqrt.pop %v3115
  %v3122 = vrsqrt.pop %v3116
  %v3123 = vrsqrt.pop %v3117
  %v3124 = vmul.f32 %v3076, %v3118
  %v3125 = vmul.f32 %v3077, %v3119
  %v3126 = vmul.f32 %v3078, %v3120
  %v3127 = vmul.f32 %v3079, %v3121
  %v3128 = vmul.f32 %v3080, %v3122
  %v3129 = vmul.f32 %v3081, %v3123
  %v3130 = vmul.f32 %v3124, %v1868
  %v3131 = vmul.f32 %v3125, %v1868
  %v3132 = vmul.f32 %v3126, %v1868
  %v3133 = vmul.f32 %v3127, %v1868
  %v3134 = vmul.f32 %v3128, %v1868
  %v3135 = vmul.f32 %v3129, %v1868
  %v3136 = vadd.f32 %v3130, %v1878
  %v3137 = vadd.f32 %v3131, %v1878
  %v3138 = vadd.f32 %v3132, %v1878
  %v3139 = vadd.f32 %v3133, %v1878
  %v3140 = vadd.f32 %v3134, %v1878
  %v3141 = vadd.f32 %v3135, %v1878
  %v3142 = vmax.f32 %v3136, 0.0
  %v3143 = vmax.f32 %v3137, 0.0
  %v3144 = vmax.f32 %v3138, 0.0
  %v3145 = vmax.f32 %v3139, 0.0
  %v3146 = vmax.f32 %v3140, 0.0
  %v3147 = vmax.f32 %v3141, 0.0
  %v3148 = vpack.c.bf16 %v3143, %v3142
  %v3149 = vpack.c.bf16 %v3145, %v3144
  %v3150 = vpack.c.bf16 %v3147, %v3146
  %v3152 = vsel %vm288, %v3148, 0
  %v3155 = vsel %vm288, %v3149, 0
  %v3158 = vsel %vm288, %v3150, 0
  %3160 = vmatprep.subr.bf16.mxu0 0
  %3161 = vmatpush1.bf16.msra.mxu0 %v1914
  %3162 = vmatprep.subr.bf16.mxu0 0
  %3163 = vmatpush1.bf16.msra.mxu0 %v1915
  %3164 = vmatprep.subr.bf16.mxu0 0
  %3165 = vmatpush1.bf16.msra.mxu0 %v1916
  %3166 = vmatprep.subr.bf16.mxu0 0
  %3167 = vmatpush1.bf16.msra.mxu0 %v1917
  %3168 = vmatprep.subr.bf16.mxu0 0
  %3169 = vmatpush1.bf16.msra.mxu0 0
  %3170 = vmatprep.subr.bf16.mxu0 0
  %3171 = vmatpush1.bf16.msra.mxu0 0
  %3172 = vmatprep.subr.bf16.mxu0 0
  %3173 = vmatpush1.bf16.msra.mxu0 0
  %3174 = vmatprep.subr.bf16.mxu0 0
  %3175 = vmatpush1.bf16.msra.mxu0 0
  %3176 = vmatprep.subr.bf16.mxu0 0
  %3177 = vmatpush1.bf16.msra.mxu0 0
  %3178 = vmatprep.subr.bf16.mxu0 0
  %3179 = vmatpush1.bf16.msra.mxu0 0
  %3180 = vmatprep.subr.bf16.mxu0 0
  %3181 = vmatpush1.bf16.msra.mxu0 0
  %3182 = vmatprep.subr.bf16.mxu0 0
  %3183 = vmatpush1.bf16.msra.mxu0 0
  %3184 = vmatprep.subr.bf16.mxu0 0
  %3185 = vmatpush1.bf16.msra.mxu0 0
  %3186 = vmatprep.subr.bf16.mxu0 0
  %3187 = vmatpush1.bf16.msra.mxu0 0
  %3188 = vmatprep.subr.bf16.mxu0 0
  %3189 = vmatpush1.bf16.msra.mxu0 0
  %3190 = vmatprep.subr.bf16.mxu0 0
  %3191 = vmatpush1.bf16.msra.mxu0 0
  %3192 = vmatprep.mubr.bf16.mxu0 0
  %3193 = vmatmul.mubr.bf16.gmra.mrb[0].mxu0 %v3152
  %v3194 = vpop.f32.mrb[0].mxu0
  %v3195 = vadd.f32 %v1897, %v3194
  %v3196 = vpop.f32.mrb[0].mxu0
  %v3197 = vpop.f32.mrb[0].mxu0
  %v3198 = vadd.f32 %v1897, %v3197
  %v3199 = vpop.f32.mrb[0].mxu0
  %3200 = vmatprep.mubr.bf16.mxu0 0
  %3201 = vmatmul.mubr.bf16.gmra.mrb[0].mxu0 %v3155
  %v3202 = vpop.f32.mrb[0].mxu0
  %v3203 = vadd.f32 %v1897, %v3202
  %v3204 = vpop.f32.mrb[0].mxu0
  %v3205 = vpop.f32.mrb[0].mxu0
  %v3206 = vadd.f32 %v1897, %v3205
  %v3207 = vpop.f32.mrb[0].mxu0
  %3208 = vmatprep.mubr.bf16.mxu0 0
  %3209 = vmatmul.mubr.bf16.gmra.mrb[0].mxu0 %v3158
  %v3210 = vpop.f32.mrb[0].mxu0
  %v3211 = vadd.f32 %v1897, %v3210
  %v3212 = vpop.f32.mrb[0].mxu0
  %v3213 = vpop.f32.mrb[0].mxu0
  %v3214 = vadd.f32 %v1897, %v3213
  %v3215 = vpop.f32.mrb[0].mxu0
  %3216 = vdwg.mxu0
  %v3217 = vpack.c.bf16 %v3198, %v3195
  %v3218 = vpack.c.bf16 %v3206, %v3203
  %v3219 = vpack.c.bf16 %v3214, %v3211
  %3220 = vmatprep.subr.bf16.mxu0 0
  %3221 = vmatpush1.bf16.msra.mxu0 %v3217
  %3222 = vmatprep.subr.bf16.mxu0 0
  %3223 = vmatpush1.bf16.msra.mxu0 %v3218
  %3224 = vmatprep.subr.bf16.mxu0 0
  %3225 = vmatpush1.bf16.msra.mxu0 %v3219
  %3226 = vmatprep.subr.bf16.mxu0 0
  %3227 = vmatpush1.bf16.msra.mxu0 0
  %3228 = vmatprep.subr.bf16.mxu0 0
  %3229 = vmatpush1.bf16.msra.mxu0 0
  %3230 = vmatprep.subr.bf16.mxu0 0
  %3231 = vmatpush1.bf16.msra.mxu0 0
  %3232 = vmatprep.subr.bf16.mxu0 0
  %3233 = vmatpush1.bf16.msra.mxu0 0
  %3234 = vmatprep.subr.bf16.mxu0 0
  %3235 = vmatpush1.bf16.msra.mxu0 0
  %3236 = vmatprep.subr.bf16.mxu0 0
  %3237 = vmatpush1.bf16.msra.mxu0 0
  %3238 = vmatprep.subr.bf16.mxu0 0
  %3239 = vmatpush1.bf16.msra.mxu0 0
  %3240 = vmatprep.subr.bf16.mxu0 0
  %3241 = vmatpush1.bf16.msra.mxu0 0
  %3242 = vmatprep.subr.bf16.mxu0 0
  %3243 = vmatpush1.bf16.msra.mxu0 0
  %3244 = vmatprep.subr.bf16.mxu0 0
  %3245 = vmatpush1.bf16.msra.mxu0 0
  %3246 = vmatprep.subr.bf16.mxu0 0
  %3247 = vmatpush1.bf16.msra.mxu0 0
  %3248 = vmatprep.subr.bf16.mxu0 0
  %3249 = vmatpush1.bf16.msra.mxu0 0
  %3250 = vmatprep.subr.bf16.mxu0 0
  %3251 = vmatpush1.bf16.msra.mxu0 0
  %3252 = vmatprep.mubr.bf16.mxu0 0
  %3253 = vmatmul.mubr.bf16.gmra.mrb[0].mxu0 %v1992
  %v3254 = vpop.f32.mrb[0].mxu0
  %v3255 = vadd.f32 0.0, %v3254
  %v3256 = vpop.f32.mrb[0].mxu0
  %v3257 = vpop.f32.mrb[0].mxu0
  %v3258 = vadd.f32 0.0, %v3257
  %v3259 = vpop.f32.mrb[0].mxu0
  %3260 = vmatprep.mubr.bf16.mxu0 0
  %3261 = vmatmul.mubr.bf16.gmra.mrb[0].mxu0 %v1995
  %v3262 = vpop.f32.mrb[0].mxu0
  %v3263 = vadd.f32 0.0, %v3262
  %v3264 = vpop.f32.mrb[0].mxu0
  %v3265 = vpop.f32.mrb[0].mxu0
  %v3266 = vpop.f32.mrb[0].mxu0
  %3267 = vdwg.mxu0
  %v3268 = vsel %vm288, %v3255, 0.0
  %3269 = vadd.xlane.f32.xlu0 %v3268
  %v3270 = vpop.xlane.xlu0 %3269
  %v3271 = vsel %vm288, %v3258, 0.0
  %3272 = vadd.xlane.f32.xlu0 %v3271
  %v3273 = vpop.xlane.xlu0 %3272
  %v3274 = vsel %vm1279, %v3263, 0.0
  %3275 = vadd.xlane.f32.xlu0 %v3274
  %v3276 = vpop.xlane.xlu0 %3275
  %v3277 = vmul.f32 %v3270, %v1044
  %v3278 = vmul.f32 %v3273, %v1044
  %v3279 = vmul.f32 %v3276, %v1044
  %v3280 = vsub.f32 %v3255, %v3277
  %v3281 = vsub.f32 %v3258, %v3278
  %v3282 = vsub.f32 %v3263, %v3279
  %v3283 = vmul.f32 %v3280, %v3280
  %v3284 = vmul.f32 %v3281, %v3281
  %v3285 = vmul.f32 %v3282, %v3282
  %v3286 = vsel %vm288, %v3283, 0.0
  %3287 = vadd.xlane.f32.xlu0 %v3286
  %v3288 = vpop.xlane.xlu0 %3287
  %v3289 = vsel %vm288, %v3284, 0.0
  %3290 = vadd.xlane.f32.xlu0 %v3289
  %v3291 = vpop.xlane.xlu0 %3290
  %v3292 = vsel %vm1279, %v3285, 0.0
  %3293 = vadd.xlane.f32.xlu0 %v3292
  %v3294 = vpop.xlane.xlu0 %3293
  %v3295 = vmul.f32 %v3288, %v1044
  %v3296 = vmul.f32 %v3291, %v1044
  %v3297 = vmul.f32 %v3294, %v1044
  %v3298 = vadd.f32 %v3295, 1e-05
  %v3299 = vadd.f32 %v3296, 1e-05
  %v3300 = vadd.f32 %v3297, 1e-05
  %v3301 = vrsqrt.pop %v3298
  %v3302 = vrsqrt.pop %v3299
  %v3303 = vrsqrt.pop %v3300
  %v3304 = vmul.f32 %v3280, %v3301
  %v3305 = vmul.f32 %v3281, %v3302
  %v3306 = vmul.f32 %v3282, %v3303
  %v3307 = vmul.f32 %v3304, %v2087
  %v3308 = vmul.f32 %v3305, %v2087
  %v3309 = vmul.f32 %v3306, %v2087
  %v3310 = vadd.f32 %v3307, %v2094
  %v3311 = vadd.f32 %v3308, %v2094
  %v3312 = vadd.f32 %v3309, %v2094
  %v3313 = vpack.c.bf16 %v3311, %v3310
  %v3314 = vpack.c.bf16 %v3312, %v3312
  %3318 = vrot.lane.b32.xlu0 %v2871, 64
  %v3319 = vpop.permute.xlu0 %3318
  %3320 = vrot.lane.b32.xlu0 %v2874, 64
  %v3321 = vpop.permute.xlu0 %3320
  %3322 = vrot.lane.b32.xlu0 %v2879, 64
  %v3323 = vpop.permute.xlu0 %3322
  %v3328 = vsel %vm288, %v3313, 0
  %v3331 = vsel %vm288, %v3314, 0
  %3333 = vmatprep.subr.bf16.mxu0 0
  %3334 = vmatpush1.bf16.msra.mxu0 %v2116
  %3335 = vmatprep.subr.bf16.mxu0 0
  %3336 = vmatpush1.bf16.msra.mxu0 %v2117
  %3337 = vmatprep.subr.bf16.mxu0 0
  %3338 = vmatpush1.bf16.msra.mxu0 %v2118
  %3339 = vmatprep.subr.bf16.mxu0 0
  %3340 = vmatpush1.bf16.msra.mxu0 %v2119
  %3341 = vmatprep.subr.bf16.mxu0 0
  %3342 = vmatpush1.bf16.msra.mxu0 0
  %3343 = vmatprep.subr.bf16.mxu0 0
  %3344 = vmatpush1.bf16.msra.mxu0 0
  %3345 = vmatprep.subr.bf16.mxu0 0
  %3346 = vmatpush1.bf16.msra.mxu0 0
  %3347 = vmatprep.subr.bf16.mxu0 0
  %3348 = vmatpush1.bf16.msra.mxu0 0
  %3349 = vmatprep.subr.bf16.mxu0 0
  %3350 = vmatpush1.bf16.msra.mxu0 0
  %3351 = vmatprep.subr.bf16.mxu0 0
  %3352 = vmatpush1.bf16.msra.mxu0 0
  %3353 = vmatprep.subr.bf16.mxu0 0
  %3354 = vmatpush1.bf16.msra.mxu0 0
  %3355 = vmatprep.subr.bf16.mxu0 0
  %3356 = vmatpush1.bf16.msra.mxu0 0
  %3357 = vmatprep.subr.bf16.mxu0 0
  %3358 = vmatpush1.bf16.msra.mxu0 0
  %3359 = vmatprep.subr.bf16.mxu0 0
  %3360 = vmatpush1.bf16.msra.mxu0 0
  %3361 = vmatprep.subr.bf16.mxu0 0
  %3362 = vmatpush1.bf16.msra.mxu0 0
  %3363 = vmatprep.subr.bf16.mxu0 0
  %3364 = vmatpush1.bf16.msra.mxu0 0
  %3365 = vmatprep.mubr.bf16.mxu0 0
  %3366 = vmatmul.mubr.bf16.gmra.mrb[0].mxu0 %v3328
  %v3367 = vpop.f32.mrb[0].mxu0
  %v3368 = vadd.f32 %v3319, %v3367
  %v3369 = vpop.f32.mrb[0].mxu0
  %v3370 = vpop.f32.mrb[0].mxu0
  %v3371 = vadd.f32 %v3321, %v3370
  %v3372 = vpop.f32.mrb[0].mxu0
  %3373 = vmatprep.mubr.bf16.mxu0 0
  %3374 = vmatmul.mubr.bf16.gmra.mrb[0].mxu0 %v3331
  %v3375 = vpop.f32.mrb[0].mxu0
  %v3376 = vadd.f32 %v3323, %v3375
  %v3377 = vpop.f32.mrb[0].mxu0
  %v3378 = vpop.f32.mrb[0].mxu0
  %v3379 = vpop.f32.mrb[0].mxu0
  %3380 = vdwg.mxu0
  %v3381 = vmax.f32 %v3368, 0.0
  %v3382 = vmax.f32 %v3371, 0.0
  %v3383 = vmax.f32 %v3376, 0.0
  %v3384 = vpack.c.bf16 %v3382, %v3381
  %v3385 = vpack.c.bf16 %v3383, %v3383
  %v3387 = vsel %vm288, %v3384, 0
  %v3390 = vsel %vm288, %v3385, 0
  %3392 = vmatprep.subr.bf16.mxu0 0
  %3393 = vmatpush1.bf16.msra.mxu0 %v2215
  %3394 = vmatprep.subr.bf16.mxu0 0
  %3395 = vmatpush1.bf16.msra.mxu0 %v2216
  %3396 = vmatprep.subr.bf16.mxu0 0
  %3397 = vmatpush1.bf16.msra.mxu0 %v2217
  %3398 = vmatprep.subr.bf16.mxu0 0
  %3399 = vmatpush1.bf16.msra.mxu0 %v2218
  %3400 = vmatprep.subr.bf16.mxu0 0
  %3401 = vmatpush1.bf16.msra.mxu0 0
  %3402 = vmatprep.subr.bf16.mxu0 0
  %3403 = vmatpush1.bf16.msra.mxu0 0
  %3404 = vmatprep.subr.bf16.mxu0 0
  %3405 = vmatpush1.bf16.msra.mxu0 0
  %3406 = vmatprep.subr.bf16.mxu0 0
  %3407 = vmatpush1.bf16.msra.mxu0 0
  %3408 = vmatprep.subr.bf16.mxu0 0
  %3409 = vmatpush1.bf16.msra.mxu0 0
  %3410 = vmatprep.subr.bf16.mxu0 0
  %3411 = vmatpush1.bf16.msra.mxu0 0
  %3412 = vmatprep.subr.bf16.mxu0 0
  %3413 = vmatpush1.bf16.msra.mxu0 0
  %3414 = vmatprep.subr.bf16.mxu0 0
  %3415 = vmatpush1.bf16.msra.mxu0 0
  %3416 = vmatprep.subr.bf16.mxu0 0
  %3417 = vmatpush1.bf16.msra.mxu0 0
  %3418 = vmatprep.subr.bf16.mxu0 0
  %3419 = vmatpush1.bf16.msra.mxu0 0
  %3420 = vmatprep.subr.bf16.mxu0 0
  %3421 = vmatpush1.bf16.msra.mxu0 0
  %3422 = vmatprep.subr.bf16.mxu0 0
  %3423 = vmatpush1.bf16.msra.mxu0 0
  %3424 = vmatprep.mubr.bf16.mxu0 0
  %3425 = vmatmul.mubr.bf16.gmra.mrb[0].mxu0 %v3387
  %v3426 = vpop.f32.mrb[0].mxu0
  %v3427 = vadd.f32 %v2198, %v3426
  %v3428 = vpop.f32.mrb[0].mxu0
  %v3429 = vpop.f32.mrb[0].mxu0
  %v3430 = vadd.f32 %v2198, %v3429
  %v3431 = vpop.f32.mrb[0].mxu0
  %3432 = vmatprep.mubr.bf16.mxu0 0
  %3433 = vmatmul.mubr.bf16.gmra.mrb[0].mxu0 %v3390
  %v3434 = vpop.f32.mrb[0].mxu0
  %v3435 = vadd.f32 %v2198, %v3434
  %v3436 = vpop.f32.mrb[0].mxu0
  %v3437 = vpop.f32.mrb[0].mxu0
  %v3438 = vpop.f32.mrb[0].mxu0
  %3439 = vdwg.mxu0
  %3440 = vmatprep.subr.bf16.mxu0 0
  %3441 = vmatpush1.bf16.msra.mxu0 %v717
  %3442 = vmatprep.subr.bf16.mxu0 0
  %3443 = vmatpush1.bf16.msra.mxu0 %v718
  %3444 = vmatprep.subr.bf16.mxu0 0
  %3445 = vmatpush1.bf16.msra.mxu0 %v719
  %3446 = vmatprep.subr.bf16.mxu0 0
  %3447 = vmatpush1.bf16.msra.mxu0 %v720
  %3448 = vmatprep.subr.bf16.mxu0 0
  %3449 = vmatpush1.bf16.msra.mxu0 0
  %3450 = vmatprep.subr.bf16.mxu0 0
  %3451 = vmatpush1.bf16.msra.mxu0 0
  %3452 = vmatprep.subr.bf16.mxu0 0
  %3453 = vmatpush1.bf16.msra.mxu0 0
  %3454 = vmatprep.subr.bf16.mxu0 0
  %3455 = vmatpush1.bf16.msra.mxu0 0
  %3456 = vmatprep.subr.bf16.mxu0 0
  %3457 = vmatpush1.bf16.msra.mxu0 0
  %3458 = vmatprep.subr.bf16.mxu0 0
  %3459 = vmatpush1.bf16.msra.mxu0 0
  %3460 = vmatprep.subr.bf16.mxu0 0
  %3461 = vmatpush1.bf16.msra.mxu0 0
  %3462 = vmatprep.subr.bf16.mxu0 0
  %3463 = vmatpush1.bf16.msra.mxu0 0
  %3464 = vmatprep.subr.bf16.mxu0 0
  %3465 = vmatpush1.bf16.msra.mxu0 0
  %3466 = vmatprep.subr.bf16.mxu0 0
  %3467 = vmatpush1.bf16.msra.mxu0 0
  %3468 = vmatprep.subr.bf16.mxu0 0
  %3469 = vmatpush1.bf16.msra.mxu0 0
  %3470 = vmatprep.subr.bf16.mxu0 0
  %3471 = vmatpush1.bf16.msra.mxu0 0
  %3472 = vmatprep.mubr.bf16.mxu0 0
  %3473 = vmatmul.mubr.bf16.gmra.mrb[0].mxu0 %v2886
  %v3474 = vpop.f32.mrb[0].mxu0
  %v3475 = vadd.f32 %v699, %v3474
  %v3476 = vpop.f32.mrb[0].mxu0
  %v3477 = vpop.f32.mrb[0].mxu0
  %v3478 = vadd.f32 %v699, %v3477
  %v3479 = vpop.f32.mrb[0].mxu0
  %3480 = vdwg.mxu0
  %v3481 = vpack.c.bf16 %v3430, %v3427
  %v3482 = vpack.c.bf16 %v3435, %v3435
  %v3484 = vsel %vm288, %v3481, 0
  %v3487 = vsel %vm288, %v3482, 0
  %3489 = vmatprep.subr.bf16.mxu0 0
  %3490 = vmatpush1.bf16.msra.mxu0 %v787
  %3491 = vmatprep.subr.bf16.mxu0 0
  %3492 = vmatpush1.bf16.msra.mxu0 %v788
  %3493 = vmatprep.subr.bf16.mxu0 0
  %3494 = vmatpush1.bf16.msra.mxu0 %v789
  %3495 = vmatprep.subr.bf16.mxu0 0
  %3496 = vmatpush1.bf16.msra.mxu0 %v790
  %3497 = vmatprep.subr.bf16.mxu0 0
  %3498 = vmatpush1.bf16.msra.mxu0 0
  %3499 = vmatprep.subr.bf16.mxu0 0
  %3500 = vmatpush1.bf16.msra.mxu0 0
  %3501 = vmatprep.subr.bf16.mxu0 0
  %3502 = vmatpush1.bf16.msra.mxu0 0
  %3503 = vmatprep.subr.bf16.mxu0 0
  %3504 = vmatpush1.bf16.msra.mxu0 0
  %3505 = vmatprep.subr.bf16.mxu0 0
  %3506 = vmatpush1.bf16.msra.mxu0 0
  %3507 = vmatprep.subr.bf16.mxu0 0
  %3508 = vmatpush1.bf16.msra.mxu0 0
  %3509 = vmatprep.subr.bf16.mxu0 0
  %3510 = vmatpush1.bf16.msra.mxu0 0
  %3511 = vmatprep.subr.bf16.mxu0 0
  %3512 = vmatpush1.bf16.msra.mxu0 0
  %3513 = vmatprep.subr.bf16.mxu0 0
  %3514 = vmatpush1.bf16.msra.mxu0 0
  %3515 = vmatprep.subr.bf16.mxu0 0
  %3516 = vmatpush1.bf16.msra.mxu0 0
  %3517 = vmatprep.subr.bf16.mxu0 0
  %3518 = vmatpush1.bf16.msra.mxu0 0
  %3519 = vmatprep.subr.bf16.mxu0 0
  %3520 = vmatpush1.bf16.msra.mxu0 0
  %3521 = vmatprep.mubr.bf16.mxu0 0
  %3522 = vmatmul.mubr.bf16.gmra.mrb[0].mxu0 %v3484
  %v3523 = vpop.f32.mrb[0].mxu0
  %v3524 = vadd.f32 0.0, %v3523
  %v3525 = vpop.f32.mrb[0].mxu0
  %v3526 = vpop.f32.mrb[0].mxu0
  %v3527 = vadd.f32 0.0, %v3526
  %v3528 = vpop.f32.mrb[0].mxu0
  %3529 = vmatprep.mubr.bf16.mxu0 0
  %3530 = vmatmul.mubr.bf16.gmra.mrb[0].mxu0 %v3487
  %v3531 = vpop.f32.mrb[0].mxu0
  %v3532 = vadd.f32 0.0, %v3531
  %v3533 = vpop.f32.mrb[0].mxu0
  %v3534 = vpop.f32.mrb[0].mxu0
  %v3535 = vpop.f32.mrb[0].mxu0
  %3536 = vdwg.mxu0
  %v3537 = vpack.c.bf16 %v3478, %v3475
  %v3538 = vpack.c.bf16 %v3527, %v3524
  %v3539 = vpack.c.bf16 %v3532, %v3532
  %v3541 = vsel %vm878, %v3539, 0
  %3543 = vmatprep.subr.bf16.mxu0 0
  %3544 = vmatpush1.bf16.msra.mxu0 %v3538
  %3545 = vmatprep.subr.bf16.mxu0 0
  %3546 = vmatpush1.bf16.msra.mxu0 %v3541
  %3547 = vmatprep.subr.bf16.mxu0 0
  %3548 = vmatpush1.bf16.msra.mxu0 0
  %3549 = vmatprep.subr.bf16.mxu0 0
  %3550 = vmatpush1.bf16.msra.mxu0 0
  %3551 = vmatprep.subr.bf16.mxu0 0
  %3552 = vmatpush1.bf16.msra.mxu0 0
  %3553 = vmatprep.subr.bf16.mxu0 0
  %3554 = vmatpush1.bf16.msra.mxu0 0
  %3555 = vmatprep.subr.bf16.mxu0 0
  %3556 = vmatpush1.bf16.msra.mxu0 0
  %3557 = vmatprep.subr.bf16.mxu0 0
  %3558 = vmatpush1.bf16.msra.mxu0 0
  %3559 = vmatprep.subr.bf16.mxu0 0
  %3560 = vmatpush1.bf16.msra.mxu0 0
  %3561 = vmatprep.subr.bf16.mxu0 0
  %3562 = vmatpush1.bf16.msra.mxu0 0
  %3563 = vmatprep.subr.bf16.mxu0 0
  %3564 = vmatpush1.bf16.msra.mxu0 0
  %3565 = vmatprep.subr.bf16.mxu0 0
  %3566 = vmatpush1.bf16.msra.mxu0 0
  %3567 = vmatprep.subr.bf16.mxu0 0
  %3568 = vmatpush1.bf16.msra.mxu0 0
  %3569 = vmatprep.subr.bf16.mxu0 0
  %3570 = vmatpush1.bf16.msra.mxu0 0
  %3571 = vmatprep.subr.bf16.mxu0 0
  %3572 = vmatpush1.bf16.msra.mxu0 0
  %3573 = vmatprep.subr.bf16.mxu0 0
  %3574 = vmatpush1.bf16.msra.mxu0 0
  %3575 = vmatprep.mubr.bf16.mxu0 0
  %3576 = vmatmul.mubr.bf16.gmra.mrb[0].mxu0 %v870
  %v3577 = vpop.f32.mrb[0].mxu0
  %v3578 = vadd.f32 0.0, %v3577
  %v3579 = vpop.f32.mrb[0].mxu0
  %v3580 = vpop.f32.mrb[0].mxu0
  %v3581 = vadd.f32 0.0, %v3580
  %v3582 = vpop.f32.mrb[0].mxu0
  %3583 = vmatprep.mubr.bf16.mxu0 0
  %3584 = vmatmul.mubr.bf16.gmra.mrb[0].mxu0 %v873
  %v3585 = vpop.f32.mrb[0].mxu0
  %v3586 = vadd.f32 0.0, %v3585
  %v3587 = vpop.f32.mrb[0].mxu0
  %v3588 = vpop.f32.mrb[0].mxu0
  %v3589 = vadd.f32 0.0, %v3588
  %v3590 = vpop.f32.mrb[0].mxu0
  %3591 = vmatprep.mubr.bf16.mxu0 0
  %3592 = vmatmul.mubr.bf16.gmra.mrb[0].mxu0 %v876
  %v3593 = vpop.f32.mrb[0].mxu0
  %v3594 = vadd.f32 0.0, %v3593
  %v3595 = vpop.f32.mrb[0].mxu0
  %v3596 = vpop.f32.mrb[0].mxu0
  %v3597 = vadd.f32 0.0, %v3596
  %v3598 = vpop.f32.mrb[0].mxu0
  %3599 = vdwg.mxu0
  %v3601 = vsel %vm965, %v3537, 0
  %3603 = vmatprep.subr.bf16.mxu0 0
  %3604 = vmatpush1.bf16.msra.mxu0 %v3601
  %3605 = vmatprep.subr.bf16.mxu0 0
  %3606 = vmatpush1.bf16.msra.mxu0 0
  %3607 = vmatprep.subr.bf16.mxu0 0
  %3608 = vmatpush1.bf16.msra.mxu0 0
  %3609 = vmatprep.subr.bf16.mxu0 0
  %3610 = vmatpush1.bf16.msra.mxu0 0
  %3611 = vmatprep.subr.bf16.mxu0 0
  %3612 = vmatpush1.bf16.msra.mxu0 0
  %3613 = vmatprep.subr.bf16.mxu0 0
  %3614 = vmatpush1.bf16.msra.mxu0 0
  %3615 = vmatprep.subr.bf16.mxu0 0
  %3616 = vmatpush1.bf16.msra.mxu0 0
  %3617 = vmatprep.subr.bf16.mxu0 0
  %3618 = vmatpush1.bf16.msra.mxu0 0
  %3619 = vmatprep.subr.bf16.mxu0 0
  %3620 = vmatpush1.bf16.msra.mxu0 0
  %3621 = vmatprep.subr.bf16.mxu0 0
  %3622 = vmatpush1.bf16.msra.mxu0 0
  %3623 = vmatprep.subr.bf16.mxu0 0
  %3624 = vmatpush1.bf16.msra.mxu0 0
  %3625 = vmatprep.subr.bf16.mxu0 0
  %3626 = vmatpush1.bf16.msra.mxu0 0
  %3627 = vmatprep.subr.bf16.mxu0 0
  %3628 = vmatpush1.bf16.msra.mxu0 0
  %3629 = vmatprep.subr.bf16.mxu0 0
  %3630 = vmatpush1.bf16.msra.mxu0 0
  %3631 = vmatprep.subr.bf16.mxu0 0
  %3632 = vmatpush1.bf16.msra.mxu0 0
  %3633 = vmatprep.subr.bf16.mxu0 0
  %3634 = vmatpush1.bf16.msra.mxu0 0
  %3635 = vmatprep.mubr.bf16.mxu0 0
  %3636 = vmatmul.mubr.bf16.gmra.mrb[0].mxu0 %v957
  %v3637 = vpop.f32.mrb[0].mxu0
  %v3638 = vadd.f32 %v3578, %v3637
  %v3639 = vpop.f32.mrb[0].mxu0
  %v3640 = vpop.f32.mrb[0].mxu0
  %v3641 = vadd.f32 %v3581, %v3640
  %v3642 = vpop.f32.mrb[0].mxu0
  %3643 = vmatprep.mubr.bf16.mxu0 0
  %3644 = vmatmul.mubr.bf16.gmra.mrb[0].mxu0 %v960
  %v3645 = vpop.f32.mrb[0].mxu0
  %v3646 = vadd.f32 %v3586, %v3645
  %v3647 = vpop.f32.mrb[0].mxu0
  %v3648 = vpop.f32.mrb[0].mxu0
  %v3649 = vadd.f32 %v3589, %v3648
  %v3650 = vpop.f32.mrb[0].mxu0
  %3651 = vmatprep.mubr.bf16.mxu0 0
  %3652 = vmatmul.mubr.bf16.gmra.mrb[0].mxu0 %v963
  %v3653 = vpop.f32.mrb[0].mxu0
  %v3654 = vadd.f32 %v3594, %v3653
  %v3655 = vpop.f32.mrb[0].mxu0
  %v3656 = vpop.f32.mrb[0].mxu0
  %v3657 = vadd.f32 %v3597, %v3656
  %v3658 = vpop.f32.mrb[0].mxu0
  %3659 = vdwg.mxu0
  %v3660 = vsel %vm288, %v3638, 0.0
  %3661 = vadd.xlane.f32.xlu0 %v3660
  %v3662 = vpop.xlane.xlu0 %3661
  %v3663 = vsel %vm288, %v3641, 0.0
  %3664 = vadd.xlane.f32.xlu0 %v3663
  %v3665 = vpop.xlane.xlu0 %3664
  %v3666 = vsel %vm288, %v3646, 0.0
  %3667 = vadd.xlane.f32.xlu0 %v3666
  %v3668 = vpop.xlane.xlu0 %3667
  %v3669 = vsel %vm288, %v3649, 0.0
  %3670 = vadd.xlane.f32.xlu0 %v3669
  %v3671 = vpop.xlane.xlu0 %3670
  %v3672 = vsel %vm288, %v3654, 0.0
  %3673 = vadd.xlane.f32.xlu0 %v3672
  %v3674 = vpop.xlane.xlu0 %3673
  %v3675 = vsel %vm288, %v3657, 0.0
  %3676 = vadd.xlane.f32.xlu0 %v3675
  %v3677 = vpop.xlane.xlu0 %3676
  %v3678 = vmul.f32 %v3662, %v1044
  %v3679 = vmul.f32 %v3665, %v1044
  %v3680 = vmul.f32 %v3668, %v1044
  %v3681 = vmul.f32 %v3671, %v1044
  %v3682 = vmul.f32 %v3674, %v1044
  %v3683 = vmul.f32 %v3677, %v1044
  %v3684 = vsub.f32 %v3638, %v3678
  %v3685 = vsub.f32 %v3641, %v3679
  %v3686 = vsub.f32 %v3646, %v3680
  %v3687 = vsub.f32 %v3649, %v3681
  %v3688 = vsub.f32 %v3654, %v3682
  %v3689 = vsub.f32 %v3657, %v3683
  %v3690 = vmul.f32 %v3684, %v3684
  %v3691 = vmul.f32 %v3685, %v3685
  %v3692 = vmul.f32 %v3686, %v3686
  %v3693 = vmul.f32 %v3687, %v3687
  %v3694 = vmul.f32 %v3688, %v3688
  %v3695 = vmul.f32 %v3689, %v3689
  %v3696 = vsel %vm288, %v3690, 0.0
  %3697 = vadd.xlane.f32.xlu0 %v3696
  %v3698 = vpop.xlane.xlu0 %3697
  %v3699 = vsel %vm288, %v3691, 0.0
  %3700 = vadd.xlane.f32.xlu0 %v3699
  %v3701 = vpop.xlane.xlu0 %3700
  %v3702 = vsel %vm288, %v3692, 0.0
  %3703 = vadd.xlane.f32.xlu0 %v3702
  %v3704 = vpop.xlane.xlu0 %3703
  %v3705 = vsel %vm288, %v3693, 0.0
  %3706 = vadd.xlane.f32.xlu0 %v3705
  %v3707 = vpop.xlane.xlu0 %3706
  %v3708 = vsel %vm288, %v3694, 0.0
  %3709 = vadd.xlane.f32.xlu0 %v3708
  %v3710 = vpop.xlane.xlu0 %3709
  %v3711 = vsel %vm288, %v3695, 0.0
  %3712 = vadd.xlane.f32.xlu0 %v3711
  %v3713 = vpop.xlane.xlu0 %3712
  %v3714 = vmul.f32 %v3698, %v1044
  %v3715 = vmul.f32 %v3701, %v1044
  %v3716 = vmul.f32 %v3704, %v1044
  %v3717 = vmul.f32 %v3707, %v1044
  %v3718 = vmul.f32 %v3710, %v1044
  %v3719 = vmul.f32 %v3713, %v1044
  %v3720 = vadd.f32 %v3714, 1e-05
  %v3721 = vadd.f32 %v3715, 1e-05
  %v3722 = vadd.f32 %v3716, 1e-05
  %v3723 = vadd.f32 %v3717, 1e-05
  %v3724 = vadd.f32 %v3718, 1e-05
  %v3725 = vadd.f32 %v3719, 1e-05
  %v3726 = vrsqrt.pop %v3720
  %v3727 = vrsqrt.pop %v3721
  %v3728 = vrsqrt.pop %v3722
  %v3729 = vrsqrt.pop %v3723
  %v3730 = vrsqrt.pop %v3724
  %v3731 = vrsqrt.pop %v3725
  %v3732 = vmul.f32 %v3684, %v3726
  %v3733 = vmul.f32 %v3685, %v3727
  %v3734 = vmul.f32 %v3686, %v3728
  %v3735 = vmul.f32 %v3687, %v3729
  %v3736 = vmul.f32 %v3688, %v3730
  %v3737 = vmul.f32 %v3689, %v3731
  %v3738 = vmul.f32 %v3732, %v1108
  %v3739 = vmul.f32 %v3733, %v1108
  %v3740 = vmul.f32 %v3734, %v1108
  %v3741 = vmul.f32 %v3735, %v1108
  %v3742 = vmul.f32 %v3736, %v1108
  %v3743 = vmul.f32 %v3737, %v1108
  %v3744 = vadd.f32 %v3738, %v1118
  %v3745 = vadd.f32 %v3739, %v1118
  %v3746 = vadd.f32 %v3740, %v1118
  %v3747 = vadd.f32 %v3741, %v1118
  %v3748 = vadd.f32 %v3742, %v1118
  %v3749 = vadd.f32 %v3743, %v1118
  %v3750 = vmax.f32 %v3744, 0.0
  %v3751 = vmax.f32 %v3745, 0.0
  %v3752 = vmax.f32 %v3746, 0.0
  %v3753 = vmax.f32 %v3747, 0.0
  %v3754 = vmax.f32 %v3748, 0.0
  %v3755 = vmax.f32 %v3749, 0.0
  %v3756 = vpack.c.bf16 %v3751, %v3750
  %v3757 = vpack.c.bf16 %v3753, %v3752
  %v3758 = vpack.c.bf16 %v3755, %v3754
  %v3760 = vsel %vm288, %v3756, 0
  %v3763 = vsel %vm288, %v3757, 0
  %v3766 = vsel %vm288, %v3758, 0
  %3768 = vmatprep.subr.bf16.mxu0 0
  %3769 = vmatpush1.bf16.msra.mxu0 %v1154
  %3770 = vmatprep.subr.bf16.mxu0 0
  %3771 = vmatpush1.bf16.msra.mxu0 %v1155
  %3772 = vmatprep.subr.bf16.mxu0 0
  %3773 = vmatpush1.bf16.msra.mxu0 %v1156
  %3774 = vmatprep.subr.bf16.mxu0 0
  %3775 = vmatpush1.bf16.msra.mxu0 %v1157
  %3776 = vmatprep.subr.bf16.mxu0 0
  %3777 = vmatpush1.bf16.msra.mxu0 0
  %3778 = vmatprep.subr.bf16.mxu0 0
  %3779 = vmatpush1.bf16.msra.mxu0 0
  %3780 = vmatprep.subr.bf16.mxu0 0
  %3781 = vmatpush1.bf16.msra.mxu0 0
  %3782 = vmatprep.subr.bf16.mxu0 0
  %3783 = vmatpush1.bf16.msra.mxu0 0
  %3784 = vmatprep.subr.bf16.mxu0 0
  %3785 = vmatpush1.bf16.msra.mxu0 0
  %3786 = vmatprep.subr.bf16.mxu0 0
  %3787 = vmatpush1.bf16.msra.mxu0 0
  %3788 = vmatprep.subr.bf16.mxu0 0
  %3789 = vmatpush1.bf16.msra.mxu0 0
  %3790 = vmatprep.subr.bf16.mxu0 0
  %3791 = vmatpush1.bf16.msra.mxu0 0
  %3792 = vmatprep.subr.bf16.mxu0 0
  %3793 = vmatpush1.bf16.msra.mxu0 0
  %3794 = vmatprep.subr.bf16.mxu0 0
  %3795 = vmatpush1.bf16.msra.mxu0 0
  %3796 = vmatprep.subr.bf16.mxu0 0
  %3797 = vmatpush1.bf16.msra.mxu0 0
  %3798 = vmatprep.subr.bf16.mxu0 0
  %3799 = vmatpush1.bf16.msra.mxu0 0
  %3800 = vmatprep.mubr.bf16.mxu0 0
  %3801 = vmatmul.mubr.bf16.gmra.mrb[0].mxu0 %v3760
  %v3802 = vpop.f32.mrb[0].mxu0
  %v3803 = vadd.f32 %v1137, %v3802
  %v3804 = vpop.f32.mrb[0].mxu0
  %v3805 = vpop.f32.mrb[0].mxu0
  %v3806 = vadd.f32 %v1137, %v3805
  %v3807 = vpop.f32.mrb[0].mxu0
  %3808 = vmatprep.mubr.bf16.mxu0 0
  %3809 = vmatmul.mubr.bf16.gmra.mrb[0].mxu0 %v3763
  %v3810 = vpop.f32.mrb[0].mxu0
  %v3811 = vadd.f32 %v1137, %v3810
  %v3812 = vpop.f32.mrb[0].mxu0
  %v3813 = vpop.f32.mrb[0].mxu0
  %v3814 = vadd.f32 %v1137, %v3813
  %v3815 = vpop.f32.mrb[0].mxu0
  %3816 = vmatprep.mubr.bf16.mxu0 0
  %3817 = vmatmul.mubr.bf16.gmra.mrb[0].mxu0 %v3766
  %v3818 = vpop.f32.mrb[0].mxu0
  %v3819 = vadd.f32 %v1137, %v3818
  %v3820 = vpop.f32.mrb[0].mxu0
  %v3821 = vpop.f32.mrb[0].mxu0
  %v3822 = vadd.f32 %v1137, %v3821
  %v3823 = vpop.f32.mrb[0].mxu0
  %3824 = vdwg.mxu0
  %v3825 = vpack.c.bf16 %v3806, %v3803
  %v3826 = vpack.c.bf16 %v3814, %v3811
  %v3827 = vpack.c.bf16 %v3822, %v3819
  %3828 = vmatprep.subr.bf16.mxu0 0
  %3829 = vmatpush1.bf16.msra.mxu0 %v3825
  %3830 = vmatprep.subr.bf16.mxu0 0
  %3831 = vmatpush1.bf16.msra.mxu0 %v3826
  %3832 = vmatprep.subr.bf16.mxu0 0
  %3833 = vmatpush1.bf16.msra.mxu0 %v3827
  %3834 = vmatprep.subr.bf16.mxu0 0
  %3835 = vmatpush1.bf16.msra.mxu0 0
  %3836 = vmatprep.subr.bf16.mxu0 0
  %3837 = vmatpush1.bf16.msra.mxu0 0
  %3838 = vmatprep.subr.bf16.mxu0 0
  %3839 = vmatpush1.bf16.msra.mxu0 0
  %3840 = vmatprep.subr.bf16.mxu0 0
  %3841 = vmatpush1.bf16.msra.mxu0 0
  %3842 = vmatprep.subr.bf16.mxu0 0
  %3843 = vmatpush1.bf16.msra.mxu0 0
  %3844 = vmatprep.subr.bf16.mxu0 0
  %3845 = vmatpush1.bf16.msra.mxu0 0
  %3846 = vmatprep.subr.bf16.mxu0 0
  %3847 = vmatpush1.bf16.msra.mxu0 0
  %3848 = vmatprep.subr.bf16.mxu0 0
  %3849 = vmatpush1.bf16.msra.mxu0 0
  %3850 = vmatprep.subr.bf16.mxu0 0
  %3851 = vmatpush1.bf16.msra.mxu0 0
  %3852 = vmatprep.subr.bf16.mxu0 0
  %3853 = vmatpush1.bf16.msra.mxu0 0
  %3854 = vmatprep.subr.bf16.mxu0 0
  %3855 = vmatpush1.bf16.msra.mxu0 0
  %3856 = vmatprep.subr.bf16.mxu0 0
  %3857 = vmatpush1.bf16.msra.mxu0 0
  %3858 = vmatprep.subr.bf16.mxu0 0
  %3859 = vmatpush1.bf16.msra.mxu0 0
  %3860 = vmatprep.mubr.bf16.mxu0 0
  %3861 = vmatmul.mubr.bf16.gmra.mrb[0].mxu0 %v1233
  %v3862 = vpop.f32.mrb[0].mxu0
  %v3863 = vadd.f32 0.0, %v3862
  %v3864 = vpop.f32.mrb[0].mxu0
  %v3865 = vpop.f32.mrb[0].mxu0
  %v3866 = vadd.f32 0.0, %v3865
  %v3867 = vpop.f32.mrb[0].mxu0
  %3868 = vdwg.mxu0
  %v3869 = vsel %vm288, %v3863, 0.0
  %3870 = vadd.xlane.f32.xlu0 %v3869
  %v3871 = vpop.xlane.xlu0 %3870
  %v3872 = vsel %vm1279, %v3866, 0.0
  %3873 = vadd.xlane.f32.xlu0 %v3872
  %v3874 = vpop.xlane.xlu0 %3873
  %v3875 = vmul.f32 %v3871, %v1044
  %v3876 = vmul.f32 %v3874, %v1044
  %v3877 = vsub.f32 %v3863, %v3875
  %v3878 = vsub.f32 %v3866, %v3876
  %v3879 = vmul.f32 %v3877, %v3877
  %v3880 = vmul.f32 %v3878, %v3878
  %v3881 = vsel %vm288, %v3879, 0.0
  %3882 = vadd.xlane.f32.xlu0 %v3881
  %v3883 = vpop.xlane.xlu0 %3882
  %v3884 = vsel %vm1279, %v3880, 0.0
  %3885 = vadd.xlane.f32.xlu0 %v3884
  %v3886 = vpop.xlane.xlu0 %3885
  %v3887 = vmul.f32 %v3883, %v1044
  %v3888 = vmul.f32 %v3886, %v1044
  %v3889 = vadd.f32 %v3887, 1e-05
  %v3890 = vadd.f32 %v3888, 1e-05
  %v3891 = vrsqrt.pop %v3889
  %v3892 = vrsqrt.pop %v3890
  %v3893 = vmul.f32 %v3877, %v3891
  %v3894 = vmul.f32 %v3878, %v3892
  %v3895 = vmul.f32 %v3893, %v1306
  %v3896 = vmul.f32 %v3894, %v1306
  %v3897 = vadd.f32 %v3895, %v1312
  %v3898 = vadd.f32 %v3896, %v1312
  %v3899 = vpack.c.bf16 %v3898, %v3897
  %3902 = vrot.lane.b32.xlu0 %v3475, 64
  %v3903 = vpop.permute.xlu0 %3902
  %3904 = vrot.lane.b32.xlu0 %v3478, 64
  %v3905 = vpop.permute.xlu0 %3904
  %v3909 = vsel %vm288, %v3899, 0
  %3911 = vmatprep.subr.bf16.mxu0 0
  %3912 = vmatpush1.bf16.msra.mxu0 %v1332
  %3913 = vmatprep.subr.bf16.mxu0 0
  %3914 = vmatpush1.bf16.msra.mxu0 %v1333
  %3915 = vmatprep.subr.bf16.mxu0 0
  %3916 = vmatpush1.bf16.msra.mxu0 %v1334
  %3917 = vmatprep.subr.bf16.mxu0 0
  %3918 = vmatpush1.bf16.msra.mxu0 %v1335
  %3919 = vmatprep.subr.bf16.mxu0 0
  %3920 = vmatpush1.bf16.msra.mxu0 0
  %3921 = vmatprep.subr.bf16.mxu0 0
  %3922 = vmatpush1.bf16.msra.mxu0 0
  %3923 = vmatprep.subr.bf16.mxu0 0
  %3924 = vmatpush1.bf16.msra.mxu0 0
  %3925 = vmatprep.subr.bf16.mxu0 0
  %3926 = vmatpush1.bf16.msra.mxu0 0
  %3927 = vmatprep.subr.bf16.mxu0 0
  %3928 = vmatpush1.bf16.msra.mxu0 0
  %3929 = vmatprep.subr.bf16.mxu0 0
  %3930 = vmatpush1.bf16.msra.mxu0 0
  %3931 = vmatprep.subr.bf16.mxu0 0
  %3932 = vmatpush1.bf16.msra.mxu0 0
  %3933 = vmatprep.subr.bf16.mxu0 0
  %3934 = vmatpush1.bf16.msra.mxu0 0
  %3935 = vmatprep.subr.bf16.mxu0 0
  %3936 = vmatpush1.bf16.msra.mxu0 0
  %3937 = vmatprep.subr.bf16.mxu0 0
  %3938 = vmatpush1.bf16.msra.mxu0 0
  %3939 = vmatprep.subr.bf16.mxu0 0
  %3940 = vmatpush1.bf16.msra.mxu0 0
  %3941 = vmatprep.subr.bf16.mxu0 0
  %3942 = vmatpush1.bf16.msra.mxu0 0
  %3943 = vmatprep.mubr.bf16.mxu0 0
  %3944 = vmatmul.mubr.bf16.gmra.mrb[0].mxu0 %v3909
  %v3945 = vpop.f32.mrb[0].mxu0
  %v3946 = vadd.f32 %v3903, %v3945
  %v3947 = vpop.f32.mrb[0].mxu0
  %v3948 = vpop.f32.mrb[0].mxu0
  %v3949 = vadd.f32 %v3905, %v3948
  %v3950 = vpop.f32.mrb[0].mxu0
  %3951 = vdwg.mxu0
  %v3952 = vmax.f32 %v3946, 0.0
  %v3953 = vmax.f32 %v3949, 0.0
  %v3954 = vpack.c.bf16 %v3953, %v3952
  %v3956 = vsel %vm288, %v3954, 0
  %3958 = vmatprep.subr.bf16.mxu0 0
  %3959 = vmatpush1.bf16.msra.mxu0 %v1415
  %3960 = vmatprep.subr.bf16.mxu0 0
  %3961 = vmatpush1.bf16.msra.mxu0 %v1416
  %3962 = vmatprep.subr.bf16.mxu0 0
  %3963 = vmatpush1.bf16.msra.mxu0 %v1417
  %3964 = vmatprep.subr.bf16.mxu0 0
  %3965 = vmatpush1.bf16.msra.mxu0 %v1418
  %3966 = vmatprep.subr.bf16.mxu0 0
  %3967 = vmatpush1.bf16.msra.mxu0 0
  %3968 = vmatprep.subr.bf16.mxu0 0
  %3969 = vmatpush1.bf16.msra.mxu0 0
  %3970 = vmatprep.subr.bf16.mxu0 0
  %3971 = vmatpush1.bf16.msra.mxu0 0
  %3972 = vmatprep.subr.bf16.mxu0 0
  %3973 = vmatpush1.bf16.msra.mxu0 0
  %3974 = vmatprep.subr.bf16.mxu0 0
  %3975 = vmatpush1.bf16.msra.mxu0 0
  %3976 = vmatprep.subr.bf16.mxu0 0
  %3977 = vmatpush1.bf16.msra.mxu0 0
  %3978 = vmatprep.subr.bf16.mxu0 0
  %3979 = vmatpush1.bf16.msra.mxu0 0
  %3980 = vmatprep.subr.bf16.mxu0 0
  %3981 = vmatpush1.bf16.msra.mxu0 0
  %3982 = vmatprep.subr.bf16.mxu0 0
  %3983 = vmatpush1.bf16.msra.mxu0 0
  %3984 = vmatprep.subr.bf16.mxu0 0
  %3985 = vmatpush1.bf16.msra.mxu0 0
  %3986 = vmatprep.subr.bf16.mxu0 0
  %3987 = vmatpush1.bf16.msra.mxu0 0
  %3988 = vmatprep.subr.bf16.mxu0 0
  %3989 = vmatpush1.bf16.msra.mxu0 0
  %3990 = vmatprep.mubr.bf16.mxu0 0
  %3991 = vmatmul.mubr.bf16.gmra.mrb[0].mxu0 %v3956
  %v3992 = vpop.f32.mrb[0].mxu0
  %v3993 = vadd.f32 %v1398, %v3992
  %v3994 = vpop.f32.mrb[0].mxu0
  %v3995 = vpop.f32.mrb[0].mxu0
  %v3996 = vadd.f32 %v1398, %v3995
  %v3997 = vpop.f32.mrb[0].mxu0
  %3998 = vdwg.mxu0
  %3999 = vmatprep.subr.bf16.mxu0 0
  %4000 = vmatpush1.bf16.msra.mxu0 %v1539
  %4001 = vmatprep.subr.bf16.mxu0 0
  %4002 = vmatpush1.bf16.msra.mxu0 %v1540
  %4003 = vmatprep.subr.bf16.mxu0 0
  %4004 = vmatpush1.bf16.msra.mxu0 %v1541
  %4005 = vmatprep.subr.bf16.mxu0 0
  %4006 = vmatpush1.bf16.msra.mxu0 %v1542
  %4007 = vmatprep.subr.bf16.mxu0 0
  %4008 = vmatpush1.bf16.msra.mxu0 0
  %4009 = vmatprep.subr.bf16.mxu0 0
  %4010 = vmatpush1.bf16.msra.mxu0 0
  %4011 = vmatprep.subr.bf16.mxu0 0
  %4012 = vmatpush1.bf16.msra.mxu0 0
  %4013 = vmatprep.subr.bf16.mxu0 0
  %4014 = vmatpush1.bf16.msra.mxu0 0
  %4015 = vmatprep.subr.bf16.mxu0 0
  %4016 = vmatpush1.bf16.msra.mxu0 0
  %4017 = vmatprep.subr.bf16.mxu0 0
  %4018 = vmatpush1.bf16.msra.mxu0 0
  %4019 = vmatprep.subr.bf16.mxu0 0
  %4020 = vmatpush1.bf16.msra.mxu0 0
  %4021 = vmatprep.subr.bf16.mxu0 0
  %4022 = vmatpush1.bf16.msra.mxu0 0
  %4023 = vmatprep.subr.bf16.mxu0 0
  %4024 = vmatpush1.bf16.msra.mxu0 0
  %4025 = vmatprep.subr.bf16.mxu0 0
  %4026 = vmatpush1.bf16.msra.mxu0 0
  %4027 = vmatprep.subr.bf16.mxu0 0
  %4028 = vmatpush1.bf16.msra.mxu0 0
  %4029 = vmatprep.subr.bf16.mxu0 0
  %4030 = vmatpush1.bf16.msra.mxu0 0
  %4031 = vmatprep.mubr.bf16.mxu0 0
  %4032 = vmatmul.mubr.bf16.gmra.mrb[0].mxu0 %v3484
  %v4033 = vpop.f32.mrb[0].mxu0
  %v4034 = vadd.f32 %v1521, %v4033
  %v4035 = vpop.f32.mrb[0].mxu0
  %v4036 = vpop.f32.mrb[0].mxu0
  %v4037 = vadd.f32 %v1521, %v4036
  %v4038 = vpop.f32.mrb[0].mxu0
  %4039 = vmatprep.mubr.bf16.mxu0 0
  %4040 = vmatmul.mubr.bf16.gmra.mrb[0].mxu0 %v3487
  %v4041 = vpop.f32.mrb[0].mxu0
  %v4042 = vadd.f32 %v1521, %v4041
  %v4043 = vpop.f32.mrb[0].mxu0
  %v4044 = vpop.f32.mrb[0].mxu0
  %v4045 = vpop.f32.mrb[0].mxu0
  %4046 = vdwg.mxu0
  %v4047 = vpack.c.bf16 %v3996, %v3993
  %v4049 = vsel %vm288, %v4047, 0
  %4051 = vmatprep.subr.bf16.mxu0 0
  %4052 = vmatpush1.bf16.msra.mxu0 %v1612
  %4053 = vmatprep.subr.bf16.mxu0 0
  %4054 = vmatpush1.bf16.msra.mxu0 %v1613
  %4055 = vmatprep.subr.bf16.mxu0 0
  %4056 = vmatpush1.bf16.msra.mxu0 %v1614
  %4057 = vmatprep.subr.bf16.mxu0 0
  %4058 = vmatpush1.bf16.msra.mxu0 %v1615
  %4059 = vmatprep.subr.bf16.mxu0 0
  %4060 = vmatpush1.bf16.msra.mxu0 0
  %4061 = vmatprep.subr.bf16.mxu0 0
  %4062 = vmatpush1.bf16.msra.mxu0 0
  %4063 = vmatprep.subr.bf16.mxu0 0
  %4064 = vmatpush1.bf16.msra.mxu0 0
  %4065 = vmatprep.subr.bf16.mxu0 0
  %4066 = vmatpush1.bf16.msra.mxu0 0
  %4067 = vmatprep.subr.bf16.mxu0 0
  %4068 = vmatpush1.bf16.msra.mxu0 0
  %4069 = vmatprep.subr.bf16.mxu0 0
  %4070 = vmatpush1.bf16.msra.mxu0 0
  %4071 = vmatprep.subr.bf16.mxu0 0
  %4072 = vmatpush1.bf16.msra.mxu0 0
  %4073 = vmatprep.subr.bf16.mxu0 0
  %4074 = vmatpush1.bf16.msra.mxu0 0
  %4075 = vmatprep.subr.bf16.mxu0 0
  %4076 = vmatpush1.bf16.msra.mxu0 0
  %4077 = vmatprep.subr.bf16.mxu0 0
  %4078 = vmatpush1.bf16.msra.mxu0 0
  %4079 = vmatprep.subr.bf16.mxu0 0
  %4080 = vmatpush1.bf16.msra.mxu0 0
  %4081 = vmatprep.subr.bf16.mxu0 0
  %4082 = vmatpush1.bf16.msra.mxu0 0
  %4083 = vmatprep.mubr.bf16.mxu0 0
  %4084 = vmatmul.mubr.bf16.gmra.mrb[0].mxu0 %v4049
  %v4085 = vpop.f32.mrb[0].mxu0
  %v4086 = vadd.f32 0.0, %v4085
  %v4087 = vpop.f32.mrb[0].mxu0
  %v4088 = vpop.f32.mrb[0].mxu0
  %v4089 = vadd.f32 0.0, %v4088
  %v4090 = vpop.f32.mrb[0].mxu0
  %4091 = vdwg.mxu0
  %v4092 = vpack.c.bf16 %v4037, %v4034
  %v4093 = vpack.c.bf16 %v4042, %v4042
  %v4094 = vpack.c.bf16 %v4089, %v4086
  %v4096 = vsel %vm965, %v4094, 0
  %4098 = vmatprep.subr.bf16.mxu0 0
  %4099 = vmatpush1.bf16.msra.mxu0 %v4096
  %4100 = vmatprep.subr.bf16.mxu0 0
  %4101 = vmatpush1.bf16.msra.mxu0 0
  %4102 = vmatprep.subr.bf16.mxu0 0
  %4103 = vmatpush1.bf16.msra.mxu0 0
  %4104 = vmatprep.subr.bf16.mxu0 0
  %4105 = vmatpush1.bf16.msra.mxu0 0
  %4106 = vmatprep.subr.bf16.mxu0 0
  %4107 = vmatpush1.bf16.msra.mxu0 0
  %4108 = vmatprep.subr.bf16.mxu0 0
  %4109 = vmatpush1.bf16.msra.mxu0 0
  %4110 = vmatprep.subr.bf16.mxu0 0
  %4111 = vmatpush1.bf16.msra.mxu0 0
  %4112 = vmatprep.subr.bf16.mxu0 0
  %4113 = vmatpush1.bf16.msra.mxu0 0
  %4114 = vmatprep.subr.bf16.mxu0 0
  %4115 = vmatpush1.bf16.msra.mxu0 0
  %4116 = vmatprep.subr.bf16.mxu0 0
  %4117 = vmatpush1.bf16.msra.mxu0 0
  %4118 = vmatprep.subr.bf16.mxu0 0
  %4119 = vmatpush1.bf16.msra.mxu0 0
  %4120 = vmatprep.subr.bf16.mxu0 0
  %4121 = vmatpush1.bf16.msra.mxu0 0
  %4122 = vmatprep.subr.bf16.mxu0 0
  %4123 = vmatpush1.bf16.msra.mxu0 0
  %4124 = vmatprep.subr.bf16.mxu0 0
  %4125 = vmatpush1.bf16.msra.mxu0 0
  %4126 = vmatprep.subr.bf16.mxu0 0
  %4127 = vmatpush1.bf16.msra.mxu0 0
  %4128 = vmatprep.subr.bf16.mxu0 0
  %4129 = vmatpush1.bf16.msra.mxu0 0
  %4130 = vmatprep.mubr.bf16.mxu0 0
  %4131 = vmatmul.mubr.bf16.gmra.mrb[0].mxu0 %v957
  %v4132 = vpop.f32.mrb[0].mxu0
  %v4133 = vadd.f32 0.0, %v4132
  %v4134 = vpop.f32.mrb[0].mxu0
  %v4135 = vpop.f32.mrb[0].mxu0
  %v4136 = vadd.f32 0.0, %v4135
  %v4137 = vpop.f32.mrb[0].mxu0
  %4138 = vmatprep.mubr.bf16.mxu0 0
  %4139 = vmatmul.mubr.bf16.gmra.mrb[0].mxu0 %v960
  %v4140 = vpop.f32.mrb[0].mxu0
  %v4141 = vadd.f32 0.0, %v4140
  %v4142 = vpop.f32.mrb[0].mxu0
  %v4143 = vpop.f32.mrb[0].mxu0
  %v4144 = vadd.f32 0.0, %v4143
  %v4145 = vpop.f32.mrb[0].mxu0
  %4146 = vmatprep.mubr.bf16.mxu0 0
  %4147 = vmatmul.mubr.bf16.gmra.mrb[0].mxu0 %v963
  %v4148 = vpop.f32.mrb[0].mxu0
  %v4149 = vadd.f32 0.0, %v4148
  %v4150 = vpop.f32.mrb[0].mxu0
  %v4151 = vpop.f32.mrb[0].mxu0
  %v4152 = vadd.f32 0.0, %v4151
  %v4153 = vpop.f32.mrb[0].mxu0
  %4154 = vdwg.mxu0
  %v4156 = vsel %vm878, %v4093, 0
  %4158 = vmatprep.subr.bf16.mxu0 0
  %4159 = vmatpush1.bf16.msra.mxu0 %v4092
  %4160 = vmatprep.subr.bf16.mxu0 0
  %4161 = vmatpush1.bf16.msra.mxu0 %v4156
  %4162 = vmatprep.subr.bf16.mxu0 0
  %4163 = vmatpush1.bf16.msra.mxu0 0
  %4164 = vmatprep.subr.bf16.mxu0 0
  %4165 = vmatpush1.bf16.msra.mxu0 0
  %4166 = vmatprep.subr.bf16.mxu0 0
  %4167 = vmatpush1.bf16.msra.mxu0 0
  %4168 = vmatprep.subr.bf16.mxu0 0
  %4169 = vmatpush1.bf16.msra.mxu0 0
  %4170 = vmatprep.subr.bf16.mxu0 0
  %4171 = vmatpush1.bf16.msra.mxu0 0
  %4172 = vmatprep.subr.bf16.mxu0 0
  %4173 = vmatpush1.bf16.msra.mxu0 0
  %4174 = vmatprep.subr.bf16.mxu0 0
  %4175 = vmatpush1.bf16.msra.mxu0 0
  %4176 = vmatprep.subr.bf16.mxu0 0
  %4177 = vmatpush1.bf16.msra.mxu0 0
  %4178 = vmatprep.subr.bf16.mxu0 0
  %4179 = vmatpush1.bf16.msra.mxu0 0
  %4180 = vmatprep.subr.bf16.mxu0 0
  %4181 = vmatpush1.bf16.msra.mxu0 0
  %4182 = vmatprep.subr.bf16.mxu0 0
  %4183 = vmatpush1.bf16.msra.mxu0 0
  %4184 = vmatprep.subr.bf16.mxu0 0
  %4185 = vmatpush1.bf16.msra.mxu0 0
  %4186 = vmatprep.subr.bf16.mxu0 0
  %4187 = vmatpush1.bf16.msra.mxu0 0
  %4188 = vmatprep.subr.bf16.mxu0 0
  %4189 = vmatpush1.bf16.msra.mxu0 0
  %4190 = vmatprep.mubr.bf16.mxu0 0
  %4191 = vmatmul.mubr.bf16.gmra.mrb[0].mxu0 %v870
  %v4192 = vpop.f32.mrb[0].mxu0
  %v4193 = vadd.f32 %v4133, %v4192
  %v4194 = vpop.f32.mrb[0].mxu0
  %v4195 = vpop.f32.mrb[0].mxu0
  %v4196 = vadd.f32 %v4136, %v4195
  %v4197 = vpop.f32.mrb[0].mxu0
  %4198 = vmatprep.mubr.bf16.mxu0 0
  %4199 = vmatmul.mubr.bf16.gmra.mrb[0].mxu0 %v873
  %v4200 = vpop.f32.mrb[0].mxu0
  %v4201 = vadd.f32 %v4141, %v4200
  %v4202 = vpop.f32.mrb[0].mxu0
  %v4203 = vpop.f32.mrb[0].mxu0
  %v4204 = vadd.f32 %v4144, %v4203
  %v4205 = vpop.f32.mrb[0].mxu0
  %4206 = vmatprep.mubr.bf16.mxu0 0
  %4207 = vmatmul.mubr.bf16.gmra.mrb[0].mxu0 %v876
  %v4208 = vpop.f32.mrb[0].mxu0
  %v4209 = vadd.f32 %v4149, %v4208
  %v4210 = vpop.f32.mrb[0].mxu0
  %v4211 = vpop.f32.mrb[0].mxu0
  %v4212 = vadd.f32 %v4152, %v4211
  %v4213 = vpop.f32.mrb[0].mxu0
  %4214 = vdwg.mxu0
  %v4215 = vsel %vm288, %v4193, 0.0
  %4216 = vadd.xlane.f32.xlu0 %v4215
  %v4217 = vpop.xlane.xlu0 %4216
  %v4218 = vsel %vm288, %v4196, 0.0
  %4219 = vadd.xlane.f32.xlu0 %v4218
  %v4220 = vpop.xlane.xlu0 %4219
  %v4221 = vsel %vm288, %v4201, 0.0
  %4222 = vadd.xlane.f32.xlu0 %v4221
  %v4223 = vpop.xlane.xlu0 %4222
  %v4224 = vsel %vm288, %v4204, 0.0
  %4225 = vadd.xlane.f32.xlu0 %v4224
  %v4226 = vpop.xlane.xlu0 %4225
  %v4227 = vsel %vm288, %v4209, 0.0
  %4228 = vadd.xlane.f32.xlu0 %v4227
  %v4229 = vpop.xlane.xlu0 %4228
  %v4230 = vsel %vm288, %v4212, 0.0
  %4231 = vadd.xlane.f32.xlu0 %v4230
  %v4232 = vpop.xlane.xlu0 %4231
  %v4233 = vmul.f32 %v4217, %v1044
  %v4234 = vmul.f32 %v4220, %v1044
  %v4235 = vmul.f32 %v4223, %v1044
  %v4236 = vmul.f32 %v4226, %v1044
  %v4237 = vmul.f32 %v4229, %v1044
  %v4238 = vmul.f32 %v4232, %v1044
  %v4239 = vsub.f32 %v4193, %v4233
  %v4240 = vsub.f32 %v4196, %v4234
  %v4241 = vsub.f32 %v4201, %v4235
  %v4242 = vsub.f32 %v4204, %v4236
  %v4243 = vsub.f32 %v4209, %v4237
  %v4244 = vsub.f32 %v4212, %v4238
  %v4245 = vmul.f32 %v4239, %v4239
  %v4246 = vmul.f32 %v4240, %v4240
  %v4247 = vmul.f32 %v4241, %v4241
  %v4248 = vmul.f32 %v4242, %v4242
  %v4249 = vmul.f32 %v4243, %v4243
  %v4250 = vmul.f32 %v4244, %v4244
  %v4251 = vsel %vm288, %v4245, 0.0
  %4252 = vadd.xlane.f32.xlu0 %v4251
  %v4253 = vpop.xlane.xlu0 %4252
  %v4254 = vsel %vm288, %v4246, 0.0
  %4255 = vadd.xlane.f32.xlu0 %v4254
  %v4256 = vpop.xlane.xlu0 %4255
  %v4257 = vsel %vm288, %v4247, 0.0
  %4258 = vadd.xlane.f32.xlu0 %v4257
  %v4259 = vpop.xlane.xlu0 %4258
  %v4260 = vsel %vm288, %v4248, 0.0
  %4261 = vadd.xlane.f32.xlu0 %v4260
  %v4262 = vpop.xlane.xlu0 %4261
  %v4263 = vsel %vm288, %v4249, 0.0
  %4264 = vadd.xlane.f32.xlu0 %v4263
  %v4265 = vpop.xlane.xlu0 %4264
  %v4266 = vsel %vm288, %v4250, 0.0
  %4267 = vadd.xlane.f32.xlu0 %v4266
  %v4268 = vpop.xlane.xlu0 %4267
  %v4269 = vmul.f32 %v4253, %v1044
  %v4270 = vmul.f32 %v4256, %v1044
  %v4271 = vmul.f32 %v4259, %v1044
  %v4272 = vmul.f32 %v4262, %v1044
  %v4273 = vmul.f32 %v4265, %v1044
  %v4274 = vmul.f32 %v4268, %v1044
  %v4275 = vadd.f32 %v4269, 1e-05
  %v4276 = vadd.f32 %v4270, 1e-05
  %v4277 = vadd.f32 %v4271, 1e-05
  %v4278 = vadd.f32 %v4272, 1e-05
  %v4279 = vadd.f32 %v4273, 1e-05
  %v4280 = vadd.f32 %v4274, 1e-05
  %v4281 = vrsqrt.pop %v4275
  %v4282 = vrsqrt.pop %v4276
  %v4283 = vrsqrt.pop %v4277
  %v4284 = vrsqrt.pop %v4278
  %v4285 = vrsqrt.pop %v4279
  %v4286 = vrsqrt.pop %v4280
  %v4287 = vmul.f32 %v4239, %v4281
  %v4288 = vmul.f32 %v4240, %v4282
  %v4289 = vmul.f32 %v4241, %v4283
  %v4290 = vmul.f32 %v4242, %v4284
  %v4291 = vmul.f32 %v4243, %v4285
  %v4292 = vmul.f32 %v4244, %v4286
  %v4293 = vmul.f32 %v4287, %v1868
  %v4294 = vmul.f32 %v4288, %v1868
  %v4295 = vmul.f32 %v4289, %v1868
  %v4296 = vmul.f32 %v4290, %v1868
  %v4297 = vmul.f32 %v4291, %v1868
  %v4298 = vmul.f32 %v4292, %v1868
  %v4299 = vadd.f32 %v4293, %v1878
  %v4300 = vadd.f32 %v4294, %v1878
  %v4301 = vadd.f32 %v4295, %v1878
  %v4302 = vadd.f32 %v4296, %v1878
  %v4303 = vadd.f32 %v4297, %v1878
  %v4304 = vadd.f32 %v4298, %v1878
  %v4305 = vmax.f32 %v4299, 0.0
  %v4306 = vmax.f32 %v4300, 0.0
  %v4307 = vmax.f32 %v4301, 0.0
  %v4308 = vmax.f32 %v4302, 0.0
  %v4309 = vmax.f32 %v4303, 0.0
  %v4310 = vmax.f32 %v4304, 0.0
  %v4311 = vpack.c.bf16 %v4306, %v4305
  %v4312 = vpack.c.bf16 %v4308, %v4307
  %v4313 = vpack.c.bf16 %v4310, %v4309
  %v4315 = vsel %vm288, %v4311, 0
  %v4318 = vsel %vm288, %v4312, 0
  %v4321 = vsel %vm288, %v4313, 0
  %4323 = vmatprep.subr.bf16.mxu0 0
  %4324 = vmatpush1.bf16.msra.mxu0 %v1914
  %4325 = vmatprep.subr.bf16.mxu0 0
  %4326 = vmatpush1.bf16.msra.mxu0 %v1915
  %4327 = vmatprep.subr.bf16.mxu0 0
  %4328 = vmatpush1.bf16.msra.mxu0 %v1916
  %4329 = vmatprep.subr.bf16.mxu0 0
  %4330 = vmatpush1.bf16.msra.mxu0 %v1917
  %4331 = vmatprep.subr.bf16.mxu0 0
  %4332 = vmatpush1.bf16.msra.mxu0 0
  %4333 = vmatprep.subr.bf16.mxu0 0
  %4334 = vmatpush1.bf16.msra.mxu0 0
  %4335 = vmatprep.subr.bf16.mxu0 0
  %4336 = vmatpush1.bf16.msra.mxu0 0
  %4337 = vmatprep.subr.bf16.mxu0 0
  %4338 = vmatpush1.bf16.msra.mxu0 0
  %4339 = vmatprep.subr.bf16.mxu0 0
  %4340 = vmatpush1.bf16.msra.mxu0 0
  %4341 = vmatprep.subr.bf16.mxu0 0
  %4342 = vmatpush1.bf16.msra.mxu0 0
  %4343 = vmatprep.subr.bf16.mxu0 0
  %4344 = vmatpush1.bf16.msra.mxu0 0
  %4345 = vmatprep.subr.bf16.mxu0 0
  %4346 = vmatpush1.bf16.msra.mxu0 0
  %4347 = vmatprep.subr.bf16.mxu0 0
  %4348 = vmatpush1.bf16.msra.mxu0 0
  %4349 = vmatprep.subr.bf16.mxu0 0
  %4350 = vmatpush1.bf16.msra.mxu0 0
  %4351 = vmatprep.subr.bf16.mxu0 0
  %4352 = vmatpush1.bf16.msra.mxu0 0
  %4353 = vmatprep.subr.bf16.mxu0 0
  %4354 = vmatpush1.bf16.msra.mxu0 0
  %4355 = vmatprep.mubr.bf16.mxu0 0
  %4356 = vmatmul.mubr.bf16.gmra.mrb[0].mxu0 %v4315
  %v4357 = vpop.f32.mrb[0].mxu0
  %v4358 = vadd.f32 %v1897, %v4357
  %v4359 = vpop.f32.mrb[0].mxu0
  %v4360 = vpop.f32.mrb[0].mxu0
  %v4361 = vadd.f32 %v1897, %v4360
  %v4362 = vpop.f32.mrb[0].mxu0
  %4363 = vmatprep.mubr.bf16.mxu0 0
  %4364 = vmatmul.mubr.bf16.gmra.mrb[0].mxu0 %v4318
  %v4365 = vpop.f32.mrb[0].mxu0
  %v4366 = vadd.f32 %v1897, %v4365
  %v4367 = vpop.f32.mrb[0].mxu0
  %v4368 = vpop.f32.mrb[0].mxu0
  %v4369 = vadd.f32 %v1897, %v4368
  %v4370 = vpop.f32.mrb[0].mxu0
  %4371 = vmatprep.mubr.bf16.mxu0 0
  %4372 = vmatmul.mubr.bf16.gmra.mrb[0].mxu0 %v4321
  %v4373 = vpop.f32.mrb[0].mxu0
  %v4374 = vadd.f32 %v1897, %v4373
  %v4375 = vpop.f32.mrb[0].mxu0
  %v4376 = vpop.f32.mrb[0].mxu0
  %v4377 = vadd.f32 %v1897, %v4376
  %v4378 = vpop.f32.mrb[0].mxu0
  %4379 = vdwg.mxu0
  %v4380 = vpack.c.bf16 %v4361, %v4358
  %v4381 = vpack.c.bf16 %v4369, %v4366
  %v4382 = vpack.c.bf16 %v4377, %v4374
  %4383 = vmatprep.subr.bf16.mxu0 0
  %4384 = vmatpush1.bf16.msra.mxu0 %v4380
  %4385 = vmatprep.subr.bf16.mxu0 0
  %4386 = vmatpush1.bf16.msra.mxu0 %v4381
  %4387 = vmatprep.subr.bf16.mxu0 0
  %4388 = vmatpush1.bf16.msra.mxu0 %v4382
  %4389 = vmatprep.subr.bf16.mxu0 0
  %4390 = vmatpush1.bf16.msra.mxu0 0
  %4391 = vmatprep.subr.bf16.mxu0 0
  %4392 = vmatpush1.bf16.msra.mxu0 0
  %4393 = vmatprep.subr.bf16.mxu0 0
  %4394 = vmatpush1.bf16.msra.mxu0 0
  %4395 = vmatprep.subr.bf16.mxu0 0
  %4396 = vmatpush1.bf16.msra.mxu0 0
  %4397 = vmatprep.subr.bf16.mxu0 0
  %4398 = vmatpush1.bf16.msra.mxu0 0
  %4399 = vmatprep.subr.bf16.mxu0 0
  %4400 = vmatpush1.bf16.msra.mxu0 0
  %4401 = vmatprep.subr.bf16.mxu0 0
  %4402 = vmatpush1.bf16.msra.mxu0 0
  %4403 = vmatprep.subr.bf16.mxu0 0
  %4404 = vmatpush1.bf16.msra.mxu0 0
  %4405 = vmatprep.subr.bf16.mxu0 0
  %4406 = vmatpush1.bf16.msra.mxu0 0
  %4407 = vmatprep.subr.bf16.mxu0 0
  %4408 = vmatpush1.bf16.msra.mxu0 0
  %4409 = vmatprep.subr.bf16.mxu0 0
  %4410 = vmatpush1.bf16.msra.mxu0 0
  %4411 = vmatprep.subr.bf16.mxu0 0
  %4412 = vmatpush1.bf16.msra.mxu0 0
  %4413 = vmatprep.subr.bf16.mxu0 0
  %4414 = vmatpush1.bf16.msra.mxu0 0
  %4415 = vmatprep.mubr.bf16.mxu0 0
  %4416 = vmatmul.mubr.bf16.gmra.mrb[0].mxu0 %v1992
  %v4417 = vpop.f32.mrb[0].mxu0
  %v4418 = vadd.f32 0.0, %v4417
  %v4419 = vpop.f32.mrb[0].mxu0
  %v4420 = vpop.f32.mrb[0].mxu0
  %v4421 = vadd.f32 0.0, %v4420
  %v4422 = vpop.f32.mrb[0].mxu0
  %4423 = vmatprep.mubr.bf16.mxu0 0
  %4424 = vmatmul.mubr.bf16.gmra.mrb[0].mxu0 %v1995
  %v4425 = vpop.f32.mrb[0].mxu0
  %v4426 = vadd.f32 0.0, %v4425
  %v4427 = vpop.f32.mrb[0].mxu0
  %v4428 = vpop.f32.mrb[0].mxu0
  %v4429 = vpop.f32.mrb[0].mxu0
  %4430 = vdwg.mxu0
  %v4431 = vsel %vm288, %v4418, 0.0
  %4432 = vadd.xlane.f32.xlu0 %v4431
  %v4433 = vpop.xlane.xlu0 %4432
  %v4434 = vsel %vm288, %v4421, 0.0
  %4435 = vadd.xlane.f32.xlu0 %v4434
  %v4436 = vpop.xlane.xlu0 %4435
  %v4437 = vsel %vm1279, %v4426, 0.0
  %4438 = vadd.xlane.f32.xlu0 %v4437
  %v4439 = vpop.xlane.xlu0 %4438
  %v4440 = vmul.f32 %v4433, %v1044
  %v4441 = vmul.f32 %v4436, %v1044
  %v4442 = vmul.f32 %v4439, %v1044
  %v4443 = vsub.f32 %v4418, %v4440
  %v4444 = vsub.f32 %v4421, %v4441
  %v4445 = vsub.f32 %v4426, %v4442
  %v4446 = vmul.f32 %v4443, %v4443
  %v4447 = vmul.f32 %v4444, %v4444
  %v4448 = vmul.f32 %v4445, %v4445
  %v4449 = vsel %vm288, %v4446, 0.0
  %4450 = vadd.xlane.f32.xlu0 %v4449
  %v4451 = vpop.xlane.xlu0 %4450
  %v4452 = vsel %vm288, %v4447, 0.0
  %4453 = vadd.xlane.f32.xlu0 %v4452
  %v4454 = vpop.xlane.xlu0 %4453
  %v4455 = vsel %vm1279, %v4448, 0.0
  %4456 = vadd.xlane.f32.xlu0 %v4455
  %v4457 = vpop.xlane.xlu0 %4456
  %v4458 = vmul.f32 %v4451, %v1044
  %v4459 = vmul.f32 %v4454, %v1044
  %v4460 = vmul.f32 %v4457, %v1044
  %v4461 = vadd.f32 %v4458, 1e-05
  %v4462 = vadd.f32 %v4459, 1e-05
  %v4463 = vadd.f32 %v4460, 1e-05
  %v4464 = vrsqrt.pop %v4461
  %v4465 = vrsqrt.pop %v4462
  %v4466 = vrsqrt.pop %v4463
  %v4467 = vmul.f32 %v4443, %v4464
  %v4468 = vmul.f32 %v4444, %v4465
  %v4469 = vmul.f32 %v4445, %v4466
  %v4470 = vmul.f32 %v4467, %v2087
  %v4471 = vmul.f32 %v4468, %v2087
  %v4472 = vmul.f32 %v4469, %v2087
  %v4473 = vadd.f32 %v4470, %v2094
  %v4474 = vadd.f32 %v4471, %v2094
  %v4475 = vadd.f32 %v4472, %v2094
  %v4476 = vpack.c.bf16 %v4474, %v4473
  %v4477 = vpack.c.bf16 %v4475, %v4475
  %4481 = vrot.lane.b32.xlu0 %v4034, 64
  %v4482 = vpop.permute.xlu0 %4481
  %4483 = vrot.lane.b32.xlu0 %v4037, 64
  %v4484 = vpop.permute.xlu0 %4483
  %4485 = vrot.lane.b32.xlu0 %v4042, 64
  %v4486 = vpop.permute.xlu0 %4485
  %v4491 = vsel %vm288, %v4476, 0
  %v4494 = vsel %vm288, %v4477, 0
  %4496 = vmatprep.subr.bf16.mxu0 0
  %4497 = vmatpush1.bf16.msra.mxu0 %v2116
  %4498 = vmatprep.subr.bf16.mxu0 0
  %4499 = vmatpush1.bf16.msra.mxu0 %v2117
  %4500 = vmatprep.subr.bf16.mxu0 0
  %4501 = vmatpush1.bf16.msra.mxu0 %v2118
  %4502 = vmatprep.subr.bf16.mxu0 0
  %4503 = vmatpush1.bf16.msra.mxu0 %v2119
  %4504 = vmatprep.subr.bf16.mxu0 0
  %4505 = vmatpush1.bf16.msra.mxu0 0
  %4506 = vmatprep.subr.bf16.mxu0 0
  %4507 = vmatpush1.bf16.msra.mxu0 0
  %4508 = vmatprep.subr.bf16.mxu0 0
  %4509 = vmatpush1.bf16.msra.mxu0 0
  %4510 = vmatprep.subr.bf16.mxu0 0
  %4511 = vmatpush1.bf16.msra.mxu0 0
  %4512 = vmatprep.subr.bf16.mxu0 0
  %4513 = vmatpush1.bf16.msra.mxu0 0
  %4514 = vmatprep.subr.bf16.mxu0 0
  %4515 = vmatpush1.bf16.msra.mxu0 0
  %4516 = vmatprep.subr.bf16.mxu0 0
  %4517 = vmatpush1.bf16.msra.mxu0 0
  %4518 = vmatprep.subr.bf16.mxu0 0
  %4519 = vmatpush1.bf16.msra.mxu0 0
  %4520 = vmatprep.subr.bf16.mxu0 0
  %4521 = vmatpush1.bf16.msra.mxu0 0
  %4522 = vmatprep.subr.bf16.mxu0 0
  %4523 = vmatpush1.bf16.msra.mxu0 0
  %4524 = vmatprep.subr.bf16.mxu0 0
  %4525 = vmatpush1.bf16.msra.mxu0 0
  %4526 = vmatprep.subr.bf16.mxu0 0
  %4527 = vmatpush1.bf16.msra.mxu0 0
  %4528 = vmatprep.mubr.bf16.mxu0 0
  %4529 = vmatmul.mubr.bf16.gmra.mrb[0].mxu0 %v4491
  %v4530 = vpop.f32.mrb[0].mxu0
  %v4531 = vadd.f32 %v4482, %v4530
  %v4532 = vpop.f32.mrb[0].mxu0
  %v4533 = vpop.f32.mrb[0].mxu0
  %v4534 = vadd.f32 %v4484, %v4533
  %v4535 = vpop.f32.mrb[0].mxu0
  %4536 = vmatprep.mubr.bf16.mxu0 0
  %4537 = vmatmul.mubr.bf16.gmra.mrb[0].mxu0 %v4494
  %v4538 = vpop.f32.mrb[0].mxu0
  %v4539 = vadd.f32 %v4486, %v4538
  %v4540 = vpop.f32.mrb[0].mxu0
  %v4541 = vpop.f32.mrb[0].mxu0
  %v4542 = vpop.f32.mrb[0].mxu0
  %4543 = vdwg.mxu0
  %v4544 = vmax.f32 %v4531, 0.0
  %v4545 = vmax.f32 %v4534, 0.0
  %v4546 = vmax.f32 %v4539, 0.0
  %v4547 = vpack.c.bf16 %v4545, %v4544
  %v4548 = vpack.c.bf16 %v4546, %v4546
  %v4550 = vsel %vm288, %v4547, 0
  %v4553 = vsel %vm288, %v4548, 0
  %4555 = vmatprep.subr.bf16.mxu0 0
  %4556 = vmatpush1.bf16.msra.mxu0 %v2215
  %4557 = vmatprep.subr.bf16.mxu0 0
  %4558 = vmatpush1.bf16.msra.mxu0 %v2216
  %4559 = vmatprep.subr.bf16.mxu0 0
  %4560 = vmatpush1.bf16.msra.mxu0 %v2217
  %4561 = vmatprep.subr.bf16.mxu0 0
  %4562 = vmatpush1.bf16.msra.mxu0 %v2218
  %4563 = vmatprep.subr.bf16.mxu0 0
  %4564 = vmatpush1.bf16.msra.mxu0 0
  %4565 = vmatprep.subr.bf16.mxu0 0
  %4566 = vmatpush1.bf16.msra.mxu0 0
  %4567 = vmatprep.subr.bf16.mxu0 0
  %4568 = vmatpush1.bf16.msra.mxu0 0
  %4569 = vmatprep.subr.bf16.mxu0 0
  %4570 = vmatpush1.bf16.msra.mxu0 0
  %4571 = vmatprep.subr.bf16.mxu0 0
  %4572 = vmatpush1.bf16.msra.mxu0 0
  %4573 = vmatprep.subr.bf16.mxu0 0
  %4574 = vmatpush1.bf16.msra.mxu0 0
  %4575 = vmatprep.subr.bf16.mxu0 0
  %4576 = vmatpush1.bf16.msra.mxu0 0
  %4577 = vmatprep.subr.bf16.mxu0 0
  %4578 = vmatpush1.bf16.msra.mxu0 0
  %4579 = vmatprep.subr.bf16.mxu0 0
  %4580 = vmatpush1.bf16.msra.mxu0 0
  %4581 = vmatprep.subr.bf16.mxu0 0
  %4582 = vmatpush1.bf16.msra.mxu0 0
  %4583 = vmatprep.subr.bf16.mxu0 0
  %4584 = vmatpush1.bf16.msra.mxu0 0
  %4585 = vmatprep.subr.bf16.mxu0 0
  %4586 = vmatpush1.bf16.msra.mxu0 0
  %4587 = vmatprep.mubr.bf16.mxu0 0
  %4588 = vmatmul.mubr.bf16.gmra.mrb[0].mxu0 %v4550
  %v4589 = vpop.f32.mrb[0].mxu0
  %v4590 = vadd.f32 %v2198, %v4589
  %v4591 = vpop.f32.mrb[0].mxu0
  %v4592 = vpop.f32.mrb[0].mxu0
  %v4593 = vadd.f32 %v2198, %v4592
  %v4594 = vpop.f32.mrb[0].mxu0
  %4595 = vmatprep.mubr.bf16.mxu0 0
  %4596 = vmatmul.mubr.bf16.gmra.mrb[0].mxu0 %v4553
  %v4597 = vpop.f32.mrb[0].mxu0
  %v4598 = vadd.f32 %v2198, %v4597
  %v4599 = vpop.f32.mrb[0].mxu0
  %v4600 = vpop.f32.mrb[0].mxu0
  %v4601 = vpop.f32.mrb[0].mxu0
  %4602 = vdwg.mxu0
  %v4603 = vld [vmem:[%s49] sm:$0xf]
  %v4604 = vld [vmem:[%s49 + $0x4] sm:$0xf]
  %v4605 = vld [vmem:[%s49 + $0x8] sm:$0xf]
  %v4606 = vld [vmem:[%s49 + $0xc] sm:$0xf]
  %v4607 = vld [vmem:[%s49 + $0x10] sm:$0xf]
  %v4608 = vld [vmem:[%s49 + $0x14] sm:$0xf]
  %v4609 = vld [vmem:[%s49 + $0x18] sm:$0xf]
  %v4610 = vld [vmem:[%s49 + $0x1c] sm:$0xf]
  %v4611 = vpack.c.bf16 %v4593, %v4590
  %v4612 = vpack.c.bf16 %v4598, %v4598
  %v4613 = vld [vmem:[%s51] sm:$0x1]
  %v4615 = vlaneseq
  %v4616 = vshrl.u32 %v4615, 7
  %v4617 = vsub.s32 0, %v4616
  %v4618 = vrot.slane %v4613, %v4617
  %v4628 = vunpack.c.l.b16 %v4603
  %v4629 = vunpack.c.l.b16 %v4604
  %v4630 = vunpack.c.l.b16 %v4605
  %v4631 = vunpack.c.l.b16 %v4606
  %v4632 = vunpack.c.l.b16 %v4607
  %v4633 = vunpack.c.l.b16 %v4608
  %v4634 = vunpack.c.l.b16 %v4609
  %v4635 = vunpack.c.l.b16 %v4610
  %v4636 = vpack.c.b16 %v4629, %v4628
  %v4637 = vpack.c.b16 %v4631, %v4630
  %v4638 = vpack.c.b16 %v4633, %v4632
  %v4639 = vpack.c.b16 %v4635, %v4634
  %v4645 = vsel %vm288, %v4611, 0
  %v4648 = vsel %vm288, %v4612, 0
  %4650 = vmatprep.subr.bf16.mxu0 0
  %4651 = vmatpush1.bf16.msra.mxu0 %v4636
  %4652 = vmatprep.subr.bf16.mxu0 0
  %4653 = vmatpush1.bf16.msra.mxu0 %v4637
  %4654 = vmatprep.subr.bf16.mxu0 0
  %4655 = vmatpush1.bf16.msra.mxu0 %v4638
  %4656 = vmatprep.subr.bf16.mxu0 0
  %4657 = vmatpush1.bf16.msra.mxu0 %v4639
  %4658 = vmatprep.subr.bf16.mxu0 0
  %4659 = vmatpush1.bf16.msra.mxu0 0
  %4660 = vmatprep.subr.bf16.mxu0 0
  %4661 = vmatpush1.bf16.msra.mxu0 0
  %4662 = vmatprep.subr.bf16.mxu0 0
  %4663 = vmatpush1.bf16.msra.mxu0 0
  %4664 = vmatprep.subr.bf16.mxu0 0
  %4665 = vmatpush1.bf16.msra.mxu0 0
  %4666 = vmatprep.subr.bf16.mxu0 0
  %4667 = vmatpush1.bf16.msra.mxu0 0
  %4668 = vmatprep.subr.bf16.mxu0 0
  %4669 = vmatpush1.bf16.msra.mxu0 0
  %4670 = vmatprep.subr.bf16.mxu0 0
  %4671 = vmatpush1.bf16.msra.mxu0 0
  %4672 = vmatprep.subr.bf16.mxu0 0
  %4673 = vmatpush1.bf16.msra.mxu0 0
  %4674 = vmatprep.subr.bf16.mxu0 0
  %4675 = vmatpush1.bf16.msra.mxu0 0
  %4676 = vmatprep.subr.bf16.mxu0 0
  %4677 = vmatpush1.bf16.msra.mxu0 0
  %4678 = vmatprep.subr.bf16.mxu0 0
  %4679 = vmatpush1.bf16.msra.mxu0 0
  %4680 = vmatprep.subr.bf16.mxu0 0
  %4681 = vmatpush1.bf16.msra.mxu0 0
  %4682 = vmatprep.mubr.bf16.mxu0 0
  %4683 = vmatmul.mubr.bf16.gmra.mrb[0].mxu0 %v4645
  %v4684 = vpop.f32.mrb[0].mxu0
  %v4685 = vadd.f32 %v4618, %v4684
  %v4686 = vpop.f32.mrb[0].mxu0
  %v4687 = vpop.f32.mrb[0].mxu0
  %v4688 = vadd.f32 %v4618, %v4687
  %v4689 = vpop.f32.mrb[0].mxu0
  %4690 = vmatprep.mubr.bf16.mxu0 0
  %4691 = vmatmul.mubr.bf16.gmra.mrb[0].mxu0 %v4648
  %v4692 = vpop.f32.mrb[0].mxu0
  %v4693 = vadd.f32 %v4618, %v4692
  %v4694 = vpop.f32.mrb[0].mxu0
  %v4695 = vpop.f32.mrb[0].mxu0
  %v4696 = vpop.f32.mrb[0].mxu0
  %4697 = vdwg.mxu0
  %v4698 = vmax.f32 %v4685, 0.0
  %v4699 = vmax.f32 %v4688, 0.0
  %v4700 = vmax.f32 %v4693, 0.0
  %v4701 = vld [vmem:[%s53] sm:$0xf]
  %v4702 = vld [vmem:[%s53 + $0x4] sm:$0xf]
  %v4703 = vld [vmem:[%s53 + $0x8] sm:$0xf]
  %v4704 = vld [vmem:[%s53 + $0xc] sm:$0xf]
  %v4705 = vld [vmem:[%s53 + $0x10] sm:$0xf]
  %v4706 = vld [vmem:[%s53 + $0x14] sm:$0xf]
  %v4707 = vld [vmem:[%s53 + $0x18] sm:$0xf]
  %v4708 = vld [vmem:[%s53 + $0x1c] sm:$0xf]
  %v4709 = vld [vmem:[%s53 + $0x20] sm:$0xf]
  %v4710 = vld [vmem:[%s53 + $0x24] sm:$0xf]
  %v4711 = vld [vmem:[%s53 + $0x28] sm:$0xf]
  %v4712 = vld [vmem:[%s53 + $0x2c] sm:$0xf]
  %v4713 = vld [vmem:[%s53 + $0x30] sm:$0xf]
  %v4714 = vld [vmem:[%s53 + $0x34] sm:$0xf]
  %v4715 = vld [vmem:[%s53 + $0x38] sm:$0xf]
  %v4716 = vld [vmem:[%s53 + $0x3c] sm:$0xf]
  %v4717 = vpack.c.bf16 %v4699, %v4698
  %v4718 = vpack.c.bf16 %v4700, %v4700
  %v4719 = vld [vmem:[%s55] sm:$0x1]
  %v4721 = vlaneseq
  %v4722 = vshrl.u32 %v4721, 7
  %v4723 = vsub.s32 0, %v4722
  %v4724 = vrot.slane %v4719, %v4723
  %v4742 = vunpack.c.l.b16 %v4701
  %v4743 = vunpack.c.l.b16 %v4702
  %v4744 = vunpack.c.l.b16 %v4703
  %v4745 = vunpack.c.l.b16 %v4704
  %v4746 = vunpack.c.l.b16 %v4705
  %v4747 = vunpack.c.l.b16 %v4706
  %v4748 = vunpack.c.l.b16 %v4707
  %v4749 = vunpack.c.l.b16 %v4708
  %v4750 = vunpack.c.l.b16 %v4709
  %v4751 = vunpack.c.l.b16 %v4710
  %v4752 = vunpack.c.l.b16 %v4711
  %v4753 = vunpack.c.l.b16 %v4712
  %v4754 = vunpack.c.l.b16 %v4713
  %v4755 = vunpack.c.l.b16 %v4714
  %v4756 = vunpack.c.l.b16 %v4715
  %v4757 = vunpack.c.l.b16 %v4716
  %v4758 = vpack.c.b16 %v4743, %v4742
  %v4759 = vpack.c.b16 %v4745, %v4744
  %v4760 = vpack.c.b16 %v4747, %v4746
  %v4761 = vpack.c.b16 %v4749, %v4748
  %v4762 = vpack.c.b16 %v4751, %v4750
  %v4763 = vpack.c.b16 %v4753, %v4752
  %v4764 = vpack.c.b16 %v4755, %v4754
  %v4765 = vpack.c.b16 %v4757, %v4756
  %4774 = vmatprep.subr.bf16.mxu0 0
  %4775 = vmatpush1.bf16.msra.mxu0 %v4758
  %4776 = vmatprep.subr.bf16.mxu0 0
  %4777 = vmatpush1.bf16.msra.mxu0 %v4759
  %4778 = vmatprep.subr.bf16.mxu0 0
  %4779 = vmatpush1.bf16.msra.mxu0 %v4760
  %4780 = vmatprep.subr.bf16.mxu0 0
  %4781 = vmatpush1.bf16.msra.mxu0 %v4761
  %4782 = vmatprep.subr.bf16.mxu0 0
  %4783 = vmatpush1.bf16.msra.mxu0 %v4762
  %4784 = vmatprep.subr.bf16.mxu0 0
  %4785 = vmatpush1.bf16.msra.mxu0 %v4763
  %4786 = vmatprep.subr.bf16.mxu0 0
  %4787 = vmatpush1.bf16.msra.mxu0 %v4764
  %4788 = vmatprep.subr.bf16.mxu0 0
  %4789 = vmatpush1.bf16.msra.mxu0 %v4765
  %4790 = vmatprep.subr.bf16.mxu0 0
  %4791 = vmatpush1.bf16.msra.mxu0 0
  %4792 = vmatprep.subr.bf16.mxu0 0
  %4793 = vmatpush1.bf16.msra.mxu0 0
  %4794 = vmatprep.subr.bf16.mxu0 0
  %4795 = vmatpush1.bf16.msra.mxu0 0
  %4796 = vmatprep.subr.bf16.mxu0 0
  %4797 = vmatpush1.bf16.msra.mxu0 0
  %4798 = vmatprep.subr.bf16.mxu0 0
  %4799 = vmatpush1.bf16.msra.mxu0 0
  %4800 = vmatprep.subr.bf16.mxu0 0
  %4801 = vmatpush1.bf16.msra.mxu0 0
  %4802 = vmatprep.subr.bf16.mxu0 0
  %4803 = vmatpush1.bf16.msra.mxu0 0
  %4804 = vmatprep.subr.bf16.mxu0 0
  %4805 = vmatpush1.bf16.msra.mxu0 0
  %4806 = vmatprep.mubr.bf16.mxu0 0
  %4807 = vmatmul.mubr.bf16.gmra.mrb[0].mxu0 %v4717
  %v4808 = vpop.f32.mrb[0].mxu0
  %v4809 = vadd.f32 %v4724, %v4808
  %v4810 = vpop.f32.mrb[0].mxu0
  %v4811 = vpop.f32.mrb[0].mxu0
  %v4812 = vadd.f32 %v4724, %v4811
  %v4813 = vpop.f32.mrb[0].mxu0
  %4814 = vmatprep.mubr.bf16.mxu0 0
  %4815 = vmatmul.mubr.bf16.gmra.mrb[0].mxu0 %v4718
  %v4816 = vpop.f32.mrb[0].mxu0
  %v4817 = vadd.f32 %v4724, %v4816
  %v4818 = vpop.f32.mrb[0].mxu0
  %v4819 = vpop.f32.mrb[0].mxu0
  %v4820 = vpop.f32.mrb[0].mxu0
  %4821 = vdwg.mxu0
  %v4822 = vmax.f32 %v4809, 0.0
  %v4823 = vmax.f32 %v4812, 0.0
  %v4824 = vmax.f32 %v4817, 0.0
  %v4825 = vld [vmem:[%s57] sm:$0xf]
  %v4826 = vld [vmem:[%s57 + $0x4] sm:$0xf]
  %v4827 = vld [vmem:[%s57 + $0x8] sm:$0xf]
  %v4828 = vld [vmem:[%s57 + $0xc] sm:$0xf]
  %v4829 = vld [vmem:[%s57 + $0x10] sm:$0xf]
  %v4830 = vld [vmem:[%s57 + $0x14] sm:$0xf]
  %v4831 = vld [vmem:[%s57 + $0x18] sm:$0xf]
  %v4832 = vld [vmem:[%s57 + $0x1c] sm:$0xf]
  %v4833 = vld [vmem:[%s57 + $0x20] sm:$0xf]
  %v4834 = vld [vmem:[%s57 + $0x24] sm:$0xf]
  %v4835 = vld [vmem:[%s57 + $0x28] sm:$0xf]
  %v4836 = vld [vmem:[%s57 + $0x2c] sm:$0xf]
  %v4837 = vld [vmem:[%s57 + $0x30] sm:$0xf]
  %v4838 = vld [vmem:[%s57 + $0x34] sm:$0xf]
  %v4839 = vld [vmem:[%s57 + $0x38] sm:$0xf]
  %v4840 = vld [vmem:[%s57 + $0x3c] sm:$0xf]
  %v4841 = vpack.c.bf16 %v4823, %v4822
  %v4842 = vpack.c.bf16 %v4824, %v4824
  %v4859 = vunpack.c.l.b16 %v4825
  %v4860 = vunpack.c.l.b16 %v4826
  %v4861 = vunpack.c.l.b16 %v4827
  %v4862 = vunpack.c.l.b16 %v4828
  %v4863 = vunpack.c.l.b16 %v4829
  %v4864 = vunpack.c.l.b16 %v4830
  %v4865 = vunpack.c.l.b16 %v4831
  %v4866 = vunpack.c.l.b16 %v4832
  %v4867 = vunpack.c.l.b16 %v4833
  %v4868 = vunpack.c.l.b16 %v4834
  %v4869 = vunpack.c.l.b16 %v4835
  %v4870 = vunpack.c.l.b16 %v4836
  %v4871 = vunpack.c.l.b16 %v4837
  %v4872 = vunpack.c.l.b16 %v4838
  %v4873 = vunpack.c.l.b16 %v4839
  %v4874 = vunpack.c.l.b16 %v4840
  %v4875 = vpack.c.b16 %v4860, %v4859
  %v4876 = vpack.c.b16 %v4862, %v4861
  %v4877 = vpack.c.b16 %v4864, %v4863
  %v4878 = vpack.c.b16 %v4866, %v4865
  %v4879 = vpack.c.b16 %v4868, %v4867
  %v4880 = vpack.c.b16 %v4870, %v4869
  %v4881 = vpack.c.b16 %v4872, %v4871
  %v4882 = vpack.c.b16 %v4874, %v4873
  %4891 = vmatprep.subr.bf16.mxu0 0
  %4892 = vmatpush1.bf16.msra.mxu0 %v4875
  %4893 = vmatprep.subr.bf16.mxu0 0
  %4894 = vmatpush1.bf16.msra.mxu0 %v4876
  %4895 = vmatprep.subr.bf16.mxu0 0
  %4896 = vmatpush1.bf16.msra.mxu0 %v4877
  %4897 = vmatprep.subr.bf16.mxu0 0
  %4898 = vmatpush1.bf16.msra.mxu0 %v4878
  %4899 = vmatprep.subr.bf16.mxu0 0
  %4900 = vmatpush1.bf16.msra.mxu0 %v4879
  %4901 = vmatprep.subr.bf16.mxu0 0
  %4902 = vmatpush1.bf16.msra.mxu0 %v4880
  %4903 = vmatprep.subr.bf16.mxu0 0
  %4904 = vmatpush1.bf16.msra.mxu0 %v4881
  %4905 = vmatprep.subr.bf16.mxu0 0
  %4906 = vmatpush1.bf16.msra.mxu0 %v4882
  %4907 = vmatprep.subr.bf16.mxu0 0
  %4908 = vmatpush1.bf16.msra.mxu0 0
  %4909 = vmatprep.subr.bf16.mxu0 0
  %4910 = vmatpush1.bf16.msra.mxu0 0
  %4911 = vmatprep.subr.bf16.mxu0 0
  %4912 = vmatpush1.bf16.msra.mxu0 0
  %4913 = vmatprep.subr.bf16.mxu0 0
  %4914 = vmatpush1.bf16.msra.mxu0 0
  %4915 = vmatprep.subr.bf16.mxu0 0
  %4916 = vmatpush1.bf16.msra.mxu0 0
  %4917 = vmatprep.subr.bf16.mxu0 0
  %4918 = vmatpush1.bf16.msra.mxu0 0
  %4919 = vmatprep.subr.bf16.mxu0 0
  %4920 = vmatpush1.bf16.msra.mxu0 0
  %4921 = vmatprep.subr.bf16.mxu0 0
  %4922 = vmatpush1.bf16.msra.mxu0 0
  %4923 = vmatprep.mubr.bf16.mxu0 0
  %4924 = vmatmul.mubr.bf16.gmra.mrb[0].mxu0 %v4841
  %v4925 = vpop.f32.mrb[0].mxu0
  %v4926 = vadd.f32 0.0, %v4925
  %v4927 = vpop.f32.mrb[0].mxu0
  %v4928 = vpop.f32.mrb[0].mxu0
  %v4929 = vadd.f32 0.0, %v4928
  %v4930 = vpop.f32.mrb[0].mxu0
  %4931 = vmatprep.mubr.bf16.mxu0 0
  %4932 = vmatmul.mubr.bf16.gmra.mrb[0].mxu0 %v4842
  %v4933 = vpop.f32.mrb[0].mxu0
  %v4934 = vadd.f32 0.0, %v4933
  %v4935 = vpop.f32.mrb[0].mxu0
  %v4936 = vpop.f32.mrb[0].mxu0
  %v4937 = vpop.f32.mrb[0].mxu0
  %4938 = vdwg.mxu0
  %4939 = vst [vmem:[%s59] sm:$0xff] %v4926
  %4940 = vst [vmem:[%s59 + $0x8] sm:$0xff] %v4929
  %4941 = vst [vmem:[%s59 + $0x10] sm:$0xf] %v4934
  // Predicated region
  $region118: #{gnn_policy_forward.1} parent=0 // pred_check
    _
  $region119: #{gnn_policy_forward.1} parent=0 // pred_check_branch
    %4943 = sbr.rel (0) target = $region121
  $region120: #{gnn_policy_forward.1} parent=0 // pred_region
    _
  $region121: #{gnn_policy_forward.1} parent=0 // pred_fallthru
    _
  // Predicated region
  $region122: #{gnn_policy_forward.1} parent=0 // pred_check
    _
  $region123: #{gnn_policy_forward.1} parent=0 // pred_check_branch
    %4945 = sbr.rel (0) target = $region125
  $region124: #{gnn_policy_forward.1} parent=0 // pred_region
    _
  $region125: #{gnn_policy_forward.1} parent=0 // pred_fallthru
    _

</llo_original>
